<compile_context>
chip_gen: v7x
topology: tpu7x:2x2x1
jax: 0.10.0
libtpu: 0.0.40
codegen_flags: <defaults>
</compile_context>

<pallas_src>
import functools

import jax
import jax.numpy as jnp
from jax.experimental import pallas as pl
from jax.experimental.pallas import tpu as pltpu

_CSQ_SENTINEL = 3.0e38  # padded codebook columns never win the argmin


def _round_up(x, m):
    return ((x + m - 1) // m) * m


def _vq_kernel(x_ref, cbt_ref, csq_ref, q_ref, ind_ref, sse_ref, *,
               tm, c_padded, valid_rows, padded_rows):
    """One tile of rows: nearest-codebook lookup + per-tile partial SSE."""
    x = x_ref[...]                               # (tm, D)   input dtype (f32 or bf16)
    cbt = cbt_ref[...]                           # (D, Cp)   pre-transposed codebook
    c_sq = csq_ref[...]                          # (1, Cp)   f32 ||c||^2 (+sentinel pad)

    # argmin_c ||x - c||^2 == argmin_c (||c||^2 - 2 x.c)  (||x||^2 is a per-row constant)
    dots = jnp.dot(x, cbt, preferred_element_type=jnp.float32)    # (tm, Cp)  MXU
    dist = c_sq - 2.0 * dots                                      # (tm, Cp)  VPU

    # Row minimum (reused for the loss) + first-min index recovery (cheaper than argmin's
    # variadic (value, index) reduce).
    row_min = jnp.min(dist, axis=-1, keepdims=True)               # (tm, 1)   XLU
    col = jax.lax.broadcasted_iota(jnp.int32, (tm, c_padded), 1)
    ind = jnp.min(jnp.where(dist == row_min, col, c_padded),
                  axis=-1).astype(jnp.int32)                      # (tm,)

    # Gather codebook rows with a one-hot contraction over Cp (MXU-friendly gather);
    # contracting against cb^T directly avoids keeping a second (C, D) codebook resident.
    onehot = (col == ind[:, None]).astype(cbt.dtype)              # (tm, Cp)
    q = jax.lax.dot_general(onehot, cbt, (((1,), (1,)), ((), ())),
                            preferred_element_type=jnp.float32)   # (tm, D)

    # TODO(synk): if the q store slot binds on v5e (D=32 -> masked vst), repack q to
    # (tm//4, 128) in-kernel; left as-is pending a bundle profile (costs XLU otherwise).
    q_ref[...] = q.astype(q_ref.dtype)
    ind_ref[...] = ind.reshape(ind_ref.shape)    # lane-dense (tm//128, 128) index store

    # Per-tile partial SSE: sum_rows (min_c dist + ||x||^2) == sum_rows ||q - x||^2.
    x_f32 = x.astype(jnp.float32)
    x_sq = jnp.sum(x_f32 * x_f32, axis=-1, keepdims=True)         # (tm, 1)
    contrib = row_min + x_sq
    if valid_rows < padded_rows:  # static (trace-time) condition: mask padded rows
        row = (pl.program_id(0) * tm +
               jax.lax.broadcasted_iota(jnp.int32, (tm, 1), 0))
        contrib = jnp.where(row < valid_rows, contrib, 0.0)
    sse_ref[0, 0] = jnp.sum(contrib)


def simple_vector_quantize(x, codebook, *, commitment_weight=1.0, tm=8192):
    """x: (B, N, D); codebook: (C, D).

    Returns (quantize, embed_ind, loss) matching the PyTorch module's forward values.
    """
    B, N, D = x.shape
    C, D2 = codebook.shape
    assert D == D2, "codebook_dim mismatch"
    M = B * N

    # Row tiling. tm must be a multiple of 1024 so the lane-dense index block
    # (tm//128, 128) is (8,128)-aligned. Prefer >= 2 grid steps so the ("parallel",)
    # grid axis can be sharded across both v7x TensorCores (single-TC chips just loop).
    assert tm % 1024 == 0, "tm must be a multiple of 1024"
    Mp_rows = _round_up(M, 1024)
    if Mp_rows >= 2048:
        tm = min(tm, _round_up(pl.cdiv(Mp_rows, 2), 1024))
    else:
        tm = min(tm, Mp_rows)
    Mp = _round_up(M, tm)
    n_tiles = Mp // tm

    x_flat = x.reshape(M, D)
    if Mp != M:
        x_flat = jnp.pad(x_flat, ((0, Mp - M), (0, 0)))

    # Hoisted codebook preprocessing (done once, not per grid step). Pad C up to a
    # lane-dense multiple of 128; padded columns get a huge ||c||^2 so they never win.
    Cp = _round_up(C, 128)
    cb_f32 = codebook.astype(jnp.float32)
    c_sq = jnp.sum(cb_f32 * cb_f32, axis=-1)                                   # (C,)
    c_sq = jnp.pad(c_sq, (0, Cp - C), constant_values=_CSQ_SENTINEL)[None, :]  # (1, Cp)
    cb_t = jnp.pad(codebook.astype(x.dtype), ((0, Cp - C), (0, 0))).T          # (D, Cp)

    # VMEM budget: double-buffered x/q/ind tiles + the (tm, Cp) f32 intermediates
    # (dots, dist, onehot, temps) + the resident codebook. v5e's 16 MiB scoped default
    # is exceeded first, so always pass an explicit limit (capped below v7x's 64 MiB/TC).
    x_bytes = jnp.dtype(x.dtype).itemsize
    est = (2 * 2 * tm * D * x_bytes            # x + q tiles, double-buffered
           + 2 * tm * 4                        # index tile, double-buffered
           + 2 * (D * Cp * x_bytes + Cp * 4)   # resident codebook^T and ||c||^2
           + 4 * tm * Cp * 4)                  # dots / dist / onehot / temps
    vmem_limit = min(max(32 * 1024 * 1024, int(1.5 * est)), 64 * 1024 * 1024)

    kernel = functools.partial(_vq_kernel, tm=tm, c_padded=Cp,
                               valid_rows=M, padded_rows=Mp)

    q_flat, ind_packed, sse_partials = pl.pallas_call(
        kernel,
        out_shape=(
            jax.ShapeDtypeStruct((Mp, D), x.dtype),             # quantize
            jax.ShapeDtypeStruct((Mp // 128, 128), jnp.int32),  # embed_ind (lane-dense)
            jax.ShapeDtypeStruct((n_tiles, 1), jnp.float32),    # per-tile SSE partials
        ),
        grid_spec=pltpu.PrefetchScalarGridSpec(
            num_scalar_prefetch=0,
            grid=(n_tiles,),
            in_specs=[
                pl.BlockSpec((tm, D), lambda i: (i, 0)),    # x tile
                pl.BlockSpec((D, Cp), lambda i: (0, 0)),    # codebook^T, resident
                pl.BlockSpec((1, Cp), lambda i: (0, 0)),    # ||c||^2, resident
            ],
            out_specs=[
                pl.BlockSpec((tm, D), lambda i: (i, 0)),
                pl.BlockSpec((tm // 128, 128), lambda i: (i, 0)),
                pl.BlockSpec((1, 1), lambda i: (i, 0), memory_space=pltpu.SMEM),
            ],
        ),
        compiler_params=pltpu.CompilerParams(
            # every grid step is independent -> shardable across TensorCores (v7x)
            dimension_semantics=("parallel",),
            vmem_limit_bytes=vmem_limit,
        ),
    )(x_flat, cb_t, c_sq)

    quantize = q_flat[:M].reshape(B, N, D)
    embed_ind = ind_packed.reshape(Mp)[:M].reshape(B, N)
    loss = jnp.sum(sse_partials) * (float(commitment_weight) / float(M * D))
    return quantize, embed_ind, loss


def _reference(x, codebook, commitment_weight=1.0):
    # pure-JAX reference for sanity checking (true squared distances)
    d = (jnp.sum(x * x, -1, keepdims=True)
         + jnp.sum(codebook * codebook, -1)[None, None, :]
         - 2.0 * jnp.einsum("bnd,cd->bnc", x, codebook))
    ind = jnp.argmin(d, axis=-1)
    q = codebook[ind]
    loss = jnp.mean((q - x) ** 2) * commitment_weight
    return q, ind, loss


if __name__ == "__main__":
    codebook_dim = 32      # D
    codebook_size = 64     # C
    B, N = 2, 8

    key = jax.random.PRNGKey(0)
    kx, kc = jax.random.split(key)
    x = jax.random.normal(kx, (B, N, codebook_dim), dtype=jnp.float32)
    # nn.Embedding default init ~ N(0, 1), deterministic here
    codebook = jax.random.normal(kc, (codebook_size, codebook_dim), dtype=jnp.float32)

    quantize, embed_ind, loss = simple_vector_quantize(
        x, codebook, commitment_weight=1.0)
    jax.block_until_ready((quantize, embed_ind, loss))

    q_ref, ind_ref, loss_ref = _reference(x, codebook)
    assert jnp.allclose(quantize, q_ref, atol=1e-5), "quantize mismatch"
    assert jnp.array_equal(embed_ind, ind_ref), "indices mismatch"
    # loss is computed from the row-min distance (||c||^2 - 2 x.c + ||x||^2), so allow a
    # slightly looser tolerance than an exact (q - x)^2 reduction would need.
    assert jnp.allclose(loss, loss_ref, rtol=1e-4, atol=1e-5), "loss mismatch"

    print("KERNEL_OK")
</pallas_src>

<mosaic_0001>
module attributes {stable_mosaic.version = 11 : i64} {
  func.func @_vq_kernel(%arg0: i32, %arg1: memref<1024x32xf32, #tpu.memory_space<vmem>>, %arg2: memref<32x128xf32, #tpu.memory_space<vmem>>, %arg3: memref<1x128xf32, #tpu.memory_space<vmem>>, %arg4: memref<1024x32xf32, #tpu.memory_space<vmem>>, %arg5: memref<8x128xi32, #tpu.memory_space<vmem>>, %arg6: memref<1x1xf32, #tpu.memory_space<smem>>) attributes {dimension_semantics = [#tpu.dimension_semantics<parallel>], iteration_bounds = array<i64: 1>, scalar_prefetch = 0 : i64, scratch_operands = 0 : i64, tpu.core_type = #tpu.core_type<tc>, window_params = [{transform_indices = @transform_0, window_bounds = array<i64: 1024, 32>}, {pipeline_mode = #tpu.pipeline_mode<synchronous>, transform_indices = @transform_1, window_bounds = array<i64: 32, 128>}, {pipeline_mode = #tpu.pipeline_mode<synchronous>, transform_indices = @transform_2, window_bounds = array<i64: 1, 128>}, {transform_indices = @transform_3, window_bounds = array<i64: 1024, 32>}, {transform_indices = @transform_4, window_bounds = array<i64: 8, 128>}, {transform_indices = @transform_5, window_bounds = array<i64: 1, 1>}]} {
    %c0 = arith.constant 0 : index
    %c0_0 = arith.constant 0 : index
    %0 = vector.load %arg1[%c0, %c0_0] : memref<1024x32xf32, #tpu.memory_space<vmem>>, vector<1024x32xf32>
    %c0_1 = arith.constant 0 : index
    %c0_2 = arith.constant 0 : index
    %1 = vector.load %arg2[%c0_1, %c0_2] : memref<32x128xf32, #tpu.memory_space<vmem>>, vector<32x128xf32>
    %c0_3 = arith.constant 0 : index
    %c0_4 = arith.constant 0 : index
    %2 = vector.load %arg3[%c0_3, %c0_4] : memref<1x128xf32, #tpu.memory_space<vmem>>, vector<1x128xf32>
    %cst = arith.constant dense<0.000000e+00> : vector<1024x128xf32>
    %3 = tpu.matmul %0, %1, %cst {dimension_numbers = #tpu.dot_dimension_numbers<[1], [0], [0], [1], [0, 0, 1, 1], [], []>} : vector<1024x32xf32>, vector<32x128xf32>, vector<1024x128xf32> -> vector<1024x128xf32>
    %cst_5 = arith.constant 2.000000e+00 : f32
    %4 = vector.broadcast %cst_5 : f32 to vector<1024x128xf32>
    %5 = arith.mulf %4, %3 : vector<1024x128xf32>
    %6 = vector.broadcast %2 : vector<1x128xf32> to vector<1024x128xf32>
    %7 = arith.subf %6, %5 : vector<1024x128xf32>
    %cst_6 = arith.constant dense<0x7F800000> : vector<1024xf32>
    %8 = vector.multi_reduction <minimumf>, %7, %cst_6 [1] : vector<1024x128xf32> to vector<1024xf32>
    %9 = vector.shape_cast %8 : vector<1024xf32> to vector<1024x1xf32>
    %10 = tpu.iota {dimensions = array<i32: 1>} : vector<1024x128xi32>
    %11 = vector.broadcast %9 : vector<1024x1xf32> to vector<1024x128xf32>
    %12 = arith.cmpf oeq, %7, %11 : vector<1024x128xf32>
    %c128_i32 = arith.constant 128 : i32
    %13 = vector.broadcast %c128_i32 : i32 to vector<1024x128xi32>
    %14 = arith.select %12, %10, %13 : vector<1024x128xi1>, vector<1024x128xi32>
    %cst_7 = arith.constant dense<2147483647> : vector<1024xi32>
    %15 = vector.multi_reduction <minsi>, %14, %cst_7 [1] : vector<1024x128xi32> to vector<1024xi32>
    %16 = vector.shape_cast %15 : vector<1024xi32> to vector<1024x1xi32>
    %17 = vector.broadcast %16 : vector<1024x1xi32> to vector<1024x128xi32>
    %18 = arith.cmpi eq, %10, %17 : vector<1024x128xi32>
    %19 = arith.extui %18 : vector<1024x128xi1> to vector<1024x128xi32>
    %20 = arith.sitofp %19 : vector<1024x128xi32> to vector<1024x128xf32>
    %cst_8 = arith.constant dense<0.000000e+00> : vector<1024x32xf32>
    %21 = tpu.matmul %20, %1, %cst_8 {dimension_numbers = #tpu.dot_dimension_numbers<[1], [1], [0], [0], [0, 0, 1, 0], [], []>} : vector<1024x128xf32>, vector<32x128xf32>, vector<1024x32xf32> -> vector<1024x32xf32>
    %c0_9 = arith.constant 0 : index
    %c0_10 = arith.constant 0 : index
    %22 = vector.load %arg4[%c0_9, %c0_10] : memref<1024x32xf32, #tpu.memory_space<vmem>>, vector<1024x32xf32>
    tpu.vector_store %arg4[%c0_9, %c0_10], %21 {strides = array<i32>} : memref<1024x32xf32, #tpu.memory_space<vmem>>, vector<1024x32xf32>,
    %23 = vector.shape_cast %15 : vector<1024xi32> to vector<8x128xi32>
    %c0_11 = arith.constant 0 : index
    %c0_12 = arith.constant 0 : index
    %24 = vector.load %arg5[%c0_11, %c0_12] : memref<8x128xi32, #tpu.memory_space<vmem>>, vector<8x128xi32>
    tpu.vector_store %arg5[%c0_11, %c0_12], %23 {strides = array<i32>} : memref<8x128xi32, #tpu.memory_space<vmem>>, vector<8x128xi32>,
    %25 = arith.mulf %0, %0 : vector<1024x32xf32>
    %cst_13 = arith.constant dense<0.000000e+00> : vector<1024xf32>
    %26 = vector.multi_reduction <add>, %25, %cst_13 [1] : vector<1024x32xf32> to vector<1024xf32>
    %27 = vector.shape_cast %26 : vector<1024xf32> to vector<1024x1xf32>
    %28 = arith.addf %9, %27 : vector<1024x1xf32>
    %c1024_i32 = arith.constant 1024 : i32
    %29 = arith.muli %arg0, %c1024_i32 : i32
    %30 = tpu.iota {dimensions = array<i32: 0>} : vector<1024x1xi32>
    %31 = vector.broadcast %29 : i32 to vector<1024x1xi32>
    %32 = arith.addi %31, %30 : vector<1024x1xi32>
    %c16_i32 = arith.constant 16 : i32
    %33 = vector.broadcast %c16_i32 : i32 to vector<1024x1xi32>
    %34 = arith.cmpi slt, %32, %33 : vector<1024x1xi32>
    %cst_14 = arith.constant 0.000000e+00 : f32
    %35 = vector.broadcast %cst_14 : f32 to vector<1024x1xf32>
    %36 = arith.select %34, %28, %35 : vector<1024x1xi1>, vector<1024x1xf32>
    %37 = vector.shape_cast %36 : vector<1024x1xf32> to vector<1x1024x1xf32>
    %cst_15 = arith.constant dense<0.000000e+00> : vector<1xf32>
    %38 = vector.multi_reduction <add>, %37, %cst_15 [1, 2] : vector<1x1024x1xf32> to vector<1xf32>
    %39 = vector.shape_cast %38 : vector<1xf32> to vector<1x1x1xf32>
    %40 = vector.extract %39[0, 0, 0] : f32 from vector<1x1x1xf32>
    %c0_16 = arith.constant 0 : index
    %c0_17 = arith.constant 0 : index
    %41 = memref.load %arg6[%c0_16, %c0_17] : memref<1x1xf32, #tpu.memory_space<smem>>
    memref.store %40, %arg6[%c0_16, %c0_17] : memref<1x1xf32, #tpu.memory_space<smem>>
    return
  }
  func.func @transform_0(%arg0: i32) -> (i32, i32) {
    %c0_i32 = arith.constant 0 : i32
    %c0_i32_0 = arith.constant 0 : i32
    return %arg0, %c0_i32 : i32, i32
  }
  func.func @transform_1(%arg0: i32) -> (i32, i32) {
    %c0_i32 = arith.constant 0 : i32
    %c0_i32_0 = arith.constant 0 : i32
    %c0_i32_1 = arith.constant 0 : i32
    return %c0_i32, %c0_i32_0 : i32, i32
  }
  func.func @transform_2(%arg0: i32) -> (i32, i32) {
    %c0_i32 = arith.constant 0 : i32
    %c0_i32_0 = arith.constant 0 : i32
    %c0_i32_1 = arith.constant 0 : i32
    return %c0_i32, %c0_i32_0 : i32, i32
  }
  func.func @transform_3(%arg0: i32) -> (i32, i32) {
    %c0_i32 = arith.constant 0 : i32
    %c0_i32_0 = arith.constant 0 : i32
    return %arg0, %c0_i32 : i32, i32
  }
  func.func @transform_4(%arg0: i32) -> (i32, i32) {
    %c0_i32 = arith.constant 0 : i32
    %c0_i32_0 = arith.constant 0 : i32
    return %arg0, %c0_i32 : i32, i32
  }
  func.func @transform_5(%arg0: i32) -> (i32, i32) {
    %c0_i32 = arith.constant 0 : i32
    %c0_i32_0 = arith.constant 0 : i32
    return %arg0, %c0_i32 : i32, i32
  }
}

</mosaic_0001>

<llo_original>
// kernel: tpu_custom_call.1
$region0: #{tpu_custom_call.1}
  #allocation0 [shape = 'u32[]', space=smem, size = 0x4, offset = 0x4, fixed_abs, tag = 'smem constant byte address 0x4 - core index']
  #allocation1 [shape = 'u32[144,128]{1,0:T(1,128)}', space=vmem, size = 0x12000, scoped, tag = 'internal scratch']
  %s0 = inlined_call_operand.vmem [shape: f32[1024,32], index: 0, kind: input, shape index: {}]
  %s1 = inlined_call_operand.vmem [shape: f32[32,128], index: 1, kind: input, shape index: {}]
  %s2 = inlined_call_operand.vmem [shape: f32[1,128], index: 2, kind: input, shape index: {}]
  %s3 = inlined_call_operand.vmem [shape: f32[1024,32], index: 3, kind: output, shape index: {0}]
  %s4 = inlined_call_operand.hbm [shape: s32[8,128], index: 4, kind: output, shape index: {1}]
  %s5 = inlined_call_operand.hbm [shape: f32[1,1], index: 5, kind: output, shape index: {2}]
  %6 = xla_tuple %s3, %s4, %s5
  %s7 = sld [smem:[#allocation0]]
  $region38: #{tpu_custom_call.1} parent=0
    _
  %s9 = ssub.s32 1, %s7
  %s10 = scalar_select 0, %s9, %s7
  $region1: #{tpu_custom_call.1} parent=0
    #allocation2 [shape = 'u8[4096]{0}', space=vmem, size = 0x1000, scoped, tag = 'output window, operand 1, single buffered']
    #allocation3 [shape = 's32[1]{0}', space=sflag, size = 0x4, scoped, tag = 'scoped memory for tpu_custom_call.1']
    #allocation4 [shape = 's32[1]{0}', space=sflag, size = 0x4, scoped, tag = 'scoped memory for tpu_custom_call.1']
    #allocation5 [shape = 'u8[512]{0}', space=smem, size = 0x200, scoped, tag = 'output window, operand 2, single buffered']
    %11 = vsyncpa [#allocation3], 0
    %12 = vsyncpa [#allocation4], 0
    // Predicated region
    $region2: #{tpu_custom_call.1} parent=1 // pred_check
      _
    $region3: #{tpu_custom_call.1} parent=1 // pred_check_branch
      %14 = sbr.rel (0) target = $region5
    $region4: #{tpu_custom_call.1} parent=1 // pred_region
      _
    $region5: #{tpu_custom_call.1} parent=1 // pred_fallthru
      _
    // Predicated region
    $region6: #{tpu_custom_call.1} parent=1 // pred_check
      _
    $region7: #{tpu_custom_call.1} parent=1 // pred_check_branch
      %16 = sbr.rel (0) target = $region9
    $region8: #{tpu_custom_call.1} parent=1 // pred_region
      _
    $region9: #{tpu_custom_call.1} parent=1 // pred_fallthru
      _
    // Predicated region
    $region10: #{tpu_custom_call.1} parent=1 // pred_check
      _
    $region11: #{tpu_custom_call.1} parent=1 // pred_check_branch
      %18 = sbr.rel (0) target = $region13
    $region12: #{tpu_custom_call.1} parent=1 // pred_region
      _
    $region13: #{tpu_custom_call.1} parent=1 // pred_fallthru
      _
    %v19 = vld [vmem:[%s0] sm:$0xff]
    %v20 = vld [vmem:[%s0 + $0x8] sm:$0xff]
    %v21 = vld [vmem:[%s0 + $0x10] sm:$0xff]
    %v22 = vld [vmem:[%s0 + $0x18] sm:$0xff]
    %v23 = vld [vmem:[%s0 + $0x20] sm:$0xff]
    %v24 = vld [vmem:[%s0 + $0x28] sm:$0xff]
    %v25 = vld [vmem:[%s0 + $0x30] sm:$0xff]
    %v26 = vld [vmem:[%s0 + $0x38] sm:$0xff]
    %v27 = vld [vmem:[%s0 + $0x40] sm:$0xff]
    %v28 = vld [vmem:[%s0 + $0x48] sm:$0xff]
    %v29 = vld [vmem:[%s0 + $0x50] sm:$0xff]
    %v30 = vld [vmem:[%s0 + $0x58] sm:$0xff]
    %v31 = vld [vmem:[%s0 + $0x60] sm:$0xff]
    %v32 = vld [vmem:[%s0 + $0x68] sm:$0xff]
    %v33 = vld [vmem:[%s0 + $0x70] sm:$0xff]
    %v34 = vld [vmem:[%s0 + $0x78] sm:$0xff]
    %v35 = vld [vmem:[%s0 + $0x80] sm:$0xff]
    %v36 = vld [vmem:[%s0 + $0x88] sm:$0xff]
    %v37 = vld [vmem:[%s0 + $0x90] sm:$0xff]
    %v38 = vld [vmem:[%s0 + $0x98] sm:$0xff]
    %v39 = vld [vmem:[%s0 + $0xa0] sm:$0xff]
    %v40 = vld [vmem:[%s0 + $0xa8] sm:$0xff]
    %v41 = vld [vmem:[%s0 + $0xb0] sm:$0xff]
    %v42 = vld [vmem:[%s0 + $0xb8] sm:$0xff]
    %v43 = vld [vmem:[%s0 + $0xc0] sm:$0xff]
    %v44 = vld [vmem:[%s0 + $0xc8] sm:$0xff]
    %v45 = vld [vmem:[%s0 + $0xd0] sm:$0xff]
    %v46 = vld [vmem:[%s0 + $0xd8] sm:$0xff]
    %v47 = vld [vmem:[%s0 + $0xe0] sm:$0xff]
    %v48 = vld [vmem:[%s0 + $0xe8] sm:$0xff]
    %v49 = vld [vmem:[%s0 + $0xf0] sm:$0xff]
    %v50 = vld [vmem:[%s0 + $0xf8] sm:$0xff]
    %v51 = vld [vmem:[%s0 + $0x100] sm:$0xff]
    %v52 = vld [vmem:[%s0 + $0x108] sm:$0xff]
    %v53 = vld [vmem:[%s0 + $0x110] sm:$0xff]
    %v54 = vld [vmem:[%s0 + $0x118] sm:$0xff]
    %v55 = vld [vmem:[%s0 + $0x120] sm:$0xff]
    %v56 = vld [vmem:[%s0 + $0x128] sm:$0xff]
    %v57 = vld [vmem:[%s0 + $0x130] sm:$0xff]
    %v58 = vld [vmem:[%s0 + $0x138] sm:$0xff]
    %v59 = vld [vmem:[%s0 + $0x140] sm:$0xff]
    %v60 = vld [vmem:[%s0 + $0x148] sm:$0xff]
    %v61 = vld [vmem:[%s0 + $0x150] sm:$0xff]
    %v62 = vld [vmem:[%s0 + $0x158] sm:$0xff]
    %v63 = vld [vmem:[%s0 + $0x160] sm:$0xff]
    %v64 = vld [vmem:[%s0 + $0x168] sm:$0xff]
    %v65 = vld [vmem:[%s0 + $0x170] sm:$0xff]
    %v66 = vld [vmem:[%s0 + $0x178] sm:$0xff]
    %v67 = vld [vmem:[%s0 + $0x180] sm:$0xff]
    %v68 = vld [vmem:[%s0 + $0x188] sm:$0xff]
    %v69 = vld [vmem:[%s0 + $0x190] sm:$0xff]
    %v70 = vld [vmem:[%s0 + $0x198] sm:$0xff]
    %v71 = vld [vmem:[%s0 + $0x1a0] sm:$0xff]
    %v72 = vld [vmem:[%s0 + $0x1a8] sm:$0xff]
    %v73 = vld [vmem:[%s0 + $0x1b0] sm:$0xff]
    %v74 = vld [vmem:[%s0 + $0x1b8] sm:$0xff]
    %v75 = vld [vmem:[%s0 + $0x1c0] sm:$0xff]
    %v76 = vld [vmem:[%s0 + $0x1c8] sm:$0xff]
    %v77 = vld [vmem:[%s0 + $0x1d0] sm:$0xff]
    %v78 = vld [vmem:[%s0 + $0x1d8] sm:$0xff]
    %v79 = vld [vmem:[%s0 + $0x1e0] sm:$0xff]
    %v80 = vld [vmem:[%s0 + $0x1e8] sm:$0xff]
    %v81 = vld [vmem:[%s0 + $0x1f0] sm:$0xff]
    %v82 = vld [vmem:[%s0 + $0x1f8] sm:$0xff]
    %v83 = vld [vmem:[%s0 + $0x200] sm:$0xff]
    %v84 = vld [vmem:[%s0 + $0x208] sm:$0xff]
    %v85 = vld [vmem:[%s0 + $0x210] sm:$0xff]
    %v86 = vld [vmem:[%s0 + $0x218] sm:$0xff]
    %v87 = vld [vmem:[%s0 + $0x220] sm:$0xff]
    %v88 = vld [vmem:[%s0 + $0x228] sm:$0xff]
    %v89 = vld [vmem:[%s0 + $0x230] sm:$0xff]
    %v90 = vld [vmem:[%s0 + $0x238] sm:$0xff]
    %v91 = vld [vmem:[%s0 + $0x240] sm:$0xff]
    %v92 = vld [vmem:[%s0 + $0x248] sm:$0xff]
    %v93 = vld [vmem:[%s0 + $0x250] sm:$0xff]
    %v94 = vld [vmem:[%s0 + $0x258] sm:$0xff]
    %v95 = vld [vmem:[%s0 + $0x260] sm:$0xff]
    %v96 = vld [vmem:[%s0 + $0x268] sm:$0xff]
    %v97 = vld [vmem:[%s0 + $0x270] sm:$0xff]
    %v98 = vld [vmem:[%s0 + $0x278] sm:$0xff]
    %v99 = vld [vmem:[%s0 + $0x280] sm:$0xff]
    %v100 = vld [vmem:[%s0 + $0x288] sm:$0xff]
    %v101 = vld [vmem:[%s0 + $0x290] sm:$0xff]
    %v102 = vld [vmem:[%s0 + $0x298] sm:$0xff]
    %v103 = vld [vmem:[%s0 + $0x2a0] sm:$0xff]
    %v104 = vld [vmem:[%s0 + $0x2a8] sm:$0xff]
    %v105 = vld [vmem:[%s0 + $0x2b0] sm:$0xff]
    %v106 = vld [vmem:[%s0 + $0x2b8] sm:$0xff]
    %v107 = vld [vmem:[%s0 + $0x2c0] sm:$0xff]
    %v108 = vld [vmem:[%s0 + $0x2c8] sm:$0xff]
    %v109 = vld [vmem:[%s0 + $0x2d0] sm:$0xff]
    %v110 = vld [vmem:[%s0 + $0x2d8] sm:$0xff]
    %v111 = vld [vmem:[%s0 + $0x2e0] sm:$0xff]
    %v112 = vld [vmem:[%s0 + $0x2e8] sm:$0xff]
    %v113 = vld [vmem:[%s0 + $0x2f0] sm:$0xff]
    %v114 = vld [vmem:[%s0 + $0x2f8] sm:$0xff]
    %v115 = vld [vmem:[%s0 + $0x300] sm:$0xff]
    %v116 = vld [vmem:[%s0 + $0x308] sm:$0xff]
    %v117 = vld [vmem:[%s0 + $0x310] sm:$0xff]
    %v118 = vld [vmem:[%s0 + $0x318] sm:$0xff]
    %v119 = vld [vmem:[%s0 + $0x320] sm:$0xff]
    %v120 = vld [vmem:[%s0 + $0x328] sm:$0xff]
    %v121 = vld [vmem:[%s0 + $0x330] sm:$0xff]
    %v122 = vld [vmem:[%s0 + $0x338] sm:$0xff]
    %v123 = vld [vmem:[%s0 + $0x340] sm:$0xff]
    %v124 = vld [vmem:[%s0 + $0x348] sm:$0xff]
    %v125 = vld [vmem:[%s0 + $0x350] sm:$0xff]
    %v126 = vld [vmem:[%s0 + $0x358] sm:$0xff]
    %v127 = vld [vmem:[%s0 + $0x360] sm:$0xff]
    %v128 = vld [vmem:[%s0 + $0x368] sm:$0xff]
    %v129 = vld [vmem:[%s0 + $0x370] sm:$0xff]
    %v130 = vld [vmem:[%s0 + $0x378] sm:$0xff]
    %v131 = vld [vmem:[%s0 + $0x380] sm:$0xff]
    %v132 = vld [vmem:[%s0 + $0x388] sm:$0xff]
    %v133 = vld [vmem:[%s0 + $0x390] sm:$0xff]
    %v134 = vld [vmem:[%s0 + $0x398] sm:$0xff]
    %v135 = vld [vmem:[%s0 + $0x3a0] sm:$0xff]
    %v136 = vld [vmem:[%s0 + $0x3a8] sm:$0xff]
    %v137 = vld [vmem:[%s0 + $0x3b0] sm:$0xff]
    %v138 = vld [vmem:[%s0 + $0x3b8] sm:$0xff]
    %v139 = vld [vmem:[%s0 + $0x3c0] sm:$0xff]
    %v140 = vld [vmem:[%s0 + $0x3c8] sm:$0xff]
    %v141 = vld [vmem:[%s0 + $0x3d0] sm:$0xff]
    %v142 = vld [vmem:[%s0 + $0x3d8] sm:$0xff]
    %v143 = vld [vmem:[%s0 + $0x3e0] sm:$0xff]
    %v144 = vld [vmem:[%s0 + $0x3e8] sm:$0xff]
    %v145 = vld [vmem:[%s0 + $0x3f0] sm:$0xff]
    %v146 = vld [vmem:[%s0 + $0x3f8] sm:$0xff]
    %v147 = vld [vmem:[%s1] sm:$0xff]
    %v148 = vld [vmem:[%s1 + $0x8] sm:$0xff]
    %v149 = vld [vmem:[%s1 + $0x10] sm:$0xff]
    %v150 = vld [vmem:[%s1 + $0x18] sm:$0xff]
    %v151 = vld [vmem:[%s2] sm:$0x1]
    %vm152 = vcmask 261120
    %v154 = vsel %vm152, %v19, 0
    %v157 = vsel %vm152, %v20, 0
    %v160 = vsel %vm152, %v21, 0
    %v163 = vsel %vm152, %v22, 0
    %v166 = vsel %vm152, %v23, 0
    %v169 = vsel %vm152, %v24, 0
    %v172 = vsel %vm152, %v25, 0
    %v175 = vsel %vm152, %v26, 0
    %v178 = vsel %vm152, %v27, 0
    %v181 = vsel %vm152, %v28, 0
    %v184 = vsel %vm152, %v29, 0
    %v187 = vsel %vm152, %v30, 0
    %v190 = vsel %vm152, %v31, 0
    %v193 = vsel %vm152, %v32, 0
    %v196 = vsel %vm152, %v33, 0
    %v199 = vsel %vm152, %v34, 0
    %v202 = vsel %vm152, %v35, 0
    %v205 = vsel %vm152, %v36, 0
    %v208 = vsel %vm152, %v37, 0
    %v211 = vsel %vm152, %v38, 0
    %v214 = vsel %vm152, %v39, 0
    %v217 = vsel %vm152, %v40, 0
    %v220 = vsel %vm152, %v41, 0
    %v223 = vsel %vm152, %v42, 0
    %v226 = vsel %vm152, %v43, 0
    %v229 = vsel %vm152, %v44, 0
    %v232 = vsel %vm152, %v45, 0
    %v235 = vsel %vm152, %v46, 0
    %v238 = vsel %vm152, %v47, 0
    %v241 = vsel %vm152, %v48, 0
    %v244 = vsel %vm152, %v49, 0
    %v247 = vsel %vm152, %v50, 0
    %v250 = vsel %vm152, %v51, 0
    %v253 = vsel %vm152, %v52, 0
    %v256 = vsel %vm152, %v53, 0
    %v259 = vsel %vm152, %v54, 0
    %v262 = vsel %vm152, %v55, 0
    %v265 = vsel %vm152, %v56, 0
    %v268 = vsel %vm152, %v57, 0
    %v271 = vsel %vm152, %v58, 0
    %v274 = vsel %vm152, %v59, 0
    %v277 = vsel %vm152, %v60, 0
    %v280 = vsel %vm152, %v61, 0
    %v283 = vsel %vm152, %v62, 0
    %v286 = vsel %vm152, %v63, 0
    %v289 = vsel %vm152, %v64, 0
    %v292 = vsel %vm152, %v65, 0
    %v295 = vsel %vm152, %v66, 0
    %v298 = vsel %vm152, %v67, 0
    %v301 = vsel %vm152, %v68, 0
    %v304 = vsel %vm152, %v69, 0
    %v307 = vsel %vm152, %v70, 0
    %v310 = vsel %vm152, %v71, 0
    %v313 = vsel %vm152, %v72, 0
    %v316 = vsel %vm152, %v73, 0
    %v319 = vsel %vm152, %v74, 0
    %v322 = vsel %vm152, %v75, 0
    %v325 = vsel %vm152, %v76, 0
    %v328 = vsel %vm152, %v77, 0
    %v331 = vsel %vm152, %v78, 0
    %v334 = vsel %vm152, %v79, 0
    %v337 = vsel %vm152, %v80, 0
    %v340 = vsel %vm152, %v81, 0
    %v343 = vsel %vm152, %v82, 0
    %v346 = vsel %vm152, %v83, 0
    %v349 = vsel %vm152, %v84, 0
    %v352 = vsel %vm152, %v85, 0
    %v355 = vsel %vm152, %v86, 0
    %v358 = vsel %vm152, %v87, 0
    %v361 = vsel %vm152, %v88, 0
    %v364 = vsel %vm152, %v89, 0
    %v367 = vsel %vm152, %v90, 0
    %v370 = vsel %vm152, %v91, 0
    %v373 = vsel %vm152, %v92, 0
    %v376 = vsel %vm152, %v93, 0
    %v379 = vsel %vm152, %v94, 0
    %v382 = vsel %vm152, %v95, 0
    %v385 = vsel %vm152, %v96, 0
    %v388 = vsel %vm152, %v97, 0
    %v391 = vsel %vm152, %v98, 0
    %v394 = vsel %vm152, %v99, 0
    %v397 = vsel %vm152, %v100, 0
    %v400 = vsel %vm152, %v101, 0
    %v403 = vsel %vm152, %v102, 0
    %v406 = vsel %vm152, %v103, 0
    %v409 = vsel %vm152, %v104, 0
    %v412 = vsel %vm152, %v105, 0
    %v415 = vsel %vm152, %v106, 0
    %v418 = vsel %vm152, %v107, 0
    %v421 = vsel %vm152, %v108, 0
    %v424 = vsel %vm152, %v109, 0
    %v427 = vsel %vm152, %v110, 0
    %v430 = vsel %vm152, %v111, 0
    %v433 = vsel %vm152, %v112, 0
    %v436 = vsel %vm152, %v113, 0
    %v439 = vsel %vm152, %v114, 0
    %v442 = vsel %vm152, %v115, 0
    %v445 = vsel %vm152, %v116, 0
    %v448 = vsel %vm152, %v117, 0
    %v451 = vsel %vm152, %v118, 0
    %v454 = vsel %vm152, %v119, 0
    %v457 = vsel %vm152, %v120, 0
    %v460 = vsel %vm152, %v121, 0
    %v463 = vsel %vm152, %v122, 0
    %v466 = vsel %vm152, %v123, 0
    %v469 = vsel %vm152, %v124, 0
    %v472 = vsel %vm152, %v125, 0
    %v475 = vsel %vm152, %v126, 0
    %v478 = vsel %vm152, %v127, 0
    %v481 = vsel %vm152, %v128, 0
    %v484 = vsel %vm152, %v129, 0
    %v487 = vsel %vm152, %v130, 0
    %v490 = vsel %vm152, %v131, 0
    %v493 = vsel %vm152, %v132, 0
    %v496 = vsel %vm152, %v133, 0
    %v499 = vsel %vm152, %v134, 0
    %v502 = vsel %vm152, %v135, 0
    %v505 = vsel %vm152, %v136, 0
    %v508 = vsel %vm152, %v137, 0
    %v511 = vsel %vm152, %v138, 0
    %v514 = vsel %vm152, %v139, 0
    %v517 = vsel %vm152, %v140, 0
    %v520 = vsel %vm152, %v141, 0
    %v523 = vsel %vm152, %v142, 0
    %v526 = vsel %vm152, %v143, 0
    %v529 = vsel %vm152, %v144, 0
    %v532 = vsel %vm152, %v145, 0
    %v535 = vsel %vm152, %v146, 0
    %537 = vmatprep.subr.mxu0 0.0
    %538 = vmatpush1.msra.mxu0 %v147
    %539 = vmatprep.subr.mxu0 0.0
    %540 = vmatpush1.msra.mxu0 %v148
    %541 = vmatprep.subr.mxu0 0.0
    %542 = vmatpush1.msra.mxu0 %v149
    %543 = vmatprep.subr.mxu0 0.0
    %544 = vmatpush1.msra.mxu0 %v150
    %545 = vmatprep.subr.mxu0 0.0
    %546 = vmatpush1.msra.mxu0 0.0
    %547 = vmatprep.subr.mxu0 0.0
    %548 = vmatpush1.msra.mxu0 0.0
    %549 = vmatprep.subr.mxu0 0.0
    %550 = vmatpush1.msra.mxu0 0.0
    %551 = vmatprep.subr.mxu0 0.0
    %552 = vmatpush1.msra.mxu0 0.0
    %553 = vmatprep.subr.mxu0 0.0
    %554 = vmatpush1.msra.mxu0 0.0
    %555 = vmatprep.subr.mxu0 0.0
    %556 = vmatpush1.msra.mxu0 0.0
    %557 = vmatprep.subr.mxu0 0.0
    %558 = vmatpush1.msra.mxu0 0.0
    %559 = vmatprep.subr.mxu0 0.0
    %560 = vmatpush1.msra.mxu0 0.0
    %561 = vmatprep.subr.mxu0 0.0
    %562 = vmatpush1.msra.mxu0 0.0
    %563 = vmatprep.subr.mxu0 0.0
    %564 = vmatpush1.msra.mxu0 0.0
    %565 = vmatprep.subr.mxu0 0.0
    %566 = vmatpush1.msra.mxu0 0.0
    %567 = vmatprep.subr.mxu0 0.0
    %568 = vmatpush1.msra.mxu0 0.0
    %569 = vmatprep.subr.mxu0 0.0
    %570 = vmatpush1.msra.mxu0 0.0
    %571 = vmatprep.subr.mxu0 0.0
    %572 = vmatpush1.msra.mxu0 0.0
    %573 = vmatprep.subr.mxu0 0.0
    %574 = vmatpush1.msra.mxu0 0.0
    %575 = vmatprep.subr.mxu0 0.0
    %576 = vmatpush1.msra.mxu0 0.0
    %577 = vmatprep.subr.mxu0 0.0
    %578 = vmatpush1.msra.mxu0 0.0
    %579 = vmatprep.subr.mxu0 0.0
    %580 = vmatpush1.msra.mxu0 0.0
    %581 = vmatprep.subr.mxu0 0.0
    %582 = vmatpush1.msra.mxu0 0.0
    %583 = vmatprep.subr.mxu0 0.0
    %584 = vmatpush1.msra.mxu0 0.0
    %585 = vmatprep.subr.mxu0 0.0
    %586 = vmatpush1.msra.mxu0 0.0
    %587 = vmatprep.subr.mxu0 0.0
    %588 = vmatpush1.msra.mxu0 0.0
    %589 = vmatprep.subr.mxu0 0.0
    %590 = vmatpush1.msra.mxu0 0.0
    %591 = vmatprep.subr.mxu0 0.0
    %592 = vmatpush1.msra.mxu0 0.0
    %593 = vmatprep.subr.mxu0 0.0
    %594 = vmatpush1.msra.mxu0 0.0
    %595 = vmatprep.subr.mxu0 0.0
    %596 = vmatpush1.msra.mxu0 0.0
    %597 = vmatprep.subr.mxu0 0.0
    %598 = vmatpush1.msra.mxu0 0.0
    %599 = vmatprep.subr.mxu0 0.0
    %600 = vmatpush1.msra.mxu0 0.0
    %601 = vmatprep.mubr.f32.mxu0 0.0
    %602 = vmatmul.mubr.f32.gmra.mrb[0].mxu0 %v154
    %v603 = vpop.f32.mrb[0].mxu0
    %v604 = vadd.f32 0.0, %v603
    %v605 = vpop.f32.mrb[0].mxu0
    %606 = vmatprep.mubr.f32.mxu0 0.0
    %607 = vmatmul.mubr.f32.gmra.mrb[0].mxu0 %v157
    %v608 = vpop.f32.mrb[0].mxu0
    %v609 = vadd.f32 0.0, %v608
    %v610 = vpop.f32.mrb[0].mxu0
    %611 = vmatprep.mubr.f32.mxu0 0.0
    %612 = vmatmul.mubr.f32.gmra.mrb[0].mxu0 %v160
    %v613 = vpop.f32.mrb[0].mxu0
    %v614 = vadd.f32 0.0, %v613
    %v615 = vpop.f32.mrb[0].mxu0
    %616 = vmatprep.mubr.f32.mxu0 0.0
    %617 = vmatmul.mubr.f32.gmra.mrb[0].mxu0 %v163
    %v618 = vpop.f32.mrb[0].mxu0
    %v619 = vadd.f32 0.0, %v618
    %v620 = vpop.f32.mrb[0].mxu0
    %621 = vmatprep.mubr.f32.mxu0 0.0
    %622 = vmatmul.mubr.f32.gmra.mrb[0].mxu0 %v166
    %v623 = vpop.f32.mrb[0].mxu0
    %v624 = vadd.f32 0.0, %v623
    %v625 = vpop.f32.mrb[0].mxu0
    %626 = vmatprep.mubr.f32.mxu0 0.0
    %627 = vmatmul.mubr.f32.gmra.mrb[0].mxu0 %v169
    %v628 = vpop.f32.mrb[0].mxu0
    %v629 = vadd.f32 0.0, %v628
    %v630 = vpop.f32.mrb[0].mxu0
    %631 = vmatprep.mubr.f32.mxu0 0.0
    %632 = vmatmul.mubr.f32.gmra.mrb[0].mxu0 %v172
    %v633 = vpop.f32.mrb[0].mxu0
    %v634 = vadd.f32 0.0, %v633
    %v635 = vpop.f32.mrb[0].mxu0
    %636 = vmatprep.mubr.f32.mxu0 0.0
    %637 = vmatmul.mubr.f32.gmra.mrb[0].mxu0 %v175
    %v638 = vpop.f32.mrb[0].mxu0
    %v639 = vadd.f32 0.0, %v638
    %v640 = vpop.f32.mrb[0].mxu0
    %641 = vmatprep.mubr.f32.mxu0 0.0
    %642 = vmatmul.mubr.f32.gmra.mrb[0].mxu0 %v178
    %v643 = vpop.f32.mrb[0].mxu0
    %v644 = vadd.f32 0.0, %v643
    %v645 = vpop.f32.mrb[0].mxu0
    %646 = vmatprep.mubr.f32.mxu0 0.0
    %647 = vmatmul.mubr.f32.gmra.mrb[0].mxu0 %v181
    %v648 = vpop.f32.mrb[0].mxu0
    %v649 = vadd.f32 0.0, %v648
    %v650 = vpop.f32.mrb[0].mxu0
    %651 = vmatprep.mubr.f32.mxu0 0.0
    %652 = vmatmul.mubr.f32.gmra.mrb[0].mxu0 %v184
    %v653 = vpop.f32.mrb[0].mxu0
    %v654 = vadd.f32 0.0, %v653
    %v655 = vpop.f32.mrb[0].mxu0
    %656 = vmatprep.mubr.f32.mxu0 0.0
    %657 = vmatmul.mubr.f32.gmra.mrb[0].mxu0 %v187
    %v658 = vpop.f32.mrb[0].mxu0
    %v659 = vadd.f32 0.0, %v658
    %v660 = vpop.f32.mrb[0].mxu0
    %661 = vmatprep.mubr.f32.mxu0 0.0
    %662 = vmatmul.mubr.f32.gmra.mrb[0].mxu0 %v190
    %v663 = vpop.f32.mrb[0].mxu0
    %v664 = vadd.f32 0.0, %v663
    %v665 = vpop.f32.mrb[0].mxu0
    %666 = vmatprep.mubr.f32.mxu0 0.0
    %667 = vmatmul.mubr.f32.gmra.mrb[0].mxu0 %v193
    %v668 = vpop.f32.mrb[0].mxu0
    %v669 = vadd.f32 0.0, %v668
    %v670 = vpop.f32.mrb[0].mxu0
    %671 = vmatprep.mubr.f32.mxu0 0.0
    %672 = vmatmul.mubr.f32.gmra.mrb[0].mxu0 %v196
    %v673 = vpop.f32.mrb[0].mxu0
    %v674 = vadd.f32 0.0, %v673
    %v675 = vpop.f32.mrb[0].mxu0
    %676 = vmatprep.mubr.f32.mxu0 0.0
    %677 = vmatmul.mubr.f32.gmra.mrb[0].mxu0 %v199
    %v678 = vpop.f32.mrb[0].mxu0
    %v679 = vadd.f32 0.0, %v678
    %v680 = vpop.f32.mrb[0].mxu0
    %681 = vmatprep.mubr.f32.mxu0 0.0
    %682 = vmatmul.mubr.f32.gmra.mrb[0].mxu0 %v202
    %v683 = vpop.f32.mrb[0].mxu0
    %v684 = vadd.f32 0.0, %v683
    %v685 = vpop.f32.mrb[0].mxu0
    %686 = vmatprep.mubr.f32.mxu0 0.0
    %687 = vmatmul.mubr.f32.gmra.mrb[0].mxu0 %v205
    %v688 = vpop.f32.mrb[0].mxu0
    %v689 = vadd.f32 0.0, %v688
    %v690 = vpop.f32.mrb[0].mxu0
    %691 = vmatprep.mubr.f32.mxu0 0.0
    %692 = vmatmul.mubr.f32.gmra.mrb[0].mxu0 %v208
    %v693 = vpop.f32.mrb[0].mxu0
    %v694 = vadd.f32 0.0, %v693
    %v695 = vpop.f32.mrb[0].mxu0
    %696 = vmatprep.mubr.f32.mxu0 0.0
    %697 = vmatmul.mubr.f32.gmra.mrb[0].mxu0 %v211
    %v698 = vpop.f32.mrb[0].mxu0
    %v699 = vadd.f32 0.0, %v698
    %v700 = vpop.f32.mrb[0].mxu0
    %701 = vmatprep.mubr.f32.mxu0 0.0
    %702 = vmatmul.mubr.f32.gmra.mrb[0].mxu0 %v214
    %v703 = vpop.f32.mrb[0].mxu0
    %v704 = vadd.f32 0.0, %v703
    %v705 = vpop.f32.mrb[0].mxu0
    %706 = vmatprep.mubr.f32.mxu0 0.0
    %707 = vmatmul.mubr.f32.gmra.mrb[0].mxu0 %v217
    %v708 = vpop.f32.mrb[0].mxu0
    %v709 = vadd.f32 0.0, %v708
    %v710 = vpop.f32.mrb[0].mxu0
    %711 = vmatprep.mubr.f32.mxu0 0.0
    %712 = vmatmul.mubr.f32.gmra.mrb[0].mxu0 %v220
    %v713 = vpop.f32.mrb[0].mxu0
    %v714 = vadd.f32 0.0, %v713
    %v715 = vpop.f32.mrb[0].mxu0
    %716 = vmatprep.mubr.f32.mxu0 0.0
    %717 = vmatmul.mubr.f32.gmra.mrb[0].mxu0 %v223
    %v718 = vpop.f32.mrb[0].mxu0
    %v719 = vadd.f32 0.0, %v718
    %v720 = vpop.f32.mrb[0].mxu0
    %721 = vmatprep.mubr.f32.mxu0 0.0
    %722 = vmatmul.mubr.f32.gmra.mrb[0].mxu0 %v226
    %v723 = vpop.f32.mrb[0].mxu0
    %v724 = vadd.f32 0.0, %v723
    %v725 = vpop.f32.mrb[0].mxu0
    %726 = vmatprep.mubr.f32.mxu0 0.0
    %727 = vmatmul.mubr.f32.gmra.mrb[0].mxu0 %v229
    %v728 = vpop.f32.mrb[0].mxu0
    %v729 = vadd.f32 0.0, %v728
    %v730 = vpop.f32.mrb[0].mxu0
    %731 = vmatprep.mubr.f32.mxu0 0.0
    %732 = vmatmul.mubr.f32.gmra.mrb[0].mxu0 %v232
    %v733 = vpop.f32.mrb[0].mxu0
    %v734 = vadd.f32 0.0, %v733
    %v735 = vpop.f32.mrb[0].mxu0
    %736 = vmatprep.mubr.f32.mxu0 0.0
    %737 = vmatmul.mubr.f32.gmra.mrb[0].mxu0 %v235
    %v738 = vpop.f32.mrb[0].mxu0
    %v739 = vadd.f32 0.0, %v738
    %v740 = vpop.f32.mrb[0].mxu0
    %741 = vmatprep.mubr.f32.mxu0 0.0
    %742 = vmatmul.mubr.f32.gmra.mrb[0].mxu0 %v238
    %v743 = vpop.f32.mrb[0].mxu0
    %v744 = vadd.f32 0.0, %v743
    %v745 = vpop.f32.mrb[0].mxu0
    %746 = vmatprep.mubr.f32.mxu0 0.0
    %747 = vmatmul.mubr.f32.gmra.mrb[0].mxu0 %v241
    %v748 = vpop.f32.mrb[0].mxu0
    %v749 = vadd.f32 0.0, %v748
    %v750 = vpop.f32.mrb[0].mxu0
    %751 = vmatprep.mubr.f32.mxu0 0.0
    %752 = vmatmul.mubr.f32.gmra.mrb[0].mxu0 %v244
    %v753 = vpop.f32.mrb[0].mxu0
    %v754 = vadd.f32 0.0, %v753
    %v755 = vpop.f32.mrb[0].mxu0
    %756 = vmatprep.mubr.f32.mxu0 0.0
    %757 = vmatmul.mubr.f32.gmra.mrb[0].mxu0 %v247
    %v758 = vpop.f32.mrb[0].mxu0
    %v759 = vadd.f32 0.0, %v758
    %v760 = vpop.f32.mrb[0].mxu0
    %761 = vmatprep.mubr.f32.mxu0 0.0
    %762 = vmatmul.mubr.f32.gmra.mrb[0].mxu0 %v250
    %v763 = vpop.f32.mrb[0].mxu0
    %v764 = vadd.f32 0.0, %v763
    %v765 = vpop.f32.mrb[0].mxu0
    %766 = vmatprep.mubr.f32.mxu0 0.0
    %767 = vmatmul.mubr.f32.gmra.mrb[0].mxu0 %v253
    %v768 = vpop.f32.mrb[0].mxu0
    %v769 = vadd.f32 0.0, %v768
    %v770 = vpop.f32.mrb[0].mxu0
    %771 = vmatprep.mubr.f32.mxu0 0.0
    %772 = vmatmul.mubr.f32.gmra.mrb[0].mxu0 %v256
    %v773 = vpop.f32.mrb[0].mxu0
    %v774 = vadd.f32 0.0, %v773
    %v775 = vpop.f32.mrb[0].mxu0
    %776 = vmatprep.mubr.f32.mxu0 0.0
    %777 = vmatmul.mubr.f32.gmra.mrb[0].mxu0 %v259
    %v778 = vpop.f32.mrb[0].mxu0
    %v779 = vadd.f32 0.0, %v778
    %v780 = vpop.f32.mrb[0].mxu0
    %781 = vmatprep.mubr.f32.mxu0 0.0
    %782 = vmatmul.mubr.f32.gmra.mrb[0].mxu0 %v262
    %v783 = vpop.f32.mrb[0].mxu0
    %v784 = vadd.f32 0.0, %v783
    %v785 = vpop.f32.mrb[0].mxu0
    %786 = vmatprep.mubr.f32.mxu0 0.0
    %787 = vmatmul.mubr.f32.gmra.mrb[0].mxu0 %v265
    %v788 = vpop.f32.mrb[0].mxu0
    %v789 = vadd.f32 0.0, %v788
    %v790 = vpop.f32.mrb[0].mxu0
    %791 = vmatprep.mubr.f32.mxu0 0.0
    %792 = vmatmul.mubr.f32.gmra.mrb[0].mxu0 %v268
    %v793 = vpop.f32.mrb[0].mxu0
    %v794 = vadd.f32 0.0, %v793
    %v795 = vpop.f32.mrb[0].mxu0
    %796 = vmatprep.mubr.f32.mxu0 0.0
    %797 = vmatmul.mubr.f32.gmra.mrb[0].mxu0 %v271
    %v798 = vpop.f32.mrb[0].mxu0
    %v799 = vadd.f32 0.0, %v798
    %v800 = vpop.f32.mrb[0].mxu0
    %801 = vmatprep.mubr.f32.mxu0 0.0
    %802 = vmatmul.mubr.f32.gmra.mrb[0].mxu0 %v274
    %v803 = vpop.f32.mrb[0].mxu0
    %v804 = vadd.f32 0.0, %v803
    %v805 = vpop.f32.mrb[0].mxu0
    %806 = vmatprep.mubr.f32.mxu0 0.0
    %807 = vmatmul.mubr.f32.gmra.mrb[0].mxu0 %v277
    %v808 = vpop.f32.mrb[0].mxu0
    %v809 = vadd.f32 0.0, %v808
    %v810 = vpop.f32.mrb[0].mxu0
    %811 = vmatprep.mubr.f32.mxu0 0.0
    %812 = vmatmul.mubr.f32.gmra.mrb[0].mxu0 %v280
    %v813 = vpop.f32.mrb[0].mxu0
    %v814 = vadd.f32 0.0, %v813
    %v815 = vpop.f32.mrb[0].mxu0
    %816 = vmatprep.mubr.f32.mxu0 0.0
    %817 = vmatmul.mubr.f32.gmra.mrb[0].mxu0 %v283
    %v818 = vpop.f32.mrb[0].mxu0
    %v819 = vadd.f32 0.0, %v818
    %v820 = vpop.f32.mrb[0].mxu0
    %821 = vmatprep.mubr.f32.mxu0 0.0
    %822 = vmatmul.mubr.f32.gmra.mrb[0].mxu0 %v286
    %v823 = vpop.f32.mrb[0].mxu0
    %v824 = vadd.f32 0.0, %v823
    %v825 = vpop.f32.mrb[0].mxu0
    %826 = vmatprep.mubr.f32.mxu0 0.0
    %827 = vmatmul.mubr.f32.gmra.mrb[0].mxu0 %v289
    %v828 = vpop.f32.mrb[0].mxu0
    %v829 = vadd.f32 0.0, %v828
    %v830 = vpop.f32.mrb[0].mxu0
    %831 = vmatprep.mubr.f32.mxu0 0.0
    %832 = vmatmul.mubr.f32.gmra.mrb[0].mxu0 %v292
    %v833 = vpop.f32.mrb[0].mxu0
    %v834 = vadd.f32 0.0, %v833
    %v835 = vpop.f32.mrb[0].mxu0
    %836 = vmatprep.mubr.f32.mxu0 0.0
    %837 = vmatmul.mubr.f32.gmra.mrb[0].mxu0 %v295
    %v838 = vpop.f32.mrb[0].mxu0
    %v839 = vadd.f32 0.0, %v838
    %v840 = vpop.f32.mrb[0].mxu0
    %841 = vmatprep.mubr.f32.mxu0 0.0
    %842 = vmatmul.mubr.f32.gmra.mrb[0].mxu0 %v298
    %v843 = vpop.f32.mrb[0].mxu0
    %v844 = vadd.f32 0.0, %v843
    %v845 = vpop.f32.mrb[0].mxu0
    %846 = vmatprep.mubr.f32.mxu0 0.0
    %847 = vmatmul.mubr.f32.gmra.mrb[0].mxu0 %v301
    %v848 = vpop.f32.mrb[0].mxu0
    %v849 = vadd.f32 0.0, %v848
    %v850 = vpop.f32.mrb[0].mxu0
    %851 = vmatprep.mubr.f32.mxu0 0.0
    %852 = vmatmul.mubr.f32.gmra.mrb[0].mxu0 %v304
    %v853 = vpop.f32.mrb[0].mxu0
    %v854 = vadd.f32 0.0, %v853
    %v855 = vpop.f32.mrb[0].mxu0
    %856 = vmatprep.mubr.f32.mxu0 0.0
    %857 = vmatmul.mubr.f32.gmra.mrb[0].mxu0 %v307
    %v858 = vpop.f32.mrb[0].mxu0
    %v859 = vadd.f32 0.0, %v858
    %v860 = vpop.f32.mrb[0].mxu0
    %861 = vmatprep.mubr.f32.mxu0 0.0
    %862 = vmatmul.mubr.f32.gmra.mrb[0].mxu0 %v310
    %v863 = vpop.f32.mrb[0].mxu0
    %v864 = vadd.f32 0.0, %v863
    %v865 = vpop.f32.mrb[0].mxu0
    %866 = vmatprep.mubr.f32.mxu0 0.0
    %867 = vmatmul.mubr.f32.gmra.mrb[0].mxu0 %v313
    %v868 = vpop.f32.mrb[0].mxu0
    %v869 = vadd.f32 0.0, %v868
    %v870 = vpop.f32.mrb[0].mxu0
    %871 = vmatprep.mubr.f32.mxu0 0.0
    %872 = vmatmul.mubr.f32.gmra.mrb[0].mxu0 %v316
    %v873 = vpop.f32.mrb[0].mxu0
    %v874 = vadd.f32 0.0, %v873
    %v875 = vpop.f32.mrb[0].mxu0
    %876 = vmatprep.mubr.f32.mxu0 0.0
    %877 = vmatmul.mubr.f32.gmra.mrb[0].mxu0 %v319
    %v878 = vpop.f32.mrb[0].mxu0
    %v879 = vadd.f32 0.0, %v878
    %v880 = vpop.f32.mrb[0].mxu0
    %881 = vmatprep.mubr.f32.mxu0 0.0
    %882 = vmatmul.mubr.f32.gmra.mrb[0].mxu0 %v322
    %v883 = vpop.f32.mrb[0].mxu0
    %v884 = vadd.f32 0.0, %v883
    %v885 = vpop.f32.mrb[0].mxu0
    %886 = vmatprep.mubr.f32.mxu0 0.0
    %887 = vmatmul.mubr.f32.gmra.mrb[0].mxu0 %v325
    %v888 = vpop.f32.mrb[0].mxu0
    %v889 = vadd.f32 0.0, %v888
    %v890 = vpop.f32.mrb[0].mxu0
    %891 = vmatprep.mubr.f32.mxu0 0.0
    %892 = vmatmul.mubr.f32.gmra.mrb[0].mxu0 %v328
    %v893 = vpop.f32.mrb[0].mxu0
    %v894 = vadd.f32 0.0, %v893
    %v895 = vpop.f32.mrb[0].mxu0
    %896 = vmatprep.mubr.f32.mxu0 0.0
    %897 = vmatmul.mubr.f32.gmra.mrb[0].mxu0 %v331
    %v898 = vpop.f32.mrb[0].mxu0
    %v899 = vadd.f32 0.0, %v898
    %v900 = vpop.f32.mrb[0].mxu0
    %901 = vmatprep.mubr.f32.mxu0 0.0
    %902 = vmatmul.mubr.f32.gmra.mrb[0].mxu0 %v334
    %v903 = vpop.f32.mrb[0].mxu0
    %v904 = vadd.f32 0.0, %v903
    %v905 = vpop.f32.mrb[0].mxu0
    %906 = vmatprep.mubr.f32.mxu0 0.0
    %907 = vmatmul.mubr.f32.gmra.mrb[0].mxu0 %v337
    %v908 = vpop.f32.mrb[0].mxu0
    %v909 = vadd.f32 0.0, %v908
    %v910 = vpop.f32.mrb[0].mxu0
    %911 = vmatprep.mubr.f32.mxu0 0.0
    %912 = vmatmul.mubr.f32.gmra.mrb[0].mxu0 %v340
    %v913 = vpop.f32.mrb[0].mxu0
    %v914 = vadd.f32 0.0, %v913
    %v915 = vpop.f32.mrb[0].mxu0
    %916 = vmatprep.mubr.f32.mxu0 0.0
    %917 = vmatmul.mubr.f32.gmra.mrb[0].mxu0 %v343
    %v918 = vpop.f32.mrb[0].mxu0
    %v919 = vadd.f32 0.0, %v918
    %v920 = vpop.f32.mrb[0].mxu0
    %921 = vmatprep.mubr.f32.mxu0 0.0
    %922 = vmatmul.mubr.f32.gmra.mrb[0].mxu0 %v346
    %v923 = vpop.f32.mrb[0].mxu0
    %v924 = vadd.f32 0.0, %v923
    %v925 = vpop.f32.mrb[0].mxu0
    %926 = vmatprep.mubr.f32.mxu0 0.0
    %927 = vmatmul.mubr.f32.gmra.mrb[0].mxu0 %v349
    %v928 = vpop.f32.mrb[0].mxu0
    %v929 = vadd.f32 0.0, %v928
    %v930 = vpop.f32.mrb[0].mxu0
    %931 = vmatprep.mubr.f32.mxu0 0.0
    %932 = vmatmul.mubr.f32.gmra.mrb[0].mxu0 %v352
    %v933 = vpop.f32.mrb[0].mxu0
    %v934 = vadd.f32 0.0, %v933
    %v935 = vpop.f32.mrb[0].mxu0
    %936 = vmatprep.mubr.f32.mxu0 0.0
    %937 = vmatmul.mubr.f32.gmra.mrb[0].mxu0 %v355
    %v938 = vpop.f32.mrb[0].mxu0
    %v939 = vadd.f32 0.0, %v938
    %v940 = vpop.f32.mrb[0].mxu0
    %941 = vmatprep.mubr.f32.mxu0 0.0
    %942 = vmatmul.mubr.f32.gmra.mrb[0].mxu0 %v358
    %v943 = vpop.f32.mrb[0].mxu0
    %v944 = vadd.f32 0.0, %v943
    %v945 = vpop.f32.mrb[0].mxu0
    %946 = vmatprep.mubr.f32.mxu0 0.0
    %947 = vmatmul.mubr.f32.gmra.mrb[0].mxu0 %v361
    %v948 = vpop.f32.mrb[0].mxu0
    %v949 = vadd.f32 0.0, %v948
    %v950 = vpop.f32.mrb[0].mxu0
    %951 = vmatprep.mubr.f32.mxu0 0.0
    %952 = vmatmul.mubr.f32.gmra.mrb[0].mxu0 %v364
    %v953 = vpop.f32.mrb[0].mxu0
    %v954 = vadd.f32 0.0, %v953
    %v955 = vpop.f32.mrb[0].mxu0
    %956 = vmatprep.mubr.f32.mxu0 0.0
    %957 = vmatmul.mubr.f32.gmra.mrb[0].mxu0 %v367
    %v958 = vpop.f32.mrb[0].mxu0
    %v959 = vadd.f32 0.0, %v958
    %v960 = vpop.f32.mrb[0].mxu0
    %961 = vmatprep.mubr.f32.mxu0 0.0
    %962 = vmatmul.mubr.f32.gmra.mrb[0].mxu0 %v370
    %v963 = vpop.f32.mrb[0].mxu0
    %v964 = vadd.f32 0.0, %v963
    %v965 = vpop.f32.mrb[0].mxu0
    %966 = vmatprep.mubr.f32.mxu0 0.0
    %967 = vmatmul.mubr.f32.gmra.mrb[0].mxu0 %v373
    %v968 = vpop.f32.mrb[0].mxu0
    %v969 = vadd.f32 0.0, %v968
    %v970 = vpop.f32.mrb[0].mxu0
    %971 = vmatprep.mubr.f32.mxu0 0.0
    %972 = vmatmul.mubr.f32.gmra.mrb[0].mxu0 %v376
    %v973 = vpop.f32.mrb[0].mxu0
    %v974 = vadd.f32 0.0, %v973
    %v975 = vpop.f32.mrb[0].mxu0
    %976 = vmatprep.mubr.f32.mxu0 0.0
    %977 = vmatmul.mubr.f32.gmra.mrb[0].mxu0 %v379
    %v978 = vpop.f32.mrb[0].mxu0
    %v979 = vadd.f32 0.0, %v978
    %v980 = vpop.f32.mrb[0].mxu0
    %981 = vmatprep.mubr.f32.mxu0 0.0
    %982 = vmatmul.mubr.f32.gmra.mrb[0].mxu0 %v382
    %v983 = vpop.f32.mrb[0].mxu0
    %v984 = vadd.f32 0.0, %v983
    %v985 = vpop.f32.mrb[0].mxu0
    %986 = vmatprep.mubr.f32.mxu0 0.0
    %987 = vmatmul.mubr.f32.gmra.mrb[0].mxu0 %v385
    %v988 = vpop.f32.mrb[0].mxu0
    %v989 = vadd.f32 0.0, %v988
    %v990 = vpop.f32.mrb[0].mxu0
    %991 = vmatprep.mubr.f32.mxu0 0.0
    %992 = vmatmul.mubr.f32.gmra.mrb[0].mxu0 %v388
    %v993 = vpop.f32.mrb[0].mxu0
    %v994 = vadd.f32 0.0, %v993
    %v995 = vpop.f32.mrb[0].mxu0
    %996 = vmatprep.mubr.f32.mxu0 0.0
    %997 = vmatmul.mubr.f32.gmra.mrb[0].mxu0 %v391
    %v998 = vpop.f32.mrb[0].mxu0
    %v999 = vadd.f32 0.0, %v998
    %v1000 = vpop.f32.mrb[0].mxu0
    %1001 = vmatprep.mubr.f32.mxu0 0.0
    %1002 = vmatmul.mubr.f32.gmra.mrb[0].mxu0 %v394
    %v1003 = vpop.f32.mrb[0].mxu0
    %v1004 = vadd.f32 0.0, %v1003
    %v1005 = vpop.f32.mrb[0].mxu0
    %1006 = vmatprep.mubr.f32.mxu0 0.0
    %1007 = vmatmul.mubr.f32.gmra.mrb[0].mxu0 %v397
    %v1008 = vpop.f32.mrb[0].mxu0
    %v1009 = vadd.f32 0.0, %v1008
    %v1010 = vpop.f32.mrb[0].mxu0
    %1011 = vmatprep.mubr.f32.mxu0 0.0
    %1012 = vmatmul.mubr.f32.gmra.mrb[0].mxu0 %v400
    %v1013 = vpop.f32.mrb[0].mxu0
    %v1014 = vadd.f32 0.0, %v1013
    %v1015 = vpop.f32.mrb[0].mxu0
    %1016 = vmatprep.mubr.f32.mxu0 0.0
    %1017 = vmatmul.mubr.f32.gmra.mrb[0].mxu0 %v403
    %v1018 = vpop.f32.mrb[0].mxu0
    %v1019 = vadd.f32 0.0, %v1018
    %v1020 = vpop.f32.mrb[0].mxu0
    %1021 = vmatprep.mubr.f32.mxu0 0.0
    %1022 = vmatmul.mubr.f32.gmra.mrb[0].mxu0 %v406
    %v1023 = vpop.f32.mrb[0].mxu0
    %v1024 = vadd.f32 0.0, %v1023
    %v1025 = vpop.f32.mrb[0].mxu0
    %1026 = vmatprep.mubr.f32.mxu0 0.0
    %1027 = vmatmul.mubr.f32.gmra.mrb[0].mxu0 %v409
    %v1028 = vpop.f32.mrb[0].mxu0
    %v1029 = vadd.f32 0.0, %v1028
    %v1030 = vpop.f32.mrb[0].mxu0
    %1031 = vmatprep.mubr.f32.mxu0 0.0
    %1032 = vmatmul.mubr.f32.gmra.mrb[0].mxu0 %v412
    %v1033 = vpop.f32.mrb[0].mxu0
    %v1034 = vadd.f32 0.0, %v1033
    %v1035 = vpop.f32.mrb[0].mxu0
    %1036 = vmatprep.mubr.f32.mxu0 0.0
    %1037 = vmatmul.mubr.f32.gmra.mrb[0].mxu0 %v415
    %v1038 = vpop.f32.mrb[0].mxu0
    %v1039 = vadd.f32 0.0, %v1038
    %v1040 = vpop.f32.mrb[0].mxu0
    %1041 = vmatprep.mubr.f32.mxu0 0.0
    %1042 = vmatmul.mubr.f32.gmra.mrb[0].mxu0 %v418
    %v1043 = vpop.f32.mrb[0].mxu0
    %v1044 = vadd.f32 0.0, %v1043
    %v1045 = vpop.f32.mrb[0].mxu0
    %1046 = vmatprep.mubr.f32.mxu0 0.0
    %1047 = vmatmul.mubr.f32.gmra.mrb[0].mxu0 %v421
    %v1048 = vpop.f32.mrb[0].mxu0
    %v1049 = vadd.f32 0.0, %v1048
    %v1050 = vpop.f32.mrb[0].mxu0
    %1051 = vmatprep.mubr.f32.mxu0 0.0
    %1052 = vmatmul.mubr.f32.gmra.mrb[0].mxu0 %v424
    %v1053 = vpop.f32.mrb[0].mxu0
    %v1054 = vadd.f32 0.0, %v1053
    %v1055 = vpop.f32.mrb[0].mxu0
    %1056 = vmatprep.mubr.f32.mxu0 0.0
    %1057 = vmatmul.mubr.f32.gmra.mrb[0].mxu0 %v427
    %v1058 = vpop.f32.mrb[0].mxu0
    %v1059 = vadd.f32 0.0, %v1058
    %v1060 = vpop.f32.mrb[0].mxu0
    %1061 = vmatprep.mubr.f32.mxu0 0.0
    %1062 = vmatmul.mubr.f32.gmra.mrb[0].mxu0 %v430
    %v1063 = vpop.f32.mrb[0].mxu0
    %v1064 = vadd.f32 0.0, %v1063
    %v1065 = vpop.f32.mrb[0].mxu0
    %1066 = vmatprep.mubr.f32.mxu0 0.0
    %1067 = vmatmul.mubr.f32.gmra.mrb[0].mxu0 %v433
    %v1068 = vpop.f32.mrb[0].mxu0
    %v1069 = vadd.f32 0.0, %v1068
    %v1070 = vpop.f32.mrb[0].mxu0
    %1071 = vmatprep.mubr.f32.mxu0 0.0
    %1072 = vmatmul.mubr.f32.gmra.mrb[0].mxu0 %v436
    %v1073 = vpop.f32.mrb[0].mxu0
    %v1074 = vadd.f32 0.0, %v1073
    %v1075 = vpop.f32.mrb[0].mxu0
    %1076 = vmatprep.mubr.f32.mxu0 0.0
    %1077 = vmatmul.mubr.f32.gmra.mrb[0].mxu0 %v439
    %v1078 = vpop.f32.mrb[0].mxu0
    %v1079 = vadd.f32 0.0, %v1078
    %v1080 = vpop.f32.mrb[0].mxu0
    %1081 = vmatprep.mubr.f32.mxu0 0.0
    %1082 = vmatmul.mubr.f32.gmra.mrb[0].mxu0 %v442
    %v1083 = vpop.f32.mrb[0].mxu0
    %v1084 = vadd.f32 0.0, %v1083
    %v1085 = vpop.f32.mrb[0].mxu0
    %1086 = vmatprep.mubr.f32.mxu0 0.0
    %1087 = vmatmul.mubr.f32.gmra.mrb[0].mxu0 %v445
    %v1088 = vpop.f32.mrb[0].mxu0
    %v1089 = vadd.f32 0.0, %v1088
    %v1090 = vpop.f32.mrb[0].mxu0
    %1091 = vmatprep.mubr.f32.mxu0 0.0
    %1092 = vmatmul.mubr.f32.gmra.mrb[0].mxu0 %v448
    %v1093 = vpop.f32.mrb[0].mxu0
    %v1094 = vadd.f32 0.0, %v1093
    %v1095 = vpop.f32.mrb[0].mxu0
    %1096 = vmatprep.mubr.f32.mxu0 0.0
    %1097 = vmatmul.mubr.f32.gmra.mrb[0].mxu0 %v451
    %v1098 = vpop.f32.mrb[0].mxu0
    %v1099 = vadd.f32 0.0, %v1098
    %v1100 = vpop.f32.mrb[0].mxu0
    %1101 = vmatprep.mubr.f32.mxu0 0.0
    %1102 = vmatmul.mubr.f32.gmra.mrb[0].mxu0 %v454
    %v1103 = vpop.f32.mrb[0].mxu0
    %v1104 = vadd.f32 0.0, %v1103
    %v1105 = vpop.f32.mrb[0].mxu0
    %1106 = vmatprep.mubr.f32.mxu0 0.0
    %1107 = vmatmul.mubr.f32.gmra.mrb[0].mxu0 %v457
    %v1108 = vpop.f32.mrb[0].mxu0
    %v1109 = vadd.f32 0.0, %v1108
    %v1110 = vpop.f32.mrb[0].mxu0
    %1111 = vmatprep.mubr.f32.mxu0 0.0
    %1112 = vmatmul.mubr.f32.gmra.mrb[0].mxu0 %v460
    %v1113 = vpop.f32.mrb[0].mxu0
    %v1114 = vadd.f32 0.0, %v1113
    %v1115 = vpop.f32.mrb[0].mxu0
    %1116 = vmatprep.mubr.f32.mxu0 0.0
    %1117 = vmatmul.mubr.f32.gmra.mrb[0].mxu0 %v463
    %v1118 = vpop.f32.mrb[0].mxu0
    %v1119 = vadd.f32 0.0, %v1118
    %v1120 = vpop.f32.mrb[0].mxu0
    %1121 = vmatprep.mubr.f32.mxu0 0.0
    %1122 = vmatmul.mubr.f32.gmra.mrb[0].mxu0 %v466
    %v1123 = vpop.f32.mrb[0].mxu0
    %v1124 = vadd.f32 0.0, %v1123
    %v1125 = vpop.f32.mrb[0].mxu0
    %1126 = vmatprep.mubr.f32.mxu0 0.0
    %1127 = vmatmul.mubr.f32.gmra.mrb[0].mxu0 %v469
    %v1128 = vpop.f32.mrb[0].mxu0
    %v1129 = vadd.f32 0.0, %v1128
    %v1130 = vpop.f32.mrb[0].mxu0
    %1131 = vmatprep.mubr.f32.mxu0 0.0
    %1132 = vmatmul.mubr.f32.gmra.mrb[0].mxu0 %v472
    %v1133 = vpop.f32.mrb[0].mxu0
    %v1134 = vadd.f32 0.0, %v1133
    %v1135 = vpop.f32.mrb[0].mxu0
    %1136 = vmatprep.mubr.f32.mxu0 0.0
    %1137 = vmatmul.mubr.f32.gmra.mrb[0].mxu0 %v475
    %v1138 = vpop.f32.mrb[0].mxu0
    %v1139 = vadd.f32 0.0, %v1138
    %v1140 = vpop.f32.mrb[0].mxu0
    %1141 = vmatprep.mubr.f32.mxu0 0.0
    %1142 = vmatmul.mubr.f32.gmra.mrb[0].mxu0 %v478
    %v1143 = vpop.f32.mrb[0].mxu0
    %v1144 = vadd.f32 0.0, %v1143
    %v1145 = vpop.f32.mrb[0].mxu0
    %1146 = vmatprep.mubr.f32.mxu0 0.0
    %1147 = vmatmul.mubr.f32.gmra.mrb[0].mxu0 %v481
    %v1148 = vpop.f32.mrb[0].mxu0
    %v1149 = vadd.f32 0.0, %v1148
    %v1150 = vpop.f32.mrb[0].mxu0
    %1151 = vmatprep.mubr.f32.mxu0 0.0
    %1152 = vmatmul.mubr.f32.gmra.mrb[0].mxu0 %v484
    %v1153 = vpop.f32.mrb[0].mxu0
    %v1154 = vadd.f32 0.0, %v1153
    %v1155 = vpop.f32.mrb[0].mxu0
    %1156 = vmatprep.mubr.f32.mxu0 0.0
    %1157 = vmatmul.mubr.f32.gmra.mrb[0].mxu0 %v487
    %v1158 = vpop.f32.mrb[0].mxu0
    %v1159 = vadd.f32 0.0, %v1158
    %v1160 = vpop.f32.mrb[0].mxu0
    %1161 = vmatprep.mubr.f32.mxu0 0.0
    %1162 = vmatmul.mubr.f32.gmra.mrb[0].mxu0 %v490
    %v1163 = vpop.f32.mrb[0].mxu0
    %v1164 = vadd.f32 0.0, %v1163
    %v1165 = vpop.f32.mrb[0].mxu0
    %1166 = vmatprep.mubr.f32.mxu0 0.0
    %1167 = vmatmul.mubr.f32.gmra.mrb[0].mxu0 %v493
    %v1168 = vpop.f32.mrb[0].mxu0
    %v1169 = vadd.f32 0.0, %v1168
    %v1170 = vpop.f32.mrb[0].mxu0
    %1171 = vmatprep.mubr.f32.mxu0 0.0
    %1172 = vmatmul.mubr.f32.gmra.mrb[0].mxu0 %v496
    %v1173 = vpop.f32.mrb[0].mxu0
    %v1174 = vadd.f32 0.0, %v1173
    %v1175 = vpop.f32.mrb[0].mxu0
    %1176 = vmatprep.mubr.f32.mxu0 0.0
    %1177 = vmatmul.mubr.f32.gmra.mrb[0].mxu0 %v499
    %v1178 = vpop.f32.mrb[0].mxu0
    %v1179 = vadd.f32 0.0, %v1178
    %v1180 = vpop.f32.mrb[0].mxu0
    %1181 = vmatprep.mubr.f32.mxu0 0.0
    %1182 = vmatmul.mubr.f32.gmra.mrb[0].mxu0 %v502
    %v1183 = vpop.f32.mrb[0].mxu0
    %v1184 = vadd.f32 0.0, %v1183
    %v1185 = vpop.f32.mrb[0].mxu0
    %1186 = vmatprep.mubr.f32.mxu0 0.0
    %1187 = vmatmul.mubr.f32.gmra.mrb[0].mxu0 %v505
    %v1188 = vpop.f32.mrb[0].mxu0
    %v1189 = vadd.f32 0.0, %v1188
    %v1190 = vpop.f32.mrb[0].mxu0
    %1191 = vmatprep.mubr.f32.mxu0 0.0
    %1192 = vmatmul.mubr.f32.gmra.mrb[0].mxu0 %v508
    %v1193 = vpop.f32.mrb[0].mxu0
    %v1194 = vadd.f32 0.0, %v1193
    %v1195 = vpop.f32.mrb[0].mxu0
    %1196 = vmatprep.mubr.f32.mxu0 0.0
    %1197 = vmatmul.mubr.f32.gmra.mrb[0].mxu0 %v511
    %v1198 = vpop.f32.mrb[0].mxu0
    %v1199 = vadd.f32 0.0, %v1198
    %v1200 = vpop.f32.mrb[0].mxu0
    %1201 = vmatprep.mubr.f32.mxu0 0.0
    %1202 = vmatmul.mubr.f32.gmra.mrb[0].mxu0 %v514
    %v1203 = vpop.f32.mrb[0].mxu0
    %v1204 = vadd.f32 0.0, %v1203
    %v1205 = vpop.f32.mrb[0].mxu0
    %1206 = vmatprep.mubr.f32.mxu0 0.0
    %1207 = vmatmul.mubr.f32.gmra.mrb[0].mxu0 %v517
    %v1208 = vpop.f32.mrb[0].mxu0
    %v1209 = vadd.f32 0.0, %v1208
    %v1210 = vpop.f32.mrb[0].mxu0
    %1211 = vmatprep.mubr.f32.mxu0 0.0
    %1212 = vmatmul.mubr.f32.gmra.mrb[0].mxu0 %v520
    %v1213 = vpop.f32.mrb[0].mxu0
    %v1214 = vadd.f32 0.0, %v1213
    %v1215 = vpop.f32.mrb[0].mxu0
    %1216 = vmatprep.mubr.f32.mxu0 0.0
    %1217 = vmatmul.mubr.f32.gmra.mrb[0].mxu0 %v523
    %v1218 = vpop.f32.mrb[0].mxu0
    %v1219 = vadd.f32 0.0, %v1218
    %v1220 = vpop.f32.mrb[0].mxu0
    %1221 = vmatprep.mubr.f32.mxu0 0.0
    %1222 = vmatmul.mubr.f32.gmra.mrb[0].mxu0 %v526
    %v1223 = vpop.f32.mrb[0].mxu0
    %v1224 = vadd.f32 0.0, %v1223
    %v1225 = vpop.f32.mrb[0].mxu0
    %1226 = vmatprep.mubr.f32.mxu0 0.0
    %1227 = vmatmul.mubr.f32.gmra.mrb[0].mxu0 %v529
    %v1228 = vpop.f32.mrb[0].mxu0
    %v1229 = vadd.f32 0.0, %v1228
    %v1230 = vpop.f32.mrb[0].mxu0
    %1231 = vmatprep.mubr.f32.mxu0 0.0
    %1232 = vmatmul.mubr.f32.gmra.mrb[0].mxu0 %v532
    %v1233 = vpop.f32.mrb[0].mxu0
    %v1234 = vadd.f32 0.0, %v1233
    %v1235 = vpop.f32.mrb[0].mxu0
    %1236 = vmatprep.mubr.f32.mxu0 0.0
    %1237 = vmatmul.mubr.f32.gmra.mrb[0].mxu0 %v535
    %v1238 = vpop.f32.mrb[0].mxu0
    %v1239 = vadd.f32 0.0, %v1238
    %v1240 = vpop.f32.mrb[0].mxu0
    %1241 = vdwg.mxu0
    %v1242 = vmul.f32 %v604, 2.0
    %v1243 = vmul.f32 %v609, 2.0
    %v1244 = vmul.f32 %v614, 2.0
    %v1245 = vmul.f32 %v619, 2.0
    %v1246 = vmul.f32 %v624, 2.0
    %v1247 = vmul.f32 %v629, 2.0
    %v1248 = vmul.f32 %v634, 2.0
    %v1249 = vmul.f32 %v639, 2.0
    %v1250 = vmul.f32 %v644, 2.0
    %v1251 = vmul.f32 %v649, 2.0
    %v1252 = vmul.f32 %v654, 2.0
    %v1253 = vmul.f32 %v659, 2.0
    %v1254 = vmul.f32 %v664, 2.0
    %v1255 = vmul.f32 %v669, 2.0
    %v1256 = vmul.f32 %v674, 2.0
    %v1257 = vmul.f32 %v679, 2.0
    %v1258 = vmul.f32 %v684, 2.0
    %v1259 = vmul.f32 %v689, 2.0
    %v1260 = vmul.f32 %v694, 2.0
    %v1261 = vmul.f32 %v699, 2.0
    %v1262 = vmul.f32 %v704, 2.0
    %v1263 = vmul.f32 %v709, 2.0
    %v1264 = vmul.f32 %v714, 2.0
    %v1265 = vmul.f32 %v719, 2.0
    %v1266 = vmul.f32 %v724, 2.0
    %v1267 = vmul.f32 %v729, 2.0
    %v1268 = vmul.f32 %v734, 2.0
    %v1269 = vmul.f32 %v739, 2.0
    %v1270 = vmul.f32 %v744, 2.0
    %v1271 = vmul.f32 %v749, 2.0
    %v1272 = vmul.f32 %v754, 2.0
    %v1273 = vmul.f32 %v759, 2.0
    %v1274 = vmul.f32 %v764, 2.0
    %v1275 = vmul.f32 %v769, 2.0
    %v1276 = vmul.f32 %v774, 2.0
    %v1277 = vmul.f32 %v779, 2.0
    %v1278 = vmul.f32 %v784, 2.0
    %v1279 = vmul.f32 %v789, 2.0
    %v1280 = vmul.f32 %v794, 2.0
    %v1281 = vmul.f32 %v799, 2.0
    %v1282 = vmul.f32 %v804, 2.0
    %v1283 = vmul.f32 %v809, 2.0
    %v1284 = vmul.f32 %v814, 2.0
    %v1285 = vmul.f32 %v819, 2.0
    %v1286 = vmul.f32 %v824, 2.0
    %v1287 = vmul.f32 %v829, 2.0
    %v1288 = vmul.f32 %v834, 2.0
    %v1289 = vmul.f32 %v839, 2.0
    %v1290 = vmul.f32 %v844, 2.0
    %v1291 = vmul.f32 %v849, 2.0
    %v1292 = vmul.f32 %v854, 2.0
    %v1293 = vmul.f32 %v859, 2.0
    %v1294 = vmul.f32 %v864, 2.0
    %v1295 = vmul.f32 %v869, 2.0
    %v1296 = vmul.f32 %v874, 2.0
    %v1297 = vmul.f32 %v879, 2.0
    %v1298 = vmul.f32 %v884, 2.0
    %v1299 = vmul.f32 %v889, 2.0
    %v1300 = vmul.f32 %v894, 2.0
    %v1301 = vmul.f32 %v899, 2.0
    %v1302 = vmul.f32 %v904, 2.0
    %v1303 = vmul.f32 %v909, 2.0
    %v1304 = vmul.f32 %v914, 2.0
    %v1305 = vmul.f32 %v919, 2.0
    %v1306 = vmul.f32 %v924, 2.0
    %v1307 = vmul.f32 %v929, 2.0
    %v1308 = vmul.f32 %v934, 2.0
    %v1309 = vmul.f32 %v939, 2.0
    %v1310 = vmul.f32 %v944, 2.0
    %v1311 = vmul.f32 %v949, 2.0
    %v1312 = vmul.f32 %v954, 2.0
    %v1313 = vmul.f32 %v959, 2.0
    %v1314 = vmul.f32 %v964, 2.0
    %v1315 = vmul.f32 %v969, 2.0
    %v1316 = vmul.f32 %v974, 2.0
    %v1317 = vmul.f32 %v979, 2.0
    %v1318 = vmul.f32 %v984, 2.0
    %v1319 = vmul.f32 %v989, 2.0
    %v1320 = vmul.f32 %v994, 2.0
    %v1321 = vmul.f32 %v999, 2.0
    %v1322 = vmul.f32 %v1004, 2.0
    %v1323 = vmul.f32 %v1009, 2.0
    %v1324 = vmul.f32 %v1014, 2.0
    %v1325 = vmul.f32 %v1019, 2.0
    %v1326 = vmul.f32 %v1024, 2.0
    %v1327 = vmul.f32 %v1029, 2.0
    %v1328 = vmul.f32 %v1034, 2.0
    %v1329 = vmul.f32 %v1039, 2.0
    %v1330 = vmul.f32 %v1044, 2.0
    %v1331 = vmul.f32 %v1049, 2.0
    %v1332 = vmul.f32 %v1054, 2.0
    %v1333 = vmul.f32 %v1059, 2.0
    %v1334 = vmul.f32 %v1064, 2.0
    %v1335 = vmul.f32 %v1069, 2.0
    %v1336 = vmul.f32 %v1074, 2.0
    %v1337 = vmul.f32 %v1079, 2.0
    %v1338 = vmul.f32 %v1084, 2.0
    %v1339 = vmul.f32 %v1089, 2.0
    %v1340 = vmul.f32 %v1094, 2.0
    %v1341 = vmul.f32 %v1099, 2.0
    %v1342 = vmul.f32 %v1104, 2.0
    %v1343 = vmul.f32 %v1109, 2.0
    %v1344 = vmul.f32 %v1114, 2.0
    %v1345 = vmul.f32 %v1119, 2.0
    %v1346 = vmul.f32 %v1124, 2.0
    %v1347 = vmul.f32 %v1129, 2.0
    %v1348 = vmul.f32 %v1134, 2.0
    %v1349 = vmul.f32 %v1139, 2.0
    %v1350 = vmul.f32 %v1144, 2.0
    %v1351 = vmul.f32 %v1149, 2.0
    %v1352 = vmul.f32 %v1154, 2.0
    %v1353 = vmul.f32 %v1159, 2.0
    %v1354 = vmul.f32 %v1164, 2.0
    %v1355 = vmul.f32 %v1169, 2.0
    %v1356 = vmul.f32 %v1174, 2.0
    %v1357 = vmul.f32 %v1179, 2.0
    %v1358 = vmul.f32 %v1184, 2.0
    %v1359 = vmul.f32 %v1189, 2.0
    %v1360 = vmul.f32 %v1194, 2.0
    %v1361 = vmul.f32 %v1199, 2.0
    %v1362 = vmul.f32 %v1204, 2.0
    %v1363 = vmul.f32 %v1209, 2.0
    %v1364 = vmul.f32 %v1214, 2.0
    %v1365 = vmul.f32 %v1219, 2.0
    %v1366 = vmul.f32 %v1224, 2.0
    %v1367 = vmul.f32 %v1229, 2.0
    %v1368 = vmul.f32 %v1234, 2.0
    %v1369 = vmul.f32 %v1239, 2.0
    %v1371 = vlaneseq
    %v1372 = vshrl.u32 %v1371, 7
    %v1373 = vsub.s32 0, %v1372
    %v1374 = vrot.slane %v151, %v1373
    %v1376 = vsub.f32 %v1374, %v1242
    %v1377 = vsub.f32 %v1374, %v1243
    %v1378 = vsub.f32 %v1374, %v1244
    %v1379 = vsub.f32 %v1374, %v1245
    %v1380 = vsub.f32 %v1374, %v1246
    %v1381 = vsub.f32 %v1374, %v1247
    %v1382 = vsub.f32 %v1374, %v1248
    %v1383 = vsub.f32 %v1374, %v1249
    %v1384 = vsub.f32 %v1374, %v1250
    %v1385 = vsub.f32 %v1374, %v1251
    %v1386 = vsub.f32 %v1374, %v1252
    %v1387 = vsub.f32 %v1374, %v1253
    %v1388 = vsub.f32 %v1374, %v1254
    %v1389 = vsub.f32 %v1374, %v1255
    %v1390 = vsub.f32 %v1374, %v1256
    %v1391 = vsub.f32 %v1374, %v1257
    %v1392 = vsub.f32 %v1374, %v1258
    %v1393 = vsub.f32 %v1374, %v1259
    %v1394 = vsub.f32 %v1374, %v1260
    %v1395 = vsub.f32 %v1374, %v1261
    %v1396 = vsub.f32 %v1374, %v1262
    %v1397 = vsub.f32 %v1374, %v1263
    %v1398 = vsub.f32 %v1374, %v1264
    %v1399 = vsub.f32 %v1374, %v1265
    %v1400 = vsub.f32 %v1374, %v1266
    %v1401 = vsub.f32 %v1374, %v1267
    %v1402 = vsub.f32 %v1374, %v1268
    %v1403 = vsub.f32 %v1374, %v1269
    %v1404 = vsub.f32 %v1374, %v1270
    %v1405 = vsub.f32 %v1374, %v1271
    %v1406 = vsub.f32 %v1374, %v1272
    %v1407 = vsub.f32 %v1374, %v1273
    %v1408 = vsub.f32 %v1374, %v1274
    %v1409 = vsub.f32 %v1374, %v1275
    %v1410 = vsub.f32 %v1374, %v1276
    %v1411 = vsub.f32 %v1374, %v1277
    %v1412 = vsub.f32 %v1374, %v1278
    %v1413 = vsub.f32 %v1374, %v1279
    %v1414 = vsub.f32 %v1374, %v1280
    %v1415 = vsub.f32 %v1374, %v1281
    %v1416 = vsub.f32 %v1374, %v1282
    %v1417 = vsub.f32 %v1374, %v1283
    %v1418 = vsub.f32 %v1374, %v1284
    %v1419 = vsub.f32 %v1374, %v1285
    %v1420 = vsub.f32 %v1374, %v1286
    %v1421 = vsub.f32 %v1374, %v1287
    %v1422 = vsub.f32 %v1374, %v1288
    %v1423 = vsub.f32 %v1374, %v1289
    %v1424 = vsub.f32 %v1374, %v1290
    %v1425 = vsub.f32 %v1374, %v1291
    %v1426 = vsub.f32 %v1374, %v1292
    %v1427 = vsub.f32 %v1374, %v1293
    %v1428 = vsub.f32 %v1374, %v1294
    %v1429 = vsub.f32 %v1374, %v1295
    %v1430 = vsub.f32 %v1374, %v1296
    %v1431 = vsub.f32 %v1374, %v1297
    %v1432 = vsub.f32 %v1374, %v1298
    %v1433 = vsub.f32 %v1374, %v1299
    %v1434 = vsub.f32 %v1374, %v1300
    %v1435 = vsub.f32 %v1374, %v1301
    %v1436 = vsub.f32 %v1374, %v1302
    %v1437 = vsub.f32 %v1374, %v1303
    %v1438 = vsub.f32 %v1374, %v1304
    %v1439 = vsub.f32 %v1374, %v1305
    %v1440 = vsub.f32 %v1374, %v1306
    %v1441 = vsub.f32 %v1374, %v1307
    %v1442 = vsub.f32 %v1374, %v1308
    %v1443 = vsub.f32 %v1374, %v1309
    %v1444 = vsub.f32 %v1374, %v1310
    %v1445 = vsub.f32 %v1374, %v1311
    %v1446 = vsub.f32 %v1374, %v1312
    %v1447 = vsub.f32 %v1374, %v1313
    %v1448 = vsub.f32 %v1374, %v1314
    %v1449 = vsub.f32 %v1374, %v1315
    %v1450 = vsub.f32 %v1374, %v1316
    %v1451 = vsub.f32 %v1374, %v1317
    %v1452 = vsub.f32 %v1374, %v1318
    %v1453 = vsub.f32 %v1374, %v1319
    %v1454 = vsub.f32 %v1374, %v1320
    %v1455 = vsub.f32 %v1374, %v1321
    %v1456 = vsub.f32 %v1374, %v1322
    %v1457 = vsub.f32 %v1374, %v1323
    %v1458 = vsub.f32 %v1374, %v1324
    %v1459 = vsub.f32 %v1374, %v1325
    %v1460 = vsub.f32 %v1374, %v1326
    %v1461 = vsub.f32 %v1374, %v1327
    %v1462 = vsub.f32 %v1374, %v1328
    %v1463 = vsub.f32 %v1374, %v1329
    %v1464 = vsub.f32 %v1374, %v1330
    %v1465 = vsub.f32 %v1374, %v1331
    %v1466 = vsub.f32 %v1374, %v1332
    %v1467 = vsub.f32 %v1374, %v1333
    %v1468 = vsub.f32 %v1374, %v1334
    %v1469 = vsub.f32 %v1374, %v1335
    %v1470 = vsub.f32 %v1374, %v1336
    %v1471 = vsub.f32 %v1374, %v1337
    %v1472 = vsub.f32 %v1374, %v1338
    %v1473 = vsub.f32 %v1374, %v1339
    %v1474 = vsub.f32 %v1374, %v1340
    %v1475 = vsub.f32 %v1374, %v1341
    %v1476 = vsub.f32 %v1374, %v1342
    %v1477 = vsub.f32 %v1374, %v1343
    %v1478 = vsub.f32 %v1374, %v1344
    %v1479 = vsub.f32 %v1374, %v1345
    %v1480 = vsub.f32 %v1374, %v1346
    %v1481 = vsub.f32 %v1374, %v1347
    %v1482 = vsub.f32 %v1374, %v1348
    %v1483 = vsub.f32 %v1374, %v1349
    %v1484 = vsub.f32 %v1374, %v1350
    %v1485 = vsub.f32 %v1374, %v1351
    %v1486 = vsub.f32 %v1374, %v1352
    %v1487 = vsub.f32 %v1374, %v1353
    %v1488 = vsub.f32 %v1374, %v1354
    %v1489 = vsub.f32 %v1374, %v1355
    %v1490 = vsub.f32 %v1374, %v1356
    %v1491 = vsub.f32 %v1374, %v1357
    %v1492 = vsub.f32 %v1374, %v1358
    %v1493 = vsub.f32 %v1374, %v1359
    %v1494 = vsub.f32 %v1374, %v1360
    %v1495 = vsub.f32 %v1374, %v1361
    %v1496 = vsub.f32 %v1374, %v1362
    %v1497 = vsub.f32 %v1374, %v1363
    %v1498 = vsub.f32 %v1374, %v1364
    %v1499 = vsub.f32 %v1374, %v1365
    %v1500 = vsub.f32 %v1374, %v1366
    %v1501 = vsub.f32 %v1374, %v1367
    %v1502 = vsub.f32 %v1374, %v1368
    %v1503 = vsub.f32 %v1374, %v1369
    %1504 = vmin.xlane.f32.xlu0 %v1376
    %v1505 = vpop.xlane.xlu0 %1504
    %1506 = vmin.xlane.f32.xlu0 %v1377
    %v1507 = vpop.xlane.xlu0 %1506
    %1508 = vmin.xlane.f32.xlu0 %v1378
    %v1509 = vpop.xlane.xlu0 %1508
    %1510 = vmin.xlane.f32.xlu0 %v1379
    %v1511 = vpop.xlane.xlu0 %1510
    %1512 = vmin.xlane.f32.xlu0 %v1380
    %v1513 = vpop.xlane.xlu0 %1512
    %1514 = vmin.xlane.f32.xlu0 %v1381
    %v1515 = vpop.xlane.xlu0 %1514
    %1516 = vmin.xlane.f32.xlu0 %v1382
    %v1517 = vpop.xlane.xlu0 %1516
    %1518 = vmin.xlane.f32.xlu0 %v1383
    %v1519 = vpop.xlane.xlu0 %1518
    %1520 = vmin.xlane.f32.xlu0 %v1384
    %v1521 = vpop.xlane.xlu0 %1520
    %1522 = vmin.xlane.f32.xlu0 %v1385
    %v1523 = vpop.xlane.xlu0 %1522
    %1524 = vmin.xlane.f32.xlu0 %v1386
    %v1525 = vpop.xlane.xlu0 %1524
    %1526 = vmin.xlane.f32.xlu0 %v1387
    %v1527 = vpop.xlane.xlu0 %1526
    %1528 = vmin.xlane.f32.xlu0 %v1388
    %v1529 = vpop.xlane.xlu0 %1528
    %1530 = vmin.xlane.f32.xlu0 %v1389
    %v1531 = vpop.xlane.xlu0 %1530
    %1532 = vmin.xlane.f32.xlu0 %v1390
    %v1533 = vpop.xlane.xlu0 %1532
    %1534 = vmin.xlane.f32.xlu0 %v1391
    %v1535 = vpop.xlane.xlu0 %1534
    %1536 = vmin.xlane.f32.xlu0 %v1392
    %v1537 = vpop.xlane.xlu0 %1536
    %1538 = vmin.xlane.f32.xlu0 %v1393
    %v1539 = vpop.xlane.xlu0 %1538
    %1540 = vmin.xlane.f32.xlu0 %v1394
    %v1541 = vpop.xlane.xlu0 %1540
    %1542 = vmin.xlane.f32.xlu0 %v1395
    %v1543 = vpop.xlane.xlu0 %1542
    %1544 = vmin.xlane.f32.xlu0 %v1396
    %v1545 = vpop.xlane.xlu0 %1544
    %1546 = vmin.xlane.f32.xlu0 %v1397
    %v1547 = vpop.xlane.xlu0 %1546
    %1548 = vmin.xlane.f32.xlu0 %v1398
    %v1549 = vpop.xlane.xlu0 %1548
    %1550 = vmin.xlane.f32.xlu0 %v1399
    %v1551 = vpop.xlane.xlu0 %1550
    %1552 = vmin.xlane.f32.xlu0 %v1400
    %v1553 = vpop.xlane.xlu0 %1552
    %1554 = vmin.xlane.f32.xlu0 %v1401
    %v1555 = vpop.xlane.xlu0 %1554
    %1556 = vmin.xlane.f32.xlu0 %v1402
    %v1557 = vpop.xlane.xlu0 %1556
    %1558 = vmin.xlane.f32.xlu0 %v1403
    %v1559 = vpop.xlane.xlu0 %1558
    %1560 = vmin.xlane.f32.xlu0 %v1404
    %v1561 = vpop.xlane.xlu0 %1560
    %1562 = vmin.xlane.f32.xlu0 %v1405
    %v1563 = vpop.xlane.xlu0 %1562
    %1564 = vmin.xlane.f32.xlu0 %v1406
    %v1565 = vpop.xlane.xlu0 %1564
    %1566 = vmin.xlane.f32.xlu0 %v1407
    %v1567 = vpop.xlane.xlu0 %1566
    %1568 = vmin.xlane.f32.xlu0 %v1408
    %v1569 = vpop.xlane.xlu0 %1568
    %1570 = vmin.xlane.f32.xlu0 %v1409
    %v1571 = vpop.xlane.xlu0 %1570
    %1572 = vmin.xlane.f32.xlu0 %v1410
    %v1573 = vpop.xlane.xlu0 %1572
    %1574 = vmin.xlane.f32.xlu0 %v1411
    %v1575 = vpop.xlane.xlu0 %1574
    %1576 = vmin.xlane.f32.xlu0 %v1412
    %v1577 = vpop.xlane.xlu0 %1576
    %1578 = vmin.xlane.f32.xlu0 %v1413
    %v1579 = vpop.xlane.xlu0 %1578
    %1580 = vmin.xlane.f32.xlu0 %v1414
    %v1581 = vpop.xlane.xlu0 %1580
    %1582 = vmin.xlane.f32.xlu0 %v1415
    %v1583 = vpop.xlane.xlu0 %1582
    %1584 = vmin.xlane.f32.xlu0 %v1416
    %v1585 = vpop.xlane.xlu0 %1584
    %1586 = vmin.xlane.f32.xlu0 %v1417
    %v1587 = vpop.xlane.xlu0 %1586
    %1588 = vmin.xlane.f32.xlu0 %v1418
    %v1589 = vpop.xlane.xlu0 %1588
    %1590 = vmin.xlane.f32.xlu0 %v1419
    %v1591 = vpop.xlane.xlu0 %1590
    %1592 = vmin.xlane.f32.xlu0 %v1420
    %v1593 = vpop.xlane.xlu0 %1592
    %1594 = vmin.xlane.f32.xlu0 %v1421
    %v1595 = vpop.xlane.xlu0 %1594
    %1596 = vmin.xlane.f32.xlu0 %v1422
    %v1597 = vpop.xlane.xlu0 %1596
    %1598 = vmin.xlane.f32.xlu0 %v1423
    %v1599 = vpop.xlane.xlu0 %1598
    %1600 = vmin.xlane.f32.xlu0 %v1424
    %v1601 = vpop.xlane.xlu0 %1600
    %1602 = vmin.xlane.f32.xlu0 %v1425
    %v1603 = vpop.xlane.xlu0 %1602
    %1604 = vmin.xlane.f32.xlu0 %v1426
    %v1605 = vpop.xlane.xlu0 %1604
    %1606 = vmin.xlane.f32.xlu0 %v1427
    %v1607 = vpop.xlane.xlu0 %1606
    %1608 = vmin.xlane.f32.xlu0 %v1428
    %v1609 = vpop.xlane.xlu0 %1608
    %1610 = vmin.xlane.f32.xlu0 %v1429
    %v1611 = vpop.xlane.xlu0 %1610
    %1612 = vmin.xlane.f32.xlu0 %v1430
    %v1613 = vpop.xlane.xlu0 %1612
    %1614 = vmin.xlane.f32.xlu0 %v1431
    %v1615 = vpop.xlane.xlu0 %1614
    %1616 = vmin.xlane.f32.xlu0 %v1432
    %v1617 = vpop.xlane.xlu0 %1616
    %1618 = vmin.xlane.f32.xlu0 %v1433
    %v1619 = vpop.xlane.xlu0 %1618
    %1620 = vmin.xlane.f32.xlu0 %v1434
    %v1621 = vpop.xlane.xlu0 %1620
    %1622 = vmin.xlane.f32.xlu0 %v1435
    %v1623 = vpop.xlane.xlu0 %1622
    %1624 = vmin.xlane.f32.xlu0 %v1436
    %v1625 = vpop.xlane.xlu0 %1624
    %1626 = vmin.xlane.f32.xlu0 %v1437
    %v1627 = vpop.xlane.xlu0 %1626
    %1628 = vmin.xlane.f32.xlu0 %v1438
    %v1629 = vpop.xlane.xlu0 %1628
    %1630 = vmin.xlane.f32.xlu0 %v1439
    %v1631 = vpop.xlane.xlu0 %1630
    %1632 = vmin.xlane.f32.xlu0 %v1440
    %v1633 = vpop.xlane.xlu0 %1632
    %1634 = vmin.xlane.f32.xlu0 %v1441
    %v1635 = vpop.xlane.xlu0 %1634
    %1636 = vmin.xlane.f32.xlu0 %v1442
    %v1637 = vpop.xlane.xlu0 %1636
    %1638 = vmin.xlane.f32.xlu0 %v1443
    %v1639 = vpop.xlane.xlu0 %1638
    %1640 = vmin.xlane.f32.xlu0 %v1444
    %v1641 = vpop.xlane.xlu0 %1640
    %1642 = vmin.xlane.f32.xlu0 %v1445
    %v1643 = vpop.xlane.xlu0 %1642
    %1644 = vmin.xlane.f32.xlu0 %v1446
    %v1645 = vpop.xlane.xlu0 %1644
    %1646 = vmin.xlane.f32.xlu0 %v1447
    %v1647 = vpop.xlane.xlu0 %1646
    %1648 = vmin.xlane.f32.xlu0 %v1448
    %v1649 = vpop.xlane.xlu0 %1648
    %1650 = vmin.xlane.f32.xlu0 %v1449
    %v1651 = vpop.xlane.xlu0 %1650
    %1652 = vmin.xlane.f32.xlu0 %v1450
    %v1653 = vpop.xlane.xlu0 %1652
    %1654 = vmin.xlane.f32.xlu0 %v1451
    %v1655 = vpop.xlane.xlu0 %1654
    %1656 = vmin.xlane.f32.xlu0 %v1452
    %v1657 = vpop.xlane.xlu0 %1656
    %1658 = vmin.xlane.f32.xlu0 %v1453
    %v1659 = vpop.xlane.xlu0 %1658
    %1660 = vmin.xlane.f32.xlu0 %v1454
    %v1661 = vpop.xlane.xlu0 %1660
    %1662 = vmin.xlane.f32.xlu0 %v1455
    %v1663 = vpop.xlane.xlu0 %1662
    %1664 = vmin.xlane.f32.xlu0 %v1456
    %v1665 = vpop.xlane.xlu0 %1664
    %1666 = vmin.xlane.f32.xlu0 %v1457
    %v1667 = vpop.xlane.xlu0 %1666
    %1668 = vmin.xlane.f32.xlu0 %v1458
    %v1669 = vpop.xlane.xlu0 %1668
    %1670 = vmin.xlane.f32.xlu0 %v1459
    %v1671 = vpop.xlane.xlu0 %1670
    %1672 = vmin.xlane.f32.xlu0 %v1460
    %v1673 = vpop.xlane.xlu0 %1672
    %1674 = vmin.xlane.f32.xlu0 %v1461
    %v1675 = vpop.xlane.xlu0 %1674
    %1676 = vmin.xlane.f32.xlu0 %v1462
    %v1677 = vpop.xlane.xlu0 %1676
    %1678 = vmin.xlane.f32.xlu0 %v1463
    %v1679 = vpop.xlane.xlu0 %1678
    %1680 = vmin.xlane.f32.xlu0 %v1464
    %v1681 = vpop.xlane.xlu0 %1680
    %1682 = vmin.xlane.f32.xlu0 %v1465
    %v1683 = vpop.xlane.xlu0 %1682
    %1684 = vmin.xlane.f32.xlu0 %v1466
    %v1685 = vpop.xlane.xlu0 %1684
    %1686 = vmin.xlane.f32.xlu0 %v1467
    %v1687 = vpop.xlane.xlu0 %1686
    %1688 = vmin.xlane.f32.xlu0 %v1468
    %v1689 = vpop.xlane.xlu0 %1688
    %1690 = vmin.xlane.f32.xlu0 %v1469
    %v1691 = vpop.xlane.xlu0 %1690
    %1692 = vmin.xlane.f32.xlu0 %v1470
    %v1693 = vpop.xlane.xlu0 %1692
    %1694 = vmin.xlane.f32.xlu0 %v1471
    %v1695 = vpop.xlane.xlu0 %1694
    %1696 = vmin.xlane.f32.xlu0 %v1472
    %v1697 = vpop.xlane.xlu0 %1696
    %1698 = vmin.xlane.f32.xlu0 %v1473
    %v1699 = vpop.xlane.xlu0 %1698
    %1700 = vmin.xlane.f32.xlu0 %v1474
    %v1701 = vpop.xlane.xlu0 %1700
    %1702 = vmin.xlane.f32.xlu0 %v1475
    %v1703 = vpop.xlane.xlu0 %1702
    %1704 = vmin.xlane.f32.xlu0 %v1476
    %v1705 = vpop.xlane.xlu0 %1704
    %1706 = vmin.xlane.f32.xlu0 %v1477
    %v1707 = vpop.xlane.xlu0 %1706
    %1708 = vmin.xlane.f32.xlu0 %v1478
    %v1709 = vpop.xlane.xlu0 %1708
    %1710 = vmin.xlane.f32.xlu0 %v1479
    %v1711 = vpop.xlane.xlu0 %1710
    %1712 = vmin.xlane.f32.xlu0 %v1480
    %v1713 = vpop.xlane.xlu0 %1712
    %1714 = vmin.xlane.f32.xlu0 %v1481
    %v1715 = vpop.xlane.xlu0 %1714
    %1716 = vmin.xlane.f32.xlu0 %v1482
    %v1717 = vpop.xlane.xlu0 %1716
    %1718 = vmin.xlane.f32.xlu0 %v1483
    %v1719 = vpop.xlane.xlu0 %1718
    %1720 = vmin.xlane.f32.xlu0 %v1484
    %v1721 = vpop.xlane.xlu0 %1720
    %1722 = vmin.xlane.f32.xlu0 %v1485
    %v1723 = vpop.xlane.xlu0 %1722
    %1724 = vmin.xlane.f32.xlu0 %v1486
    %v1725 = vpop.xlane.xlu0 %1724
    %1726 = vmin.xlane.f32.xlu0 %v1487
    %v1727 = vpop.xlane.xlu0 %1726
    %1728 = vmin.xlane.f32.xlu0 %v1488
    %v1729 = vpop.xlane.xlu0 %1728
    %1730 = vmin.xlane.f32.xlu0 %v1489
    %v1731 = vpop.xlane.xlu0 %1730
    %1732 = vmin.xlane.f32.xlu0 %v1490
    %v1733 = vpop.xlane.xlu0 %1732
    %1734 = vmin.xlane.f32.xlu0 %v1491
    %v1735 = vpop.xlane.xlu0 %1734
    %1736 = vmin.xlane.f32.xlu0 %v1492
    %v1737 = vpop.xlane.xlu0 %1736
    %1738 = vmin.xlane.f32.xlu0 %v1493
    %v1739 = vpop.xlane.xlu0 %1738
    %1740 = vmin.xlane.f32.xlu0 %v1494
    %v1741 = vpop.xlane.xlu0 %1740
    %1742 = vmin.xlane.f32.xlu0 %v1495
    %v1743 = vpop.xlane.xlu0 %1742
    %1744 = vmin.xlane.f32.xlu0 %v1496
    %v1745 = vpop.xlane.xlu0 %1744
    %1746 = vmin.xlane.f32.xlu0 %v1497
    %v1747 = vpop.xlane.xlu0 %1746
    %1748 = vmin.xlane.f32.xlu0 %v1498
    %v1749 = vpop.xlane.xlu0 %1748
    %1750 = vmin.xlane.f32.xlu0 %v1499
    %v1751 = vpop.xlane.xlu0 %1750
    %1752 = vmin.xlane.f32.xlu0 %v1500
    %v1753 = vpop.xlane.xlu0 %1752
    %1754 = vmin.xlane.f32.xlu0 %v1501
    %v1755 = vpop.xlane.xlu0 %1754
    %1756 = vmin.xlane.f32.xlu0 %v1502
    %v1757 = vpop.xlane.xlu0 %1756
    %1758 = vmin.xlane.f32.xlu0 %v1503
    %v1759 = vpop.xlane.xlu0 %1758
    %v1760 = vlaneseq
    %v1761 = vand.u32 %v1760, 127
    %vm1762 = vcmp.eq.f32.partialorder %v1376, %v1505
    %vm1763 = vcmp.eq.f32.partialorder %v1377, %v1507
    %vm1764 = vcmp.eq.f32.partialorder %v1378, %v1509
    %vm1765 = vcmp.eq.f32.partialorder %v1379, %v1511
    %vm1766 = vcmp.eq.f32.partialorder %v1380, %v1513
    %vm1767 = vcmp.eq.f32.partialorder %v1381, %v1515
    %vm1768 = vcmp.eq.f32.partialorder %v1382, %v1517
    %vm1769 = vcmp.eq.f32.partialorder %v1383, %v1519
    %vm1770 = vcmp.eq.f32.partialorder %v1384, %v1521
    %vm1771 = vcmp.eq.f32.partialorder %v1385, %v1523
    %vm1772 = vcmp.eq.f32.partialorder %v1386, %v1525
    %vm1773 = vcmp.eq.f32.partialorder %v1387, %v1527
    %vm1774 = vcmp.eq.f32.partialorder %v1388, %v1529
    %vm1775 = vcmp.eq.f32.partialorder %v1389, %v1531
    %vm1776 = vcmp.eq.f32.partialorder %v1390, %v1533
    %vm1777 = vcmp.eq.f32.partialorder %v1391, %v1535
    %vm1778 = vcmp.eq.f32.partialorder %v1392, %v1537
    %vm1779 = vcmp.eq.f32.partialorder %v1393, %v1539
    %vm1780 = vcmp.eq.f32.partialorder %v1394, %v1541
    %vm1781 = vcmp.eq.f32.partialorder %v1395, %v1543
    %vm1782 = vcmp.eq.f32.partialorder %v1396, %v1545
    %vm1783 = vcmp.eq.f32.partialorder %v1397, %v1547
    %vm1784 = vcmp.eq.f32.partialorder %v1398, %v1549
    %vm1785 = vcmp.eq.f32.partialorder %v1399, %v1551
    %vm1786 = vcmp.eq.f32.partialorder %v1400, %v1553
    %vm1787 = vcmp.eq.f32.partialorder %v1401, %v1555
    %vm1788 = vcmp.eq.f32.partialorder %v1402, %v1557
    %vm1789 = vcmp.eq.f32.partialorder %v1403, %v1559
    %vm1790 = vcmp.eq.f32.partialorder %v1404, %v1561
    %vm1791 = vcmp.eq.f32.partialorder %v1405, %v1563
    %vm1792 = vcmp.eq.f32.partialorder %v1406, %v1565
    %vm1793 = vcmp.eq.f32.partialorder %v1407, %v1567
    %vm1794 = vcmp.eq.f32.partialorder %v1408, %v1569
    %vm1795 = vcmp.eq.f32.partialorder %v1409, %v1571
    %vm1796 = vcmp.eq.f32.partialorder %v1410, %v1573
    %vm1797 = vcmp.eq.f32.partialorder %v1411, %v1575
    %vm1798 = vcmp.eq.f32.partialorder %v1412, %v1577
    %vm1799 = vcmp.eq.f32.partialorder %v1413, %v1579
    %vm1800 = vcmp.eq.f32.partialorder %v1414, %v1581
    %vm1801 = vcmp.eq.f32.partialorder %v1415, %v1583
    %vm1802 = vcmp.eq.f32.partialorder %v1416, %v1585
    %vm1803 = vcmp.eq.f32.partialorder %v1417, %v1587
    %vm1804 = vcmp.eq.f32.partialorder %v1418, %v1589
    %vm1805 = vcmp.eq.f32.partialorder %v1419, %v1591
    %vm1806 = vcmp.eq.f32.partialorder %v1420, %v1593
    %vm1807 = vcmp.eq.f32.partialorder %v1421, %v1595
    %vm1808 = vcmp.eq.f32.partialorder %v1422, %v1597
    %vm1809 = vcmp.eq.f32.partialorder %v1423, %v1599
    %vm1810 = vcmp.eq.f32.partialorder %v1424, %v1601
    %vm1811 = vcmp.eq.f32.partialorder %v1425, %v1603
    %vm1812 = vcmp.eq.f32.partialorder %v1426, %v1605
    %vm1813 = vcmp.eq.f32.partialorder %v1427, %v1607
    %vm1814 = vcmp.eq.f32.partialorder %v1428, %v1609
    %vm1815 = vcmp.eq.f32.partialorder %v1429, %v1611
    %vm1816 = vcmp.eq.f32.partialorder %v1430, %v1613
    %vm1817 = vcmp.eq.f32.partialorder %v1431, %v1615
    %vm1818 = vcmp.eq.f32.partialorder %v1432, %v1617
    %vm1819 = vcmp.eq.f32.partialorder %v1433, %v1619
    %vm1820 = vcmp.eq.f32.partialorder %v1434, %v1621
    %vm1821 = vcmp.eq.f32.partialorder %v1435, %v1623
    %vm1822 = vcmp.eq.f32.partialorder %v1436, %v1625
    %vm1823 = vcmp.eq.f32.partialorder %v1437, %v1627
    %vm1824 = vcmp.eq.f32.partialorder %v1438, %v1629
    %vm1825 = vcmp.eq.f32.partialorder %v1439, %v1631
    %vm1826 = vcmp.eq.f32.partialorder %v1440, %v1633
    %vm1827 = vcmp.eq.f32.partialorder %v1441, %v1635
    %vm1828 = vcmp.eq.f32.partialorder %v1442, %v1637
    %vm1829 = vcmp.eq.f32.partialorder %v1443, %v1639
    %vm1830 = vcmp.eq.f32.partialorder %v1444, %v1641
    %vm1831 = vcmp.eq.f32.partialorder %v1445, %v1643
    %vm1832 = vcmp.eq.f32.partialorder %v1446, %v1645
    %vm1833 = vcmp.eq.f32.partialorder %v1447, %v1647
    %vm1834 = vcmp.eq.f32.partialorder %v1448, %v1649
    %vm1835 = vcmp.eq.f32.partialorder %v1449, %v1651
    %vm1836 = vcmp.eq.f32.partialorder %v1450, %v1653
    %vm1837 = vcmp.eq.f32.partialorder %v1451, %v1655
    %vm1838 = vcmp.eq.f32.partialorder %v1452, %v1657
    %vm1839 = vcmp.eq.f32.partialorder %v1453, %v1659
    %vm1840 = vcmp.eq.f32.partialorder %v1454, %v1661
    %vm1841 = vcmp.eq.f32.partialorder %v1455, %v1663
    %vm1842 = vcmp.eq.f32.partialorder %v1456, %v1665
    %vm1843 = vcmp.eq.f32.partialorder %v1457, %v1667
    %vm1844 = vcmp.eq.f32.partialorder %v1458, %v1669
    %vm1845 = vcmp.eq.f32.partialorder %v1459, %v1671
    %vm1846 = vcmp.eq.f32.partialorder %v1460, %v1673
    %vm1847 = vcmp.eq.f32.partialorder %v1461, %v1675
    %vm1848 = vcmp.eq.f32.partialorder %v1462, %v1677
    %vm1849 = vcmp.eq.f32.partialorder %v1463, %v1679
    %vm1850 = vcmp.eq.f32.partialorder %v1464, %v1681
    %vm1851 = vcmp.eq.f32.partialorder %v1465, %v1683
    %vm1852 = vcmp.eq.f32.partialorder %v1466, %v1685
    %vm1853 = vcmp.eq.f32.partialorder %v1467, %v1687
    %vm1854 = vcmp.eq.f32.partialorder %v1468, %v1689
    %vm1855 = vcmp.eq.f32.partialorder %v1469, %v1691
    %vm1856 = vcmp.eq.f32.partialorder %v1470, %v1693
    %vm1857 = vcmp.eq.f32.partialorder %v1471, %v1695
    %vm1858 = vcmp.eq.f32.partialorder %v1472, %v1697
    %vm1859 = vcmp.eq.f32.partialorder %v1473, %v1699
    %vm1860 = vcmp.eq.f32.partialorder %v1474, %v1701
    %vm1861 = vcmp.eq.f32.partialorder %v1475, %v1703
    %vm1862 = vcmp.eq.f32.partialorder %v1476, %v1705
    %vm1863 = vcmp.eq.f32.partialorder %v1477, %v1707
    %vm1864 = vcmp.eq.f32.partialorder %v1478, %v1709
    %vm1865 = vcmp.eq.f32.partialorder %v1479, %v1711
    %vm1866 = vcmp.eq.f32.partialorder %v1480, %v1713
    %vm1867 = vcmp.eq.f32.partialorder %v1481, %v1715
    %vm1868 = vcmp.eq.f32.partialorder %v1482, %v1717
    %vm1869 = vcmp.eq.f32.partialorder %v1483, %v1719
    %vm1870 = vcmp.eq.f32.partialorder %v1484, %v1721
    %vm1871 = vcmp.eq.f32.partialorder %v1485, %v1723
    %vm1872 = vcmp.eq.f32.partialorder %v1486, %v1725
    %vm1873 = vcmp.eq.f32.partialorder %v1487, %v1727
    %vm1874 = vcmp.eq.f32.partialorder %v1488, %v1729
    %vm1875 = vcmp.eq.f32.partialorder %v1489, %v1731
    %vm1876 = vcmp.eq.f32.partialorder %v1490, %v1733
    %vm1877 = vcmp.eq.f32.partialorder %v1491, %v1735
    %vm1878 = vcmp.eq.f32.partialorder %v1492, %v1737
    %vm1879 = vcmp.eq.f32.partialorder %v1493, %v1739
    %vm1880 = vcmp.eq.f32.partialorder %v1494, %v1741
    %vm1881 = vcmp.eq.f32.partialorder %v1495, %v1743
    %vm1882 = vcmp.eq.f32.partialorder %v1496, %v1745
    %vm1883 = vcmp.eq.f32.partialorder %v1497, %v1747
    %vm1884 = vcmp.eq.f32.partialorder %v1498, %v1749
    %vm1885 = vcmp.eq.f32.partialorder %v1499, %v1751
    %vm1886 = vcmp.eq.f32.partialorder %v1500, %v1753
    %vm1887 = vcmp.eq.f32.partialorder %v1501, %v1755
    %vm1888 = vcmp.eq.f32.partialorder %v1502, %v1757
    %vm1889 = vcmp.eq.f32.partialorder %v1503, %v1759
    %v1890 = vsel %vm1762, %v1761, 128
    %v1891 = vsel %vm1763, %v1761, 128
    %v1892 = vsel %vm1764, %v1761, 128
    %v1893 = vsel %vm1765, %v1761, 128
    %v1894 = vsel %vm1766, %v1761, 128
    %v1895 = vsel %vm1767, %v1761, 128
    %v1896 = vsel %vm1768, %v1761, 128
    %v1897 = vsel %vm1769, %v1761, 128
    %v1898 = vsel %vm1770, %v1761, 128
    %v1899 = vsel %vm1771, %v1761, 128
    %v1900 = vsel %vm1772, %v1761, 128
    %v1901 = vsel %vm1773, %v1761, 128
    %v1902 = vsel %vm1774, %v1761, 128
    %v1903 = vsel %vm1775, %v1761, 128
    %v1904 = vsel %vm1776, %v1761, 128
    %v1905 = vsel %vm1777, %v1761, 128
    %v1906 = vsel %vm1778, %v1761, 128
    %v1907 = vsel %vm1779, %v1761, 128
    %v1908 = vsel %vm1780, %v1761, 128
    %v1909 = vsel %vm1781, %v1761, 128
    %v1910 = vsel %vm1782, %v1761, 128
    %v1911 = vsel %vm1783, %v1761, 128
    %v1912 = vsel %vm1784, %v1761, 128
    %v1913 = vsel %vm1785, %v1761, 128
    %v1914 = vsel %vm1786, %v1761, 128
    %v1915 = vsel %vm1787, %v1761, 128
    %v1916 = vsel %vm1788, %v1761, 128
    %v1917 = vsel %vm1789, %v1761, 128
    %v1918 = vsel %vm1790, %v1761, 128
    %v1919 = vsel %vm1791, %v1761, 128
    %v1920 = vsel %vm1792, %v1761, 128
    %v1921 = vsel %vm1793, %v1761, 128
    %v1922 = vsel %vm1794, %v1761, 128
    %v1923 = vsel %vm1795, %v1761, 128
    %v1924 = vsel %vm1796, %v1761, 128
    %v1925 = vsel %vm1797, %v1761, 128
    %v1926 = vsel %vm1798, %v1761, 128
    %v1927 = vsel %vm1799, %v1761, 128
    %v1928 = vsel %vm1800, %v1761, 128
    %v1929 = vsel %vm1801, %v1761, 128
    %v1930 = vsel %vm1802, %v1761, 128
    %v1931 = vsel %vm1803, %v1761, 128
    %v1932 = vsel %vm1804, %v1761, 128
    %v1933 = vsel %vm1805, %v1761, 128
    %v1934 = vsel %vm1806, %v1761, 128
    %v1935 = vsel %vm1807, %v1761, 128
    %v1936 = vsel %vm1808, %v1761, 128
    %v1937 = vsel %vm1809, %v1761, 128
    %v1938 = vsel %vm1810, %v1761, 128
    %v1939 = vsel %vm1811, %v1761, 128
    %v1940 = vsel %vm1812, %v1761, 128
    %v1941 = vsel %vm1813, %v1761, 128
    %v1942 = vsel %vm1814, %v1761, 128
    %v1943 = vsel %vm1815, %v1761, 128
    %v1944 = vsel %vm1816, %v1761, 128
    %v1945 = vsel %vm1817, %v1761, 128
    %v1946 = vsel %vm1818, %v1761, 128
    %v1947 = vsel %vm1819, %v1761, 128
    %v1948 = vsel %vm1820, %v1761, 128
    %v1949 = vsel %vm1821, %v1761, 128
    %v1950 = vsel %vm1822, %v1761, 128
    %v1951 = vsel %vm1823, %v1761, 128
    %v1952 = vsel %vm1824, %v1761, 128
    %v1953 = vsel %vm1825, %v1761, 128
    %v1954 = vsel %vm1826, %v1761, 128
    %v1955 = vsel %vm1827, %v1761, 128
    %v1956 = vsel %vm1828, %v1761, 128
    %v1957 = vsel %vm1829, %v1761, 128
    %v1958 = vsel %vm1830, %v1761, 128
    %v1959 = vsel %vm1831, %v1761, 128
    %v1960 = vsel %vm1832, %v1761, 128
    %v1961 = vsel %vm1833, %v1761, 128
    %v1962 = vsel %vm1834, %v1761, 128
    %v1963 = vsel %vm1835, %v1761, 128
    %v1964 = vsel %vm1836, %v1761, 128
    %v1965 = vsel %vm1837, %v1761, 128
    %v1966 = vsel %vm1838, %v1761, 128
    %v1967 = vsel %vm1839, %v1761, 128
    %v1968 = vsel %vm1840, %v1761, 128
    %v1969 = vsel %vm1841, %v1761, 128
    %v1970 = vsel %vm1842, %v1761, 128
    %v1971 = vsel %vm1843, %v1761, 128
    %v1972 = vsel %vm1844, %v1761, 128
    %v1973 = vsel %vm1845, %v1761, 128
    %v1974 = vsel %vm1846, %v1761, 128
    %v1975 = vsel %vm1847, %v1761, 128
    %v1976 = vsel %vm1848, %v1761, 128
    %v1977 = vsel %vm1849, %v1761, 128
    %v1978 = vsel %vm1850, %v1761, 128
    %v1979 = vsel %vm1851, %v1761, 128
    %v1980 = vsel %vm1852, %v1761, 128
    %v1981 = vsel %vm1853, %v1761, 128
    %v1982 = vsel %vm1854, %v1761, 128
    %v1983 = vsel %vm1855, %v1761, 128
    %v1984 = vsel %vm1856, %v1761, 128
    %v1985 = vsel %vm1857, %v1761, 128
    %v1986 = vsel %vm1858, %v1761, 128
    %v1987 = vsel %vm1859, %v1761, 128
    %v1988 = vsel %vm1860, %v1761, 128
    %v1989 = vsel %vm1861, %v1761, 128
    %v1990 = vsel %vm1862, %v1761, 128
    %v1991 = vsel %vm1863, %v1761, 128
    %v1992 = vsel %vm1864, %v1761, 128
    %v1993 = vsel %vm1865, %v1761, 128
    %v1994 = vsel %vm1866, %v1761, 128
    %v1995 = vsel %vm1867, %v1761, 128
    %v1996 = vsel %vm1868, %v1761, 128
    %v1997 = vsel %vm1869, %v1761, 128
    %v1998 = vsel %vm1870, %v1761, 128
    %v1999 = vsel %vm1871, %v1761, 128
    %v2000 = vsel %vm1872, %v1761, 128
    %v2001 = vsel %vm1873, %v1761, 128
    %v2002 = vsel %vm1874, %v1761, 128
    %v2003 = vsel %vm1875, %v1761, 128
    %v2004 = vsel %vm1876, %v1761, 128
    %v2005 = vsel %vm1877, %v1761, 128
    %v2006 = vsel %vm1878, %v1761, 128
    %v2007 = vsel %vm1879, %v1761, 128
    %v2008 = vsel %vm1880, %v1761, 128
    %v2009 = vsel %vm1881, %v1761, 128
    %v2010 = vsel %vm1882, %v1761, 128
    %v2011 = vsel %vm1883, %v1761, 128
    %v2012 = vsel %vm1884, %v1761, 128
    %v2013 = vsel %vm1885, %v1761, 128
    %v2014 = vsel %vm1886, %v1761, 128
    %v2015 = vsel %vm1887, %v1761, 128
    %v2016 = vsel %vm1888, %v1761, 128
    %v2017 = vsel %vm1889, %v1761, 128
    %v2018 = vand.u32 %v1890, 65535
    %v2019 = vshra.s32 %v1890, 16
    %v2020 = vcvt.s32.f32 %v2018
    %v2021 = vcvt.s32.f32 %v2019
    %2022 = vmin.xlane.f32.xlu0 %v2021
    %v2023 = vpop.xlane.xlu0 %2022
    %vm2024 = vcmp.eq.f32.partialorder %v2021, %v2023
    %v2025 = vsel %vm2024, %v2020, inf
    %2026 = vmin.xlane.f32.xlu0 %v2025
    %v2027 = vpop.xlane.xlu0 %2026
    %v2028 = vcvt.f32.s32 %v2027
    %v2029 = vcvt.f32.s32 %v2023
    %v2030 = vshll.u32 %v2029, 16
    %v2031 = vadd.s32 %v2030, %v2028
    %v2032 = vand.u32 %v1891, 65535
    %v2033 = vshra.s32 %v1891, 16
    %v2034 = vcvt.s32.f32 %v2032
    %v2035 = vcvt.s32.f32 %v2033
    %2036 = vmin.xlane.f32.xlu0 %v2035
    %v2037 = vpop.xlane.xlu0 %2036
    %vm2038 = vcmp.eq.f32.partialorder %v2035, %v2037
    %v2039 = vsel %vm2038, %v2034, inf
    %2040 = vmin.xlane.f32.xlu0 %v2039
    %v2041 = vpop.xlane.xlu0 %2040
    %v2042 = vcvt.f32.s32 %v2041
    %v2043 = vcvt.f32.s32 %v2037
    %v2044 = vshll.u32 %v2043, 16
    %v2045 = vadd.s32 %v2044, %v2042
    %v2046 = vand.u32 %v1892, 65535
    %v2047 = vshra.s32 %v1892, 16
    %v2048 = vcvt.s32.f32 %v2046
    %v2049 = vcvt.s32.f32 %v2047
    %2050 = vmin.xlane.f32.xlu0 %v2049
    %v2051 = vpop.xlane.xlu0 %2050
    %vm2052 = vcmp.eq.f32.partialorder %v2049, %v2051
    %v2053 = vsel %vm2052, %v2048, inf
    %2054 = vmin.xlane.f32.xlu0 %v2053
    %v2055 = vpop.xlane.xlu0 %2054
    %v2056 = vcvt.f32.s32 %v2055
    %v2057 = vcvt.f32.s32 %v2051
    %v2058 = vshll.u32 %v2057, 16
    %v2059 = vadd.s32 %v2058, %v2056
    %v2060 = vand.u32 %v1893, 65535
    %v2061 = vshra.s32 %v1893, 16
    %v2062 = vcvt.s32.f32 %v2060
    %v2063 = vcvt.s32.f32 %v2061
    %2064 = vmin.xlane.f32.xlu0 %v2063
    %v2065 = vpop.xlane.xlu0 %2064
    %vm2066 = vcmp.eq.f32.partialorder %v2063, %v2065
    %v2067 = vsel %vm2066, %v2062, inf
    %2068 = vmin.xlane.f32.xlu0 %v2067
    %v2069 = vpop.xlane.xlu0 %2068
    %v2070 = vcvt.f32.s32 %v2069
    %v2071 = vcvt.f32.s32 %v2065
    %v2072 = vshll.u32 %v2071, 16
    %v2073 = vadd.s32 %v2072, %v2070
    %v2074 = vand.u32 %v1894, 65535
    %v2075 = vshra.s32 %v1894, 16
    %v2076 = vcvt.s32.f32 %v2074
    %v2077 = vcvt.s32.f32 %v2075
    %2078 = vmin.xlane.f32.xlu0 %v2077
    %v2079 = vpop.xlane.xlu0 %2078
    %vm2080 = vcmp.eq.f32.partialorder %v2077, %v2079
    %v2081 = vsel %vm2080, %v2076, inf
    %2082 = vmin.xlane.f32.xlu0 %v2081
    %v2083 = vpop.xlane.xlu0 %2082
    %v2084 = vcvt.f32.s32 %v2083
    %v2085 = vcvt.f32.s32 %v2079
    %v2086 = vshll.u32 %v2085, 16
    %v2087 = vadd.s32 %v2086, %v2084
    %v2088 = vand.u32 %v1895, 65535
    %v2089 = vshra.s32 %v1895, 16
    %v2090 = vcvt.s32.f32 %v2088
    %v2091 = vcvt.s32.f32 %v2089
    %2092 = vmin.xlane.f32.xlu0 %v2091
    %v2093 = vpop.xlane.xlu0 %2092
    %vm2094 = vcmp.eq.f32.partialorder %v2091, %v2093
    %v2095 = vsel %vm2094, %v2090, inf
    %2096 = vmin.xlane.f32.xlu0 %v2095
    %v2097 = vpop.xlane.xlu0 %2096
    %v2098 = vcvt.f32.s32 %v2097
    %v2099 = vcvt.f32.s32 %v2093
    %v2100 = vshll.u32 %v2099, 16
    %v2101 = vadd.s32 %v2100, %v2098
    %v2102 = vand.u32 %v1896, 65535
    %v2103 = vshra.s32 %v1896, 16
    %v2104 = vcvt.s32.f32 %v2102
    %v2105 = vcvt.s32.f32 %v2103
    %2106 = vmin.xlane.f32.xlu0 %v2105
    %v2107 = vpop.xlane.xlu0 %2106
    %vm2108 = vcmp.eq.f32.partialorder %v2105, %v2107
    %v2109 = vsel %vm2108, %v2104, inf
    %2110 = vmin.xlane.f32.xlu0 %v2109
    %v2111 = vpop.xlane.xlu0 %2110
    %v2112 = vcvt.f32.s32 %v2111
    %v2113 = vcvt.f32.s32 %v2107
    %v2114 = vshll.u32 %v2113, 16
    %v2115 = vadd.s32 %v2114, %v2112
    %v2116 = vand.u32 %v1897, 65535
    %v2117 = vshra.s32 %v1897, 16
    %v2118 = vcvt.s32.f32 %v2116
    %v2119 = vcvt.s32.f32 %v2117
    %2120 = vmin.xlane.f32.xlu0 %v2119
    %v2121 = vpop.xlane.xlu0 %2120
    %vm2122 = vcmp.eq.f32.partialorder %v2119, %v2121
    %v2123 = vsel %vm2122, %v2118, inf
    %2124 = vmin.xlane.f32.xlu0 %v2123
    %v2125 = vpop.xlane.xlu0 %2124
    %v2126 = vcvt.f32.s32 %v2125
    %v2127 = vcvt.f32.s32 %v2121
    %v2128 = vshll.u32 %v2127, 16
    %v2129 = vadd.s32 %v2128, %v2126
    %v2130 = vand.u32 %v1898, 65535
    %v2131 = vshra.s32 %v1898, 16
    %v2132 = vcvt.s32.f32 %v2130
    %v2133 = vcvt.s32.f32 %v2131
    %2134 = vmin.xlane.f32.xlu0 %v2133
    %v2135 = vpop.xlane.xlu0 %2134
    %vm2136 = vcmp.eq.f32.partialorder %v2133, %v2135
    %v2137 = vsel %vm2136, %v2132, inf
    %2138 = vmin.xlane.f32.xlu0 %v2137
    %v2139 = vpop.xlane.xlu0 %2138
    %v2140 = vcvt.f32.s32 %v2139
    %v2141 = vcvt.f32.s32 %v2135
    %v2142 = vshll.u32 %v2141, 16
    %v2143 = vadd.s32 %v2142, %v2140
    %v2144 = vand.u32 %v1899, 65535
    %v2145 = vshra.s32 %v1899, 16
    %v2146 = vcvt.s32.f32 %v2144
    %v2147 = vcvt.s32.f32 %v2145
    %2148 = vmin.xlane.f32.xlu0 %v2147
    %v2149 = vpop.xlane.xlu0 %2148
    %vm2150 = vcmp.eq.f32.partialorder %v2147, %v2149
    %v2151 = vsel %vm2150, %v2146, inf
    %2152 = vmin.xlane.f32.xlu0 %v2151
    %v2153 = vpop.xlane.xlu0 %2152
    %v2154 = vcvt.f32.s32 %v2153
    %v2155 = vcvt.f32.s32 %v2149
    %v2156 = vshll.u32 %v2155, 16
    %v2157 = vadd.s32 %v2156, %v2154
    %v2158 = vand.u32 %v1900, 65535
    %v2159 = vshra.s32 %v1900, 16
    %v2160 = vcvt.s32.f32 %v2158
    %v2161 = vcvt.s32.f32 %v2159
    %2162 = vmin.xlane.f32.xlu0 %v2161
    %v2163 = vpop.xlane.xlu0 %2162
    %vm2164 = vcmp.eq.f32.partialorder %v2161, %v2163
    %v2165 = vsel %vm2164, %v2160, inf
    %2166 = vmin.xlane.f32.xlu0 %v2165
    %v2167 = vpop.xlane.xlu0 %2166
    %v2168 = vcvt.f32.s32 %v2167
    %v2169 = vcvt.f32.s32 %v2163
    %v2170 = vshll.u32 %v2169, 16
    %v2171 = vadd.s32 %v2170, %v2168
    %v2172 = vand.u32 %v1901, 65535
    %v2173 = vshra.s32 %v1901, 16
    %v2174 = vcvt.s32.f32 %v2172
    %v2175 = vcvt.s32.f32 %v2173
    %2176 = vmin.xlane.f32.xlu0 %v2175
    %v2177 = vpop.xlane.xlu0 %2176
    %vm2178 = vcmp.eq.f32.partialorder %v2175, %v2177
    %v2179 = vsel %vm2178, %v2174, inf
    %2180 = vmin.xlane.f32.xlu0 %v2179
    %v2181 = vpop.xlane.xlu0 %2180
    %v2182 = vcvt.f32.s32 %v2181
    %v2183 = vcvt.f32.s32 %v2177
    %v2184 = vshll.u32 %v2183, 16
    %v2185 = vadd.s32 %v2184, %v2182
    %v2186 = vand.u32 %v1902, 65535
    %v2187 = vshra.s32 %v1902, 16
    %v2188 = vcvt.s32.f32 %v2186
    %v2189 = vcvt.s32.f32 %v2187
    %2190 = vmin.xlane.f32.xlu0 %v2189
    %v2191 = vpop.xlane.xlu0 %2190
    %vm2192 = vcmp.eq.f32.partialorder %v2189, %v2191
    %v2193 = vsel %vm2192, %v2188, inf
    %2194 = vmin.xlane.f32.xlu0 %v2193
    %v2195 = vpop.xlane.xlu0 %2194
    %v2196 = vcvt.f32.s32 %v2195
    %v2197 = vcvt.f32.s32 %v2191
    %v2198 = vshll.u32 %v2197, 16
    %v2199 = vadd.s32 %v2198, %v2196
    %v2200 = vand.u32 %v1903, 65535
    %v2201 = vshra.s32 %v1903, 16
    %v2202 = vcvt.s32.f32 %v2200
    %v2203 = vcvt.s32.f32 %v2201
    %2204 = vmin.xlane.f32.xlu0 %v2203
    %v2205 = vpop.xlane.xlu0 %2204
    %vm2206 = vcmp.eq.f32.partialorder %v2203, %v2205
    %v2207 = vsel %vm2206, %v2202, inf
    %2208 = vmin.xlane.f32.xlu0 %v2207
    %v2209 = vpop.xlane.xlu0 %2208
    %v2210 = vcvt.f32.s32 %v2209
    %v2211 = vcvt.f32.s32 %v2205
    %v2212 = vshll.u32 %v2211, 16
    %v2213 = vadd.s32 %v2212, %v2210
    %v2214 = vand.u32 %v1904, 65535
    %v2215 = vshra.s32 %v1904, 16
    %v2216 = vcvt.s32.f32 %v2214
    %v2217 = vcvt.s32.f32 %v2215
    %2218 = vmin.xlane.f32.xlu0 %v2217
    %v2219 = vpop.xlane.xlu0 %2218
    %vm2220 = vcmp.eq.f32.partialorder %v2217, %v2219
    %v2221 = vsel %vm2220, %v2216, inf
    %2222 = vmin.xlane.f32.xlu0 %v2221
    %v2223 = vpop.xlane.xlu0 %2222
    %v2224 = vcvt.f32.s32 %v2223
    %v2225 = vcvt.f32.s32 %v2219
    %v2226 = vshll.u32 %v2225, 16
    %v2227 = vadd.s32 %v2226, %v2224
    %v2228 = vand.u32 %v1905, 65535
    %v2229 = vshra.s32 %v1905, 16
    %v2230 = vcvt.s32.f32 %v2228
    %v2231 = vcvt.s32.f32 %v2229
    %2232 = vmin.xlane.f32.xlu0 %v2231
    %v2233 = vpop.xlane.xlu0 %2232
    %vm2234 = vcmp.eq.f32.partialorder %v2231, %v2233
    %v2235 = vsel %vm2234, %v2230, inf
    %2236 = vmin.xlane.f32.xlu0 %v2235
    %v2237 = vpop.xlane.xlu0 %2236
    %v2238 = vcvt.f32.s32 %v2237
    %v2239 = vcvt.f32.s32 %v2233
    %v2240 = vshll.u32 %v2239, 16
    %v2241 = vadd.s32 %v2240, %v2238
    %v2242 = vand.u32 %v1906, 65535
    %v2243 = vshra.s32 %v1906, 16
    %v2244 = vcvt.s32.f32 %v2242
    %v2245 = vcvt.s32.f32 %v2243
    %2246 = vmin.xlane.f32.xlu0 %v2245
    %v2247 = vpop.xlane.xlu0 %2246
    %vm2248 = vcmp.eq.f32.partialorder %v2245, %v2247
    %v2249 = vsel %vm2248, %v2244, inf
    %2250 = vmin.xlane.f32.xlu0 %v2249
    %v2251 = vpop.xlane.xlu0 %2250
    %v2252 = vcvt.f32.s32 %v2251
    %v2253 = vcvt.f32.s32 %v2247
    %v2254 = vshll.u32 %v2253, 16
    %v2255 = vadd.s32 %v2254, %v2252
    %v2256 = vand.u32 %v1907, 65535
    %v2257 = vshra.s32 %v1907, 16
    %v2258 = vcvt.s32.f32 %v2256
    %v2259 = vcvt.s32.f32 %v2257
    %2260 = vmin.xlane.f32.xlu0 %v2259
    %v2261 = vpop.xlane.xlu0 %2260
    %vm2262 = vcmp.eq.f32.partialorder %v2259, %v2261
    %v2263 = vsel %vm2262, %v2258, inf
    %2264 = vmin.xlane.f32.xlu0 %v2263
    %v2265 = vpop.xlane.xlu0 %2264
    %v2266 = vcvt.f32.s32 %v2265
    %v2267 = vcvt.f32.s32 %v2261
    %v2268 = vshll.u32 %v2267, 16
    %v2269 = vadd.s32 %v2268, %v2266
    %v2270 = vand.u32 %v1908, 65535
    %v2271 = vshra.s32 %v1908, 16
    %v2272 = vcvt.s32.f32 %v2270
    %v2273 = vcvt.s32.f32 %v2271
    %2274 = vmin.xlane.f32.xlu0 %v2273
    %v2275 = vpop.xlane.xlu0 %2274
    %vm2276 = vcmp.eq.f32.partialorder %v2273, %v2275
    %v2277 = vsel %vm2276, %v2272, inf
    %2278 = vmin.xlane.f32.xlu0 %v2277
    %v2279 = vpop.xlane.xlu0 %2278
    %v2280 = vcvt.f32.s32 %v2279
    %v2281 = vcvt.f32.s32 %v2275
    %v2282 = vshll.u32 %v2281, 16
    %v2283 = vadd.s32 %v2282, %v2280
    %v2284 = vand.u32 %v1909, 65535
    %v2285 = vshra.s32 %v1909, 16
    %v2286 = vcvt.s32.f32 %v2284
    %v2287 = vcvt.s32.f32 %v2285
    %2288 = vmin.xlane.f32.xlu0 %v2287
    %v2289 = vpop.xlane.xlu0 %2288
    %vm2290 = vcmp.eq.f32.partialorder %v2287, %v2289
    %v2291 = vsel %vm2290, %v2286, inf
    %2292 = vmin.xlane.f32.xlu0 %v2291
    %v2293 = vpop.xlane.xlu0 %2292
    %v2294 = vcvt.f32.s32 %v2293
    %v2295 = vcvt.f32.s32 %v2289
    %v2296 = vshll.u32 %v2295, 16
    %v2297 = vadd.s32 %v2296, %v2294
    %v2298 = vand.u32 %v1910, 65535
    %v2299 = vshra.s32 %v1910, 16
    %v2300 = vcvt.s32.f32 %v2298
    %v2301 = vcvt.s32.f32 %v2299
    %2302 = vmin.xlane.f32.xlu0 %v2301
    %v2303 = vpop.xlane.xlu0 %2302
    %vm2304 = vcmp.eq.f32.partialorder %v2301, %v2303
    %v2305 = vsel %vm2304, %v2300, inf
    %2306 = vmin.xlane.f32.xlu0 %v2305
    %v2307 = vpop.xlane.xlu0 %2306
    %v2308 = vcvt.f32.s32 %v2307
    %v2309 = vcvt.f32.s32 %v2303
    %v2310 = vshll.u32 %v2309, 16
    %v2311 = vadd.s32 %v2310, %v2308
    %v2312 = vand.u32 %v1911, 65535
    %v2313 = vshra.s32 %v1911, 16
    %v2314 = vcvt.s32.f32 %v2312
    %v2315 = vcvt.s32.f32 %v2313
    %2316 = vmin.xlane.f32.xlu0 %v2315
    %v2317 = vpop.xlane.xlu0 %2316
    %vm2318 = vcmp.eq.f32.partialorder %v2315, %v2317
    %v2319 = vsel %vm2318, %v2314, inf
    %2320 = vmin.xlane.f32.xlu0 %v2319
    %v2321 = vpop.xlane.xlu0 %2320
    %v2322 = vcvt.f32.s32 %v2321
    %v2323 = vcvt.f32.s32 %v2317
    %v2324 = vshll.u32 %v2323, 16
    %v2325 = vadd.s32 %v2324, %v2322
    %v2326 = vand.u32 %v1912, 65535
    %v2327 = vshra.s32 %v1912, 16
    %v2328 = vcvt.s32.f32 %v2326
    %v2329 = vcvt.s32.f32 %v2327
    %2330 = vmin.xlane.f32.xlu0 %v2329
    %v2331 = vpop.xlane.xlu0 %2330
    %vm2332 = vcmp.eq.f32.partialorder %v2329, %v2331
    %v2333 = vsel %vm2332, %v2328, inf
    %2334 = vmin.xlane.f32.xlu0 %v2333
    %v2335 = vpop.xlane.xlu0 %2334
    %v2336 = vcvt.f32.s32 %v2335
    %v2337 = vcvt.f32.s32 %v2331
    %v2338 = vshll.u32 %v2337, 16
    %v2339 = vadd.s32 %v2338, %v2336
    %v2340 = vand.u32 %v1913, 65535
    %v2341 = vshra.s32 %v1913, 16
    %v2342 = vcvt.s32.f32 %v2340
    %v2343 = vcvt.s32.f32 %v2341
    %2344 = vmin.xlane.f32.xlu0 %v2343
    %v2345 = vpop.xlane.xlu0 %2344
    %vm2346 = vcmp.eq.f32.partialorder %v2343, %v2345
    %v2347 = vsel %vm2346, %v2342, inf
    %2348 = vmin.xlane.f32.xlu0 %v2347
    %v2349 = vpop.xlane.xlu0 %2348
    %v2350 = vcvt.f32.s32 %v2349
    %v2351 = vcvt.f32.s32 %v2345
    %v2352 = vshll.u32 %v2351, 16
    %v2353 = vadd.s32 %v2352, %v2350
    %v2354 = vand.u32 %v1914, 65535
    %v2355 = vshra.s32 %v1914, 16
    %v2356 = vcvt.s32.f32 %v2354
    %v2357 = vcvt.s32.f32 %v2355
    %2358 = vmin.xlane.f32.xlu0 %v2357
    %v2359 = vpop.xlane.xlu0 %2358
    %vm2360 = vcmp.eq.f32.partialorder %v2357, %v2359
    %v2361 = vsel %vm2360, %v2356, inf
    %2362 = vmin.xlane.f32.xlu0 %v2361
    %v2363 = vpop.xlane.xlu0 %2362
    %v2364 = vcvt.f32.s32 %v2363
    %v2365 = vcvt.f32.s32 %v2359
    %v2366 = vshll.u32 %v2365, 16
    %v2367 = vadd.s32 %v2366, %v2364
    %v2368 = vand.u32 %v1915, 65535
    %v2369 = vshra.s32 %v1915, 16
    %v2370 = vcvt.s32.f32 %v2368
    %v2371 = vcvt.s32.f32 %v2369
    %2372 = vmin.xlane.f32.xlu0 %v2371
    %v2373 = vpop.xlane.xlu0 %2372
    %vm2374 = vcmp.eq.f32.partialorder %v2371, %v2373
    %v2375 = vsel %vm2374, %v2370, inf
    %2376 = vmin.xlane.f32.xlu0 %v2375
    %v2377 = vpop.xlane.xlu0 %2376
    %v2378 = vcvt.f32.s32 %v2377
    %v2379 = vcvt.f32.s32 %v2373
    %v2380 = vshll.u32 %v2379, 16
    %v2381 = vadd.s32 %v2380, %v2378
    %v2382 = vand.u32 %v1916, 65535
    %v2383 = vshra.s32 %v1916, 16
    %v2384 = vcvt.s32.f32 %v2382
    %v2385 = vcvt.s32.f32 %v2383
    %2386 = vmin.xlane.f32.xlu0 %v2385
    %v2387 = vpop.xlane.xlu0 %2386
    %vm2388 = vcmp.eq.f32.partialorder %v2385, %v2387
    %v2389 = vsel %vm2388, %v2384, inf
    %2390 = vmin.xlane.f32.xlu0 %v2389
    %v2391 = vpop.xlane.xlu0 %2390
    %v2392 = vcvt.f32.s32 %v2391
    %v2393 = vcvt.f32.s32 %v2387
    %v2394 = vshll.u32 %v2393, 16
    %v2395 = vadd.s32 %v2394, %v2392
    %v2396 = vand.u32 %v1917, 65535
    %v2397 = vshra.s32 %v1917, 16
    %v2398 = vcvt.s32.f32 %v2396
    %v2399 = vcvt.s32.f32 %v2397
    %2400 = vmin.xlane.f32.xlu0 %v2399
    %v2401 = vpop.xlane.xlu0 %2400
    %vm2402 = vcmp.eq.f32.partialorder %v2399, %v2401
    %v2403 = vsel %vm2402, %v2398, inf
    %2404 = vmin.xlane.f32.xlu0 %v2403
    %v2405 = vpop.xlane.xlu0 %2404
    %v2406 = vcvt.f32.s32 %v2405
    %v2407 = vcvt.f32.s32 %v2401
    %v2408 = vshll.u32 %v2407, 16
    %v2409 = vadd.s32 %v2408, %v2406
    %v2410 = vand.u32 %v1918, 65535
    %v2411 = vshra.s32 %v1918, 16
    %v2412 = vcvt.s32.f32 %v2410
    %v2413 = vcvt.s32.f32 %v2411
    %2414 = vmin.xlane.f32.xlu0 %v2413
    %v2415 = vpop.xlane.xlu0 %2414
    %vm2416 = vcmp.eq.f32.partialorder %v2413, %v2415
    %v2417 = vsel %vm2416, %v2412, inf
    %2418 = vmin.xlane.f32.xlu0 %v2417
    %v2419 = vpop.xlane.xlu0 %2418
    %v2420 = vcvt.f32.s32 %v2419
    %v2421 = vcvt.f32.s32 %v2415
    %v2422 = vshll.u32 %v2421, 16
    %v2423 = vadd.s32 %v2422, %v2420
    %v2424 = vand.u32 %v1919, 65535
    %v2425 = vshra.s32 %v1919, 16
    %v2426 = vcvt.s32.f32 %v2424
    %v2427 = vcvt.s32.f32 %v2425
    %2428 = vmin.xlane.f32.xlu0 %v2427
    %v2429 = vpop.xlane.xlu0 %2428
    %vm2430 = vcmp.eq.f32.partialorder %v2427, %v2429
    %v2431 = vsel %vm2430, %v2426, inf
    %2432 = vmin.xlane.f32.xlu0 %v2431
    %v2433 = vpop.xlane.xlu0 %2432
    %v2434 = vcvt.f32.s32 %v2433
    %v2435 = vcvt.f32.s32 %v2429
    %v2436 = vshll.u32 %v2435, 16
    %v2437 = vadd.s32 %v2436, %v2434
    %v2438 = vand.u32 %v1920, 65535
    %v2439 = vshra.s32 %v1920, 16
    %v2440 = vcvt.s32.f32 %v2438
    %v2441 = vcvt.s32.f32 %v2439
    %2442 = vmin.xlane.f32.xlu0 %v2441
    %v2443 = vpop.xlane.xlu0 %2442
    %vm2444 = vcmp.eq.f32.partialorder %v2441, %v2443
    %v2445 = vsel %vm2444, %v2440, inf
    %2446 = vmin.xlane.f32.xlu0 %v2445
    %v2447 = vpop.xlane.xlu0 %2446
    %v2448 = vcvt.f32.s32 %v2447
    %v2449 = vcvt.f32.s32 %v2443
    %v2450 = vshll.u32 %v2449, 16
    %v2451 = vadd.s32 %v2450, %v2448
    %v2452 = vand.u32 %v1921, 65535
    %v2453 = vshra.s32 %v1921, 16
    %v2454 = vcvt.s32.f32 %v2452
    %v2455 = vcvt.s32.f32 %v2453
    %2456 = vmin.xlane.f32.xlu0 %v2455
    %v2457 = vpop.xlane.xlu0 %2456
    %vm2458 = vcmp.eq.f32.partialorder %v2455, %v2457
    %v2459 = vsel %vm2458, %v2454, inf
    %2460 = vmin.xlane.f32.xlu0 %v2459
    %v2461 = vpop.xlane.xlu0 %2460
    %v2462 = vcvt.f32.s32 %v2461
    %v2463 = vcvt.f32.s32 %v2457
    %v2464 = vshll.u32 %v2463, 16
    %v2465 = vadd.s32 %v2464, %v2462
    %v2466 = vand.u32 %v1922, 65535
    %v2467 = vshra.s32 %v1922, 16
    %v2468 = vcvt.s32.f32 %v2466
    %v2469 = vcvt.s32.f32 %v2467
    %2470 = vmin.xlane.f32.xlu0 %v2469
    %v2471 = vpop.xlane.xlu0 %2470
    %vm2472 = vcmp.eq.f32.partialorder %v2469, %v2471
    %v2473 = vsel %vm2472, %v2468, inf
    %2474 = vmin.xlane.f32.xlu0 %v2473
    %v2475 = vpop.xlane.xlu0 %2474
    %v2476 = vcvt.f32.s32 %v2475
    %v2477 = vcvt.f32.s32 %v2471
    %v2478 = vshll.u32 %v2477, 16
    %v2479 = vadd.s32 %v2478, %v2476
    %v2480 = vand.u32 %v1923, 65535
    %v2481 = vshra.s32 %v1923, 16
    %v2482 = vcvt.s32.f32 %v2480
    %v2483 = vcvt.s32.f32 %v2481
    %2484 = vmin.xlane.f32.xlu0 %v2483
    %v2485 = vpop.xlane.xlu0 %2484
    %vm2486 = vcmp.eq.f32.partialorder %v2483, %v2485
    %v2487 = vsel %vm2486, %v2482, inf
    %2488 = vmin.xlane.f32.xlu0 %v2487
    %v2489 = vpop.xlane.xlu0 %2488
    %v2490 = vcvt.f32.s32 %v2489
    %v2491 = vcvt.f32.s32 %v2485
    %v2492 = vshll.u32 %v2491, 16
    %v2493 = vadd.s32 %v2492, %v2490
    %v2494 = vand.u32 %v1924, 65535
    %v2495 = vshra.s32 %v1924, 16
    %v2496 = vcvt.s32.f32 %v2494
    %v2497 = vcvt.s32.f32 %v2495
    %2498 = vmin.xlane.f32.xlu0 %v2497
    %v2499 = vpop.xlane.xlu0 %2498
    %vm2500 = vcmp.eq.f32.partialorder %v2497, %v2499
    %v2501 = vsel %vm2500, %v2496, inf
    %2502 = vmin.xlane.f32.xlu0 %v2501
    %v2503 = vpop.xlane.xlu0 %2502
    %v2504 = vcvt.f32.s32 %v2503
    %v2505 = vcvt.f32.s32 %v2499
    %v2506 = vshll.u32 %v2505, 16
    %v2507 = vadd.s32 %v2506, %v2504
    %v2508 = vand.u32 %v1925, 65535
    %v2509 = vshra.s32 %v1925, 16
    %v2510 = vcvt.s32.f32 %v2508
    %v2511 = vcvt.s32.f32 %v2509
    %2512 = vmin.xlane.f32.xlu0 %v2511
    %v2513 = vpop.xlane.xlu0 %2512
    %vm2514 = vcmp.eq.f32.partialorder %v2511, %v2513
    %v2515 = vsel %vm2514, %v2510, inf
    %2516 = vmin.xlane.f32.xlu0 %v2515
    %v2517 = vpop.xlane.xlu0 %2516
    %v2518 = vcvt.f32.s32 %v2517
    %v2519 = vcvt.f32.s32 %v2513
    %v2520 = vshll.u32 %v2519, 16
    %v2521 = vadd.s32 %v2520, %v2518
    %v2522 = vand.u32 %v1926, 65535
    %v2523 = vshra.s32 %v1926, 16
    %v2524 = vcvt.s32.f32 %v2522
    %v2525 = vcvt.s32.f32 %v2523
    %2526 = vmin.xlane.f32.xlu0 %v2525
    %v2527 = vpop.xlane.xlu0 %2526
    %vm2528 = vcmp.eq.f32.partialorder %v2525, %v2527
    %v2529 = vsel %vm2528, %v2524, inf
    %2530 = vmin.xlane.f32.xlu0 %v2529
    %v2531 = vpop.xlane.xlu0 %2530
    %v2532 = vcvt.f32.s32 %v2531
    %v2533 = vcvt.f32.s32 %v2527
    %v2534 = vshll.u32 %v2533, 16
    %v2535 = vadd.s32 %v2534, %v2532
    %v2536 = vand.u32 %v1927, 65535
    %v2537 = vshra.s32 %v1927, 16
    %v2538 = vcvt.s32.f32 %v2536
    %v2539 = vcvt.s32.f32 %v2537
    %2540 = vmin.xlane.f32.xlu0 %v2539
    %v2541 = vpop.xlane.xlu0 %2540
    %vm2542 = vcmp.eq.f32.partialorder %v2539, %v2541
    %v2543 = vsel %vm2542, %v2538, inf
    %2544 = vmin.xlane.f32.xlu0 %v2543
    %v2545 = vpop.xlane.xlu0 %2544
    %v2546 = vcvt.f32.s32 %v2545
    %v2547 = vcvt.f32.s32 %v2541
    %v2548 = vshll.u32 %v2547, 16
    %v2549 = vadd.s32 %v2548, %v2546
    %v2550 = vand.u32 %v1928, 65535
    %v2551 = vshra.s32 %v1928, 16
    %v2552 = vcvt.s32.f32 %v2550
    %v2553 = vcvt.s32.f32 %v2551
    %2554 = vmin.xlane.f32.xlu0 %v2553
    %v2555 = vpop.xlane.xlu0 %2554
    %vm2556 = vcmp.eq.f32.partialorder %v2553, %v2555
    %v2557 = vsel %vm2556, %v2552, inf
    %2558 = vmin.xlane.f32.xlu0 %v2557
    %v2559 = vpop.xlane.xlu0 %2558
    %v2560 = vcvt.f32.s32 %v2559
    %v2561 = vcvt.f32.s32 %v2555
    %v2562 = vshll.u32 %v2561, 16
    %v2563 = vadd.s32 %v2562, %v2560
    %v2564 = vand.u32 %v1929, 65535
    %v2565 = vshra.s32 %v1929, 16
    %v2566 = vcvt.s32.f32 %v2564
    %v2567 = vcvt.s32.f32 %v2565
    %2568 = vmin.xlane.f32.xlu0 %v2567
    %v2569 = vpop.xlane.xlu0 %2568
    %vm2570 = vcmp.eq.f32.partialorder %v2567, %v2569
    %v2571 = vsel %vm2570, %v2566, inf
    %2572 = vmin.xlane.f32.xlu0 %v2571
    %v2573 = vpop.xlane.xlu0 %2572
    %v2574 = vcvt.f32.s32 %v2573
    %v2575 = vcvt.f32.s32 %v2569
    %v2576 = vshll.u32 %v2575, 16
    %v2577 = vadd.s32 %v2576, %v2574
    %v2578 = vand.u32 %v1930, 65535
    %v2579 = vshra.s32 %v1930, 16
    %v2580 = vcvt.s32.f32 %v2578
    %v2581 = vcvt.s32.f32 %v2579
    %2582 = vmin.xlane.f32.xlu0 %v2581
    %v2583 = vpop.xlane.xlu0 %2582
    %vm2584 = vcmp.eq.f32.partialorder %v2581, %v2583
    %v2585 = vsel %vm2584, %v2580, inf
    %2586 = vmin.xlane.f32.xlu0 %v2585
    %v2587 = vpop.xlane.xlu0 %2586
    %v2588 = vcvt.f32.s32 %v2587
    %v2589 = vcvt.f32.s32 %v2583
    %v2590 = vshll.u32 %v2589, 16
    %v2591 = vadd.s32 %v2590, %v2588
    %v2592 = vand.u32 %v1931, 65535
    %v2593 = vshra.s32 %v1931, 16
    %v2594 = vcvt.s32.f32 %v2592
    %v2595 = vcvt.s32.f32 %v2593
    %2596 = vmin.xlane.f32.xlu0 %v2595
    %v2597 = vpop.xlane.xlu0 %2596
    %vm2598 = vcmp.eq.f32.partialorder %v2595, %v2597
    %v2599 = vsel %vm2598, %v2594, inf
    %2600 = vmin.xlane.f32.xlu0 %v2599
    %v2601 = vpop.xlane.xlu0 %2600
    %v2602 = vcvt.f32.s32 %v2601
    %v2603 = vcvt.f32.s32 %v2597
    %v2604 = vshll.u32 %v2603, 16
    %v2605 = vadd.s32 %v2604, %v2602
    %v2606 = vand.u32 %v1932, 65535
    %v2607 = vshra.s32 %v1932, 16
    %v2608 = vcvt.s32.f32 %v2606
    %v2609 = vcvt.s32.f32 %v2607
    %2610 = vmin.xlane.f32.xlu0 %v2609
    %v2611 = vpop.xlane.xlu0 %2610
    %vm2612 = vcmp.eq.f32.partialorder %v2609, %v2611
    %v2613 = vsel %vm2612, %v2608, inf
    %2614 = vmin.xlane.f32.xlu0 %v2613
    %v2615 = vpop.xlane.xlu0 %2614
    %v2616 = vcvt.f32.s32 %v2615
    %v2617 = vcvt.f32.s32 %v2611
    %v2618 = vshll.u32 %v2617, 16
    %v2619 = vadd.s32 %v2618, %v2616
    %v2620 = vand.u32 %v1933, 65535
    %v2621 = vshra.s32 %v1933, 16
    %v2622 = vcvt.s32.f32 %v2620
    %v2623 = vcvt.s32.f32 %v2621
    %2624 = vmin.xlane.f32.xlu0 %v2623
    %v2625 = vpop.xlane.xlu0 %2624
    %vm2626 = vcmp.eq.f32.partialorder %v2623, %v2625
    %v2627 = vsel %vm2626, %v2622, inf
    %2628 = vmin.xlane.f32.xlu0 %v2627
    %v2629 = vpop.xlane.xlu0 %2628
    %v2630 = vcvt.f32.s32 %v2629
    %v2631 = vcvt.f32.s32 %v2625
    %v2632 = vshll.u32 %v2631, 16
    %v2633 = vadd.s32 %v2632, %v2630
    %v2634 = vand.u32 %v1934, 65535
    %v2635 = vshra.s32 %v1934, 16
    %v2636 = vcvt.s32.f32 %v2634
    %v2637 = vcvt.s32.f32 %v2635
    %2638 = vmin.xlane.f32.xlu0 %v2637
    %v2639 = vpop.xlane.xlu0 %2638
    %vm2640 = vcmp.eq.f32.partialorder %v2637, %v2639
    %v2641 = vsel %vm2640, %v2636, inf
    %2642 = vmin.xlane.f32.xlu0 %v2641
    %v2643 = vpop.xlane.xlu0 %2642
    %v2644 = vcvt.f32.s32 %v2643
    %v2645 = vcvt.f32.s32 %v2639
    %v2646 = vshll.u32 %v2645, 16
    %v2647 = vadd.s32 %v2646, %v2644
    %v2648 = vand.u32 %v1935, 65535
    %v2649 = vshra.s32 %v1935, 16
    %v2650 = vcvt.s32.f32 %v2648
    %v2651 = vcvt.s32.f32 %v2649
    %2652 = vmin.xlane.f32.xlu0 %v2651
    %v2653 = vpop.xlane.xlu0 %2652
    %vm2654 = vcmp.eq.f32.partialorder %v2651, %v2653
    %v2655 = vsel %vm2654, %v2650, inf
    %2656 = vmin.xlane.f32.xlu0 %v2655
    %v2657 = vpop.xlane.xlu0 %2656
    %v2658 = vcvt.f32.s32 %v2657
    %v2659 = vcvt.f32.s32 %v2653
    %v2660 = vshll.u32 %v2659, 16
    %v2661 = vadd.s32 %v2660, %v2658
    %v2662 = vand.u32 %v1936, 65535
    %v2663 = vshra.s32 %v1936, 16
    %v2664 = vcvt.s32.f32 %v2662
    %v2665 = vcvt.s32.f32 %v2663
    %2666 = vmin.xlane.f32.xlu0 %v2665
    %v2667 = vpop.xlane.xlu0 %2666
    %vm2668 = vcmp.eq.f32.partialorder %v2665, %v2667
    %v2669 = vsel %vm2668, %v2664, inf
    %2670 = vmin.xlane.f32.xlu0 %v2669
    %v2671 = vpop.xlane.xlu0 %2670
    %v2672 = vcvt.f32.s32 %v2671
    %v2673 = vcvt.f32.s32 %v2667
    %v2674 = vshll.u32 %v2673, 16
    %v2675 = vadd.s32 %v2674, %v2672
    %v2676 = vand.u32 %v1937, 65535
    %v2677 = vshra.s32 %v1937, 16
    %v2678 = vcvt.s32.f32 %v2676
    %v2679 = vcvt.s32.f32 %v2677
    %2680 = vmin.xlane.f32.xlu0 %v2679
    %v2681 = vpop.xlane.xlu0 %2680
    %vm2682 = vcmp.eq.f32.partialorder %v2679, %v2681
    %v2683 = vsel %vm2682, %v2678, inf
    %2684 = vmin.xlane.f32.xlu0 %v2683
    %v2685 = vpop.xlane.xlu0 %2684
    %v2686 = vcvt.f32.s32 %v2685
    %v2687 = vcvt.f32.s32 %v2681
    %v2688 = vshll.u32 %v2687, 16
    %v2689 = vadd.s32 %v2688, %v2686
    %v2690 = vand.u32 %v1938, 65535
    %v2691 = vshra.s32 %v1938, 16
    %v2692 = vcvt.s32.f32 %v2690
    %v2693 = vcvt.s32.f32 %v2691
    %2694 = vmin.xlane.f32.xlu0 %v2693
    %v2695 = vpop.xlane.xlu0 %2694
    %vm2696 = vcmp.eq.f32.partialorder %v2693, %v2695
    %v2697 = vsel %vm2696, %v2692, inf
    %2698 = vmin.xlane.f32.xlu0 %v2697
    %v2699 = vpop.xlane.xlu0 %2698
    %v2700 = vcvt.f32.s32 %v2699
    %v2701 = vcvt.f32.s32 %v2695
    %v2702 = vshll.u32 %v2701, 16
    %v2703 = vadd.s32 %v2702, %v2700
    %v2704 = vand.u32 %v1939, 65535
    %v2705 = vshra.s32 %v1939, 16
    %v2706 = vcvt.s32.f32 %v2704
    %v2707 = vcvt.s32.f32 %v2705
    %2708 = vmin.xlane.f32.xlu0 %v2707
    %v2709 = vpop.xlane.xlu0 %2708
    %vm2710 = vcmp.eq.f32.partialorder %v2707, %v2709
    %v2711 = vsel %vm2710, %v2706, inf
    %2712 = vmin.xlane.f32.xlu0 %v2711
    %v2713 = vpop.xlane.xlu0 %2712
    %v2714 = vcvt.f32.s32 %v2713
    %v2715 = vcvt.f32.s32 %v2709
    %v2716 = vshll.u32 %v2715, 16
    %v2717 = vadd.s32 %v2716, %v2714
    %v2718 = vand.u32 %v1940, 65535
    %v2719 = vshra.s32 %v1940, 16
    %v2720 = vcvt.s32.f32 %v2718
    %v2721 = vcvt.s32.f32 %v2719
    %2722 = vmin.xlane.f32.xlu0 %v2721
    %v2723 = vpop.xlane.xlu0 %2722
    %vm2724 = vcmp.eq.f32.partialorder %v2721, %v2723
    %v2725 = vsel %vm2724, %v2720, inf
    %2726 = vmin.xlane.f32.xlu0 %v2725
    %v2727 = vpop.xlane.xlu0 %2726
    %v2728 = vcvt.f32.s32 %v2727
    %v2729 = vcvt.f32.s32 %v2723
    %v2730 = vshll.u32 %v2729, 16
    %v2731 = vadd.s32 %v2730, %v2728
    %v2732 = vand.u32 %v1941, 65535
    %v2733 = vshra.s32 %v1941, 16
    %v2734 = vcvt.s32.f32 %v2732
    %v2735 = vcvt.s32.f32 %v2733
    %2736 = vmin.xlane.f32.xlu0 %v2735
    %v2737 = vpop.xlane.xlu0 %2736
    %vm2738 = vcmp.eq.f32.partialorder %v2735, %v2737
    %v2739 = vsel %vm2738, %v2734, inf
    %2740 = vmin.xlane.f32.xlu0 %v2739
    %v2741 = vpop.xlane.xlu0 %2740
    %v2742 = vcvt.f32.s32 %v2741
    %v2743 = vcvt.f32.s32 %v2737
    %v2744 = vshll.u32 %v2743, 16
    %v2745 = vadd.s32 %v2744, %v2742
    %v2746 = vand.u32 %v1942, 65535
    %v2747 = vshra.s32 %v1942, 16
    %v2748 = vcvt.s32.f32 %v2746
    %v2749 = vcvt.s32.f32 %v2747
    %2750 = vmin.xlane.f32.xlu0 %v2749
    %v2751 = vpop.xlane.xlu0 %2750
    %vm2752 = vcmp.eq.f32.partialorder %v2749, %v2751
    %v2753 = vsel %vm2752, %v2748, inf
    %2754 = vmin.xlane.f32.xlu0 %v2753
    %v2755 = vpop.xlane.xlu0 %2754
    %v2756 = vcvt.f32.s32 %v2755
    %v2757 = vcvt.f32.s32 %v2751
    %v2758 = vshll.u32 %v2757, 16
    %v2759 = vadd.s32 %v2758, %v2756
    %v2760 = vand.u32 %v1943, 65535
    %v2761 = vshra.s32 %v1943, 16
    %v2762 = vcvt.s32.f32 %v2760
    %v2763 = vcvt.s32.f32 %v2761
    %2764 = vmin.xlane.f32.xlu0 %v2763
    %v2765 = vpop.xlane.xlu0 %2764
    %vm2766 = vcmp.eq.f32.partialorder %v2763, %v2765
    %v2767 = vsel %vm2766, %v2762, inf
    %2768 = vmin.xlane.f32.xlu0 %v2767
    %v2769 = vpop.xlane.xlu0 %2768
    %v2770 = vcvt.f32.s32 %v2769
    %v2771 = vcvt.f32.s32 %v2765
    %v2772 = vshll.u32 %v2771, 16
    %v2773 = vadd.s32 %v2772, %v2770
    %v2774 = vand.u32 %v1944, 65535
    %v2775 = vshra.s32 %v1944, 16
    %v2776 = vcvt.s32.f32 %v2774
    %v2777 = vcvt.s32.f32 %v2775
    %2778 = vmin.xlane.f32.xlu0 %v2777
    %v2779 = vpop.xlane.xlu0 %2778
    %vm2780 = vcmp.eq.f32.partialorder %v2777, %v2779
    %v2781 = vsel %vm2780, %v2776, inf
    %2782 = vmin.xlane.f32.xlu0 %v2781
    %v2783 = vpop.xlane.xlu0 %2782
    %v2784 = vcvt.f32.s32 %v2783
    %v2785 = vcvt.f32.s32 %v2779
    %v2786 = vshll.u32 %v2785, 16
    %v2787 = vadd.s32 %v2786, %v2784
    %v2788 = vand.u32 %v1945, 65535
    %v2789 = vshra.s32 %v1945, 16
    %v2790 = vcvt.s32.f32 %v2788
    %v2791 = vcvt.s32.f32 %v2789
    %2792 = vmin.xlane.f32.xlu0 %v2791
    %v2793 = vpop.xlane.xlu0 %2792
    %vm2794 = vcmp.eq.f32.partialorder %v2791, %v2793
    %v2795 = vsel %vm2794, %v2790, inf
    %2796 = vmin.xlane.f32.xlu0 %v2795
    %v2797 = vpop.xlane.xlu0 %2796
    %v2798 = vcvt.f32.s32 %v2797
    %v2799 = vcvt.f32.s32 %v2793
    %v2800 = vshll.u32 %v2799, 16
    %v2801 = vadd.s32 %v2800, %v2798
    %v2802 = vand.u32 %v1946, 65535
    %v2803 = vshra.s32 %v1946, 16
    %v2804 = vcvt.s32.f32 %v2802
    %v2805 = vcvt.s32.f32 %v2803
    %2806 = vmin.xlane.f32.xlu0 %v2805
    %v2807 = vpop.xlane.xlu0 %2806
    %vm2808 = vcmp.eq.f32.partialorder %v2805, %v2807
    %v2809 = vsel %vm2808, %v2804, inf
    %2810 = vmin.xlane.f32.xlu0 %v2809
    %v2811 = vpop.xlane.xlu0 %2810
    %v2812 = vcvt.f32.s32 %v2811
    %v2813 = vcvt.f32.s32 %v2807
    %v2814 = vshll.u32 %v2813, 16
    %v2815 = vadd.s32 %v2814, %v2812
    %v2816 = vand.u32 %v1947, 65535
    %v2817 = vshra.s32 %v1947, 16
    %v2818 = vcvt.s32.f32 %v2816
    %v2819 = vcvt.s32.f32 %v2817
    %2820 = vmin.xlane.f32.xlu0 %v2819
    %v2821 = vpop.xlane.xlu0 %2820
    %vm2822 = vcmp.eq.f32.partialorder %v2819, %v2821
    %v2823 = vsel %vm2822, %v2818, inf
    %2824 = vmin.xlane.f32.xlu0 %v2823
    %v2825 = vpop.xlane.xlu0 %2824
    %v2826 = vcvt.f32.s32 %v2825
    %v2827 = vcvt.f32.s32 %v2821
    %v2828 = vshll.u32 %v2827, 16
    %v2829 = vadd.s32 %v2828, %v2826
    %v2830 = vand.u32 %v1948, 65535
    %v2831 = vshra.s32 %v1948, 16
    %v2832 = vcvt.s32.f32 %v2830
    %v2833 = vcvt.s32.f32 %v2831
    %2834 = vmin.xlane.f32.xlu0 %v2833
    %v2835 = vpop.xlane.xlu0 %2834
    %vm2836 = vcmp.eq.f32.partialorder %v2833, %v2835
    %v2837 = vsel %vm2836, %v2832, inf
    %2838 = vmin.xlane.f32.xlu0 %v2837
    %v2839 = vpop.xlane.xlu0 %2838
    %v2840 = vcvt.f32.s32 %v2839
    %v2841 = vcvt.f32.s32 %v2835
    %v2842 = vshll.u32 %v2841, 16
    %v2843 = vadd.s32 %v2842, %v2840
    %v2844 = vand.u32 %v1949, 65535
    %v2845 = vshra.s32 %v1949, 16
    %v2846 = vcvt.s32.f32 %v2844
    %v2847 = vcvt.s32.f32 %v2845
    %2848 = vmin.xlane.f32.xlu0 %v2847
    %v2849 = vpop.xlane.xlu0 %2848
    %vm2850 = vcmp.eq.f32.partialorder %v2847, %v2849
    %v2851 = vsel %vm2850, %v2846, inf
    %2852 = vmin.xlane.f32.xlu0 %v2851
    %v2853 = vpop.xlane.xlu0 %2852
    %v2854 = vcvt.f32.s32 %v2853
    %v2855 = vcvt.f32.s32 %v2849
    %v2856 = vshll.u32 %v2855, 16
    %v2857 = vadd.s32 %v2856, %v2854
    %v2858 = vand.u32 %v1950, 65535
    %v2859 = vshra.s32 %v1950, 16
    %v2860 = vcvt.s32.f32 %v2858
    %v2861 = vcvt.s32.f32 %v2859
    %2862 = vmin.xlane.f32.xlu0 %v2861
    %v2863 = vpop.xlane.xlu0 %2862
    %vm2864 = vcmp.eq.f32.partialorder %v2861, %v2863
    %v2865 = vsel %vm2864, %v2860, inf
    %2866 = vmin.xlane.f32.xlu0 %v2865
    %v2867 = vpop.xlane.xlu0 %2866
    %v2868 = vcvt.f32.s32 %v2867
    %v2869 = vcvt.f32.s32 %v2863
    %v2870 = vshll.u32 %v2869, 16
    %v2871 = vadd.s32 %v2870, %v2868
    %v2872 = vand.u32 %v1951, 65535
    %v2873 = vshra.s32 %v1951, 16
    %v2874 = vcvt.s32.f32 %v2872
    %v2875 = vcvt.s32.f32 %v2873
    %2876 = vmin.xlane.f32.xlu0 %v2875
    %v2877 = vpop.xlane.xlu0 %2876
    %vm2878 = vcmp.eq.f32.partialorder %v2875, %v2877
    %v2879 = vsel %vm2878, %v2874, inf
    %2880 = vmin.xlane.f32.xlu0 %v2879
    %v2881 = vpop.xlane.xlu0 %2880
    %v2882 = vcvt.f32.s32 %v2881
    %v2883 = vcvt.f32.s32 %v2877
    %v2884 = vshll.u32 %v2883, 16
    %v2885 = vadd.s32 %v2884, %v2882
    %v2886 = vand.u32 %v1952, 65535
    %v2887 = vshra.s32 %v1952, 16
    %v2888 = vcvt.s32.f32 %v2886
    %v2889 = vcvt.s32.f32 %v2887
    %2890 = vmin.xlane.f32.xlu0 %v2889
    %v2891 = vpop.xlane.xlu0 %2890
    %vm2892 = vcmp.eq.f32.partialorder %v2889, %v2891
    %v2893 = vsel %vm2892, %v2888, inf
    %2894 = vmin.xlane.f32.xlu0 %v2893
    %v2895 = vpop.xlane.xlu0 %2894
    %v2896 = vcvt.f32.s32 %v2895
    %v2897 = vcvt.f32.s32 %v2891
    %v2898 = vshll.u32 %v2897, 16
    %v2899 = vadd.s32 %v2898, %v2896
    %v2900 = vand.u32 %v1953, 65535
    %v2901 = vshra.s32 %v1953, 16
    %v2902 = vcvt.s32.f32 %v2900
    %v2903 = vcvt.s32.f32 %v2901
    %2904 = vmin.xlane.f32.xlu0 %v2903
    %v2905 = vpop.xlane.xlu0 %2904
    %vm2906 = vcmp.eq.f32.partialorder %v2903, %v2905
    %v2907 = vsel %vm2906, %v2902, inf
    %2908 = vmin.xlane.f32.xlu0 %v2907
    %v2909 = vpop.xlane.xlu0 %2908
    %v2910 = vcvt.f32.s32 %v2909
    %v2911 = vcvt.f32.s32 %v2905
    %v2912 = vshll.u32 %v2911, 16
    %v2913 = vadd.s32 %v2912, %v2910
    %v2914 = vand.u32 %v1954, 65535
    %v2915 = vshra.s32 %v1954, 16
    %v2916 = vcvt.s32.f32 %v2914
    %v2917 = vcvt.s32.f32 %v2915
    %2918 = vmin.xlane.f32.xlu0 %v2917
    %v2919 = vpop.xlane.xlu0 %2918
    %vm2920 = vcmp.eq.f32.partialorder %v2917, %v2919
    %v2921 = vsel %vm2920, %v2916, inf
    %2922 = vmin.xlane.f32.xlu0 %v2921
    %v2923 = vpop.xlane.xlu0 %2922
    %v2924 = vcvt.f32.s32 %v2923
    %v2925 = vcvt.f32.s32 %v2919
    %v2926 = vshll.u32 %v2925, 16
    %v2927 = vadd.s32 %v2926, %v2924
    %v2928 = vand.u32 %v1955, 65535
    %v2929 = vshra.s32 %v1955, 16
    %v2930 = vcvt.s32.f32 %v2928
    %v2931 = vcvt.s32.f32 %v2929
    %2932 = vmin.xlane.f32.xlu0 %v2931
    %v2933 = vpop.xlane.xlu0 %2932
    %vm2934 = vcmp.eq.f32.partialorder %v2931, %v2933
    %v2935 = vsel %vm2934, %v2930, inf
    %2936 = vmin.xlane.f32.xlu0 %v2935
    %v2937 = vpop.xlane.xlu0 %2936
    %v2938 = vcvt.f32.s32 %v2937
    %v2939 = vcvt.f32.s32 %v2933
    %v2940 = vshll.u32 %v2939, 16
    %v2941 = vadd.s32 %v2940, %v2938
    %v2942 = vand.u32 %v1956, 65535
    %v2943 = vshra.s32 %v1956, 16
    %v2944 = vcvt.s32.f32 %v2942
    %v2945 = vcvt.s32.f32 %v2943
    %2946 = vmin.xlane.f32.xlu0 %v2945
    %v2947 = vpop.xlane.xlu0 %2946
    %vm2948 = vcmp.eq.f32.partialorder %v2945, %v2947
    %v2949 = vsel %vm2948, %v2944, inf
    %2950 = vmin.xlane.f32.xlu0 %v2949
    %v2951 = vpop.xlane.xlu0 %2950
    %v2952 = vcvt.f32.s32 %v2951
    %v2953 = vcvt.f32.s32 %v2947
    %v2954 = vshll.u32 %v2953, 16
    %v2955 = vadd.s32 %v2954, %v2952
    %v2956 = vand.u32 %v1957, 65535
    %v2957 = vshra.s32 %v1957, 16
    %v2958 = vcvt.s32.f32 %v2956
    %v2959 = vcvt.s32.f32 %v2957
    %2960 = vmin.xlane.f32.xlu0 %v2959
    %v2961 = vpop.xlane.xlu0 %2960
    %vm2962 = vcmp.eq.f32.partialorder %v2959, %v2961
    %v2963 = vsel %vm2962, %v2958, inf
    %2964 = vmin.xlane.f32.xlu0 %v2963
    %v2965 = vpop.xlane.xlu0 %2964
    %v2966 = vcvt.f32.s32 %v2965
    %v2967 = vcvt.f32.s32 %v2961
    %v2968 = vshll.u32 %v2967, 16
    %v2969 = vadd.s32 %v2968, %v2966
    %v2970 = vand.u32 %v1958, 65535
    %v2971 = vshra.s32 %v1958, 16
    %v2972 = vcvt.s32.f32 %v2970
    %v2973 = vcvt.s32.f32 %v2971
    %2974 = vmin.xlane.f32.xlu0 %v2973
    %v2975 = vpop.xlane.xlu0 %2974
    %vm2976 = vcmp.eq.f32.partialorder %v2973, %v2975
    %v2977 = vsel %vm2976, %v2972, inf
    %2978 = vmin.xlane.f32.xlu0 %v2977
    %v2979 = vpop.xlane.xlu0 %2978
    %v2980 = vcvt.f32.s32 %v2979
    %v2981 = vcvt.f32.s32 %v2975
    %v2982 = vshll.u32 %v2981, 16
    %v2983 = vadd.s32 %v2982, %v2980
    %v2984 = vand.u32 %v1959, 65535
    %v2985 = vshra.s32 %v1959, 16
    %v2986 = vcvt.s32.f32 %v2984
    %v2987 = vcvt.s32.f32 %v2985
    %2988 = vmin.xlane.f32.xlu0 %v2987
    %v2989 = vpop.xlane.xlu0 %2988
    %vm2990 = vcmp.eq.f32.partialorder %v2987, %v2989
    %v2991 = vsel %vm2990, %v2986, inf
    %2992 = vmin.xlane.f32.xlu0 %v2991
    %v2993 = vpop.xlane.xlu0 %2992
    %v2994 = vcvt.f32.s32 %v2993
    %v2995 = vcvt.f32.s32 %v2989
    %v2996 = vshll.u32 %v2995, 16
    %v2997 = vadd.s32 %v2996, %v2994
    %v2998 = vand.u32 %v1960, 65535
    %v2999 = vshra.s32 %v1960, 16
    %v3000 = vcvt.s32.f32 %v2998
    %v3001 = vcvt.s32.f32 %v2999
    %3002 = vmin.xlane.f32.xlu0 %v3001
    %v3003 = vpop.xlane.xlu0 %3002
    %vm3004 = vcmp.eq.f32.partialorder %v3001, %v3003
    %v3005 = vsel %vm3004, %v3000, inf
    %3006 = vmin.xlane.f32.xlu0 %v3005
    %v3007 = vpop.xlane.xlu0 %3006
    %v3008 = vcvt.f32.s32 %v3007
    %v3009 = vcvt.f32.s32 %v3003
    %v3010 = vshll.u32 %v3009, 16
    %v3011 = vadd.s32 %v3010, %v3008
    %v3012 = vand.u32 %v1961, 65535
    %v3013 = vshra.s32 %v1961, 16
    %v3014 = vcvt.s32.f32 %v3012
    %v3015 = vcvt.s32.f32 %v3013
    %3016 = vmin.xlane.f32.xlu0 %v3015
    %v3017 = vpop.xlane.xlu0 %3016
    %vm3018 = vcmp.eq.f32.partialorder %v3015, %v3017
    %v3019 = vsel %vm3018, %v3014, inf
    %3020 = vmin.xlane.f32.xlu0 %v3019
    %v3021 = vpop.xlane.xlu0 %3020
    %v3022 = vcvt.f32.s32 %v3021
    %v3023 = vcvt.f32.s32 %v3017
    %v3024 = vshll.u32 %v3023, 16
    %v3025 = vadd.s32 %v3024, %v3022
    %v3026 = vand.u32 %v1962, 65535
    %v3027 = vshra.s32 %v1962, 16
    %v3028 = vcvt.s32.f32 %v3026
    %v3029 = vcvt.s32.f32 %v3027
    %3030 = vmin.xlane.f32.xlu0 %v3029
    %v3031 = vpop.xlane.xlu0 %3030
    %vm3032 = vcmp.eq.f32.partialorder %v3029, %v3031
    %v3033 = vsel %vm3032, %v3028, inf
    %3034 = vmin.xlane.f32.xlu0 %v3033
    %v3035 = vpop.xlane.xlu0 %3034
    %v3036 = vcvt.f32.s32 %v3035
    %v3037 = vcvt.f32.s32 %v3031
    %v3038 = vshll.u32 %v3037, 16
    %v3039 = vadd.s32 %v3038, %v3036
    %v3040 = vand.u32 %v1963, 65535
    %v3041 = vshra.s32 %v1963, 16
    %v3042 = vcvt.s32.f32 %v3040
    %v3043 = vcvt.s32.f32 %v3041
    %3044 = vmin.xlane.f32.xlu0 %v3043
    %v3045 = vpop.xlane.xlu0 %3044
    %vm3046 = vcmp.eq.f32.partialorder %v3043, %v3045
    %v3047 = vsel %vm3046, %v3042, inf
    %3048 = vmin.xlane.f32.xlu0 %v3047
    %v3049 = vpop.xlane.xlu0 %3048
    %v3050 = vcvt.f32.s32 %v3049
    %v3051 = vcvt.f32.s32 %v3045
    %v3052 = vshll.u32 %v3051, 16
    %v3053 = vadd.s32 %v3052, %v3050
    %v3054 = vand.u32 %v1964, 65535
    %v3055 = vshra.s32 %v1964, 16
    %v3056 = vcvt.s32.f32 %v3054
    %v3057 = vcvt.s32.f32 %v3055
    %3058 = vmin.xlane.f32.xlu0 %v3057
    %v3059 = vpop.xlane.xlu0 %3058
    %vm3060 = vcmp.eq.f32.partialorder %v3057, %v3059
    %v3061 = vsel %vm3060, %v3056, inf
    %3062 = vmin.xlane.f32.xlu0 %v3061
    %v3063 = vpop.xlane.xlu0 %3062
    %v3064 = vcvt.f32.s32 %v3063
    %v3065 = vcvt.f32.s32 %v3059
    %v3066 = vshll.u32 %v3065, 16
    %v3067 = vadd.s32 %v3066, %v3064
    %v3068 = vand.u32 %v1965, 65535
    %v3069 = vshra.s32 %v1965, 16
    %v3070 = vcvt.s32.f32 %v3068
    %v3071 = vcvt.s32.f32 %v3069
    %3072 = vmin.xlane.f32.xlu0 %v3071
    %v3073 = vpop.xlane.xlu0 %3072
    %vm3074 = vcmp.eq.f32.partialorder %v3071, %v3073
    %v3075 = vsel %vm3074, %v3070, inf
    %3076 = vmin.xlane.f32.xlu0 %v3075
    %v3077 = vpop.xlane.xlu0 %3076
    %v3078 = vcvt.f32.s32 %v3077
    %v3079 = vcvt.f32.s32 %v3073
    %v3080 = vshll.u32 %v3079, 16
    %v3081 = vadd.s32 %v3080, %v3078
    %v3082 = vand.u32 %v1966, 65535
    %v3083 = vshra.s32 %v1966, 16
    %v3084 = vcvt.s32.f32 %v3082
    %v3085 = vcvt.s32.f32 %v3083
    %3086 = vmin.xlane.f32.xlu0 %v3085
    %v3087 = vpop.xlane.xlu0 %3086
    %vm3088 = vcmp.eq.f32.partialorder %v3085, %v3087
    %v3089 = vsel %vm3088, %v3084, inf
    %3090 = vmin.xlane.f32.xlu0 %v3089
    %v3091 = vpop.xlane.xlu0 %3090
    %v3092 = vcvt.f32.s32 %v3091
    %v3093 = vcvt.f32.s32 %v3087
    %v3094 = vshll.u32 %v3093, 16
    %v3095 = vadd.s32 %v3094, %v3092
    %v3096 = vand.u32 %v1967, 65535
    %v3097 = vshra.s32 %v1967, 16
    %v3098 = vcvt.s32.f32 %v3096
    %v3099 = vcvt.s32.f32 %v3097
    %3100 = vmin.xlane.f32.xlu0 %v3099
    %v3101 = vpop.xlane.xlu0 %3100
    %vm3102 = vcmp.eq.f32.partialorder %v3099, %v3101
    %v3103 = vsel %vm3102, %v3098, inf
    %3104 = vmin.xlane.f32.xlu0 %v3103
    %v3105 = vpop.xlane.xlu0 %3104
    %v3106 = vcvt.f32.s32 %v3105
    %v3107 = vcvt.f32.s32 %v3101
    %v3108 = vshll.u32 %v3107, 16
    %v3109 = vadd.s32 %v3108, %v3106
    %v3110 = vand.u32 %v1968, 65535
    %v3111 = vshra.s32 %v1968, 16
    %v3112 = vcvt.s32.f32 %v3110
    %v3113 = vcvt.s32.f32 %v3111
    %3114 = vmin.xlane.f32.xlu0 %v3113
    %v3115 = vpop.xlane.xlu0 %3114
    %vm3116 = vcmp.eq.f32.partialorder %v3113, %v3115
    %v3117 = vsel %vm3116, %v3112, inf
    %3118 = vmin.xlane.f32.xlu0 %v3117
    %v3119 = vpop.xlane.xlu0 %3118
    %v3120 = vcvt.f32.s32 %v3119
    %v3121 = vcvt.f32.s32 %v3115
    %v3122 = vshll.u32 %v3121, 16
    %v3123 = vadd.s32 %v3122, %v3120
    %v3124 = vand.u32 %v1969, 65535
    %v3125 = vshra.s32 %v1969, 16
    %v3126 = vcvt.s32.f32 %v3124
    %v3127 = vcvt.s32.f32 %v3125
    %3128 = vmin.xlane.f32.xlu0 %v3127
    %v3129 = vpop.xlane.xlu0 %3128
    %vm3130 = vcmp.eq.f32.partialorder %v3127, %v3129
    %v3131 = vsel %vm3130, %v3126, inf
    %3132 = vmin.xlane.f32.xlu0 %v3131
    %v3133 = vpop.xlane.xlu0 %3132
    %v3134 = vcvt.f32.s32 %v3133
    %v3135 = vcvt.f32.s32 %v3129
    %v3136 = vshll.u32 %v3135, 16
    %v3137 = vadd.s32 %v3136, %v3134
    %v3138 = vand.u32 %v1970, 65535
    %v3139 = vshra.s32 %v1970, 16
    %v3140 = vcvt.s32.f32 %v3138
    %v3141 = vcvt.s32.f32 %v3139
    %3142 = vmin.xlane.f32.xlu0 %v3141
    %v3143 = vpop.xlane.xlu0 %3142
    %vm3144 = vcmp.eq.f32.partialorder %v3141, %v3143
    %v3145 = vsel %vm3144, %v3140, inf
    %3146 = vmin.xlane.f32.xlu0 %v3145
    %v3147 = vpop.xlane.xlu0 %3146
    %v3148 = vcvt.f32.s32 %v3147
    %v3149 = vcvt.f32.s32 %v3143
    %v3150 = vshll.u32 %v3149, 16
    %v3151 = vadd.s32 %v3150, %v3148
    %v3152 = vand.u32 %v1971, 65535
    %v3153 = vshra.s32 %v1971, 16
    %v3154 = vcvt.s32.f32 %v3152
    %v3155 = vcvt.s32.f32 %v3153
    %3156 = vmin.xlane.f32.xlu0 %v3155
    %v3157 = vpop.xlane.xlu0 %3156
    %vm3158 = vcmp.eq.f32.partialorder %v3155, %v3157
    %v3159 = vsel %vm3158, %v3154, inf
    %3160 = vmin.xlane.f32.xlu0 %v3159
    %v3161 = vpop.xlane.xlu0 %3160
    %v3162 = vcvt.f32.s32 %v3161
    %v3163 = vcvt.f32.s32 %v3157
    %v3164 = vshll.u32 %v3163, 16
    %v3165 = vadd.s32 %v3164, %v3162
    %v3166 = vand.u32 %v1972, 65535
    %v3167 = vshra.s32 %v1972, 16
    %v3168 = vcvt.s32.f32 %v3166
    %v3169 = vcvt.s32.f32 %v3167
    %3170 = vmin.xlane.f32.xlu0 %v3169
    %v3171 = vpop.xlane.xlu0 %3170
    %vm3172 = vcmp.eq.f32.partialorder %v3169, %v3171
    %v3173 = vsel %vm3172, %v3168, inf
    %3174 = vmin.xlane.f32.xlu0 %v3173
    %v3175 = vpop.xlane.xlu0 %3174
    %v3176 = vcvt.f32.s32 %v3175
    %v3177 = vcvt.f32.s32 %v3171
    %v3178 = vshll.u32 %v3177, 16
    %v3179 = vadd.s32 %v3178, %v3176
    %v3180 = vand.u32 %v1973, 65535
    %v3181 = vshra.s32 %v1973, 16
    %v3182 = vcvt.s32.f32 %v3180
    %v3183 = vcvt.s32.f32 %v3181
    %3184 = vmin.xlane.f32.xlu0 %v3183
    %v3185 = vpop.xlane.xlu0 %3184
    %vm3186 = vcmp.eq.f32.partialorder %v3183, %v3185
    %v3187 = vsel %vm3186, %v3182, inf
    %3188 = vmin.xlane.f32.xlu0 %v3187
    %v3189 = vpop.xlane.xlu0 %3188
    %v3190 = vcvt.f32.s32 %v3189
    %v3191 = vcvt.f32.s32 %v3185
    %v3192 = vshll.u32 %v3191, 16
    %v3193 = vadd.s32 %v3192, %v3190
    %v3194 = vand.u32 %v1974, 65535
    %v3195 = vshra.s32 %v1974, 16
    %v3196 = vcvt.s32.f32 %v3194
    %v3197 = vcvt.s32.f32 %v3195
    %3198 = vmin.xlane.f32.xlu0 %v3197
    %v3199 = vpop.xlane.xlu0 %3198
    %vm3200 = vcmp.eq.f32.partialorder %v3197, %v3199
    %v3201 = vsel %vm3200, %v3196, inf
    %3202 = vmin.xlane.f32.xlu0 %v3201
    %v3203 = vpop.xlane.xlu0 %3202
    %v3204 = vcvt.f32.s32 %v3203
    %v3205 = vcvt.f32.s32 %v3199
    %v3206 = vshll.u32 %v3205, 16
    %v3207 = vadd.s32 %v3206, %v3204
    %v3208 = vand.u32 %v1975, 65535
    %v3209 = vshra.s32 %v1975, 16
    %v3210 = vcvt.s32.f32 %v3208
    %v3211 = vcvt.s32.f32 %v3209
    %3212 = vmin.xlane.f32.xlu0 %v3211
    %v3213 = vpop.xlane.xlu0 %3212
    %vm3214 = vcmp.eq.f32.partialorder %v3211, %v3213
    %v3215 = vsel %vm3214, %v3210, inf
    %3216 = vmin.xlane.f32.xlu0 %v3215
    %v3217 = vpop.xlane.xlu0 %3216
    %v3218 = vcvt.f32.s32 %v3217
    %v3219 = vcvt.f32.s32 %v3213
    %v3220 = vshll.u32 %v3219, 16
    %v3221 = vadd.s32 %v3220, %v3218
    %v3222 = vand.u32 %v1976, 65535
    %v3223 = vshra.s32 %v1976, 16
    %v3224 = vcvt.s32.f32 %v3222
    %v3225 = vcvt.s32.f32 %v3223
    %3226 = vmin.xlane.f32.xlu0 %v3225
    %v3227 = vpop.xlane.xlu0 %3226
    %vm3228 = vcmp.eq.f32.partialorder %v3225, %v3227
    %v3229 = vsel %vm3228, %v3224, inf
    %3230 = vmin.xlane.f32.xlu0 %v3229
    %v3231 = vpop.xlane.xlu0 %3230
    %v3232 = vcvt.f32.s32 %v3231
    %v3233 = vcvt.f32.s32 %v3227
    %v3234 = vshll.u32 %v3233, 16
    %v3235 = vadd.s32 %v3234, %v3232
    %v3236 = vand.u32 %v1977, 65535
    %v3237 = vshra.s32 %v1977, 16
    %v3238 = vcvt.s32.f32 %v3236
    %v3239 = vcvt.s32.f32 %v3237
    %3240 = vmin.xlane.f32.xlu0 %v3239
    %v3241 = vpop.xlane.xlu0 %3240
    %vm3242 = vcmp.eq.f32.partialorder %v3239, %v3241
    %v3243 = vsel %vm3242, %v3238, inf
    %3244 = vmin.xlane.f32.xlu0 %v3243
    %v3245 = vpop.xlane.xlu0 %3244
    %v3246 = vcvt.f32.s32 %v3245
    %v3247 = vcvt.f32.s32 %v3241
    %v3248 = vshll.u32 %v3247, 16
    %v3249 = vadd.s32 %v3248, %v3246
    %v3250 = vand.u32 %v1978, 65535
    %v3251 = vshra.s32 %v1978, 16
    %v3252 = vcvt.s32.f32 %v3250
    %v3253 = vcvt.s32.f32 %v3251
    %3254 = vmin.xlane.f32.xlu0 %v3253
    %v3255 = vpop.xlane.xlu0 %3254
    %vm3256 = vcmp.eq.f32.partialorder %v3253, %v3255
    %v3257 = vsel %vm3256, %v3252, inf
    %3258 = vmin.xlane.f32.xlu0 %v3257
    %v3259 = vpop.xlane.xlu0 %3258
    %v3260 = vcvt.f32.s32 %v3259
    %v3261 = vcvt.f32.s32 %v3255
    %v3262 = vshll.u32 %v3261, 16
    %v3263 = vadd.s32 %v3262, %v3260
    %v3264 = vand.u32 %v1979, 65535
    %v3265 = vshra.s32 %v1979, 16
    %v3266 = vcvt.s32.f32 %v3264
    %v3267 = vcvt.s32.f32 %v3265
    %3268 = vmin.xlane.f32.xlu0 %v3267
    %v3269 = vpop.xlane.xlu0 %3268
    %vm3270 = vcmp.eq.f32.partialorder %v3267, %v3269
    %v3271 = vsel %vm3270, %v3266, inf
    %3272 = vmin.xlane.f32.xlu0 %v3271
    %v3273 = vpop.xlane.xlu0 %3272
    %v3274 = vcvt.f32.s32 %v3273
    %v3275 = vcvt.f32.s32 %v3269
    %v3276 = vshll.u32 %v3275, 16
    %v3277 = vadd.s32 %v3276, %v3274
    %v3278 = vand.u32 %v1980, 65535
    %v3279 = vshra.s32 %v1980, 16
    %v3280 = vcvt.s32.f32 %v3278
    %v3281 = vcvt.s32.f32 %v3279
    %3282 = vmin.xlane.f32.xlu0 %v3281
    %v3283 = vpop.xlane.xlu0 %3282
    %vm3284 = vcmp.eq.f32.partialorder %v3281, %v3283
    %v3285 = vsel %vm3284, %v3280, inf
    %3286 = vmin.xlane.f32.xlu0 %v3285
    %v3287 = vpop.xlane.xlu0 %3286
    %v3288 = vcvt.f32.s32 %v3287
    %v3289 = vcvt.f32.s32 %v3283
    %v3290 = vshll.u32 %v3289, 16
    %v3291 = vadd.s32 %v3290, %v3288
    %v3292 = vand.u32 %v1981, 65535
    %v3293 = vshra.s32 %v1981, 16
    %v3294 = vcvt.s32.f32 %v3292
    %v3295 = vcvt.s32.f32 %v3293
    %3296 = vmin.xlane.f32.xlu0 %v3295
    %v3297 = vpop.xlane.xlu0 %3296
    %vm3298 = vcmp.eq.f32.partialorder %v3295, %v3297
    %v3299 = vsel %vm3298, %v3294, inf
    %3300 = vmin.xlane.f32.xlu0 %v3299
    %v3301 = vpop.xlane.xlu0 %3300
    %v3302 = vcvt.f32.s32 %v3301
    %v3303 = vcvt.f32.s32 %v3297
    %v3304 = vshll.u32 %v3303, 16
    %v3305 = vadd.s32 %v3304, %v3302
    %v3306 = vand.u32 %v1982, 65535
    %v3307 = vshra.s32 %v1982, 16
    %v3308 = vcvt.s32.f32 %v3306
    %v3309 = vcvt.s32.f32 %v3307
    %3310 = vmin.xlane.f32.xlu0 %v3309
    %v3311 = vpop.xlane.xlu0 %3310
    %vm3312 = vcmp.eq.f32.partialorder %v3309, %v3311
    %v3313 = vsel %vm3312, %v3308, inf
    %3314 = vmin.xlane.f32.xlu0 %v3313
    %v3315 = vpop.xlane.xlu0 %3314
    %v3316 = vcvt.f32.s32 %v3315
    %v3317 = vcvt.f32.s32 %v3311
    %v3318 = vshll.u32 %v3317, 16
    %v3319 = vadd.s32 %v3318, %v3316
    %v3320 = vand.u32 %v1983, 65535
    %v3321 = vshra.s32 %v1983, 16
    %v3322 = vcvt.s32.f32 %v3320
    %v3323 = vcvt.s32.f32 %v3321
    %3324 = vmin.xlane.f32.xlu0 %v3323
    %v3325 = vpop.xlane.xlu0 %3324
    %vm3326 = vcmp.eq.f32.partialorder %v3323, %v3325
    %v3327 = vsel %vm3326, %v3322, inf
    %3328 = vmin.xlane.f32.xlu0 %v3327
    %v3329 = vpop.xlane.xlu0 %3328
    %v3330 = vcvt.f32.s32 %v3329
    %v3331 = vcvt.f32.s32 %v3325
    %v3332 = vshll.u32 %v3331, 16
    %v3333 = vadd.s32 %v3332, %v3330
    %v3334 = vand.u32 %v1984, 65535
    %v3335 = vshra.s32 %v1984, 16
    %v3336 = vcvt.s32.f32 %v3334
    %v3337 = vcvt.s32.f32 %v3335
    %3338 = vmin.xlane.f32.xlu0 %v3337
    %v3339 = vpop.xlane.xlu0 %3338
    %vm3340 = vcmp.eq.f32.partialorder %v3337, %v3339
    %v3341 = vsel %vm3340, %v3336, inf
    %3342 = vmin.xlane.f32.xlu0 %v3341
    %v3343 = vpop.xlane.xlu0 %3342
    %v3344 = vcvt.f32.s32 %v3343
    %v3345 = vcvt.f32.s32 %v3339
    %v3346 = vshll.u32 %v3345, 16
    %v3347 = vadd.s32 %v3346, %v3344
    %v3348 = vand.u32 %v1985, 65535
    %v3349 = vshra.s32 %v1985, 16
    %v3350 = vcvt.s32.f32 %v3348
    %v3351 = vcvt.s32.f32 %v3349
    %3352 = vmin.xlane.f32.xlu0 %v3351
    %v3353 = vpop.xlane.xlu0 %3352
    %vm3354 = vcmp.eq.f32.partialorder %v3351, %v3353
    %v3355 = vsel %vm3354, %v3350, inf
    %3356 = vmin.xlane.f32.xlu0 %v3355
    %v3357 = vpop.xlane.xlu0 %3356
    %v3358 = vcvt.f32.s32 %v3357
    %v3359 = vcvt.f32.s32 %v3353
    %v3360 = vshll.u32 %v3359, 16
    %v3361 = vadd.s32 %v3360, %v3358
    %v3362 = vand.u32 %v1986, 65535
    %v3363 = vshra.s32 %v1986, 16
    %v3364 = vcvt.s32.f32 %v3362
    %v3365 = vcvt.s32.f32 %v3363
    %3366 = vmin.xlane.f32.xlu0 %v3365
    %v3367 = vpop.xlane.xlu0 %3366
    %vm3368 = vcmp.eq.f32.partialorder %v3365, %v3367
    %v3369 = vsel %vm3368, %v3364, inf
    %3370 = vmin.xlane.f32.xlu0 %v3369
    %v3371 = vpop.xlane.xlu0 %3370
    %v3372 = vcvt.f32.s32 %v3371
    %v3373 = vcvt.f32.s32 %v3367
    %v3374 = vshll.u32 %v3373, 16
    %v3375 = vadd.s32 %v3374, %v3372
    %v3376 = vand.u32 %v1987, 65535
    %v3377 = vshra.s32 %v1987, 16
    %v3378 = vcvt.s32.f32 %v3376
    %v3379 = vcvt.s32.f32 %v3377
    %3380 = vmin.xlane.f32.xlu0 %v3379
    %v3381 = vpop.xlane.xlu0 %3380
    %vm3382 = vcmp.eq.f32.partialorder %v3379, %v3381
    %v3383 = vsel %vm3382, %v3378, inf
    %3384 = vmin.xlane.f32.xlu0 %v3383
    %v3385 = vpop.xlane.xlu0 %3384
    %v3386 = vcvt.f32.s32 %v3385
    %v3387 = vcvt.f32.s32 %v3381
    %v3388 = vshll.u32 %v3387, 16
    %v3389 = vadd.s32 %v3388, %v3386
    %v3390 = vand.u32 %v1988, 65535
    %v3391 = vshra.s32 %v1988, 16
    %v3392 = vcvt.s32.f32 %v3390
    %v3393 = vcvt.s32.f32 %v3391
    %3394 = vmin.xlane.f32.xlu0 %v3393
    %v3395 = vpop.xlane.xlu0 %3394
    %vm3396 = vcmp.eq.f32.partialorder %v3393, %v3395
    %v3397 = vsel %vm3396, %v3392, inf
    %3398 = vmin.xlane.f32.xlu0 %v3397
    %v3399 = vpop.xlane.xlu0 %3398
    %v3400 = vcvt.f32.s32 %v3399
    %v3401 = vcvt.f32.s32 %v3395
    %v3402 = vshll.u32 %v3401, 16
    %v3403 = vadd.s32 %v3402, %v3400
    %v3404 = vand.u32 %v1989, 65535
    %v3405 = vshra.s32 %v1989, 16
    %v3406 = vcvt.s32.f32 %v3404
    %v3407 = vcvt.s32.f32 %v3405
    %3408 = vmin.xlane.f32.xlu0 %v3407
    %v3409 = vpop.xlane.xlu0 %3408
    %vm3410 = vcmp.eq.f32.partialorder %v3407, %v3409
    %v3411 = vsel %vm3410, %v3406, inf
    %3412 = vmin.xlane.f32.xlu0 %v3411
    %v3413 = vpop.xlane.xlu0 %3412
    %v3414 = vcvt.f32.s32 %v3413
    %v3415 = vcvt.f32.s32 %v3409
    %v3416 = vshll.u32 %v3415, 16
    %v3417 = vadd.s32 %v3416, %v3414
    %v3418 = vand.u32 %v1990, 65535
    %v3419 = vshra.s32 %v1990, 16
    %v3420 = vcvt.s32.f32 %v3418
    %v3421 = vcvt.s32.f32 %v3419
    %3422 = vmin.xlane.f32.xlu0 %v3421
    %v3423 = vpop.xlane.xlu0 %3422
    %vm3424 = vcmp.eq.f32.partialorder %v3421, %v3423
    %v3425 = vsel %vm3424, %v3420, inf
    %3426 = vmin.xlane.f32.xlu0 %v3425
    %v3427 = vpop.xlane.xlu0 %3426
    %v3428 = vcvt.f32.s32 %v3427
    %v3429 = vcvt.f32.s32 %v3423
    %v3430 = vshll.u32 %v3429, 16
    %v3431 = vadd.s32 %v3430, %v3428
    %v3432 = vand.u32 %v1991, 65535
    %v3433 = vshra.s32 %v1991, 16
    %v3434 = vcvt.s32.f32 %v3432
    %v3435 = vcvt.s32.f32 %v3433
    %3436 = vmin.xlane.f32.xlu0 %v3435
    %v3437 = vpop.xlane.xlu0 %3436
    %vm3438 = vcmp.eq.f32.partialorder %v3435, %v3437
    %v3439 = vsel %vm3438, %v3434, inf
    %3440 = vmin.xlane.f32.xlu0 %v3439
    %v3441 = vpop.xlane.xlu0 %3440
    %v3442 = vcvt.f32.s32 %v3441
    %v3443 = vcvt.f32.s32 %v3437
    %v3444 = vshll.u32 %v3443, 16
    %v3445 = vadd.s32 %v3444, %v3442
    %v3446 = vand.u32 %v1992, 65535
    %v3447 = vshra.s32 %v1992, 16
    %v3448 = vcvt.s32.f32 %v3446
    %v3449 = vcvt.s32.f32 %v3447
    %3450 = vmin.xlane.f32.xlu0 %v3449
    %v3451 = vpop.xlane.xlu0 %3450
    %vm3452 = vcmp.eq.f32.partialorder %v3449, %v3451
    %v3453 = vsel %vm3452, %v3448, inf
    %3454 = vmin.xlane.f32.xlu0 %v3453
    %v3455 = vpop.xlane.xlu0 %3454
    %v3456 = vcvt.f32.s32 %v3455
    %v3457 = vcvt.f32.s32 %v3451
    %v3458 = vshll.u32 %v3457, 16
    %v3459 = vadd.s32 %v3458, %v3456
    %v3460 = vand.u32 %v1993, 65535
    %v3461 = vshra.s32 %v1993, 16
    %v3462 = vcvt.s32.f32 %v3460
    %v3463 = vcvt.s32.f32 %v3461
    %3464 = vmin.xlane.f32.xlu0 %v3463
    %v3465 = vpop.xlane.xlu0 %3464
    %vm3466 = vcmp.eq.f32.partialorder %v3463, %v3465
    %v3467 = vsel %vm3466, %v3462, inf
    %3468 = vmin.xlane.f32.xlu0 %v3467
    %v3469 = vpop.xlane.xlu0 %3468
    %v3470 = vcvt.f32.s32 %v3469
    %v3471 = vcvt.f32.s32 %v3465
    %v3472 = vshll.u32 %v3471, 16
    %v3473 = vadd.s32 %v3472, %v3470
    %v3474 = vand.u32 %v1994, 65535
    %v3475 = vshra.s32 %v1994, 16
    %v3476 = vcvt.s32.f32 %v3474
    %v3477 = vcvt.s32.f32 %v3475
    %3478 = vmin.xlane.f32.xlu0 %v3477
    %v3479 = vpop.xlane.xlu0 %3478
    %vm3480 = vcmp.eq.f32.partialorder %v3477, %v3479
    %v3481 = vsel %vm3480, %v3476, inf
    %3482 = vmin.xlane.f32.xlu0 %v3481
    %v3483 = vpop.xlane.xlu0 %3482
    %v3484 = vcvt.f32.s32 %v3483
    %v3485 = vcvt.f32.s32 %v3479
    %v3486 = vshll.u32 %v3485, 16
    %v3487 = vadd.s32 %v3486, %v3484
    %v3488 = vand.u32 %v1995, 65535
    %v3489 = vshra.s32 %v1995, 16
    %v3490 = vcvt.s32.f32 %v3488
    %v3491 = vcvt.s32.f32 %v3489
    %3492 = vmin.xlane.f32.xlu0 %v3491
    %v3493 = vpop.xlane.xlu0 %3492
    %vm3494 = vcmp.eq.f32.partialorder %v3491, %v3493
    %v3495 = vsel %vm3494, %v3490, inf
    %3496 = vmin.xlane.f32.xlu0 %v3495
    %v3497 = vpop.xlane.xlu0 %3496
    %v3498 = vcvt.f32.s32 %v3497
    %v3499 = vcvt.f32.s32 %v3493
    %v3500 = vshll.u32 %v3499, 16
    %v3501 = vadd.s32 %v3500, %v3498
    %v3502 = vand.u32 %v1996, 65535
    %v3503 = vshra.s32 %v1996, 16
    %v3504 = vcvt.s32.f32 %v3502
    %v3505 = vcvt.s32.f32 %v3503
    %3506 = vmin.xlane.f32.xlu0 %v3505
    %v3507 = vpop.xlane.xlu0 %3506
    %vm3508 = vcmp.eq.f32.partialorder %v3505, %v3507
    %v3509 = vsel %vm3508, %v3504, inf
    %3510 = vmin.xlane.f32.xlu0 %v3509
    %v3511 = vpop.xlane.xlu0 %3510
    %v3512 = vcvt.f32.s32 %v3511
    %v3513 = vcvt.f32.s32 %v3507
    %v3514 = vshll.u32 %v3513, 16
    %v3515 = vadd.s32 %v3514, %v3512
    %v3516 = vand.u32 %v1997, 65535
    %v3517 = vshra.s32 %v1997, 16
    %v3518 = vcvt.s32.f32 %v3516
    %v3519 = vcvt.s32.f32 %v3517
    %3520 = vmin.xlane.f32.xlu0 %v3519
    %v3521 = vpop.xlane.xlu0 %3520
    %vm3522 = vcmp.eq.f32.partialorder %v3519, %v3521
    %v3523 = vsel %vm3522, %v3518, inf
    %3524 = vmin.xlane.f32.xlu0 %v3523
    %v3525 = vpop.xlane.xlu0 %3524
    %v3526 = vcvt.f32.s32 %v3525
    %v3527 = vcvt.f32.s32 %v3521
    %v3528 = vshll.u32 %v3527, 16
    %v3529 = vadd.s32 %v3528, %v3526
    %v3530 = vand.u32 %v1998, 65535
    %v3531 = vshra.s32 %v1998, 16
    %v3532 = vcvt.s32.f32 %v3530
    %v3533 = vcvt.s32.f32 %v3531
    %3534 = vmin.xlane.f32.xlu0 %v3533
    %v3535 = vpop.xlane.xlu0 %3534
    %vm3536 = vcmp.eq.f32.partialorder %v3533, %v3535
    %v3537 = vsel %vm3536, %v3532, inf
    %3538 = vmin.xlane.f32.xlu0 %v3537
    %v3539 = vpop.xlane.xlu0 %3538
    %v3540 = vcvt.f32.s32 %v3539
    %v3541 = vcvt.f32.s32 %v3535
    %v3542 = vshll.u32 %v3541, 16
    %v3543 = vadd.s32 %v3542, %v3540
    %v3544 = vand.u32 %v1999, 65535
    %v3545 = vshra.s32 %v1999, 16
    %v3546 = vcvt.s32.f32 %v3544
    %v3547 = vcvt.s32.f32 %v3545
    %3548 = vmin.xlane.f32.xlu0 %v3547
    %v3549 = vpop.xlane.xlu0 %3548
    %vm3550 = vcmp.eq.f32.partialorder %v3547, %v3549
    %v3551 = vsel %vm3550, %v3546, inf
    %3552 = vmin.xlane.f32.xlu0 %v3551
    %v3553 = vpop.xlane.xlu0 %3552
    %v3554 = vcvt.f32.s32 %v3553
    %v3555 = vcvt.f32.s32 %v3549
    %v3556 = vshll.u32 %v3555, 16
    %v3557 = vadd.s32 %v3556, %v3554
    %v3558 = vand.u32 %v2000, 65535
    %v3559 = vshra.s32 %v2000, 16
    %v3560 = vcvt.s32.f32 %v3558
    %v3561 = vcvt.s32.f32 %v3559
    %3562 = vmin.xlane.f32.xlu0 %v3561
    %v3563 = vpop.xlane.xlu0 %3562
    %vm3564 = vcmp.eq.f32.partialorder %v3561, %v3563
    %v3565 = vsel %vm3564, %v3560, inf
    %3566 = vmin.xlane.f32.xlu0 %v3565
    %v3567 = vpop.xlane.xlu0 %3566
    %v3568 = vcvt.f32.s32 %v3567
    %v3569 = vcvt.f32.s32 %v3563
    %v3570 = vshll.u32 %v3569, 16
    %v3571 = vadd.s32 %v3570, %v3568
    %v3572 = vand.u32 %v2001, 65535
    %v3573 = vshra.s32 %v2001, 16
    %v3574 = vcvt.s32.f32 %v3572
    %v3575 = vcvt.s32.f32 %v3573
    %3576 = vmin.xlane.f32.xlu0 %v3575
    %v3577 = vpop.xlane.xlu0 %3576
    %vm3578 = vcmp.eq.f32.partialorder %v3575, %v3577
    %v3579 = vsel %vm3578, %v3574, inf
    %3580 = vmin.xlane.f32.xlu0 %v3579
    %v3581 = vpop.xlane.xlu0 %3580
    %v3582 = vcvt.f32.s32 %v3581
    %v3583 = vcvt.f32.s32 %v3577
    %v3584 = vshll.u32 %v3583, 16
    %v3585 = vadd.s32 %v3584, %v3582
    %v3586 = vand.u32 %v2002, 65535
    %v3587 = vshra.s32 %v2002, 16
    %v3588 = vcvt.s32.f32 %v3586
    %v3589 = vcvt.s32.f32 %v3587
    %3590 = vmin.xlane.f32.xlu0 %v3589
    %v3591 = vpop.xlane.xlu0 %3590
    %vm3592 = vcmp.eq.f32.partialorder %v3589, %v3591
    %v3593 = vsel %vm3592, %v3588, inf
    %3594 = vmin.xlane.f32.xlu0 %v3593
    %v3595 = vpop.xlane.xlu0 %3594
    %v3596 = vcvt.f32.s32 %v3595
    %v3597 = vcvt.f32.s32 %v3591
    %v3598 = vshll.u32 %v3597, 16
    %v3599 = vadd.s32 %v3598, %v3596
    %v3600 = vand.u32 %v2003, 65535
    %v3601 = vshra.s32 %v2003, 16
    %v3602 = vcvt.s32.f32 %v3600
    %v3603 = vcvt.s32.f32 %v3601
    %3604 = vmin.xlane.f32.xlu0 %v3603
    %v3605 = vpop.xlane.xlu0 %3604
    %vm3606 = vcmp.eq.f32.partialorder %v3603, %v3605
    %v3607 = vsel %vm3606, %v3602, inf
    %3608 = vmin.xlane.f32.xlu0 %v3607
    %v3609 = vpop.xlane.xlu0 %3608
    %v3610 = vcvt.f32.s32 %v3609
    %v3611 = vcvt.f32.s32 %v3605
    %v3612 = vshll.u32 %v3611, 16
    %v3613 = vadd.s32 %v3612, %v3610
    %v3614 = vand.u32 %v2004, 65535
    %v3615 = vshra.s32 %v2004, 16
    %v3616 = vcvt.s32.f32 %v3614
    %v3617 = vcvt.s32.f32 %v3615
    %3618 = vmin.xlane.f32.xlu0 %v3617
    %v3619 = vpop.xlane.xlu0 %3618
    %vm3620 = vcmp.eq.f32.partialorder %v3617, %v3619
    %v3621 = vsel %vm3620, %v3616, inf
    %3622 = vmin.xlane.f32.xlu0 %v3621
    %v3623 = vpop.xlane.xlu0 %3622
    %v3624 = vcvt.f32.s32 %v3623
    %v3625 = vcvt.f32.s32 %v3619
    %v3626 = vshll.u32 %v3625, 16
    %v3627 = vadd.s32 %v3626, %v3624
    %v3628 = vand.u32 %v2005, 65535
    %v3629 = vshra.s32 %v2005, 16
    %v3630 = vcvt.s32.f32 %v3628
    %v3631 = vcvt.s32.f32 %v3629
    %3632 = vmin.xlane.f32.xlu0 %v3631
    %v3633 = vpop.xlane.xlu0 %3632
    %vm3634 = vcmp.eq.f32.partialorder %v3631, %v3633
    %v3635 = vsel %vm3634, %v3630, inf
    %3636 = vmin.xlane.f32.xlu0 %v3635
    %v3637 = vpop.xlane.xlu0 %3636
    %v3638 = vcvt.f32.s32 %v3637
    %v3639 = vcvt.f32.s32 %v3633
    %v3640 = vshll.u32 %v3639, 16
    %v3641 = vadd.s32 %v3640, %v3638
    %v3642 = vand.u32 %v2006, 65535
    %v3643 = vshra.s32 %v2006, 16
    %v3644 = vcvt.s32.f32 %v3642
    %v3645 = vcvt.s32.f32 %v3643
    %3646 = vmin.xlane.f32.xlu0 %v3645
    %v3647 = vpop.xlane.xlu0 %3646
    %vm3648 = vcmp.eq.f32.partialorder %v3645, %v3647
    %v3649 = vsel %vm3648, %v3644, inf
    %3650 = vmin.xlane.f32.xlu0 %v3649
    %v3651 = vpop.xlane.xlu0 %3650
    %v3652 = vcvt.f32.s32 %v3651
    %v3653 = vcvt.f32.s32 %v3647
    %v3654 = vshll.u32 %v3653, 16
    %v3655 = vadd.s32 %v3654, %v3652
    %v3656 = vand.u32 %v2007, 65535
    %v3657 = vshra.s32 %v2007, 16
    %v3658 = vcvt.s32.f32 %v3656
    %v3659 = vcvt.s32.f32 %v3657
    %3660 = vmin.xlane.f32.xlu0 %v3659
    %v3661 = vpop.xlane.xlu0 %3660
    %vm3662 = vcmp.eq.f32.partialorder %v3659, %v3661
    %v3663 = vsel %vm3662, %v3658, inf
    %3664 = vmin.xlane.f32.xlu0 %v3663
    %v3665 = vpop.xlane.xlu0 %3664
    %v3666 = vcvt.f32.s32 %v3665
    %v3667 = vcvt.f32.s32 %v3661
    %v3668 = vshll.u32 %v3667, 16
    %v3669 = vadd.s32 %v3668, %v3666
    %v3670 = vand.u32 %v2008, 65535
    %v3671 = vshra.s32 %v2008, 16
    %v3672 = vcvt.s32.f32 %v3670
    %v3673 = vcvt.s32.f32 %v3671
    %3674 = vmin.xlane.f32.xlu0 %v3673
    %v3675 = vpop.xlane.xlu0 %3674
    %vm3676 = vcmp.eq.f32.partialorder %v3673, %v3675
    %v3677 = vsel %vm3676, %v3672, inf
    %3678 = vmin.xlane.f32.xlu0 %v3677
    %v3679 = vpop.xlane.xlu0 %3678
    %v3680 = vcvt.f32.s32 %v3679
    %v3681 = vcvt.f32.s32 %v3675
    %v3682 = vshll.u32 %v3681, 16
    %v3683 = vadd.s32 %v3682, %v3680
    %v3684 = vand.u32 %v2009, 65535
    %v3685 = vshra.s32 %v2009, 16
    %v3686 = vcvt.s32.f32 %v3684
    %v3687 = vcvt.s32.f32 %v3685
    %3688 = vmin.xlane.f32.xlu0 %v3687
    %v3689 = vpop.xlane.xlu0 %3688
    %vm3690 = vcmp.eq.f32.partialorder %v3687, %v3689
    %v3691 = vsel %vm3690, %v3686, inf
    %3692 = vmin.xlane.f32.xlu0 %v3691
    %v3693 = vpop.xlane.xlu0 %3692
    %v3694 = vcvt.f32.s32 %v3693
    %v3695 = vcvt.f32.s32 %v3689
    %v3696 = vshll.u32 %v3695, 16
    %v3697 = vadd.s32 %v3696, %v3694
    %v3698 = vand.u32 %v2010, 65535
    %v3699 = vshra.s32 %v2010, 16
    %v3700 = vcvt.s32.f32 %v3698
    %v3701 = vcvt.s32.f32 %v3699
    %3702 = vmin.xlane.f32.xlu0 %v3701
    %v3703 = vpop.xlane.xlu0 %3702
    %vm3704 = vcmp.eq.f32.partialorder %v3701, %v3703
    %v3705 = vsel %vm3704, %v3700, inf
    %3706 = vmin.xlane.f32.xlu0 %v3705
    %v3707 = vpop.xlane.xlu0 %3706
    %v3708 = vcvt.f32.s32 %v3707
    %v3709 = vcvt.f32.s32 %v3703
    %v3710 = vshll.u32 %v3709, 16
    %v3711 = vadd.s32 %v3710, %v3708
    %v3712 = vand.u32 %v2011, 65535
    %v3713 = vshra.s32 %v2011, 16
    %v3714 = vcvt.s32.f32 %v3712
    %v3715 = vcvt.s32.f32 %v3713
    %3716 = vmin.xlane.f32.xlu0 %v3715
    %v3717 = vpop.xlane.xlu0 %3716
    %vm3718 = vcmp.eq.f32.partialorder %v3715, %v3717
    %v3719 = vsel %vm3718, %v3714, inf
    %3720 = vmin.xlane.f32.xlu0 %v3719
    %v3721 = vpop.xlane.xlu0 %3720
    %v3722 = vcvt.f32.s32 %v3721
    %v3723 = vcvt.f32.s32 %v3717
    %v3724 = vshll.u32 %v3723, 16
    %v3725 = vadd.s32 %v3724, %v3722
    %v3726 = vand.u32 %v2012, 65535
    %v3727 = vshra.s32 %v2012, 16
    %v3728 = vcvt.s32.f32 %v3726
    %v3729 = vcvt.s32.f32 %v3727
    %3730 = vmin.xlane.f32.xlu0 %v3729
    %v3731 = vpop.xlane.xlu0 %3730
    %vm3732 = vcmp.eq.f32.partialorder %v3729, %v3731
    %v3733 = vsel %vm3732, %v3728, inf
    %3734 = vmin.xlane.f32.xlu0 %v3733
    %v3735 = vpop.xlane.xlu0 %3734
    %v3736 = vcvt.f32.s32 %v3735
    %v3737 = vcvt.f32.s32 %v3731
    %v3738 = vshll.u32 %v3737, 16
    %v3739 = vadd.s32 %v3738, %v3736
    %v3740 = vand.u32 %v2013, 65535
    %v3741 = vshra.s32 %v2013, 16
    %v3742 = vcvt.s32.f32 %v3740
    %v3743 = vcvt.s32.f32 %v3741
    %3744 = vmin.xlane.f32.xlu0 %v3743
    %v3745 = vpop.xlane.xlu0 %3744
    %vm3746 = vcmp.eq.f32.partialorder %v3743, %v3745
    %v3747 = vsel %vm3746, %v3742, inf
    %3748 = vmin.xlane.f32.xlu0 %v3747
    %v3749 = vpop.xlane.xlu0 %3748
    %v3750 = vcvt.f32.s32 %v3749
    %v3751 = vcvt.f32.s32 %v3745
    %v3752 = vshll.u32 %v3751, 16
    %v3753 = vadd.s32 %v3752, %v3750
    %v3754 = vand.u32 %v2014, 65535
    %v3755 = vshra.s32 %v2014, 16
    %v3756 = vcvt.s32.f32 %v3754
    %v3757 = vcvt.s32.f32 %v3755
    %3758 = vmin.xlane.f32.xlu0 %v3757
    %v3759 = vpop.xlane.xlu0 %3758
    %vm3760 = vcmp.eq.f32.partialorder %v3757, %v3759
    %v3761 = vsel %vm3760, %v3756, inf
    %3762 = vmin.xlane.f32.xlu0 %v3761
    %v3763 = vpop.xlane.xlu0 %3762
    %v3764 = vcvt.f32.s32 %v3763
    %v3765 = vcvt.f32.s32 %v3759
    %v3766 = vshll.u32 %v3765, 16
    %v3767 = vadd.s32 %v3766, %v3764
    %v3768 = vand.u32 %v2015, 65535
    %v3769 = vshra.s32 %v2015, 16
    %v3770 = vcvt.s32.f32 %v3768
    %v3771 = vcvt.s32.f32 %v3769
    %3772 = vmin.xlane.f32.xlu0 %v3771
    %v3773 = vpop.xlane.xlu0 %3772
    %vm3774 = vcmp.eq.f32.partialorder %v3771, %v3773
    %v3775 = vsel %vm3774, %v3770, inf
    %3776 = vmin.xlane.f32.xlu0 %v3775
    %v3777 = vpop.xlane.xlu0 %3776
    %v3778 = vcvt.f32.s32 %v3777
    %v3779 = vcvt.f32.s32 %v3773
    %v3780 = vshll.u32 %v3779, 16
    %v3781 = vadd.s32 %v3780, %v3778
    %v3782 = vand.u32 %v2016, 65535
    %v3783 = vshra.s32 %v2016, 16
    %v3784 = vcvt.s32.f32 %v3782
    %v3785 = vcvt.s32.f32 %v3783
    %3786 = vmin.xlane.f32.xlu0 %v3785
    %v3787 = vpop.xlane.xlu0 %3786
    %vm3788 = vcmp.eq.f32.partialorder %v3785, %v3787
    %v3789 = vsel %vm3788, %v3784, inf
    %3790 = vmin.xlane.f32.xlu0 %v3789
    %v3791 = vpop.xlane.xlu0 %3790
    %v3792 = vcvt.f32.s32 %v3791
    %v3793 = vcvt.f32.s32 %v3787
    %v3794 = vshll.u32 %v3793, 16
    %v3795 = vadd.s32 %v3794, %v3792
    %v3796 = vand.u32 %v2017, 65535
    %v3797 = vshra.s32 %v2017, 16
    %v3798 = vcvt.s32.f32 %v3796
    %v3799 = vcvt.s32.f32 %v3797
    %3800 = vmin.xlane.f32.xlu0 %v3799
    %v3801 = vpop.xlane.xlu0 %3800
    %vm3802 = vcmp.eq.f32.partialorder %v3799, %v3801
    %v3803 = vsel %vm3802, %v3798, inf
    %3804 = vmin.xlane.f32.xlu0 %v3803
    %v3805 = vpop.xlane.xlu0 %3804
    %v3806 = vcvt.f32.s32 %v3805
    %v3807 = vcvt.f32.s32 %v3801
    %v3808 = vshll.u32 %v3807, 16
    %v3809 = vadd.s32 %v3808, %v3806
    %vm3810 = vcmp.eq.s32.totalorder %v1761, %v2031
    %vm3811 = vcmp.eq.s32.totalorder %v1761, %v2045
    %vm3812 = vcmp.eq.s32.totalorder %v1761, %v2059
    %vm3813 = vcmp.eq.s32.totalorder %v1761, %v2073
    %vm3814 = vcmp.eq.s32.totalorder %v1761, %v2087
    %vm3815 = vcmp.eq.s32.totalorder %v1761, %v2101
    %vm3816 = vcmp.eq.s32.totalorder %v1761, %v2115
    %vm3817 = vcmp.eq.s32.totalorder %v1761, %v2129
    %vm3818 = vcmp.eq.s32.totalorder %v1761, %v2143
    %vm3819 = vcmp.eq.s32.totalorder %v1761, %v2157
    %vm3820 = vcmp.eq.s32.totalorder %v1761, %v2171
    %vm3821 = vcmp.eq.s32.totalorder %v1761, %v2185
    %vm3822 = vcmp.eq.s32.totalorder %v1761, %v2199
    %vm3823 = vcmp.eq.s32.totalorder %v1761, %v2213
    %vm3824 = vcmp.eq.s32.totalorder %v1761, %v2227
    %vm3825 = vcmp.eq.s32.totalorder %v1761, %v2241
    %vm3826 = vcmp.eq.s32.totalorder %v1761, %v2255
    %vm3827 = vcmp.eq.s32.totalorder %v1761, %v2269
    %vm3828 = vcmp.eq.s32.totalorder %v1761, %v2283
    %vm3829 = vcmp.eq.s32.totalorder %v1761, %v2297
    %vm3830 = vcmp.eq.s32.totalorder %v1761, %v2311
    %vm3831 = vcmp.eq.s32.totalorder %v1761, %v2325
    %vm3832 = vcmp.eq.s32.totalorder %v1761, %v2339
    %vm3833 = vcmp.eq.s32.totalorder %v1761, %v2353
    %vm3834 = vcmp.eq.s32.totalorder %v1761, %v2367
    %vm3835 = vcmp.eq.s32.totalorder %v1761, %v2381
    %vm3836 = vcmp.eq.s32.totalorder %v1761, %v2395
    %vm3837 = vcmp.eq.s32.totalorder %v1761, %v2409
    %vm3838 = vcmp.eq.s32.totalorder %v1761, %v2423
    %vm3839 = vcmp.eq.s32.totalorder %v1761, %v2437
    %vm3840 = vcmp.eq.s32.totalorder %v1761, %v2451
    %vm3841 = vcmp.eq.s32.totalorder %v1761, %v2465
    %vm3842 = vcmp.eq.s32.totalorder %v1761, %v2479
    %vm3843 = vcmp.eq.s32.totalorder %v1761, %v2493
    %vm3844 = vcmp.eq.s32.totalorder %v1761, %v2507
    %vm3845 = vcmp.eq.s32.totalorder %v1761, %v2521
    %vm3846 = vcmp.eq.s32.totalorder %v1761, %v2535
    %vm3847 = vcmp.eq.s32.totalorder %v1761, %v2549
    %vm3848 = vcmp.eq.s32.totalorder %v1761, %v2563
    %vm3849 = vcmp.eq.s32.totalorder %v1761, %v2577
    %vm3850 = vcmp.eq.s32.totalorder %v1761, %v2591
    %vm3851 = vcmp.eq.s32.totalorder %v1761, %v2605
    %vm3852 = vcmp.eq.s32.totalorder %v1761, %v2619
    %vm3853 = vcmp.eq.s32.totalorder %v1761, %v2633
    %vm3854 = vcmp.eq.s32.totalorder %v1761, %v2647
    %vm3855 = vcmp.eq.s32.totalorder %v1761, %v2661
    %vm3856 = vcmp.eq.s32.totalorder %v1761, %v2675
    %vm3857 = vcmp.eq.s32.totalorder %v1761, %v2689
    %vm3858 = vcmp.eq.s32.totalorder %v1761, %v2703
    %vm3859 = vcmp.eq.s32.totalorder %v1761, %v2717
    %vm3860 = vcmp.eq.s32.totalorder %v1761, %v2731
    %vm3861 = vcmp.eq.s32.totalorder %v1761, %v2745
    %vm3862 = vcmp.eq.s32.totalorder %v1761, %v2759
    %vm3863 = vcmp.eq.s32.totalorder %v1761, %v2773
    %vm3864 = vcmp.eq.s32.totalorder %v1761, %v2787
    %vm3865 = vcmp.eq.s32.totalorder %v1761, %v2801
    %vm3866 = vcmp.eq.s32.totalorder %v1761, %v2815
    %vm3867 = vcmp.eq.s32.totalorder %v1761, %v2829
    %vm3868 = vcmp.eq.s32.totalorder %v1761, %v2843
    %vm3869 = vcmp.eq.s32.totalorder %v1761, %v2857
    %vm3870 = vcmp.eq.s32.totalorder %v1761, %v2871
    %vm3871 = vcmp.eq.s32.totalorder %v1761, %v2885
    %vm3872 = vcmp.eq.s32.totalorder %v1761, %v2899
    %vm3873 = vcmp.eq.s32.totalorder %v1761, %v2913
    %vm3874 = vcmp.eq.s32.totalorder %v1761, %v2927
    %vm3875 = vcmp.eq.s32.totalorder %v1761, %v2941
    %vm3876 = vcmp.eq.s32.totalorder %v1761, %v2955
    %vm3877 = vcmp.eq.s32.totalorder %v1761, %v2969
    %vm3878 = vcmp.eq.s32.totalorder %v1761, %v2983
    %vm3879 = vcmp.eq.s32.totalorder %v1761, %v2997
    %vm3880 = vcmp.eq.s32.totalorder %v1761, %v3011
    %vm3881 = vcmp.eq.s32.totalorder %v1761, %v3025
    %vm3882 = vcmp.eq.s32.totalorder %v1761, %v3039
    %vm3883 = vcmp.eq.s32.totalorder %v1761, %v3053
    %vm3884 = vcmp.eq.s32.totalorder %v1761, %v3067
    %vm3885 = vcmp.eq.s32.totalorder %v1761, %v3081
    %vm3886 = vcmp.eq.s32.totalorder %v1761, %v3095
    %vm3887 = vcmp.eq.s32.totalorder %v1761, %v3109
    %vm3888 = vcmp.eq.s32.totalorder %v1761, %v3123
    %vm3889 = vcmp.eq.s32.totalorder %v1761, %v3137
    %vm3890 = vcmp.eq.s32.totalorder %v1761, %v3151
    %vm3891 = vcmp.eq.s32.totalorder %v1761, %v3165
    %vm3892 = vcmp.eq.s32.totalorder %v1761, %v3179
    %vm3893 = vcmp.eq.s32.totalorder %v1761, %v3193
    %vm3894 = vcmp.eq.s32.totalorder %v1761, %v3207
    %vm3895 = vcmp.eq.s32.totalorder %v1761, %v3221
    %vm3896 = vcmp.eq.s32.totalorder %v1761, %v3235
    %vm3897 = vcmp.eq.s32.totalorder %v1761, %v3249
    %vm3898 = vcmp.eq.s32.totalorder %v1761, %v3263
    %vm3899 = vcmp.eq.s32.totalorder %v1761, %v3277
    %vm3900 = vcmp.eq.s32.totalorder %v1761, %v3291
    %vm3901 = vcmp.eq.s32.totalorder %v1761, %v3305
    %vm3902 = vcmp.eq.s32.totalorder %v1761, %v3319
    %vm3903 = vcmp.eq.s32.totalorder %v1761, %v3333
    %vm3904 = vcmp.eq.s32.totalorder %v1761, %v3347
    %vm3905 = vcmp.eq.s32.totalorder %v1761, %v3361
    %vm3906 = vcmp.eq.s32.totalorder %v1761, %v3375
    %vm3907 = vcmp.eq.s32.totalorder %v1761, %v3389
    %vm3908 = vcmp.eq.s32.totalorder %v1761, %v3403
    %vm3909 = vcmp.eq.s32.totalorder %v1761, %v3417
    %vm3910 = vcmp.eq.s32.totalorder %v1761, %v3431
    %vm3911 = vcmp.eq.s32.totalorder %v1761, %v3445
    %vm3912 = vcmp.eq.s32.totalorder %v1761, %v3459
    %vm3913 = vcmp.eq.s32.totalorder %v1761, %v3473
    %vm3914 = vcmp.eq.s32.totalorder %v1761, %v3487
    %vm3915 = vcmp.eq.s32.totalorder %v1761, %v3501
    %vm3916 = vcmp.eq.s32.totalorder %v1761, %v3515
    %vm3917 = vcmp.eq.s32.totalorder %v1761, %v3529
    %vm3918 = vcmp.eq.s32.totalorder %v1761, %v3543
    %vm3919 = vcmp.eq.s32.totalorder %v1761, %v3557
    %vm3920 = vcmp.eq.s32.totalorder %v1761, %v3571
    %vm3921 = vcmp.eq.s32.totalorder %v1761, %v3585
    %vm3922 = vcmp.eq.s32.totalorder %v1761, %v3599
    %vm3923 = vcmp.eq.s32.totalorder %v1761, %v3613
    %vm3924 = vcmp.eq.s32.totalorder %v1761, %v3627
    %vm3925 = vcmp.eq.s32.totalorder %v1761, %v3641
    %vm3926 = vcmp.eq.s32.totalorder %v1761, %v3655
    %vm3927 = vcmp.eq.s32.totalorder %v1761, %v3669
    %vm3928 = vcmp.eq.s32.totalorder %v1761, %v3683
    %vm3929 = vcmp.eq.s32.totalorder %v1761, %v3697
    %vm3930 = vcmp.eq.s32.totalorder %v1761, %v3711
    %vm3931 = vcmp.eq.s32.totalorder %v1761, %v3725
    %vm3932 = vcmp.eq.s32.totalorder %v1761, %v3739
    %vm3933 = vcmp.eq.s32.totalorder %v1761, %v3753
    %vm3934 = vcmp.eq.s32.totalorder %v1761, %v3767
    %vm3935 = vcmp.eq.s32.totalorder %v1761, %v3781
    %vm3936 = vcmp.eq.s32.totalorder %v1761, %v3795
    %vm3937 = vcmp.eq.s32.totalorder %v1761, %v3809
    %v3938 = vsel %vm3810, 1, 0
    %v3939 = vsel %vm3811, 1, 0
    %v3940 = vsel %vm3812, 1, 0
    %v3941 = vsel %vm3813, 1, 0
    %v3942 = vsel %vm3814, 1, 0
    %v3943 = vsel %vm3815, 1, 0
    %v3944 = vsel %vm3816, 1, 0
    %v3945 = vsel %vm3817, 1, 0
    %v3946 = vsel %vm3818, 1, 0
    %v3947 = vsel %vm3819, 1, 0
    %v3948 = vsel %vm3820, 1, 0
    %v3949 = vsel %vm3821, 1, 0
    %v3950 = vsel %vm3822, 1, 0
    %v3951 = vsel %vm3823, 1, 0
    %v3952 = vsel %vm3824, 1, 0
    %v3953 = vsel %vm3825, 1, 0
    %v3954 = vsel %vm3826, 1, 0
    %v3955 = vsel %vm3827, 1, 0
    %v3956 = vsel %vm3828, 1, 0
    %v3957 = vsel %vm3829, 1, 0
    %v3958 = vsel %vm3830, 1, 0
    %v3959 = vsel %vm3831, 1, 0
    %v3960 = vsel %vm3832, 1, 0
    %v3961 = vsel %vm3833, 1, 0
    %v3962 = vsel %vm3834, 1, 0
    %v3963 = vsel %vm3835, 1, 0
    %v3964 = vsel %vm3836, 1, 0
    %v3965 = vsel %vm3837, 1, 0
    %v3966 = vsel %vm3838, 1, 0
    %v3967 = vsel %vm3839, 1, 0
    %v3968 = vsel %vm3840, 1, 0
    %v3969 = vsel %vm3841, 1, 0
    %v3970 = vsel %vm3842, 1, 0
    %v3971 = vsel %vm3843, 1, 0
    %v3972 = vsel %vm3844, 1, 0
    %v3973 = vsel %vm3845, 1, 0
    %v3974 = vsel %vm3846, 1, 0
    %v3975 = vsel %vm3847, 1, 0
    %v3976 = vsel %vm3848, 1, 0
    %v3977 = vsel %vm3849, 1, 0
    %v3978 = vsel %vm3850, 1, 0
    %v3979 = vsel %vm3851, 1, 0
    %v3980 = vsel %vm3852, 1, 0
    %v3981 = vsel %vm3853, 1, 0
    %v3982 = vsel %vm3854, 1, 0
    %v3983 = vsel %vm3855, 1, 0
    %v3984 = vsel %vm3856, 1, 0
    %v3985 = vsel %vm3857, 1, 0
    %v3986 = vsel %vm3858, 1, 0
    %v3987 = vsel %vm3859, 1, 0
    %v3988 = vsel %vm3860, 1, 0
    %v3989 = vsel %vm3861, 1, 0
    %v3990 = vsel %vm3862, 1, 0
    %v3991 = vsel %vm3863, 1, 0
    %v3992 = vsel %vm3864, 1, 0
    %v3993 = vsel %vm3865, 1, 0
    %v3994 = vsel %vm3866, 1, 0
    %v3995 = vsel %vm3867, 1, 0
    %v3996 = vsel %vm3868, 1, 0
    %v3997 = vsel %vm3869, 1, 0
    %v3998 = vsel %vm3870, 1, 0
    %v3999 = vsel %vm3871, 1, 0
    %v4000 = vsel %vm3872, 1, 0
    %v4001 = vsel %vm3873, 1, 0
    %v4002 = vsel %vm3874, 1, 0
    %v4003 = vsel %vm3875, 1, 0
    %v4004 = vsel %vm3876, 1, 0
    %v4005 = vsel %vm3877, 1, 0
    %v4006 = vsel %vm3878, 1, 0
    %v4007 = vsel %vm3879, 1, 0
    %v4008 = vsel %vm3880, 1, 0
    %v4009 = vsel %vm3881, 1, 0
    %v4010 = vsel %vm3882, 1, 0
    %v4011 = vsel %vm3883, 1, 0
    %v4012 = vsel %vm3884, 1, 0
    %v4013 = vsel %vm3885, 1, 0
    %v4014 = vsel %vm3886, 1, 0
    %v4015 = vsel %vm3887, 1, 0
    %v4016 = vsel %vm3888, 1, 0
    %v4017 = vsel %vm3889, 1, 0
    %v4018 = vsel %vm3890, 1, 0
    %v4019 = vsel %vm3891, 1, 0
    %v4020 = vsel %vm3892, 1, 0
    %v4021 = vsel %vm3893, 1, 0
    %v4022 = vsel %vm3894, 1, 0
    %v4023 = vsel %vm3895, 1, 0
    %v4024 = vsel %vm3896, 1, 0
    %v4025 = vsel %vm3897, 1, 0
    %v4026 = vsel %vm3898, 1, 0
    %v4027 = vsel %vm3899, 1, 0
    %v4028 = vsel %vm3900, 1, 0
    %v4029 = vsel %vm3901, 1, 0
    %v4030 = vsel %vm3902, 1, 0
    %v4031 = vsel %vm3903, 1, 0
    %v4032 = vsel %vm3904, 1, 0
    %v4033 = vsel %vm3905, 1, 0
    %v4034 = vsel %vm3906, 1, 0
    %v4035 = vsel %vm3907, 1, 0
    %v4036 = vsel %vm3908, 1, 0
    %v4037 = vsel %vm3909, 1, 0
    %v4038 = vsel %vm3910, 1, 0
    %v4039 = vsel %vm3911, 1, 0
    %v4040 = vsel %vm3912, 1, 0
    %v4041 = vsel %vm3913, 1, 0
    %v4042 = vsel %vm3914, 1, 0
    %v4043 = vsel %vm3915, 1, 0
    %v4044 = vsel %vm3916, 1, 0
    %v4045 = vsel %vm3917, 1, 0
    %v4046 = vsel %vm3918, 1, 0
    %v4047 = vsel %vm3919, 1, 0
    %v4048 = vsel %vm3920, 1, 0
    %v4049 = vsel %vm3921, 1, 0
    %v4050 = vsel %vm3922, 1, 0
    %v4051 = vsel %vm3923, 1, 0
    %v4052 = vsel %vm3924, 1, 0
    %v4053 = vsel %vm3925, 1, 0
    %v4054 = vsel %vm3926, 1, 0
    %v4055 = vsel %vm3927, 1, 0
    %v4056 = vsel %vm3928, 1, 0
    %v4057 = vsel %vm3929, 1, 0
    %v4058 = vsel %vm3930, 1, 0
    %v4059 = vsel %vm3931, 1, 0
    %v4060 = vsel %vm3932, 1, 0
    %v4061 = vsel %vm3933, 1, 0
    %v4062 = vsel %vm3934, 1, 0
    %v4063 = vsel %vm3935, 1, 0
    %v4064 = vsel %vm3936, 1, 0
    %v4065 = vsel %vm3937, 1, 0
    %v4066 = vcvt.s32.f32 %v3938
    %v4067 = vcvt.s32.f32 %v3939
    %v4068 = vcvt.s32.f32 %v3940
    %v4069 = vcvt.s32.f32 %v3941
    %v4070 = vcvt.s32.f32 %v3942
    %v4071 = vcvt.s32.f32 %v3943
    %v4072 = vcvt.s32.f32 %v3944
    %v4073 = vcvt.s32.f32 %v3945
    %v4074 = vcvt.s32.f32 %v3946
    %v4075 = vcvt.s32.f32 %v3947
    %v4076 = vcvt.s32.f32 %v3948
    %v4077 = vcvt.s32.f32 %v3949
    %v4078 = vcvt.s32.f32 %v3950
    %v4079 = vcvt.s32.f32 %v3951
    %v4080 = vcvt.s32.f32 %v3952
    %v4081 = vcvt.s32.f32 %v3953
    %v4082 = vcvt.s32.f32 %v3954
    %v4083 = vcvt.s32.f32 %v3955
    %v4084 = vcvt.s32.f32 %v3956
    %v4085 = vcvt.s32.f32 %v3957
    %v4086 = vcvt.s32.f32 %v3958
    %v4087 = vcvt.s32.f32 %v3959
    %v4088 = vcvt.s32.f32 %v3960
    %v4089 = vcvt.s32.f32 %v3961
    %v4090 = vcvt.s32.f32 %v3962
    %v4091 = vcvt.s32.f32 %v3963
    %v4092 = vcvt.s32.f32 %v3964
    %v4093 = vcvt.s32.f32 %v3965
    %v4094 = vcvt.s32.f32 %v3966
    %v4095 = vcvt.s32.f32 %v3967
    %v4096 = vcvt.s32.f32 %v3968
    %v4097 = vcvt.s32.f32 %v3969
    %v4098 = vcvt.s32.f32 %v3970
    %v4099 = vcvt.s32.f32 %v3971
    %v4100 = vcvt.s32.f32 %v3972
    %v4101 = vcvt.s32.f32 %v3973
    %v4102 = vcvt.s32.f32 %v3974
    %v4103 = vcvt.s32.f32 %v3975
    %v4104 = vcvt.s32.f32 %v3976
    %v4105 = vcvt.s32.f32 %v3977
    %v4106 = vcvt.s32.f32 %v3978
    %v4107 = vcvt.s32.f32 %v3979
    %v4108 = vcvt.s32.f32 %v3980
    %v4109 = vcvt.s32.f32 %v3981
    %v4110 = vcvt.s32.f32 %v3982
    %v4111 = vcvt.s32.f32 %v3983
    %v4112 = vcvt.s32.f32 %v3984
    %v4113 = vcvt.s32.f32 %v3985
    %v4114 = vcvt.s32.f32 %v3986
    %v4115 = vcvt.s32.f32 %v3987
    %v4116 = vcvt.s32.f32 %v3988
    %v4117 = vcvt.s32.f32 %v3989
    %v4118 = vcvt.s32.f32 %v3990
    %v4119 = vcvt.s32.f32 %v3991
    %v4120 = vcvt.s32.f32 %v3992
    %v4121 = vcvt.s32.f32 %v3993
    %v4122 = vcvt.s32.f32 %v3994
    %v4123 = vcvt.s32.f32 %v3995
    %v4124 = vcvt.s32.f32 %v3996
    %v4125 = vcvt.s32.f32 %v3997
    %v4126 = vcvt.s32.f32 %v3998
    %v4127 = vcvt.s32.f32 %v3999
    %v4128 = vcvt.s32.f32 %v4000
    %v4129 = vcvt.s32.f32 %v4001
    %v4130 = vcvt.s32.f32 %v4002
    %v4131 = vcvt.s32.f32 %v4003
    %v4132 = vcvt.s32.f32 %v4004
    %v4133 = vcvt.s32.f32 %v4005
    %v4134 = vcvt.s32.f32 %v4006
    %v4135 = vcvt.s32.f32 %v4007
    %v4136 = vcvt.s32.f32 %v4008
    %v4137 = vcvt.s32.f32 %v4009
    %v4138 = vcvt.s32.f32 %v4010
    %v4139 = vcvt.s32.f32 %v4011
    %v4140 = vcvt.s32.f32 %v4012
    %v4141 = vcvt.s32.f32 %v4013
    %v4142 = vcvt.s32.f32 %v4014
    %v4143 = vcvt.s32.f32 %v4015
    %v4144 = vcvt.s32.f32 %v4016
    %v4145 = vcvt.s32.f32 %v4017
    %v4146 = vcvt.s32.f32 %v4018
    %v4147 = vcvt.s32.f32 %v4019
    %v4148 = vcvt.s32.f32 %v4020
    %v4149 = vcvt.s32.f32 %v4021
    %v4150 = vcvt.s32.f32 %v4022
    %v4151 = vcvt.s32.f32 %v4023
    %v4152 = vcvt.s32.f32 %v4024
    %v4153 = vcvt.s32.f32 %v4025
    %v4154 = vcvt.s32.f32 %v4026
    %v4155 = vcvt.s32.f32 %v4027
    %v4156 = vcvt.s32.f32 %v4028
    %v4157 = vcvt.s32.f32 %v4029
    %v4158 = vcvt.s32.f32 %v4030
    %v4159 = vcvt.s32.f32 %v4031
    %v4160 = vcvt.s32.f32 %v4032
    %v4161 = vcvt.s32.f32 %v4033
    %v4162 = vcvt.s32.f32 %v4034
    %v4163 = vcvt.s32.f32 %v4035
    %v4164 = vcvt.s32.f32 %v4036
    %v4165 = vcvt.s32.f32 %v4037
    %v4166 = vcvt.s32.f32 %v4038
    %v4167 = vcvt.s32.f32 %v4039
    %v4168 = vcvt.s32.f32 %v4040
    %v4169 = vcvt.s32.f32 %v4041
    %v4170 = vcvt.s32.f32 %v4042
    %v4171 = vcvt.s32.f32 %v4043
    %v4172 = vcvt.s32.f32 %v4044
    %v4173 = vcvt.s32.f32 %v4045
    %v4174 = vcvt.s32.f32 %v4046
    %v4175 = vcvt.s32.f32 %v4047
    %v4176 = vcvt.s32.f32 %v4048
    %v4177 = vcvt.s32.f32 %v4049
    %v4178 = vcvt.s32.f32 %v4050
    %v4179 = vcvt.s32.f32 %v4051
    %v4180 = vcvt.s32.f32 %v4052
    %v4181 = vcvt.s32.f32 %v4053
    %v4182 = vcvt.s32.f32 %v4054
    %v4183 = vcvt.s32.f32 %v4055
    %v4184 = vcvt.s32.f32 %v4056
    %v4185 = vcvt.s32.f32 %v4057
    %v4186 = vcvt.s32.f32 %v4058
    %v4187 = vcvt.s32.f32 %v4059
    %v4188 = vcvt.s32.f32 %v4060
    %v4189 = vcvt.s32.f32 %v4061
    %v4190 = vcvt.s32.f32 %v4062
    %v4191 = vcvt.s32.f32 %v4063
    %v4192 = vcvt.s32.f32 %v4064
    %v4193 = vcvt.s32.f32 %v4065
    %4194 = vmatprep.subr.mxu0 0.0
    %4195 = vmatpush1.xpose.msra.mxu0 %v147
    %4196 = vmatprep.subr.mxu0 0.0
    %4197 = vmatpush1.xpose.msra.mxu0 %v148
    %4198 = vmatprep.subr.mxu0 0.0
    %4199 = vmatpush1.xpose.msra.mxu0 %v149
    %4200 = vmatprep.subr.mxu0 0.0
    %4201 = vmatpush1.xpose.msra.mxu0 %v150
    %4202 = vmatprep.subr.mxu0 0.0
    %4203 = vmatpush1.xpose.msra.mxu0 0.0
    %4204 = vmatprep.subr.mxu0 0.0
    %4205 = vmatpush1.xpose.msra.mxu0 0.0
    %4206 = vmatprep.subr.mxu0 0.0
    %4207 = vmatpush1.xpose.msra.mxu0 0.0
    %4208 = vmatprep.subr.mxu0 0.0
    %4209 = vmatpush1.xpose.msra.mxu0 0.0
    %4210 = vmatprep.subr.mxu0 0.0
    %4211 = vmatpush1.xpose.msra.mxu0 0.0
    %4212 = vmatprep.subr.mxu0 0.0
    %4213 = vmatpush1.xpose.msra.mxu0 0.0
    %4214 = vmatprep.subr.mxu0 0.0
    %4215 = vmatpush1.xpose.msra.mxu0 0.0
    %4216 = vmatprep.subr.mxu0 0.0
    %4217 = vmatpush1.xpose.msra.mxu0 0.0
    %4218 = vmatprep.subr.mxu0 0.0
    %4219 = vmatpush1.xpose.msra.mxu0 0.0
    %4220 = vmatprep.subr.mxu0 0.0
    %4221 = vmatpush1.xpose.msra.mxu0 0.0
    %4222 = vmatprep.subr.mxu0 0.0
    %4223 = vmatpush1.xpose.msra.mxu0 0.0
    %4224 = vmatprep.subr.mxu0 0.0
    %4225 = vmatpush1.xpose.msra.mxu0 0.0
    %4226 = vmatprep.subr.mxu0 0.0
    %4227 = vmatpush1.xpose.msra.mxu0 0.0
    %4228 = vmatprep.subr.mxu0 0.0
    %4229 = vmatpush1.xpose.msra.mxu0 0.0
    %4230 = vmatprep.subr.mxu0 0.0
    %4231 = vmatpush1.xpose.msra.mxu0 0.0
    %4232 = vmatprep.subr.mxu0 0.0
    %4233 = vmatpush1.xpose.msra.mxu0 0.0
    %4234 = vmatprep.subr.mxu0 0.0
    %4235 = vmatpush1.xpose.msra.mxu0 0.0
    %4236 = vmatprep.subr.mxu0 0.0
    %4237 = vmatpush1.xpose.msra.mxu0 0.0
    %4238 = vmatprep.subr.mxu0 0.0
    %4239 = vmatpush1.xpose.msra.mxu0 0.0
    %4240 = vmatprep.subr.mxu0 0.0
    %4241 = vmatpush1.xpose.msra.mxu0 0.0
    %4242 = vmatprep.subr.mxu0 0.0
    %4243 = vmatpush1.xpose.msra.mxu0 0.0
    %4244 = vmatprep.subr.mxu0 0.0
    %4245 = vmatpush1.xpose.msra.mxu0 0.0
    %4246 = vmatprep.subr.mxu0 0.0
    %4247 = vmatpush1.xpose.msra.mxu0 0.0
    %4248 = vmatprep.subr.mxu0 0.0
    %4249 = vmatpush1.xpose.msra.mxu0 0.0
    %4250 = vmatprep.subr.mxu0 0.0
    %4251 = vmatpush1.xpose.msra.mxu0 0.0
    %4252 = vmatprep.subr.mxu0 0.0
    %4253 = vmatpush1.xpose.msra.mxu0 0.0
    %4254 = vmatprep.subr.mxu0 0.0
    %4255 = vmatpush1.xpose.msra.mxu0 0.0
    %4256 = vmatprep.subr.mxu0 0.0
    %4257 = vmatpush1.xpose.msra.mxu0 0.0
    %4258 = vmatprep.mubr.f32.mxu0 0.0
    %4259 = vmatmul.mubr.f32.gmra.mrb[0].mxu0 %v4066
    %v4260 = vpop.f32.mrb[0].mxu0
    %v4261 = vadd.f32 0.0, %v4260
    %v4262 = vpop.f32.mrb[0].mxu0
    %4263 = vmatprep.mubr.f32.mxu0 0.0
    %4264 = vmatmul.mubr.f32.gmra.mrb[0].mxu0 %v4067
    %v4265 = vpop.f32.mrb[0].mxu0
    %v4266 = vadd.f32 0.0, %v4265
    %v4267 = vpop.f32.mrb[0].mxu0
    %4268 = vmatprep.mubr.f32.mxu0 0.0
    %4269 = vmatmul.mubr.f32.gmra.mrb[0].mxu0 %v4068
    %v4270 = vpop.f32.mrb[0].mxu0
    %v4271 = vadd.f32 0.0, %v4270
    %v4272 = vpop.f32.mrb[0].mxu0
    %4273 = vmatprep.mubr.f32.mxu0 0.0
    %4274 = vmatmul.mubr.f32.gmra.mrb[0].mxu0 %v4069
    %v4275 = vpop.f32.mrb[0].mxu0
    %v4276 = vadd.f32 0.0, %v4275
    %v4277 = vpop.f32.mrb[0].mxu0
    %4278 = vmatprep.mubr.f32.mxu0 0.0
    %4279 = vmatmul.mubr.f32.gmra.mrb[0].mxu0 %v4070
    %v4280 = vpop.f32.mrb[0].mxu0
    %v4281 = vadd.f32 0.0, %v4280
    %v4282 = vpop.f32.mrb[0].mxu0
    %4283 = vmatprep.mubr.f32.mxu0 0.0
    %4284 = vmatmul.mubr.f32.gmra.mrb[0].mxu0 %v4071
    %v4285 = vpop.f32.mrb[0].mxu0
    %v4286 = vadd.f32 0.0, %v4285
    %v4287 = vpop.f32.mrb[0].mxu0
    %4288 = vmatprep.mubr.f32.mxu0 0.0
    %4289 = vmatmul.mubr.f32.gmra.mrb[0].mxu0 %v4072
    %v4290 = vpop.f32.mrb[0].mxu0
    %v4291 = vadd.f32 0.0, %v4290
    %v4292 = vpop.f32.mrb[0].mxu0
    %4293 = vmatprep.mubr.f32.mxu0 0.0
    %4294 = vmatmul.mubr.f32.gmra.mrb[0].mxu0 %v4073
    %v4295 = vpop.f32.mrb[0].mxu0
    %v4296 = vadd.f32 0.0, %v4295
    %v4297 = vpop.f32.mrb[0].mxu0
    %4298 = vmatprep.mubr.f32.mxu0 0.0
    %4299 = vmatmul.mubr.f32.gmra.mrb[0].mxu0 %v4074
    %v4300 = vpop.f32.mrb[0].mxu0
    %v4301 = vadd.f32 0.0, %v4300
    %v4302 = vpop.f32.mrb[0].mxu0
    %4303 = vmatprep.mubr.f32.mxu0 0.0
    %4304 = vmatmul.mubr.f32.gmra.mrb[0].mxu0 %v4075
    %v4305 = vpop.f32.mrb[0].mxu0
    %v4306 = vadd.f32 0.0, %v4305
    %v4307 = vpop.f32.mrb[0].mxu0
    %4308 = vmatprep.mubr.f32.mxu0 0.0
    %4309 = vmatmul.mubr.f32.gmra.mrb[0].mxu0 %v4076
    %v4310 = vpop.f32.mrb[0].mxu0
    %v4311 = vadd.f32 0.0, %v4310
    %v4312 = vpop.f32.mrb[0].mxu0
    %4313 = vmatprep.mubr.f32.mxu0 0.0
    %4314 = vmatmul.mubr.f32.gmra.mrb[0].mxu0 %v4077
    %v4315 = vpop.f32.mrb[0].mxu0
    %v4316 = vadd.f32 0.0, %v4315
    %v4317 = vpop.f32.mrb[0].mxu0
    %4318 = vmatprep.mubr.f32.mxu0 0.0
    %4319 = vmatmul.mubr.f32.gmra.mrb[0].mxu0 %v4078
    %v4320 = vpop.f32.mrb[0].mxu0
    %v4321 = vadd.f32 0.0, %v4320
    %v4322 = vpop.f32.mrb[0].mxu0
    %4323 = vmatprep.mubr.f32.mxu0 0.0
    %4324 = vmatmul.mubr.f32.gmra.mrb[0].mxu0 %v4079
    %v4325 = vpop.f32.mrb[0].mxu0
    %v4326 = vadd.f32 0.0, %v4325
    %v4327 = vpop.f32.mrb[0].mxu0
    %4328 = vmatprep.mubr.f32.mxu0 0.0
    %4329 = vmatmul.mubr.f32.gmra.mrb[0].mxu0 %v4080
    %v4330 = vpop.f32.mrb[0].mxu0
    %v4331 = vadd.f32 0.0, %v4330
    %v4332 = vpop.f32.mrb[0].mxu0
    %4333 = vmatprep.mubr.f32.mxu0 0.0
    %4334 = vmatmul.mubr.f32.gmra.mrb[0].mxu0 %v4081
    %v4335 = vpop.f32.mrb[0].mxu0
    %v4336 = vadd.f32 0.0, %v4335
    %v4337 = vpop.f32.mrb[0].mxu0
    %4338 = vmatprep.mubr.f32.mxu0 0.0
    %4339 = vmatmul.mubr.f32.gmra.mrb[0].mxu0 %v4082
    %v4340 = vpop.f32.mrb[0].mxu0
    %v4341 = vadd.f32 0.0, %v4340
    %v4342 = vpop.f32.mrb[0].mxu0
    %4343 = vmatprep.mubr.f32.mxu0 0.0
    %4344 = vmatmul.mubr.f32.gmra.mrb[0].mxu0 %v4083
    %v4345 = vpop.f32.mrb[0].mxu0
    %v4346 = vadd.f32 0.0, %v4345
    %v4347 = vpop.f32.mrb[0].mxu0
    %4348 = vmatprep.mubr.f32.mxu0 0.0
    %4349 = vmatmul.mubr.f32.gmra.mrb[0].mxu0 %v4084
    %v4350 = vpop.f32.mrb[0].mxu0
    %v4351 = vadd.f32 0.0, %v4350
    %v4352 = vpop.f32.mrb[0].mxu0
    %4353 = vmatprep.mubr.f32.mxu0 0.0
    %4354 = vmatmul.mubr.f32.gmra.mrb[0].mxu0 %v4085
    %v4355 = vpop.f32.mrb[0].mxu0
    %v4356 = vadd.f32 0.0, %v4355
    %v4357 = vpop.f32.mrb[0].mxu0
    %4358 = vmatprep.mubr.f32.mxu0 0.0
    %4359 = vmatmul.mubr.f32.gmra.mrb[0].mxu0 %v4086
    %v4360 = vpop.f32.mrb[0].mxu0
    %v4361 = vadd.f32 0.0, %v4360
    %v4362 = vpop.f32.mrb[0].mxu0
    %4363 = vmatprep.mubr.f32.mxu0 0.0
    %4364 = vmatmul.mubr.f32.gmra.mrb[0].mxu0 %v4087
    %v4365 = vpop.f32.mrb[0].mxu0
    %v4366 = vadd.f32 0.0, %v4365
    %v4367 = vpop.f32.mrb[0].mxu0
    %4368 = vmatprep.mubr.f32.mxu0 0.0
    %4369 = vmatmul.mubr.f32.gmra.mrb[0].mxu0 %v4088
    %v4370 = vpop.f32.mrb[0].mxu0
    %v4371 = vadd.f32 0.0, %v4370
    %v4372 = vpop.f32.mrb[0].mxu0
    %4373 = vmatprep.mubr.f32.mxu0 0.0
    %4374 = vmatmul.mubr.f32.gmra.mrb[0].mxu0 %v4089
    %v4375 = vpop.f32.mrb[0].mxu0
    %v4376 = vadd.f32 0.0, %v4375
    %v4377 = vpop.f32.mrb[0].mxu0
    %4378 = vmatprep.mubr.f32.mxu0 0.0
    %4379 = vmatmul.mubr.f32.gmra.mrb[0].mxu0 %v4090
    %v4380 = vpop.f32.mrb[0].mxu0
    %v4381 = vadd.f32 0.0, %v4380
    %v4382 = vpop.f32.mrb[0].mxu0
    %4383 = vmatprep.mubr.f32.mxu0 0.0
    %4384 = vmatmul.mubr.f32.gmra.mrb[0].mxu0 %v4091
    %v4385 = vpop.f32.mrb[0].mxu0
    %v4386 = vadd.f32 0.0, %v4385
    %v4387 = vpop.f32.mrb[0].mxu0
    %4388 = vmatprep.mubr.f32.mxu0 0.0
    %4389 = vmatmul.mubr.f32.gmra.mrb[0].mxu0 %v4092
    %v4390 = vpop.f32.mrb[0].mxu0
    %v4391 = vadd.f32 0.0, %v4390
    %v4392 = vpop.f32.mrb[0].mxu0
    %4393 = vmatprep.mubr.f32.mxu0 0.0
    %4394 = vmatmul.mubr.f32.gmra.mrb[0].mxu0 %v4093
    %v4395 = vpop.f32.mrb[0].mxu0
    %v4396 = vadd.f32 0.0, %v4395
    %v4397 = vpop.f32.mrb[0].mxu0
    %4398 = vmatprep.mubr.f32.mxu0 0.0
    %4399 = vmatmul.mubr.f32.gmra.mrb[0].mxu0 %v4094
    %v4400 = vpop.f32.mrb[0].mxu0
    %v4401 = vadd.f32 0.0, %v4400
    %v4402 = vpop.f32.mrb[0].mxu0
    %4403 = vmatprep.mubr.f32.mxu0 0.0
    %4404 = vmatmul.mubr.f32.gmra.mrb[0].mxu0 %v4095
    %v4405 = vpop.f32.mrb[0].mxu0
    %v4406 = vadd.f32 0.0, %v4405
    %v4407 = vpop.f32.mrb[0].mxu0
    %4408 = vmatprep.mubr.f32.mxu0 0.0
    %4409 = vmatmul.mubr.f32.gmra.mrb[0].mxu0 %v4096
    %v4410 = vpop.f32.mrb[0].mxu0
    %v4411 = vadd.f32 0.0, %v4410
    %v4412 = vpop.f32.mrb[0].mxu0
    %4413 = vmatprep.mubr.f32.mxu0 0.0
    %4414 = vmatmul.mubr.f32.gmra.mrb[0].mxu0 %v4097
    %v4415 = vpop.f32.mrb[0].mxu0
    %v4416 = vadd.f32 0.0, %v4415
    %v4417 = vpop.f32.mrb[0].mxu0
    %4418 = vmatprep.mubr.f32.mxu0 0.0
    %4419 = vmatmul.mubr.f32.gmra.mrb[0].mxu0 %v4098
    %v4420 = vpop.f32.mrb[0].mxu0
    %v4421 = vadd.f32 0.0, %v4420
    %v4422 = vpop.f32.mrb[0].mxu0
    %4423 = vmatprep.mubr.f32.mxu0 0.0
    %4424 = vmatmul.mubr.f32.gmra.mrb[0].mxu0 %v4099
    %v4425 = vpop.f32.mrb[0].mxu0
    %v4426 = vadd.f32 0.0, %v4425
    %v4427 = vpop.f32.mrb[0].mxu0
    %4428 = vmatprep.mubr.f32.mxu0 0.0
    %4429 = vmatmul.mubr.f32.gmra.mrb[0].mxu0 %v4100
    %v4430 = vpop.f32.mrb[0].mxu0
    %v4431 = vadd.f32 0.0, %v4430
    %v4432 = vpop.f32.mrb[0].mxu0
    %4433 = vmatprep.mubr.f32.mxu0 0.0
    %4434 = vmatmul.mubr.f32.gmra.mrb[0].mxu0 %v4101
    %v4435 = vpop.f32.mrb[0].mxu0
    %v4436 = vadd.f32 0.0, %v4435
    %v4437 = vpop.f32.mrb[0].mxu0
    %4438 = vmatprep.mubr.f32.mxu0 0.0
    %4439 = vmatmul.mubr.f32.gmra.mrb[0].mxu0 %v4102
    %v4440 = vpop.f32.mrb[0].mxu0
    %v4441 = vadd.f32 0.0, %v4440
    %v4442 = vpop.f32.mrb[0].mxu0
    %4443 = vmatprep.mubr.f32.mxu0 0.0
    %4444 = vmatmul.mubr.f32.gmra.mrb[0].mxu0 %v4103
    %v4445 = vpop.f32.mrb[0].mxu0
    %v4446 = vadd.f32 0.0, %v4445
    %v4447 = vpop.f32.mrb[0].mxu0
    %4448 = vmatprep.mubr.f32.mxu0 0.0
    %4449 = vmatmul.mubr.f32.gmra.mrb[0].mxu0 %v4104
    %v4450 = vpop.f32.mrb[0].mxu0
    %v4451 = vadd.f32 0.0, %v4450
    %v4452 = vpop.f32.mrb[0].mxu0
    %4453 = vmatprep.mubr.f32.mxu0 0.0
    %4454 = vmatmul.mubr.f32.gmra.mrb[0].mxu0 %v4105
    %v4455 = vpop.f32.mrb[0].mxu0
    %v4456 = vadd.f32 0.0, %v4455
    %v4457 = vpop.f32.mrb[0].mxu0
    %4458 = vmatprep.mubr.f32.mxu0 0.0
    %4459 = vmatmul.mubr.f32.gmra.mrb[0].mxu0 %v4106
    %v4460 = vpop.f32.mrb[0].mxu0
    %v4461 = vadd.f32 0.0, %v4460
    %v4462 = vpop.f32.mrb[0].mxu0
    %4463 = vmatprep.mubr.f32.mxu0 0.0
    %4464 = vmatmul.mubr.f32.gmra.mrb[0].mxu0 %v4107
    %v4465 = vpop.f32.mrb[0].mxu0
    %v4466 = vadd.f32 0.0, %v4465
    %v4467 = vpop.f32.mrb[0].mxu0
    %4468 = vmatprep.mubr.f32.mxu0 0.0
    %4469 = vmatmul.mubr.f32.gmra.mrb[0].mxu0 %v4108
    %v4470 = vpop.f32.mrb[0].mxu0
    %v4471 = vadd.f32 0.0, %v4470
    %v4472 = vpop.f32.mrb[0].mxu0
    %4473 = vmatprep.mubr.f32.mxu0 0.0
    %4474 = vmatmul.mubr.f32.gmra.mrb[0].mxu0 %v4109
    %v4475 = vpop.f32.mrb[0].mxu0
    %v4476 = vadd.f32 0.0, %v4475
    %v4477 = vpop.f32.mrb[0].mxu0
    %4478 = vmatprep.mubr.f32.mxu0 0.0
    %4479 = vmatmul.mubr.f32.gmra.mrb[0].mxu0 %v4110
    %v4480 = vpop.f32.mrb[0].mxu0
    %v4481 = vadd.f32 0.0, %v4480
    %v4482 = vpop.f32.mrb[0].mxu0
    %4483 = vmatprep.mubr.f32.mxu0 0.0
    %4484 = vmatmul.mubr.f32.gmra.mrb[0].mxu0 %v4111
    %v4485 = vpop.f32.mrb[0].mxu0
    %v4486 = vadd.f32 0.0, %v4485
    %v4487 = vpop.f32.mrb[0].mxu0
    %4488 = vmatprep.mubr.f32.mxu0 0.0
    %4489 = vmatmul.mubr.f32.gmra.mrb[0].mxu0 %v4112
    %v4490 = vpop.f32.mrb[0].mxu0
    %v4491 = vadd.f32 0.0, %v4490
    %v4492 = vpop.f32.mrb[0].mxu0
    %4493 = vmatprep.mubr.f32.mxu0 0.0
    %4494 = vmatmul.mubr.f32.gmra.mrb[0].mxu0 %v4113
    %v4495 = vpop.f32.mrb[0].mxu0
    %v4496 = vadd.f32 0.0, %v4495
    %v4497 = vpop.f32.mrb[0].mxu0
    %4498 = vmatprep.mubr.f32.mxu0 0.0
    %4499 = vmatmul.mubr.f32.gmra.mrb[0].mxu0 %v4114
    %v4500 = vpop.f32.mrb[0].mxu0
    %v4501 = vadd.f32 0.0, %v4500
    %v4502 = vpop.f32.mrb[0].mxu0
    %4503 = vmatprep.mubr.f32.mxu0 0.0
    %4504 = vmatmul.mubr.f32.gmra.mrb[0].mxu0 %v4115
    %v4505 = vpop.f32.mrb[0].mxu0
    %v4506 = vadd.f32 0.0, %v4505
    %v4507 = vpop.f32.mrb[0].mxu0
    %4508 = vmatprep.mubr.f32.mxu0 0.0
    %4509 = vmatmul.mubr.f32.gmra.mrb[0].mxu0 %v4116
    %v4510 = vpop.f32.mrb[0].mxu0
    %v4511 = vadd.f32 0.0, %v4510
    %v4512 = vpop.f32.mrb[0].mxu0
    %4513 = vmatprep.mubr.f32.mxu0 0.0
    %4514 = vmatmul.mubr.f32.gmra.mrb[0].mxu0 %v4117
    %v4515 = vpop.f32.mrb[0].mxu0
    %v4516 = vadd.f32 0.0, %v4515
    %v4517 = vpop.f32.mrb[0].mxu0
    %4518 = vmatprep.mubr.f32.mxu0 0.0
    %4519 = vmatmul.mubr.f32.gmra.mrb[0].mxu0 %v4118
    %v4520 = vpop.f32.mrb[0].mxu0
    %v4521 = vadd.f32 0.0, %v4520
    %v4522 = vpop.f32.mrb[0].mxu0
    %4523 = vmatprep.mubr.f32.mxu0 0.0
    %4524 = vmatmul.mubr.f32.gmra.mrb[0].mxu0 %v4119
    %v4525 = vpop.f32.mrb[0].mxu0
    %v4526 = vadd.f32 0.0, %v4525
    %v4527 = vpop.f32.mrb[0].mxu0
    %4528 = vmatprep.mubr.f32.mxu0 0.0
    %4529 = vmatmul.mubr.f32.gmra.mrb[0].mxu0 %v4120
    %v4530 = vpop.f32.mrb[0].mxu0
    %v4531 = vadd.f32 0.0, %v4530
    %v4532 = vpop.f32.mrb[0].mxu0
    %4533 = vmatprep.mubr.f32.mxu0 0.0
    %4534 = vmatmul.mubr.f32.gmra.mrb[0].mxu0 %v4121
    %v4535 = vpop.f32.mrb[0].mxu0
    %v4536 = vadd.f32 0.0, %v4535
    %v4537 = vpop.f32.mrb[0].mxu0
    %4538 = vmatprep.mubr.f32.mxu0 0.0
    %4539 = vmatmul.mubr.f32.gmra.mrb[0].mxu0 %v4122
    %v4540 = vpop.f32.mrb[0].mxu0
    %v4541 = vadd.f32 0.0, %v4540
    %v4542 = vpop.f32.mrb[0].mxu0
    %4543 = vmatprep.mubr.f32.mxu0 0.0
    %4544 = vmatmul.mubr.f32.gmra.mrb[0].mxu0 %v4123
    %v4545 = vpop.f32.mrb[0].mxu0
    %v4546 = vadd.f32 0.0, %v4545
    %v4547 = vpop.f32.mrb[0].mxu0
    %4548 = vmatprep.mubr.f32.mxu0 0.0
    %4549 = vmatmul.mubr.f32.gmra.mrb[0].mxu0 %v4124
    %v4550 = vpop.f32.mrb[0].mxu0
    %v4551 = vadd.f32 0.0, %v4550
    %v4552 = vpop.f32.mrb[0].mxu0
    %4553 = vmatprep.mubr.f32.mxu0 0.0
    %4554 = vmatmul.mubr.f32.gmra.mrb[0].mxu0 %v4125
    %v4555 = vpop.f32.mrb[0].mxu0
    %v4556 = vadd.f32 0.0, %v4555
    %v4557 = vpop.f32.mrb[0].mxu0
    %4558 = vmatprep.mubr.f32.mxu0 0.0
    %4559 = vmatmul.mubr.f32.gmra.mrb[0].mxu0 %v4126
    %v4560 = vpop.f32.mrb[0].mxu0
    %v4561 = vadd.f32 0.0, %v4560
    %v4562 = vpop.f32.mrb[0].mxu0
    %4563 = vmatprep.mubr.f32.mxu0 0.0
    %4564 = vmatmul.mubr.f32.gmra.mrb[0].mxu0 %v4127
    %v4565 = vpop.f32.mrb[0].mxu0
    %v4566 = vadd.f32 0.0, %v4565
    %v4567 = vpop.f32.mrb[0].mxu0
    %4568 = vmatprep.mubr.f32.mxu0 0.0
    %4569 = vmatmul.mubr.f32.gmra.mrb[0].mxu0 %v4128
    %v4570 = vpop.f32.mrb[0].mxu0
    %v4571 = vadd.f32 0.0, %v4570
    %v4572 = vpop.f32.mrb[0].mxu0
    %4573 = vmatprep.mubr.f32.mxu0 0.0
    %4574 = vmatmul.mubr.f32.gmra.mrb[0].mxu0 %v4129
    %v4575 = vpop.f32.mrb[0].mxu0
    %v4576 = vadd.f32 0.0, %v4575
    %v4577 = vpop.f32.mrb[0].mxu0
    %4578 = vmatprep.mubr.f32.mxu0 0.0
    %4579 = vmatmul.mubr.f32.gmra.mrb[0].mxu0 %v4130
    %v4580 = vpop.f32.mrb[0].mxu0
    %v4581 = vadd.f32 0.0, %v4580
    %v4582 = vpop.f32.mrb[0].mxu0
    %4583 = vmatprep.mubr.f32.mxu0 0.0
    %4584 = vmatmul.mubr.f32.gmra.mrb[0].mxu0 %v4131
    %v4585 = vpop.f32.mrb[0].mxu0
    %v4586 = vadd.f32 0.0, %v4585
    %v4587 = vpop.f32.mrb[0].mxu0
    %4588 = vmatprep.mubr.f32.mxu0 0.0
    %4589 = vmatmul.mubr.f32.gmra.mrb[0].mxu0 %v4132
    %v4590 = vpop.f32.mrb[0].mxu0
    %v4591 = vadd.f32 0.0, %v4590
    %v4592 = vpop.f32.mrb[0].mxu0
    %4593 = vmatprep.mubr.f32.mxu0 0.0
    %4594 = vmatmul.mubr.f32.gmra.mrb[0].mxu0 %v4133
    %v4595 = vpop.f32.mrb[0].mxu0
    %v4596 = vadd.f32 0.0, %v4595
    %v4597 = vpop.f32.mrb[0].mxu0
    %4598 = vmatprep.mubr.f32.mxu0 0.0
    %4599 = vmatmul.mubr.f32.gmra.mrb[0].mxu0 %v4134
    %v4600 = vpop.f32.mrb[0].mxu0
    %v4601 = vadd.f32 0.0, %v4600
    %v4602 = vpop.f32.mrb[0].mxu0
    %4603 = vmatprep.mubr.f32.mxu0 0.0
    %4604 = vmatmul.mubr.f32.gmra.mrb[0].mxu0 %v4135
    %v4605 = vpop.f32.mrb[0].mxu0
    %v4606 = vadd.f32 0.0, %v4605
    %v4607 = vpop.f32.mrb[0].mxu0
    %4608 = vmatprep.mubr.f32.mxu0 0.0
    %4609 = vmatmul.mubr.f32.gmra.mrb[0].mxu0 %v4136
    %v4610 = vpop.f32.mrb[0].mxu0
    %v4611 = vadd.f32 0.0, %v4610
    %v4612 = vpop.f32.mrb[0].mxu0
    %4613 = vmatprep.mubr.f32.mxu0 0.0
    %4614 = vmatmul.mubr.f32.gmra.mrb[0].mxu0 %v4137
    %v4615 = vpop.f32.mrb[0].mxu0
    %v4616 = vadd.f32 0.0, %v4615
    %v4617 = vpop.f32.mrb[0].mxu0
    %4618 = vmatprep.mubr.f32.mxu0 0.0
    %4619 = vmatmul.mubr.f32.gmra.mrb[0].mxu0 %v4138
    %v4620 = vpop.f32.mrb[0].mxu0
    %v4621 = vadd.f32 0.0, %v4620
    %v4622 = vpop.f32.mrb[0].mxu0
    %4623 = vmatprep.mubr.f32.mxu0 0.0
    %4624 = vmatmul.mubr.f32.gmra.mrb[0].mxu0 %v4139
    %v4625 = vpop.f32.mrb[0].mxu0
    %v4626 = vadd.f32 0.0, %v4625
    %v4627 = vpop.f32.mrb[0].mxu0
    %4628 = vmatprep.mubr.f32.mxu0 0.0
    %4629 = vmatmul.mubr.f32.gmra.mrb[0].mxu0 %v4140
    %v4630 = vpop.f32.mrb[0].mxu0
    %v4631 = vadd.f32 0.0, %v4630
    %v4632 = vpop.f32.mrb[0].mxu0
    %4633 = vmatprep.mubr.f32.mxu0 0.0
    %4634 = vmatmul.mubr.f32.gmra.mrb[0].mxu0 %v4141
    %v4635 = vpop.f32.mrb[0].mxu0
    %v4636 = vadd.f32 0.0, %v4635
    %v4637 = vpop.f32.mrb[0].mxu0
    %4638 = vmatprep.mubr.f32.mxu0 0.0
    %4639 = vmatmul.mubr.f32.gmra.mrb[0].mxu0 %v4142
    %v4640 = vpop.f32.mrb[0].mxu0
    %v4641 = vadd.f32 0.0, %v4640
    %v4642 = vpop.f32.mrb[0].mxu0
    %4643 = vmatprep.mubr.f32.mxu0 0.0
    %4644 = vmatmul.mubr.f32.gmra.mrb[0].mxu0 %v4143
    %v4645 = vpop.f32.mrb[0].mxu0
    %v4646 = vadd.f32 0.0, %v4645
    %v4647 = vpop.f32.mrb[0].mxu0
    %4648 = vmatprep.mubr.f32.mxu0 0.0
    %4649 = vmatmul.mubr.f32.gmra.mrb[0].mxu0 %v4144
    %v4650 = vpop.f32.mrb[0].mxu0
    %v4651 = vadd.f32 0.0, %v4650
    %v4652 = vpop.f32.mrb[0].mxu0
    %4653 = vmatprep.mubr.f32.mxu0 0.0
    %4654 = vmatmul.mubr.f32.gmra.mrb[0].mxu0 %v4145
    %v4655 = vpop.f32.mrb[0].mxu0
    %v4656 = vadd.f32 0.0, %v4655
    %v4657 = vpop.f32.mrb[0].mxu0
    %4658 = vmatprep.mubr.f32.mxu0 0.0
    %4659 = vmatmul.mubr.f32.gmra.mrb[0].mxu0 %v4146
    %v4660 = vpop.f32.mrb[0].mxu0
    %v4661 = vadd.f32 0.0, %v4660
    %v4662 = vpop.f32.mrb[0].mxu0
    %4663 = vmatprep.mubr.f32.mxu0 0.0
    %4664 = vmatmul.mubr.f32.gmra.mrb[0].mxu0 %v4147
    %v4665 = vpop.f32.mrb[0].mxu0
    %v4666 = vadd.f32 0.0, %v4665
    %v4667 = vpop.f32.mrb[0].mxu0
    %4668 = vmatprep.mubr.f32.mxu0 0.0
    %4669 = vmatmul.mubr.f32.gmra.mrb[0].mxu0 %v4148
    %v4670 = vpop.f32.mrb[0].mxu0
    %v4671 = vadd.f32 0.0, %v4670
    %v4672 = vpop.f32.mrb[0].mxu0
    %4673 = vmatprep.mubr.f32.mxu0 0.0
    %4674 = vmatmul.mubr.f32.gmra.mrb[0].mxu0 %v4149
    %v4675 = vpop.f32.mrb[0].mxu0
    %v4676 = vadd.f32 0.0, %v4675
    %v4677 = vpop.f32.mrb[0].mxu0
    %4678 = vmatprep.mubr.f32.mxu0 0.0
    %4679 = vmatmul.mubr.f32.gmra.mrb[0].mxu0 %v4150
    %v4680 = vpop.f32.mrb[0].mxu0
    %v4681 = vadd.f32 0.0, %v4680
    %v4682 = vpop.f32.mrb[0].mxu0
    %4683 = vmatprep.mubr.f32.mxu0 0.0
    %4684 = vmatmul.mubr.f32.gmra.mrb[0].mxu0 %v4151
    %v4685 = vpop.f32.mrb[0].mxu0
    %v4686 = vadd.f32 0.0, %v4685
    %v4687 = vpop.f32.mrb[0].mxu0
    %4688 = vmatprep.mubr.f32.mxu0 0.0
    %4689 = vmatmul.mubr.f32.gmra.mrb[0].mxu0 %v4152
    %v4690 = vpop.f32.mrb[0].mxu0
    %v4691 = vadd.f32 0.0, %v4690
    %v4692 = vpop.f32.mrb[0].mxu0
    %4693 = vmatprep.mubr.f32.mxu0 0.0
    %4694 = vmatmul.mubr.f32.gmra.mrb[0].mxu0 %v4153
    %v4695 = vpop.f32.mrb[0].mxu0
    %v4696 = vadd.f32 0.0, %v4695
    %v4697 = vpop.f32.mrb[0].mxu0
    %4698 = vmatprep.mubr.f32.mxu0 0.0
    %4699 = vmatmul.mubr.f32.gmra.mrb[0].mxu0 %v4154
    %v4700 = vpop.f32.mrb[0].mxu0
    %v4701 = vadd.f32 0.0, %v4700
    %v4702 = vpop.f32.mrb[0].mxu0
    %4703 = vmatprep.mubr.f32.mxu0 0.0
    %4704 = vmatmul.mubr.f32.gmra.mrb[0].mxu0 %v4155
    %v4705 = vpop.f32.mrb[0].mxu0
    %v4706 = vadd.f32 0.0, %v4705
    %v4707 = vpop.f32.mrb[0].mxu0
    %4708 = vmatprep.mubr.f32.mxu0 0.0
    %4709 = vmatmul.mubr.f32.gmra.mrb[0].mxu0 %v4156
    %v4710 = vpop.f32.mrb[0].mxu0
    %v4711 = vadd.f32 0.0, %v4710
    %v4712 = vpop.f32.mrb[0].mxu0
    %4713 = vmatprep.mubr.f32.mxu0 0.0
    %4714 = vmatmul.mubr.f32.gmra.mrb[0].mxu0 %v4157
    %v4715 = vpop.f32.mrb[0].mxu0
    %v4716 = vadd.f32 0.0, %v4715
    %v4717 = vpop.f32.mrb[0].mxu0
    %4718 = vmatprep.mubr.f32.mxu0 0.0
    %4719 = vmatmul.mubr.f32.gmra.mrb[0].mxu0 %v4158
    %v4720 = vpop.f32.mrb[0].mxu0
    %v4721 = vadd.f32 0.0, %v4720
    %v4722 = vpop.f32.mrb[0].mxu0
    %4723 = vmatprep.mubr.f32.mxu0 0.0
    %4724 = vmatmul.mubr.f32.gmra.mrb[0].mxu0 %v4159
    %v4725 = vpop.f32.mrb[0].mxu0
    %v4726 = vadd.f32 0.0, %v4725
    %v4727 = vpop.f32.mrb[0].mxu0
    %4728 = vmatprep.mubr.f32.mxu0 0.0
    %4729 = vmatmul.mubr.f32.gmra.mrb[0].mxu0 %v4160
    %v4730 = vpop.f32.mrb[0].mxu0
    %v4731 = vadd.f32 0.0, %v4730
    %v4732 = vpop.f32.mrb[0].mxu0
    %4733 = vmatprep.mubr.f32.mxu0 0.0
    %4734 = vmatmul.mubr.f32.gmra.mrb[0].mxu0 %v4161
    %v4735 = vpop.f32.mrb[0].mxu0
    %v4736 = vadd.f32 0.0, %v4735
    %v4737 = vpop.f32.mrb[0].mxu0
    %4738 = vmatprep.mubr.f32.mxu0 0.0
    %4739 = vmatmul.mubr.f32.gmra.mrb[0].mxu0 %v4162
    %v4740 = vpop.f32.mrb[0].mxu0
    %v4741 = vadd.f32 0.0, %v4740
    %v4742 = vpop.f32.mrb[0].mxu0
    %4743 = vmatprep.mubr.f32.mxu0 0.0
    %4744 = vmatmul.mubr.f32.gmra.mrb[0].mxu0 %v4163
    %v4745 = vpop.f32.mrb[0].mxu0
    %v4746 = vadd.f32 0.0, %v4745
    %v4747 = vpop.f32.mrb[0].mxu0
    %4748 = vmatprep.mubr.f32.mxu0 0.0
    %4749 = vmatmul.mubr.f32.gmra.mrb[0].mxu0 %v4164
    %v4750 = vpop.f32.mrb[0].mxu0
    %v4751 = vadd.f32 0.0, %v4750
    %v4752 = vpop.f32.mrb[0].mxu0
    %4753 = vmatprep.mubr.f32.mxu0 0.0
    %4754 = vmatmul.mubr.f32.gmra.mrb[0].mxu0 %v4165
    %v4755 = vpop.f32.mrb[0].mxu0
    %v4756 = vadd.f32 0.0, %v4755
    %v4757 = vpop.f32.mrb[0].mxu0
    %4758 = vmatprep.mubr.f32.mxu0 0.0
    %4759 = vmatmul.mubr.f32.gmra.mrb[0].mxu0 %v4166
    %v4760 = vpop.f32.mrb[0].mxu0
    %v4761 = vadd.f32 0.0, %v4760
    %v4762 = vpop.f32.mrb[0].mxu0
    %4763 = vmatprep.mubr.f32.mxu0 0.0
    %4764 = vmatmul.mubr.f32.gmra.mrb[0].mxu0 %v4167
    %v4765 = vpop.f32.mrb[0].mxu0
    %v4766 = vadd.f32 0.0, %v4765
    %v4767 = vpop.f32.mrb[0].mxu0
    %4768 = vmatprep.mubr.f32.mxu0 0.0
    %4769 = vmatmul.mubr.f32.gmra.mrb[0].mxu0 %v4168
    %v4770 = vpop.f32.mrb[0].mxu0
    %v4771 = vadd.f32 0.0, %v4770
    %v4772 = vpop.f32.mrb[0].mxu0
    %4773 = vmatprep.mubr.f32.mxu0 0.0
    %4774 = vmatmul.mubr.f32.gmra.mrb[0].mxu0 %v4169
    %v4775 = vpop.f32.mrb[0].mxu0
    %v4776 = vadd.f32 0.0, %v4775
    %v4777 = vpop.f32.mrb[0].mxu0
    %4778 = vmatprep.mubr.f32.mxu0 0.0
    %4779 = vmatmul.mubr.f32.gmra.mrb[0].mxu0 %v4170
    %v4780 = vpop.f32.mrb[0].mxu0
    %v4781 = vadd.f32 0.0, %v4780
    %v4782 = vpop.f32.mrb[0].mxu0
    %4783 = vmatprep.mubr.f32.mxu0 0.0
    %4784 = vmatmul.mubr.f32.gmra.mrb[0].mxu0 %v4171
    %v4785 = vpop.f32.mrb[0].mxu0
    %v4786 = vadd.f32 0.0, %v4785
    %v4787 = vpop.f32.mrb[0].mxu0
    %4788 = vmatprep.mubr.f32.mxu0 0.0
    %4789 = vmatmul.mubr.f32.gmra.mrb[0].mxu0 %v4172
    %v4790 = vpop.f32.mrb[0].mxu0
    %v4791 = vadd.f32 0.0, %v4790
    %v4792 = vpop.f32.mrb[0].mxu0
    %4793 = vmatprep.mubr.f32.mxu0 0.0
    %4794 = vmatmul.mubr.f32.gmra.mrb[0].mxu0 %v4173
    %v4795 = vpop.f32.mrb[0].mxu0
    %v4796 = vadd.f32 0.0, %v4795
    %v4797 = vpop.f32.mrb[0].mxu0
    %4798 = vmatprep.mubr.f32.mxu0 0.0
    %4799 = vmatmul.mubr.f32.gmra.mrb[0].mxu0 %v4174
    %v4800 = vpop.f32.mrb[0].mxu0
    %v4801 = vadd.f32 0.0, %v4800
    %v4802 = vpop.f32.mrb[0].mxu0
    %4803 = vmatprep.mubr.f32.mxu0 0.0
    %4804 = vmatmul.mubr.f32.gmra.mrb[0].mxu0 %v4175
    %v4805 = vpop.f32.mrb[0].mxu0
    %v4806 = vadd.f32 0.0, %v4805
    %v4807 = vpop.f32.mrb[0].mxu0
    %4808 = vmatprep.mubr.f32.mxu0 0.0
    %4809 = vmatmul.mubr.f32.gmra.mrb[0].mxu0 %v4176
    %v4810 = vpop.f32.mrb[0].mxu0
    %v4811 = vadd.f32 0.0, %v4810
    %v4812 = vpop.f32.mrb[0].mxu0
    %4813 = vmatprep.mubr.f32.mxu0 0.0
    %4814 = vmatmul.mubr.f32.gmra.mrb[0].mxu0 %v4177
    %v4815 = vpop.f32.mrb[0].mxu0
    %v4816 = vadd.f32 0.0, %v4815
    %v4817 = vpop.f32.mrb[0].mxu0
    %4818 = vmatprep.mubr.f32.mxu0 0.0
    %4819 = vmatmul.mubr.f32.gmra.mrb[0].mxu0 %v4178
    %v4820 = vpop.f32.mrb[0].mxu0
    %v4821 = vadd.f32 0.0, %v4820
    %v4822 = vpop.f32.mrb[0].mxu0
    %4823 = vmatprep.mubr.f32.mxu0 0.0
    %4824 = vmatmul.mubr.f32.gmra.mrb[0].mxu0 %v4179
    %v4825 = vpop.f32.mrb[0].mxu0
    %v4826 = vadd.f32 0.0, %v4825
    %v4827 = vpop.f32.mrb[0].mxu0
    %4828 = vmatprep.mubr.f32.mxu0 0.0
    %4829 = vmatmul.mubr.f32.gmra.mrb[0].mxu0 %v4180
    %v4830 = vpop.f32.mrb[0].mxu0
    %v4831 = vadd.f32 0.0, %v4830
    %v4832 = vpop.f32.mrb[0].mxu0
    %4833 = vmatprep.mubr.f32.mxu0 0.0
    %4834 = vmatmul.mubr.f32.gmra.mrb[0].mxu0 %v4181
    %v4835 = vpop.f32.mrb[0].mxu0
    %v4836 = vadd.f32 0.0, %v4835
    %v4837 = vpop.f32.mrb[0].mxu0
    %4838 = vmatprep.mubr.f32.mxu0 0.0
    %4839 = vmatmul.mubr.f32.gmra.mrb[0].mxu0 %v4182
    %v4840 = vpop.f32.mrb[0].mxu0
    %v4841 = vadd.f32 0.0, %v4840
    %v4842 = vpop.f32.mrb[0].mxu0
    %4843 = vmatprep.mubr.f32.mxu0 0.0
    %4844 = vmatmul.mubr.f32.gmra.mrb[0].mxu0 %v4183
    %v4845 = vpop.f32.mrb[0].mxu0
    %v4846 = vadd.f32 0.0, %v4845
    %v4847 = vpop.f32.mrb[0].mxu0
    %4848 = vmatprep.mubr.f32.mxu0 0.0
    %4849 = vmatmul.mubr.f32.gmra.mrb[0].mxu0 %v4184
    %v4850 = vpop.f32.mrb[0].mxu0
    %v4851 = vadd.f32 0.0, %v4850
    %v4852 = vpop.f32.mrb[0].mxu0
    %4853 = vmatprep.mubr.f32.mxu0 0.0
    %4854 = vmatmul.mubr.f32.gmra.mrb[0].mxu0 %v4185
    %v4855 = vpop.f32.mrb[0].mxu0
    %v4856 = vadd.f32 0.0, %v4855
    %v4857 = vpop.f32.mrb[0].mxu0
    %4858 = vmatprep.mubr.f32.mxu0 0.0
    %4859 = vmatmul.mubr.f32.gmra.mrb[0].mxu0 %v4186
    %v4860 = vpop.f32.mrb[0].mxu0
    %v4861 = vadd.f32 0.0, %v4860
    %v4862 = vpop.f32.mrb[0].mxu0
    %4863 = vmatprep.mubr.f32.mxu0 0.0
    %4864 = vmatmul.mubr.f32.gmra.mrb[0].mxu0 %v4187
    %v4865 = vpop.f32.mrb[0].mxu0
    %v4866 = vadd.f32 0.0, %v4865
    %v4867 = vpop.f32.mrb[0].mxu0
    %4868 = vmatprep.mubr.f32.mxu0 0.0
    %4869 = vmatmul.mubr.f32.gmra.mrb[0].mxu0 %v4188
    %v4870 = vpop.f32.mrb[0].mxu0
    %v4871 = vadd.f32 0.0, %v4870
    %v4872 = vpop.f32.mrb[0].mxu0
    %4873 = vmatprep.mubr.f32.mxu0 0.0
    %4874 = vmatmul.mubr.f32.gmra.mrb[0].mxu0 %v4189
    %v4875 = vpop.f32.mrb[0].mxu0
    %v4876 = vadd.f32 0.0, %v4875
    %v4877 = vpop.f32.mrb[0].mxu0
    %4878 = vmatprep.mubr.f32.mxu0 0.0
    %4879 = vmatmul.mubr.f32.gmra.mrb[0].mxu0 %v4190
    %v4880 = vpop.f32.mrb[0].mxu0
    %v4881 = vadd.f32 0.0, %v4880
    %v4882 = vpop.f32.mrb[0].mxu0
    %4883 = vmatprep.mubr.f32.mxu0 0.0
    %4884 = vmatmul.mubr.f32.gmra.mrb[0].mxu0 %v4191
    %v4885 = vpop.f32.mrb[0].mxu0
    %v4886 = vadd.f32 0.0, %v4885
    %v4887 = vpop.f32.mrb[0].mxu0
    %4888 = vmatprep.mubr.f32.mxu0 0.0
    %4889 = vmatmul.mubr.f32.gmra.mrb[0].mxu0 %v4192
    %v4890 = vpop.f32.mrb[0].mxu0
    %v4891 = vadd.f32 0.0, %v4890
    %v4892 = vpop.f32.mrb[0].mxu0
    %4893 = vmatprep.mubr.f32.mxu0 0.0
    %4894 = vmatmul.mubr.f32.gmra.mrb[0].mxu0 %v4193
    %v4895 = vpop.f32.mrb[0].mxu0
    %v4896 = vadd.f32 0.0, %v4895
    %v4897 = vpop.f32.mrb[0].mxu0
    %4898 = vdwg.mxu0
    %4899 = vst.msk [vmem:[%s3] sm:$0xff] %vm152, %v4261
    %4900 = vst.msk [vmem:[%s3 + $0x8] sm:$0xff] %vm152, %v4266
    %4901 = vst.msk [vmem:[%s3 + $0x10] sm:$0xff] %vm152, %v4271
    %4902 = vst.msk [vmem:[%s3 + $0x18] sm:$0xff] %vm152, %v4276
    %4903 = vst.msk [vmem:[%s3 + $0x20] sm:$0xff] %vm152, %v4281
    %4904 = vst.msk [vmem:[%s3 + $0x28] sm:$0xff] %vm152, %v4286
    %4905 = vst.msk [vmem:[%s3 + $0x30] sm:$0xff] %vm152, %v4291
    %4906 = vst.msk [vmem:[%s3 + $0x38] sm:$0xff] %vm152, %v4296
    %4907 = vst.msk [vmem:[%s3 + $0x40] sm:$0xff] %vm152, %v4301
    %4908 = vst.msk [vmem:[%s3 + $0x48] sm:$0xff] %vm152, %v4306
    %4909 = vst.msk [vmem:[%s3 + $0x50] sm:$0xff] %vm152, %v4311
    %4910 = vst.msk [vmem:[%s3 + $0x58] sm:$0xff] %vm152, %v4316
    %4911 = vst.msk [vmem:[%s3 + $0x60] sm:$0xff] %vm152, %v4321
    %4912 = vst.msk [vmem:[%s3 + $0x68] sm:$0xff] %vm152, %v4326
    %4913 = vst.msk [vmem:[%s3 + $0x70] sm:$0xff] %vm152, %v4331
    %4914 = vst.msk [vmem:[%s3 + $0x78] sm:$0xff] %vm152, %v4336
    %4915 = vst.msk [vmem:[%s3 + $0x80] sm:$0xff] %vm152, %v4341
    %4916 = vst.msk [vmem:[%s3 + $0x88] sm:$0xff] %vm152, %v4346
    %4917 = vst.msk [vmem:[%s3 + $0x90] sm:$0xff] %vm152, %v4351
    %4918 = vst.msk [vmem:[%s3 + $0x98] sm:$0xff] %vm152, %v4356
    %4919 = vst.msk [vmem:[%s3 + $0xa0] sm:$0xff] %vm152, %v4361
    %4920 = vst.msk [vmem:[%s3 + $0xa8] sm:$0xff] %vm152, %v4366
    %4921 = vst.msk [vmem:[%s3 + $0xb0] sm:$0xff] %vm152, %v4371
    %4922 = vst.msk [vmem:[%s3 + $0xb8] sm:$0xff] %vm152, %v4376
    %4923 = vst.msk [vmem:[%s3 + $0xc0] sm:$0xff] %vm152, %v4381
    %4924 = vst.msk [vmem:[%s3 + $0xc8] sm:$0xff] %vm152, %v4386
    %4925 = vst.msk [vmem:[%s3 + $0xd0] sm:$0xff] %vm152, %v4391
    %4926 = vst.msk [vmem:[%s3 + $0xd8] sm:$0xff] %vm152, %v4396
    %4927 = vst.msk [vmem:[%s3 + $0xe0] sm:$0xff] %vm152, %v4401
    %4928 = vst.msk [vmem:[%s3 + $0xe8] sm:$0xff] %vm152, %v4406
    %4929 = vst.msk [vmem:[%s3 + $0xf0] sm:$0xff] %vm152, %v4411
    %4930 = vst.msk [vmem:[%s3 + $0xf8] sm:$0xff] %vm152, %v4416
    %4931 = vst.msk [vmem:[%s3 + $0x100] sm:$0xff] %vm152, %v4421
    %4932 = vst.msk [vmem:[%s3 + $0x108] sm:$0xff] %vm152, %v4426
    %4933 = vst.msk [vmem:[%s3 + $0x110] sm:$0xff] %vm152, %v4431
    %4934 = vst.msk [vmem:[%s3 + $0x118] sm:$0xff] %vm152, %v4436
    %4935 = vst.msk [vmem:[%s3 + $0x120] sm:$0xff] %vm152, %v4441
    %4936 = vst.msk [vmem:[%s3 + $0x128] sm:$0xff] %vm152, %v4446
    %4937 = vst.msk [vmem:[%s3 + $0x130] sm:$0xff] %vm152, %v4451
    %4938 = vst.msk [vmem:[%s3 + $0x138] sm:$0xff] %vm152, %v4456
    %4939 = vst.msk [vmem:[%s3 + $0x140] sm:$0xff] %vm152, %v4461
    %4940 = vst.msk [vmem:[%s3 + $0x148] sm:$0xff] %vm152, %v4466
    %4941 = vst.msk [vmem:[%s3 + $0x150] sm:$0xff] %vm152, %v4471
    %4942 = vst.msk [vmem:[%s3 + $0x158] sm:$0xff] %vm152, %v4476
    %4943 = vst.msk [vmem:[%s3 + $0x160] sm:$0xff] %vm152, %v4481
    %4944 = vst.msk [vmem:[%s3 + $0x168] sm:$0xff] %vm152, %v4486
    %4945 = vst.msk [vmem:[%s3 + $0x170] sm:$0xff] %vm152, %v4491
    %4946 = vst.msk [vmem:[%s3 + $0x178] sm:$0xff] %vm152, %v4496
    %4947 = vst.msk [vmem:[%s3 + $0x180] sm:$0xff] %vm152, %v4501
    %4948 = vst.msk [vmem:[%s3 + $0x188] sm:$0xff] %vm152, %v4506
    %4949 = vst.msk [vmem:[%s3 + $0x190] sm:$0xff] %vm152, %v4511
    %4950 = vst.msk [vmem:[%s3 + $0x198] sm:$0xff] %vm152, %v4516
    %4951 = vst.msk [vmem:[%s3 + $0x1a0] sm:$0xff] %vm152, %v4521
    %4952 = vst.msk [vmem:[%s3 + $0x1a8] sm:$0xff] %vm152, %v4526
    %4953 = vst.msk [vmem:[%s3 + $0x1b0] sm:$0xff] %vm152, %v4531
    %4954 = vst.msk [vmem:[%s3 + $0x1b8] sm:$0xff] %vm152, %v4536
    %4955 = vst.msk [vmem:[%s3 + $0x1c0] sm:$0xff] %vm152, %v4541
    %4956 = vst.msk [vmem:[%s3 + $0x1c8] sm:$0xff] %vm152, %v4546
    %4957 = vst.msk [vmem:[%s3 + $0x1d0] sm:$0xff] %vm152, %v4551
    %4958 = vst.msk [vmem:[%s3 + $0x1d8] sm:$0xff] %vm152, %v4556
    %4959 = vst.msk [vmem:[%s3 + $0x1e0] sm:$0xff] %vm152, %v4561
    %4960 = vst.msk [vmem:[%s3 + $0x1e8] sm:$0xff] %vm152, %v4566
    %4961 = vst.msk [vmem:[%s3 + $0x1f0] sm:$0xff] %vm152, %v4571
    %4962 = vst.msk [vmem:[%s3 + $0x1f8] sm:$0xff] %vm152, %v4576
    %4963 = vst.msk [vmem:[%s3 + $0x200] sm:$0xff] %vm152, %v4581
    %4964 = vst.msk [vmem:[%s3 + $0x208] sm:$0xff] %vm152, %v4586
    %4965 = vst.msk [vmem:[%s3 + $0x210] sm:$0xff] %vm152, %v4591
    %4966 = vst.msk [vmem:[%s3 + $0x218] sm:$0xff] %vm152, %v4596
    %4967 = vst.msk [vmem:[%s3 + $0x220] sm:$0xff] %vm152, %v4601
    %4968 = vst.msk [vmem:[%s3 + $0x228] sm:$0xff] %vm152, %v4606
    %4969 = vst.msk [vmem:[%s3 + $0x230] sm:$0xff] %vm152, %v4611
    %4970 = vst.msk [vmem:[%s3 + $0x238] sm:$0xff] %vm152, %v4616
    %4971 = vst.msk [vmem:[%s3 + $0x240] sm:$0xff] %vm152, %v4621
    %4972 = vst.msk [vmem:[%s3 + $0x248] sm:$0xff] %vm152, %v4626
    %4973 = vst.msk [vmem:[%s3 + $0x250] sm:$0xff] %vm152, %v4631
    %4974 = vst.msk [vmem:[%s3 + $0x258] sm:$0xff] %vm152, %v4636
    %4975 = vst.msk [vmem:[%s3 + $0x260] sm:$0xff] %vm152, %v4641
    %4976 = vst.msk [vmem:[%s3 + $0x268] sm:$0xff] %vm152, %v4646
    %4977 = vst.msk [vmem:[%s3 + $0x270] sm:$0xff] %vm152, %v4651
    %4978 = vst.msk [vmem:[%s3 + $0x278] sm:$0xff] %vm152, %v4656
    %4979 = vst.msk [vmem:[%s3 + $0x280] sm:$0xff] %vm152, %v4661
    %4980 = vst.msk [vmem:[%s3 + $0x288] sm:$0xff] %vm152, %v4666
    %4981 = vst.msk [vmem:[%s3 + $0x290] sm:$0xff] %vm152, %v4671
    %4982 = vst.msk [vmem:[%s3 + $0x298] sm:$0xff] %vm152, %v4676
    %4983 = vst.msk [vmem:[%s3 + $0x2a0] sm:$0xff] %vm152, %v4681
    %4984 = vst.msk [vmem:[%s3 + $0x2a8] sm:$0xff] %vm152, %v4686
    %4985 = vst.msk [vmem:[%s3 + $0x2b0] sm:$0xff] %vm152, %v4691
    %4986 = vst.msk [vmem:[%s3 + $0x2b8] sm:$0xff] %vm152, %v4696
    %4987 = vst.msk [vmem:[%s3 + $0x2c0] sm:$0xff] %vm152, %v4701
    %4988 = vst.msk [vmem:[%s3 + $0x2c8] sm:$0xff] %vm152, %v4706
    %4989 = vst.msk [vmem:[%s3 + $0x2d0] sm:$0xff] %vm152, %v4711
    %4990 = vst.msk [vmem:[%s3 + $0x2d8] sm:$0xff] %vm152, %v4716
    %4991 = vst.msk [vmem:[%s3 + $0x2e0] sm:$0xff] %vm152, %v4721
    %4992 = vst.msk [vmem:[%s3 + $0x2e8] sm:$0xff] %vm152, %v4726
    %4993 = vst.msk [vmem:[%s3 + $0x2f0] sm:$0xff] %vm152, %v4731
    %4994 = vst.msk [vmem:[%s3 + $0x2f8] sm:$0xff] %vm152, %v4736
    %4995 = vst.msk [vmem:[%s3 + $0x300] sm:$0xff] %vm152, %v4741
    %4996 = vst.msk [vmem:[%s3 + $0x308] sm:$0xff] %vm152, %v4746
    %4997 = vst.msk [vmem:[%s3 + $0x310] sm:$0xff] %vm152, %v4751
    %4998 = vst.msk [vmem:[%s3 + $0x318] sm:$0xff] %vm152, %v4756
    %4999 = vst.msk [vmem:[%s3 + $0x320] sm:$0xff] %vm152, %v4761
    %5000 = vst.msk [vmem:[%s3 + $0x328] sm:$0xff] %vm152, %v4766
    %5001 = vst.msk [vmem:[%s3 + $0x330] sm:$0xff] %vm152, %v4771
    %5002 = vst.msk [vmem:[%s3 + $0x338] sm:$0xff] %vm152, %v4776
    %5003 = vst.msk [vmem:[%s3 + $0x340] sm:$0xff] %vm152, %v4781
    %5004 = vst.msk [vmem:[%s3 + $0x348] sm:$0xff] %vm152, %v4786
    %5005 = vst.msk [vmem:[%s3 + $0x350] sm:$0xff] %vm152, %v4791
    %5006 = vst.msk [vmem:[%s3 + $0x358] sm:$0xff] %vm152, %v4796
    %5007 = vst.msk [vmem:[%s3 + $0x360] sm:$0xff] %vm152, %v4801
    %5008 = vst.msk [vmem:[%s3 + $0x368] sm:$0xff] %vm152, %v4806
    %5009 = vst.msk [vmem:[%s3 + $0x370] sm:$0xff] %vm152, %v4811
    %5010 = vst.msk [vmem:[%s3 + $0x378] sm:$0xff] %vm152, %v4816
    %5011 = vst.msk [vmem:[%s3 + $0x380] sm:$0xff] %vm152, %v4821
    %5012 = vst.msk [vmem:[%s3 + $0x388] sm:$0xff] %vm152, %v4826
    %5013 = vst.msk [vmem:[%s3 + $0x390] sm:$0xff] %vm152, %v4831
    %5014 = vst.msk [vmem:[%s3 + $0x398] sm:$0xff] %vm152, %v4836
    %5015 = vst.msk [vmem:[%s3 + $0x3a0] sm:$0xff] %vm152, %v4841
    %5016 = vst.msk [vmem:[%s3 + $0x3a8] sm:$0xff] %vm152, %v4846
    %5017 = vst.msk [vmem:[%s3 + $0x3b0] sm:$0xff] %vm152, %v4851
    %5018 = vst.msk [vmem:[%s3 + $0x3b8] sm:$0xff] %vm152, %v4856
    %5019 = vst.msk [vmem:[%s3 + $0x3c0] sm:$0xff] %vm152, %v4861
    %5020 = vst.msk [vmem:[%s3 + $0x3c8] sm:$0xff] %vm152, %v4866
    %5021 = vst.msk [vmem:[%s3 + $0x3d0] sm:$0xff] %vm152, %v4871
    %5022 = vst.msk [vmem:[%s3 + $0x3d8] sm:$0xff] %vm152, %v4876
    %5023 = vst.msk [vmem:[%s3 + $0x3e0] sm:$0xff] %vm152, %v4881
    %5024 = vst.msk [vmem:[%s3 + $0x3e8] sm:$0xff] %vm152, %v4886
    %5025 = vst.msk [vmem:[%s3 + $0x3f0] sm:$0xff] %vm152, %v4891
    %5026 = vst.msk [vmem:[%s3 + $0x3f8] sm:$0xff] %vm152, %v4896
    %v5027 = vlaneseq
    %v5028 = vshrl.u32 %v5027, 7
    %v5029 = vsub.s32 %v1761, %v5028
    %v5030 = vrot.slane %v2031, %v5029
    %v5031 = vadd.s32 %v1761, 4294967288
    %v5032 = vlaneseq
    %v5033 = vshrl.u32 %v5032, 7
    %v5034 = vsub.s32 %v5031, %v5033
    %v5035 = vrot.slane %v2045, %v5034
    %vm5036 = vcmask 130112
    %v5037 = vsel %vm5036, %v5035, %v5030
    %v5038 = vadd.s32 %v1761, 4294967280
    %v5039 = vlaneseq
    %v5040 = vshrl.u32 %v5039, 7
    %v5041 = vsub.s32 %v5038, %v5040
    %v5042 = vrot.slane %v2059, %v5041
    %vm5043 = vcmask 195712
    %v5044 = vsel %vm5043, %v5042, %v5037
    %v5045 = vadd.s32 %v1761, 4294967272
    %v5046 = vlaneseq
    %v5047 = vshrl.u32 %v5046, 7
    %v5048 = vsub.s32 %v5045, %v5047
    %v5049 = vrot.slane %v2073, %v5048
    %vm5050 = vcmask 261312
    %v5051 = vsel %vm5050, %v5049, %v5044
    %v5052 = vadd.s32 %v1761, 4294967264
    %v5053 = vlaneseq
    %v5054 = vshrl.u32 %v5053, 7
    %v5055 = vsub.s32 %v5052, %v5054
    %v5056 = vrot.slane %v2087, %v5055
    %vm5057 = vcmask 326912
    %v5058 = vsel %vm5057, %v5056, %v5051
    %v5059 = vadd.s32 %v1761, 4294967256
    %v5060 = vlaneseq
    %v5061 = vshrl.u32 %v5060, 7
    %v5062 = vsub.s32 %v5059, %v5061
    %v5063 = vrot.slane %v2101, %v5062
    %vm5064 = vcmask 392512
    %v5065 = vsel %vm5064, %v5063, %v5058
    %v5066 = vadd.s32 %v1761, 4294967248
    %v5067 = vlaneseq
    %v5068 = vshrl.u32 %v5067, 7
    %v5069 = vsub.s32 %v5066, %v5068
    %v5070 = vrot.slane %v2115, %v5069
    %vm5071 = vcmask 458112
    %v5072 = vsel %vm5071, %v5070, %v5065
    %v5073 = vadd.s32 %v1761, 4294967240
    %v5074 = vlaneseq
    %v5075 = vshrl.u32 %v5074, 7
    %v5076 = vsub.s32 %v5073, %v5075
    %v5077 = vrot.slane %v2129, %v5076
    %vm5078 = vcmask 523712
    %v5079 = vsel %vm5078, %v5077, %v5072
    %v5080 = vadd.s32 %v1761, 4294967232
    %v5081 = vlaneseq
    %v5082 = vshrl.u32 %v5081, 7
    %v5083 = vsub.s32 %v5080, %v5082
    %v5084 = vrot.slane %v2143, %v5083
    %vm5085 = vcmask 589312
    %v5086 = vsel %vm5085, %v5084, %v5079
    %v5087 = vadd.s32 %v1761, 4294967224
    %v5088 = vlaneseq
    %v5089 = vshrl.u32 %v5088, 7
    %v5090 = vsub.s32 %v5087, %v5089
    %v5091 = vrot.slane %v2157, %v5090
    %vm5092 = vcmask 654912
    %v5093 = vsel %vm5092, %v5091, %v5086
    %v5094 = vadd.s32 %v1761, 4294967216
    %v5095 = vlaneseq
    %v5096 = vshrl.u32 %v5095, 7
    %v5097 = vsub.s32 %v5094, %v5096
    %v5098 = vrot.slane %v2171, %v5097
    %vm5099 = vcmask 720512
    %v5100 = vsel %vm5099, %v5098, %v5093
    %v5101 = vadd.s32 %v1761, 4294967208
    %v5102 = vlaneseq
    %v5103 = vshrl.u32 %v5102, 7
    %v5104 = vsub.s32 %v5101, %v5103
    %v5105 = vrot.slane %v2185, %v5104
    %vm5106 = vcmask 786112
    %v5107 = vsel %vm5106, %v5105, %v5100
    %v5108 = vadd.s32 %v1761, 4294967200
    %v5109 = vlaneseq
    %v5110 = vshrl.u32 %v5109, 7
    %v5111 = vsub.s32 %v5108, %v5110
    %v5112 = vrot.slane %v2199, %v5111
    %vm5113 = vcmask 851712
    %v5114 = vsel %vm5113, %v5112, %v5107
    %v5115 = vadd.s32 %v1761, 4294967192
    %v5116 = vlaneseq
    %v5117 = vshrl.u32 %v5116, 7
    %v5118 = vsub.s32 %v5115, %v5117
    %v5119 = vrot.slane %v2213, %v5118
    %vm5120 = vcmask 917312
    %v5121 = vsel %vm5120, %v5119, %v5114
    %v5122 = vadd.s32 %v1761, 4294967184
    %v5123 = vlaneseq
    %v5124 = vshrl.u32 %v5123, 7
    %v5125 = vsub.s32 %v5122, %v5124
    %v5126 = vrot.slane %v2227, %v5125
    %vm5127 = vcmask 982912
    %v5128 = vsel %vm5127, %v5126, %v5121
    %v5129 = vadd.s32 %v1761, 4294967176
    %v5130 = vlaneseq
    %v5131 = vshrl.u32 %v5130, 7
    %v5132 = vsub.s32 %v5129, %v5131
    %v5133 = vrot.slane %v2241, %v5132
    %vm5134 = vcmask 1048512
    %v5135 = vsel %vm5134, %v5133, %v5128
    %5136 = vst [vmem:[#allocation2] ss:$8 sm:$0x1] %v5135
    %5137 = vst [vmem:[#allocation2] ss:$8 sm:$0x0] %v5135
    %v5138 = vlaneseq
    %v5139 = vshrl.u32 %v5138, 7
    %v5140 = vsub.s32 %v1761, %v5139
    %v5141 = vrot.slane %v2255, %v5140
    %v5142 = vlaneseq
    %v5143 = vshrl.u32 %v5142, 7
    %v5144 = vsub.s32 %v5031, %v5143
    %v5145 = vrot.slane %v2269, %v5144
    %v5146 = vsel %vm5036, %v5145, %v5141
    %v5147 = vlaneseq
    %v5148 = vshrl.u32 %v5147, 7
    %v5149 = vsub.s32 %v5038, %v5148
    %v5150 = vrot.slane %v2283, %v5149
    %v5151 = vsel %vm5043, %v5150, %v5146
    %v5152 = vlaneseq
    %v5153 = vshrl.u32 %v5152, 7
    %v5154 = vsub.s32 %v5045, %v5153
    %v5155 = vrot.slane %v2297, %v5154
    %v5156 = vsel %vm5050, %v5155, %v5151
    %v5157 = vlaneseq
    %v5158 = vshrl.u32 %v5157, 7
    %v5159 = vsub.s32 %v5052, %v5158
    %v5160 = vrot.slane %v2311, %v5159
    %v5161 = vsel %vm5057, %v5160, %v5156
    %v5162 = vlaneseq
    %v5163 = vshrl.u32 %v5162, 7
    %v5164 = vsub.s32 %v5059, %v5163
    %v5165 = vrot.slane %v2325, %v5164
    %v5166 = vsel %vm5064, %v5165, %v5161
    %v5167 = vlaneseq
    %v5168 = vshrl.u32 %v5167, 7
    %v5169 = vsub.s32 %v5066, %v5168
    %v5170 = vrot.slane %v2339, %v5169
    %v5171 = vsel %vm5071, %v5170, %v5166
    %v5172 = vlaneseq
    %v5173 = vshrl.u32 %v5172, 7
    %v5174 = vsub.s32 %v5073, %v5173
    %v5175 = vrot.slane %v2353, %v5174
    %v5176 = vsel %vm5078, %v5175, %v5171
    %v5177 = vlaneseq
    %v5178 = vshrl.u32 %v5177, 7
    %v5179 = vsub.s32 %v5080, %v5178
    %v5180 = vrot.slane %v2367, %v5179
    %v5181 = vsel %vm5085, %v5180, %v5176
    %v5182 = vlaneseq
    %v5183 = vshrl.u32 %v5182, 7
    %v5184 = vsub.s32 %v5087, %v5183
    %v5185 = vrot.slane %v2381, %v5184
    %v5186 = vsel %vm5092, %v5185, %v5181
    %v5187 = vlaneseq
    %v5188 = vshrl.u32 %v5187, 7
    %v5189 = vsub.s32 %v5094, %v5188
    %v5190 = vrot.slane %v2395, %v5189
    %v5191 = vsel %vm5099, %v5190, %v5186
    %v5192 = vlaneseq
    %v5193 = vshrl.u32 %v5192, 7
    %v5194 = vsub.s32 %v5101, %v5193
    %v5195 = vrot.slane %v2409, %v5194
    %v5196 = vsel %vm5106, %v5195, %v5191
    %v5197 = vlaneseq
    %v5198 = vshrl.u32 %v5197, 7
    %v5199 = vsub.s32 %v5108, %v5198
    %v5200 = vrot.slane %v2423, %v5199
    %v5201 = vsel %vm5113, %v5200, %v5196
    %v5202 = vlaneseq
    %v5203 = vshrl.u32 %v5202, 7
    %v5204 = vsub.s32 %v5115, %v5203
    %v5205 = vrot.slane %v2437, %v5204
    %v5206 = vsel %vm5120, %v5205, %v5201
    %v5207 = vlaneseq
    %v5208 = vshrl.u32 %v5207, 7
    %v5209 = vsub.s32 %v5122, %v5208
    %v5210 = vrot.slane %v2451, %v5209
    %v5211 = vsel %vm5127, %v5210, %v5206
    %v5212 = vlaneseq
    %v5213 = vshrl.u32 %v5212, 7
    %v5214 = vsub.s32 %v5129, %v5213
    %v5215 = vrot.slane %v2465, %v5214
    %v5216 = vsel %vm5134, %v5215, %v5211
    %s5217 = scalar_lea.vmem [#allocation2], 1
    %5218 = vst [vmem:[%s5217] ss:$8 sm:$0x1] %v5216
    %5219 = vst [vmem:[%s5217] ss:$8 sm:$0x0] %v5216
    %v5220 = vlaneseq
    %v5221 = vshrl.u32 %v5220, 7
    %v5222 = vsub.s32 %v1761, %v5221
    %v5223 = vrot.slane %v2479, %v5222
    %v5224 = vlaneseq
    %v5225 = vshrl.u32 %v5224, 7
    %v5226 = vsub.s32 %v5031, %v5225
    %v5227 = vrot.slane %v2493, %v5226
    %v5228 = vsel %vm5036, %v5227, %v5223
    %v5229 = vlaneseq
    %v5230 = vshrl.u32 %v5229, 7
    %v5231 = vsub.s32 %v5038, %v5230
    %v5232 = vrot.slane %v2507, %v5231
    %v5233 = vsel %vm5043, %v5232, %v5228
    %v5234 = vlaneseq
    %v5235 = vshrl.u32 %v5234, 7
    %v5236 = vsub.s32 %v5045, %v5235
    %v5237 = vrot.slane %v2521, %v5236
    %v5238 = vsel %vm5050, %v5237, %v5233
    %v5239 = vlaneseq
    %v5240 = vshrl.u32 %v5239, 7
    %v5241 = vsub.s32 %v5052, %v5240
    %v5242 = vrot.slane %v2535, %v5241
    %v5243 = vsel %vm5057, %v5242, %v5238
    %v5244 = vlaneseq
    %v5245 = vshrl.u32 %v5244, 7
    %v5246 = vsub.s32 %v5059, %v5245
    %v5247 = vrot.slane %v2549, %v5246
    %v5248 = vsel %vm5064, %v5247, %v5243
    %v5249 = vlaneseq
    %v5250 = vshrl.u32 %v5249, 7
    %v5251 = vsub.s32 %v5066, %v5250
    %v5252 = vrot.slane %v2563, %v5251
    %v5253 = vsel %vm5071, %v5252, %v5248
    %v5254 = vlaneseq
    %v5255 = vshrl.u32 %v5254, 7
    %v5256 = vsub.s32 %v5073, %v5255
    %v5257 = vrot.slane %v2577, %v5256
    %v5258 = vsel %vm5078, %v5257, %v5253
    %v5259 = vlaneseq
    %v5260 = vshrl.u32 %v5259, 7
    %v5261 = vsub.s32 %v5080, %v5260
    %v5262 = vrot.slane %v2591, %v5261
    %v5263 = vsel %vm5085, %v5262, %v5258
    %v5264 = vlaneseq
    %v5265 = vshrl.u32 %v5264, 7
    %v5266 = vsub.s32 %v5087, %v5265
    %v5267 = vrot.slane %v2605, %v5266
    %v5268 = vsel %vm5092, %v5267, %v5263
    %v5269 = vlaneseq
    %v5270 = vshrl.u32 %v5269, 7
    %v5271 = vsub.s32 %v5094, %v5270
    %v5272 = vrot.slane %v2619, %v5271
    %v5273 = vsel %vm5099, %v5272, %v5268
    %v5274 = vlaneseq
    %v5275 = vshrl.u32 %v5274, 7
    %v5276 = vsub.s32 %v5101, %v5275
    %v5277 = vrot.slane %v2633, %v5276
    %v5278 = vsel %vm5106, %v5277, %v5273
    %v5279 = vlaneseq
    %v5280 = vshrl.u32 %v5279, 7
    %v5281 = vsub.s32 %v5108, %v5280
    %v5282 = vrot.slane %v2647, %v5281
    %v5283 = vsel %vm5113, %v5282, %v5278
    %v5284 = vlaneseq
    %v5285 = vshrl.u32 %v5284, 7
    %v5286 = vsub.s32 %v5115, %v5285
    %v5287 = vrot.slane %v2661, %v5286
    %v5288 = vsel %vm5120, %v5287, %v5283
    %v5289 = vlaneseq
    %v5290 = vshrl.u32 %v5289, 7
    %v5291 = vsub.s32 %v5122, %v5290
    %v5292 = vrot.slane %v2675, %v5291
    %v5293 = vsel %vm5127, %v5292, %v5288
    %v5294 = vlaneseq
    %v5295 = vshrl.u32 %v5294, 7
    %v5296 = vsub.s32 %v5129, %v5295
    %v5297 = vrot.slane %v2689, %v5296
    %v5298 = vsel %vm5134, %v5297, %v5293
    %s5299 = scalar_lea.vmem [#allocation2], 2
    %5300 = vst [vmem:[%s5299] ss:$8 sm:$0x1] %v5298
    %5301 = vst [vmem:[%s5299] ss:$8 sm:$0x0] %v5298
    %v5302 = vlaneseq
    %v5303 = vshrl.u32 %v5302, 7
    %v5304 = vsub.s32 %v1761, %v5303
    %v5305 = vrot.slane %v2703, %v5304
    %v5306 = vlaneseq
    %v5307 = vshrl.u32 %v5306, 7
    %v5308 = vsub.s32 %v5031, %v5307
    %v5309 = vrot.slane %v2717, %v5308
    %v5310 = vsel %vm5036, %v5309, %v5305
    %v5311 = vlaneseq
    %v5312 = vshrl.u32 %v5311, 7
    %v5313 = vsub.s32 %v5038, %v5312
    %v5314 = vrot.slane %v2731, %v5313
    %v5315 = vsel %vm5043, %v5314, %v5310
    %v5316 = vlaneseq
    %v5317 = vshrl.u32 %v5316, 7
    %v5318 = vsub.s32 %v5045, %v5317
    %v5319 = vrot.slane %v2745, %v5318
    %v5320 = vsel %vm5050, %v5319, %v5315
    %v5321 = vlaneseq
    %v5322 = vshrl.u32 %v5321, 7
    %v5323 = vsub.s32 %v5052, %v5322
    %v5324 = vrot.slane %v2759, %v5323
    %v5325 = vsel %vm5057, %v5324, %v5320
    %v5326 = vlaneseq
    %v5327 = vshrl.u32 %v5326, 7
    %v5328 = vsub.s32 %v5059, %v5327
    %v5329 = vrot.slane %v2773, %v5328
    %v5330 = vsel %vm5064, %v5329, %v5325
    %v5331 = vlaneseq
    %v5332 = vshrl.u32 %v5331, 7
    %v5333 = vsub.s32 %v5066, %v5332
    %v5334 = vrot.slane %v2787, %v5333
    %v5335 = vsel %vm5071, %v5334, %v5330
    %v5336 = vlaneseq
    %v5337 = vshrl.u32 %v5336, 7
    %v5338 = vsub.s32 %v5073, %v5337
    %v5339 = vrot.slane %v2801, %v5338
    %v5340 = vsel %vm5078, %v5339, %v5335
    %v5341 = vlaneseq
    %v5342 = vshrl.u32 %v5341, 7
    %v5343 = vsub.s32 %v5080, %v5342
    %v5344 = vrot.slane %v2815, %v5343
    %v5345 = vsel %vm5085, %v5344, %v5340
    %v5346 = vlaneseq
    %v5347 = vshrl.u32 %v5346, 7
    %v5348 = vsub.s32 %v5087, %v5347
    %v5349 = vrot.slane %v2829, %v5348
    %v5350 = vsel %vm5092, %v5349, %v5345
    %v5351 = vlaneseq
    %v5352 = vshrl.u32 %v5351, 7
    %v5353 = vsub.s32 %v5094, %v5352
    %v5354 = vrot.slane %v2843, %v5353
    %v5355 = vsel %vm5099, %v5354, %v5350
    %v5356 = vlaneseq
    %v5357 = vshrl.u32 %v5356, 7
    %v5358 = vsub.s32 %v5101, %v5357
    %v5359 = vrot.slane %v2857, %v5358
    %v5360 = vsel %vm5106, %v5359, %v5355
    %v5361 = vlaneseq
    %v5362 = vshrl.u32 %v5361, 7
    %v5363 = vsub.s32 %v5108, %v5362
    %v5364 = vrot.slane %v2871, %v5363
    %v5365 = vsel %vm5113, %v5364, %v5360
    %v5366 = vlaneseq
    %v5367 = vshrl.u32 %v5366, 7
    %v5368 = vsub.s32 %v5115, %v5367
    %v5369 = vrot.slane %v2885, %v5368
    %v5370 = vsel %vm5120, %v5369, %v5365
    %v5371 = vlaneseq
    %v5372 = vshrl.u32 %v5371, 7
    %v5373 = vsub.s32 %v5122, %v5372
    %v5374 = vrot.slane %v2899, %v5373
    %v5375 = vsel %vm5127, %v5374, %v5370
    %v5376 = vlaneseq
    %v5377 = vshrl.u32 %v5376, 7
    %v5378 = vsub.s32 %v5129, %v5377
    %v5379 = vrot.slane %v2913, %v5378
    %v5380 = vsel %vm5134, %v5379, %v5375
    %s5381 = scalar_lea.vmem [#allocation2], 3
    %5382 = vst [vmem:[%s5381] ss:$8 sm:$0x1] %v5380
    %5383 = vst [vmem:[%s5381] ss:$8 sm:$0x0] %v5380
    %v5384 = vlaneseq
    %v5385 = vshrl.u32 %v5384, 7
    %v5386 = vsub.s32 %v1761, %v5385
    %v5387 = vrot.slane %v2927, %v5386
    %v5388 = vlaneseq
    %v5389 = vshrl.u32 %v5388, 7
    %v5390 = vsub.s32 %v5031, %v5389
    %v5391 = vrot.slane %v2941, %v5390
    %v5392 = vsel %vm5036, %v5391, %v5387
    %v5393 = vlaneseq
    %v5394 = vshrl.u32 %v5393, 7
    %v5395 = vsub.s32 %v5038, %v5394
    %v5396 = vrot.slane %v2955, %v5395
    %v5397 = vsel %vm5043, %v5396, %v5392
    %v5398 = vlaneseq
    %v5399 = vshrl.u32 %v5398, 7
    %v5400 = vsub.s32 %v5045, %v5399
    %v5401 = vrot.slane %v2969, %v5400
    %v5402 = vsel %vm5050, %v5401, %v5397
    %v5403 = vlaneseq
    %v5404 = vshrl.u32 %v5403, 7
    %v5405 = vsub.s32 %v5052, %v5404
    %v5406 = vrot.slane %v2983, %v5405
    %v5407 = vsel %vm5057, %v5406, %v5402
    %v5408 = vlaneseq
    %v5409 = vshrl.u32 %v5408, 7
    %v5410 = vsub.s32 %v5059, %v5409
    %v5411 = vrot.slane %v2997, %v5410
    %v5412 = vsel %vm5064, %v5411, %v5407
    %v5413 = vlaneseq
    %v5414 = vshrl.u32 %v5413, 7
    %v5415 = vsub.s32 %v5066, %v5414
    %v5416 = vrot.slane %v3011, %v5415
    %v5417 = vsel %vm5071, %v5416, %v5412
    %v5418 = vlaneseq
    %v5419 = vshrl.u32 %v5418, 7
    %v5420 = vsub.s32 %v5073, %v5419
    %v5421 = vrot.slane %v3025, %v5420
    %v5422 = vsel %vm5078, %v5421, %v5417
    %v5423 = vlaneseq
    %v5424 = vshrl.u32 %v5423, 7
    %v5425 = vsub.s32 %v5080, %v5424
    %v5426 = vrot.slane %v3039, %v5425
    %v5427 = vsel %vm5085, %v5426, %v5422
    %v5428 = vlaneseq
    %v5429 = vshrl.u32 %v5428, 7
    %v5430 = vsub.s32 %v5087, %v5429
    %v5431 = vrot.slane %v3053, %v5430
    %v5432 = vsel %vm5092, %v5431, %v5427
    %v5433 = vlaneseq
    %v5434 = vshrl.u32 %v5433, 7
    %v5435 = vsub.s32 %v5094, %v5434
    %v5436 = vrot.slane %v3067, %v5435
    %v5437 = vsel %vm5099, %v5436, %v5432
    %v5438 = vlaneseq
    %v5439 = vshrl.u32 %v5438, 7
    %v5440 = vsub.s32 %v5101, %v5439
    %v5441 = vrot.slane %v3081, %v5440
    %v5442 = vsel %vm5106, %v5441, %v5437
    %v5443 = vlaneseq
    %v5444 = vshrl.u32 %v5443, 7
    %v5445 = vsub.s32 %v5108, %v5444
    %v5446 = vrot.slane %v3095, %v5445
    %v5447 = vsel %vm5113, %v5446, %v5442
    %v5448 = vlaneseq
    %v5449 = vshrl.u32 %v5448, 7
    %v5450 = vsub.s32 %v5115, %v5449
    %v5451 = vrot.slane %v3109, %v5450
    %v5452 = vsel %vm5120, %v5451, %v5447
    %v5453 = vlaneseq
    %v5454 = vshrl.u32 %v5453, 7
    %v5455 = vsub.s32 %v5122, %v5454
    %v5456 = vrot.slane %v3123, %v5455
    %v5457 = vsel %vm5127, %v5456, %v5452
    %v5458 = vlaneseq
    %v5459 = vshrl.u32 %v5458, 7
    %v5460 = vsub.s32 %v5129, %v5459
    %v5461 = vrot.slane %v3137, %v5460
    %v5462 = vsel %vm5134, %v5461, %v5457
    %s5463 = scalar_lea.vmem [#allocation2], 4
    %5464 = vst [vmem:[%s5463] ss:$8 sm:$0x1] %v5462
    %5465 = vst [vmem:[%s5463] ss:$8 sm:$0x0] %v5462
    %v5466 = vlaneseq
    %v5467 = vshrl.u32 %v5466, 7
    %v5468 = vsub.s32 %v1761, %v5467
    %v5469 = vrot.slane %v3151, %v5468
    %v5470 = vlaneseq
    %v5471 = vshrl.u32 %v5470, 7
    %v5472 = vsub.s32 %v5031, %v5471
    %v5473 = vrot.slane %v3165, %v5472
    %v5474 = vsel %vm5036, %v5473, %v5469
    %v5475 = vlaneseq
    %v5476 = vshrl.u32 %v5475, 7
    %v5477 = vsub.s32 %v5038, %v5476
    %v5478 = vrot.slane %v3179, %v5477
    %v5479 = vsel %vm5043, %v5478, %v5474
    %v5480 = vlaneseq
    %v5481 = vshrl.u32 %v5480, 7
    %v5482 = vsub.s32 %v5045, %v5481
    %v5483 = vrot.slane %v3193, %v5482
    %v5484 = vsel %vm5050, %v5483, %v5479
    %v5485 = vlaneseq
    %v5486 = vshrl.u32 %v5485, 7
    %v5487 = vsub.s32 %v5052, %v5486
    %v5488 = vrot.slane %v3207, %v5487
    %v5489 = vsel %vm5057, %v5488, %v5484
    %v5490 = vlaneseq
    %v5491 = vshrl.u32 %v5490, 7
    %v5492 = vsub.s32 %v5059, %v5491
    %v5493 = vrot.slane %v3221, %v5492
    %v5494 = vsel %vm5064, %v5493, %v5489
    %v5495 = vlaneseq
    %v5496 = vshrl.u32 %v5495, 7
    %v5497 = vsub.s32 %v5066, %v5496
    %v5498 = vrot.slane %v3235, %v5497
    %v5499 = vsel %vm5071, %v5498, %v5494
    %v5500 = vlaneseq
    %v5501 = vshrl.u32 %v5500, 7
    %v5502 = vsub.s32 %v5073, %v5501
    %v5503 = vrot.slane %v3249, %v5502
    %v5504 = vsel %vm5078, %v5503, %v5499
    %v5505 = vlaneseq
    %v5506 = vshrl.u32 %v5505, 7
    %v5507 = vsub.s32 %v5080, %v5506
    %v5508 = vrot.slane %v3263, %v5507
    %v5509 = vsel %vm5085, %v5508, %v5504
    %v5510 = vlaneseq
    %v5511 = vshrl.u32 %v5510, 7
    %v5512 = vsub.s32 %v5087, %v5511
    %v5513 = vrot.slane %v3277, %v5512
    %v5514 = vsel %vm5092, %v5513, %v5509
    %v5515 = vlaneseq
    %v5516 = vshrl.u32 %v5515, 7
    %v5517 = vsub.s32 %v5094, %v5516
    %v5518 = vrot.slane %v3291, %v5517
    %v5519 = vsel %vm5099, %v5518, %v5514
    %v5520 = vlaneseq
    %v5521 = vshrl.u32 %v5520, 7
    %v5522 = vsub.s32 %v5101, %v5521
    %v5523 = vrot.slane %v3305, %v5522
    %v5524 = vsel %vm5106, %v5523, %v5519
    %v5525 = vlaneseq
    %v5526 = vshrl.u32 %v5525, 7
    %v5527 = vsub.s32 %v5108, %v5526
    %v5528 = vrot.slane %v3319, %v5527
    %v5529 = vsel %vm5113, %v5528, %v5524
    %v5530 = vlaneseq
    %v5531 = vshrl.u32 %v5530, 7
    %v5532 = vsub.s32 %v5115, %v5531
    %v5533 = vrot.slane %v3333, %v5532
    %v5534 = vsel %vm5120, %v5533, %v5529
    %v5535 = vlaneseq
    %v5536 = vshrl.u32 %v5535, 7
    %v5537 = vsub.s32 %v5122, %v5536
    %v5538 = vrot.slane %v3347, %v5537
    %v5539 = vsel %vm5127, %v5538, %v5534
    %v5540 = vlaneseq
    %v5541 = vshrl.u32 %v5540, 7
    %v5542 = vsub.s32 %v5129, %v5541
    %v5543 = vrot.slane %v3361, %v5542
    %v5544 = vsel %vm5134, %v5543, %v5539
    %s5545 = scalar_lea.vmem [#allocation2], 5
    %5546 = vst [vmem:[%s5545] ss:$8 sm:$0x1] %v5544
    %5547 = vst [vmem:[%s5545] ss:$8 sm:$0x0] %v5544
    %v5548 = vlaneseq
    %v5549 = vshrl.u32 %v5548, 7
    %v5550 = vsub.s32 %v1761, %v5549
    %v5551 = vrot.slane %v3375, %v5550
    %v5552 = vlaneseq
    %v5553 = vshrl.u32 %v5552, 7
    %v5554 = vsub.s32 %v5031, %v5553
    %v5555 = vrot.slane %v3389, %v5554
    %v5556 = vsel %vm5036, %v5555, %v5551
    %v5557 = vlaneseq
    %v5558 = vshrl.u32 %v5557, 7
    %v5559 = vsub.s32 %v5038, %v5558
    %v5560 = vrot.slane %v3403, %v5559
    %v5561 = vsel %vm5043, %v5560, %v5556
    %v5562 = vlaneseq
    %v5563 = vshrl.u32 %v5562, 7
    %v5564 = vsub.s32 %v5045, %v5563
    %v5565 = vrot.slane %v3417, %v5564
    %v5566 = vsel %vm5050, %v5565, %v5561
    %v5567 = vlaneseq
    %v5568 = vshrl.u32 %v5567, 7
    %v5569 = vsub.s32 %v5052, %v5568
    %v5570 = vrot.slane %v3431, %v5569
    %v5571 = vsel %vm5057, %v5570, %v5566
    %v5572 = vlaneseq
    %v5573 = vshrl.u32 %v5572, 7
    %v5574 = vsub.s32 %v5059, %v5573
    %v5575 = vrot.slane %v3445, %v5574
    %v5576 = vsel %vm5064, %v5575, %v5571
    %v5577 = vlaneseq
    %v5578 = vshrl.u32 %v5577, 7
    %v5579 = vsub.s32 %v5066, %v5578
    %v5580 = vrot.slane %v3459, %v5579
    %v5581 = vsel %vm5071, %v5580, %v5576
    %v5582 = vlaneseq
    %v5583 = vshrl.u32 %v5582, 7
    %v5584 = vsub.s32 %v5073, %v5583
    %v5585 = vrot.slane %v3473, %v5584
    %v5586 = vsel %vm5078, %v5585, %v5581
    %v5587 = vlaneseq
    %v5588 = vshrl.u32 %v5587, 7
    %v5589 = vsub.s32 %v5080, %v5588
    %v5590 = vrot.slane %v3487, %v5589
    %v5591 = vsel %vm5085, %v5590, %v5586
    %v5592 = vlaneseq
    %v5593 = vshrl.u32 %v5592, 7
    %v5594 = vsub.s32 %v5087, %v5593
    %v5595 = vrot.slane %v3501, %v5594
    %v5596 = vsel %vm5092, %v5595, %v5591
    %v5597 = vlaneseq
    %v5598 = vshrl.u32 %v5597, 7
    %v5599 = vsub.s32 %v5094, %v5598
    %v5600 = vrot.slane %v3515, %v5599
    %v5601 = vsel %vm5099, %v5600, %v5596
    %v5602 = vlaneseq
    %v5603 = vshrl.u32 %v5602, 7
    %v5604 = vsub.s32 %v5101, %v5603
    %v5605 = vrot.slane %v3529, %v5604
    %v5606 = vsel %vm5106, %v5605, %v5601
    %v5607 = vlaneseq
    %v5608 = vshrl.u32 %v5607, 7
    %v5609 = vsub.s32 %v5108, %v5608
    %v5610 = vrot.slane %v3543, %v5609
    %v5611 = vsel %vm5113, %v5610, %v5606
    %v5612 = vlaneseq
    %v5613 = vshrl.u32 %v5612, 7
    %v5614 = vsub.s32 %v5115, %v5613
    %v5615 = vrot.slane %v3557, %v5614
    %v5616 = vsel %vm5120, %v5615, %v5611
    %v5617 = vlaneseq
    %v5618 = vshrl.u32 %v5617, 7
    %v5619 = vsub.s32 %v5122, %v5618
    %v5620 = vrot.slane %v3571, %v5619
    %v5621 = vsel %vm5127, %v5620, %v5616
    %v5622 = vlaneseq
    %v5623 = vshrl.u32 %v5622, 7
    %v5624 = vsub.s32 %v5129, %v5623
    %v5625 = vrot.slane %v3585, %v5624
    %v5626 = vsel %vm5134, %v5625, %v5621
    %s5627 = scalar_lea.vmem [#allocation2], 6
    %5628 = vst [vmem:[%s5627] ss:$8 sm:$0x1] %v5626
    %5629 = vst [vmem:[%s5627] ss:$8 sm:$0x0] %v5626
    %v5630 = vlaneseq
    %v5631 = vshrl.u32 %v5630, 7
    %v5632 = vsub.s32 %v1761, %v5631
    %v5633 = vrot.slane %v3599, %v5632
    %v5634 = vlaneseq
    %v5635 = vshrl.u32 %v5634, 7
    %v5636 = vsub.s32 %v5031, %v5635
    %v5637 = vrot.slane %v3613, %v5636
    %v5638 = vsel %vm5036, %v5637, %v5633
    %v5639 = vlaneseq
    %v5640 = vshrl.u32 %v5639, 7
    %v5641 = vsub.s32 %v5038, %v5640
    %v5642 = vrot.slane %v3627, %v5641
    %v5643 = vsel %vm5043, %v5642, %v5638
    %v5644 = vlaneseq
    %v5645 = vshrl.u32 %v5644, 7
    %v5646 = vsub.s32 %v5045, %v5645
    %v5647 = vrot.slane %v3641, %v5646
    %v5648 = vsel %vm5050, %v5647, %v5643
    %v5649 = vlaneseq
    %v5650 = vshrl.u32 %v5649, 7
    %v5651 = vsub.s32 %v5052, %v5650
    %v5652 = vrot.slane %v3655, %v5651
    %v5653 = vsel %vm5057, %v5652, %v5648
    %v5654 = vlaneseq
    %v5655 = vshrl.u32 %v5654, 7
    %v5656 = vsub.s32 %v5059, %v5655
    %v5657 = vrot.slane %v3669, %v5656
    %v5658 = vsel %vm5064, %v5657, %v5653
    %v5659 = vlaneseq
    %v5660 = vshrl.u32 %v5659, 7
    %v5661 = vsub.s32 %v5066, %v5660
    %v5662 = vrot.slane %v3683, %v5661
    %v5663 = vsel %vm5071, %v5662, %v5658
    %v5664 = vlaneseq
    %v5665 = vshrl.u32 %v5664, 7
    %v5666 = vsub.s32 %v5073, %v5665
    %v5667 = vrot.slane %v3697, %v5666
    %v5668 = vsel %vm5078, %v5667, %v5663
    %v5669 = vlaneseq
    %v5670 = vshrl.u32 %v5669, 7
    %v5671 = vsub.s32 %v5080, %v5670
    %v5672 = vrot.slane %v3711, %v5671
    %v5673 = vsel %vm5085, %v5672, %v5668
    %v5674 = vlaneseq
    %v5675 = vshrl.u32 %v5674, 7
    %v5676 = vsub.s32 %v5087, %v5675
    %v5677 = vrot.slane %v3725, %v5676
    %v5678 = vsel %vm5092, %v5677, %v5673
    %v5679 = vlaneseq
    %v5680 = vshrl.u32 %v5679, 7
    %v5681 = vsub.s32 %v5094, %v5680
    %v5682 = vrot.slane %v3739, %v5681
    %v5683 = vsel %vm5099, %v5682, %v5678
    %v5684 = vlaneseq
    %v5685 = vshrl.u32 %v5684, 7
    %v5686 = vsub.s32 %v5101, %v5685
    %v5687 = vrot.slane %v3753, %v5686
    %v5688 = vsel %vm5106, %v5687, %v5683
    %v5689 = vlaneseq
    %v5690 = vshrl.u32 %v5689, 7
    %v5691 = vsub.s32 %v5108, %v5690
    %v5692 = vrot.slane %v3767, %v5691
    %v5693 = vsel %vm5113, %v5692, %v5688
    %v5694 = vlaneseq
    %v5695 = vshrl.u32 %v5694, 7
    %v5696 = vsub.s32 %v5115, %v5695
    %v5697 = vrot.slane %v3781, %v5696
    %v5698 = vsel %vm5120, %v5697, %v5693
    %v5699 = vlaneseq
    %v5700 = vshrl.u32 %v5699, 7
    %v5701 = vsub.s32 %v5122, %v5700
    %v5702 = vrot.slane %v3795, %v5701
    %v5703 = vsel %vm5127, %v5702, %v5698
    %v5704 = vlaneseq
    %v5705 = vshrl.u32 %v5704, 7
    %v5706 = vsub.s32 %v5129, %v5705
    %v5707 = vrot.slane %v3809, %v5706
    %v5708 = vsel %vm5134, %v5707, %v5703
    %s5709 = scalar_lea.vmem [#allocation2], 7
    %5710 = vst [vmem:[%s5709] ss:$8 sm:$0x1] %v5708
    %5711 = vst [vmem:[%s5709] ss:$8 sm:$0x0] %v5708
    %v5712 = vmul.f32 %v19, %v19
    %v5713 = vmul.f32 %v20, %v20
    %v5714 = vmul.f32 %v21, %v21
    %v5715 = vmul.f32 %v22, %v22
    %v5716 = vmul.f32 %v23, %v23
    %v5717 = vmul.f32 %v24, %v24
    %v5718 = vmul.f32 %v25, %v25
    %v5719 = vmul.f32 %v26, %v26
    %v5720 = vmul.f32 %v27, %v27
    %v5721 = vmul.f32 %v28, %v28
    %v5722 = vmul.f32 %v29, %v29
    %v5723 = vmul.f32 %v30, %v30
    %v5724 = vmul.f32 %v31, %v31
    %v5725 = vmul.f32 %v32, %v32
    %v5726 = vmul.f32 %v33, %v33
    %v5727 = vmul.f32 %v34, %v34
    %v5728 = vmul.f32 %v35, %v35
    %v5729 = vmul.f32 %v36, %v36
    %v5730 = vmul.f32 %v37, %v37
    %v5731 = vmul.f32 %v38, %v38
    %v5732 = vmul.f32 %v39, %v39
    %v5733 = vmul.f32 %v40, %v40
    %v5734 = vmul.f32 %v41, %v41
    %v5735 = vmul.f32 %v42, %v42
    %v5736 = vmul.f32 %v43, %v43
    %v5737 = vmul.f32 %v44, %v44
    %v5738 = vmul.f32 %v45, %v45
    %v5739 = vmul.f32 %v46, %v46
    %v5740 = vmul.f32 %v47, %v47
    %v5741 = vmul.f32 %v48, %v48
    %v5742 = vmul.f32 %v49, %v49
    %v5743 = vmul.f32 %v50, %v50
    %v5744 = vmul.f32 %v51, %v51
    %v5745 = vmul.f32 %v52, %v52
    %v5746 = vmul.f32 %v53, %v53
    %v5747 = vmul.f32 %v54, %v54
    %v5748 = vmul.f32 %v55, %v55
    %v5749 = vmul.f32 %v56, %v56
    %v5750 = vmul.f32 %v57, %v57
    %v5751 = vmul.f32 %v58, %v58
    %v5752 = vmul.f32 %v59, %v59
    %v5753 = vmul.f32 %v60, %v60
    %v5754 = vmul.f32 %v61, %v61
    %v5755 = vmul.f32 %v62, %v62
    %v5756 = vmul.f32 %v63, %v63
    %v5757 = vmul.f32 %v64, %v64
    %v5758 = vmul.f32 %v65, %v65
    %v5759 = vmul.f32 %v66, %v66
    %v5760 = vmul.f32 %v67, %v67
    %v5761 = vmul.f32 %v68, %v68
    %v5762 = vmul.f32 %v69, %v69
    %v5763 = vmul.f32 %v70, %v70
    %v5764 = vmul.f32 %v71, %v71
    %v5765 = vmul.f32 %v72, %v72
    %v5766 = vmul.f32 %v73, %v73
    %v5767 = vmul.f32 %v74, %v74
    %v5768 = vmul.f32 %v75, %v75
    %v5769 = vmul.f32 %v76, %v76
    %v5770 = vmul.f32 %v77, %v77
    %v5771 = vmul.f32 %v78, %v78
    %v5772 = vmul.f32 %v79, %v79
    %v5773 = vmul.f32 %v80, %v80
    %v5774 = vmul.f32 %v81, %v81
    %v5775 = vmul.f32 %v82, %v82
    %v5776 = vmul.f32 %v83, %v83
    %v5777 = vmul.f32 %v84, %v84
    %v5778 = vmul.f32 %v85, %v85
    %v5779 = vmul.f32 %v86, %v86
    %v5780 = vmul.f32 %v87, %v87
    %v5781 = vmul.f32 %v88, %v88
    %v5782 = vmul.f32 %v89, %v89
    %v5783 = vmul.f32 %v90, %v90
    %v5784 = vmul.f32 %v91, %v91
    %v5785 = vmul.f32 %v92, %v92
    %v5786 = vmul.f32 %v93, %v93
    %v5787 = vmul.f32 %v94, %v94
    %v5788 = vmul.f32 %v95, %v95
    %v5789 = vmul.f32 %v96, %v96
    %v5790 = vmul.f32 %v97, %v97
    %v5791 = vmul.f32 %v98, %v98
    %v5792 = vmul.f32 %v99, %v99
    %v5793 = vmul.f32 %v100, %v100
    %v5794 = vmul.f32 %v101, %v101
    %v5795 = vmul.f32 %v102, %v102
    %v5796 = vmul.f32 %v103, %v103
    %v5797 = vmul.f32 %v104, %v104
    %v5798 = vmul.f32 %v105, %v105
    %v5799 = vmul.f32 %v106, %v106
    %v5800 = vmul.f32 %v107, %v107
    %v5801 = vmul.f32 %v108, %v108
    %v5802 = vmul.f32 %v109, %v109
    %v5803 = vmul.f32 %v110, %v110
    %v5804 = vmul.f32 %v111, %v111
    %v5805 = vmul.f32 %v112, %v112
    %v5806 = vmul.f32 %v113, %v113
    %v5807 = vmul.f32 %v114, %v114
    %v5808 = vmul.f32 %v115, %v115
    %v5809 = vmul.f32 %v116, %v116
    %v5810 = vmul.f32 %v117, %v117
    %v5811 = vmul.f32 %v118, %v118
    %v5812 = vmul.f32 %v119, %v119
    %v5813 = vmul.f32 %v120, %v120
    %v5814 = vmul.f32 %v121, %v121
    %v5815 = vmul.f32 %v122, %v122
    %v5816 = vmul.f32 %v123, %v123
    %v5817 = vmul.f32 %v124, %v124
    %v5818 = vmul.f32 %v125, %v125
    %v5819 = vmul.f32 %v126, %v126
    %v5820 = vmul.f32 %v127, %v127
    %v5821 = vmul.f32 %v128, %v128
    %v5822 = vmul.f32 %v129, %v129
    %v5823 = vmul.f32 %v130, %v130
    %v5824 = vmul.f32 %v131, %v131
    %v5825 = vmul.f32 %v132, %v132
    %v5826 = vmul.f32 %v133, %v133
    %v5827 = vmul.f32 %v134, %v134
    %v5828 = vmul.f32 %v135, %v135
    %v5829 = vmul.f32 %v136, %v136
    %v5830 = vmul.f32 %v137, %v137
    %v5831 = vmul.f32 %v138, %v138
    %v5832 = vmul.f32 %v139, %v139
    %v5833 = vmul.f32 %v140, %v140
    %v5834 = vmul.f32 %v141, %v141
    %v5835 = vmul.f32 %v142, %v142
    %v5836 = vmul.f32 %v143, %v143
    %v5837 = vmul.f32 %v144, %v144
    %v5838 = vmul.f32 %v145, %v145
    %v5839 = vmul.f32 %v146, %v146
    %v5840 = vsel %vm152, %v5712, 0.0
    %5841 = vadd.xlane.f32.xlu0 %v5840
    %v5842 = vpop.xlane.xlu0 %5841
    %v5843 = vsel %vm152, %v5713, 0.0
    %5844 = vadd.xlane.f32.xlu0 %v5843
    %v5845 = vpop.xlane.xlu0 %5844
    %v5846 = vsel %vm152, %v5714, 0.0
    %5847 = vadd.xlane.f32.xlu0 %v5846
    %v5848 = vpop.xlane.xlu0 %5847
    %v5849 = vsel %vm152, %v5715, 0.0
    %5850 = vadd.xlane.f32.xlu0 %v5849
    %v5851 = vpop.xlane.xlu0 %5850
    %v5852 = vsel %vm152, %v5716, 0.0
    %5853 = vadd.xlane.f32.xlu0 %v5852
    %v5854 = vpop.xlane.xlu0 %5853
    %v5855 = vsel %vm152, %v5717, 0.0
    %5856 = vadd.xlane.f32.xlu0 %v5855
    %v5857 = vpop.xlane.xlu0 %5856
    %v5858 = vsel %vm152, %v5718, 0.0
    %5859 = vadd.xlane.f32.xlu0 %v5858
    %v5860 = vpop.xlane.xlu0 %5859
    %v5861 = vsel %vm152, %v5719, 0.0
    %5862 = vadd.xlane.f32.xlu0 %v5861
    %v5863 = vpop.xlane.xlu0 %5862
    %v5864 = vsel %vm152, %v5720, 0.0
    %5865 = vadd.xlane.f32.xlu0 %v5864
    %v5866 = vpop.xlane.xlu0 %5865
    %v5867 = vsel %vm152, %v5721, 0.0
    %5868 = vadd.xlane.f32.xlu0 %v5867
    %v5869 = vpop.xlane.xlu0 %5868
    %v5870 = vsel %vm152, %v5722, 0.0
    %5871 = vadd.xlane.f32.xlu0 %v5870
    %v5872 = vpop.xlane.xlu0 %5871
    %v5873 = vsel %vm152, %v5723, 0.0
    %5874 = vadd.xlane.f32.xlu0 %v5873
    %v5875 = vpop.xlane.xlu0 %5874
    %v5876 = vsel %vm152, %v5724, 0.0
    %5877 = vadd.xlane.f32.xlu0 %v5876
    %v5878 = vpop.xlane.xlu0 %5877
    %v5879 = vsel %vm152, %v5725, 0.0
    %5880 = vadd.xlane.f32.xlu0 %v5879
    %v5881 = vpop.xlane.xlu0 %5880
    %v5882 = vsel %vm152, %v5726, 0.0
    %5883 = vadd.xlane.f32.xlu0 %v5882
    %v5884 = vpop.xlane.xlu0 %5883
    %v5885 = vsel %vm152, %v5727, 0.0
    %5886 = vadd.xlane.f32.xlu0 %v5885
    %v5887 = vpop.xlane.xlu0 %5886
    %v5888 = vsel %vm152, %v5728, 0.0
    %5889 = vadd.xlane.f32.xlu0 %v5888
    %v5890 = vpop.xlane.xlu0 %5889
    %v5891 = vsel %vm152, %v5729, 0.0
    %5892 = vadd.xlane.f32.xlu0 %v5891
    %v5893 = vpop.xlane.xlu0 %5892
    %v5894 = vsel %vm152, %v5730, 0.0
    %5895 = vadd.xlane.f32.xlu0 %v5894
    %v5896 = vpop.xlane.xlu0 %5895
    %v5897 = vsel %vm152, %v5731, 0.0
    %5898 = vadd.xlane.f32.xlu0 %v5897
    %v5899 = vpop.xlane.xlu0 %5898
    %v5900 = vsel %vm152, %v5732, 0.0
    %5901 = vadd.xlane.f32.xlu0 %v5900
    %v5902 = vpop.xlane.xlu0 %5901
    %v5903 = vsel %vm152, %v5733, 0.0
    %5904 = vadd.xlane.f32.xlu0 %v5903
    %v5905 = vpop.xlane.xlu0 %5904
    %v5906 = vsel %vm152, %v5734, 0.0
    %5907 = vadd.xlane.f32.xlu0 %v5906
    %v5908 = vpop.xlane.xlu0 %5907
    %v5909 = vsel %vm152, %v5735, 0.0
    %5910 = vadd.xlane.f32.xlu0 %v5909
    %v5911 = vpop.xlane.xlu0 %5910
    %v5912 = vsel %vm152, %v5736, 0.0
    %5913 = vadd.xlane.f32.xlu0 %v5912
    %v5914 = vpop.xlane.xlu0 %5913
    %v5915 = vsel %vm152, %v5737, 0.0
    %5916 = vadd.xlane.f32.xlu0 %v5915
    %v5917 = vpop.xlane.xlu0 %5916
    %v5918 = vsel %vm152, %v5738, 0.0
    %5919 = vadd.xlane.f32.xlu0 %v5918
    %v5920 = vpop.xlane.xlu0 %5919
    %v5921 = vsel %vm152, %v5739, 0.0
    %5922 = vadd.xlane.f32.xlu0 %v5921
    %v5923 = vpop.xlane.xlu0 %5922
    %v5924 = vsel %vm152, %v5740, 0.0
    %5925 = vadd.xlane.f32.xlu0 %v5924
    %v5926 = vpop.xlane.xlu0 %5925
    %v5927 = vsel %vm152, %v5741, 0.0
    %5928 = vadd.xlane.f32.xlu0 %v5927
    %v5929 = vpop.xlane.xlu0 %5928
    %v5930 = vsel %vm152, %v5742, 0.0
    %5931 = vadd.xlane.f32.xlu0 %v5930
    %v5932 = vpop.xlane.xlu0 %5931
    %v5933 = vsel %vm152, %v5743, 0.0
    %5934 = vadd.xlane.f32.xlu0 %v5933
    %v5935 = vpop.xlane.xlu0 %5934
    %v5936 = vsel %vm152, %v5744, 0.0
    %5937 = vadd.xlane.f32.xlu0 %v5936
    %v5938 = vpop.xlane.xlu0 %5937
    %v5939 = vsel %vm152, %v5745, 0.0
    %5940 = vadd.xlane.f32.xlu0 %v5939
    %v5941 = vpop.xlane.xlu0 %5940
    %v5942 = vsel %vm152, %v5746, 0.0
    %5943 = vadd.xlane.f32.xlu0 %v5942
    %v5944 = vpop.xlane.xlu0 %5943
    %v5945 = vsel %vm152, %v5747, 0.0
    %5946 = vadd.xlane.f32.xlu0 %v5945
    %v5947 = vpop.xlane.xlu0 %5946
    %v5948 = vsel %vm152, %v5748, 0.0
    %5949 = vadd.xlane.f32.xlu0 %v5948
    %v5950 = vpop.xlane.xlu0 %5949
    %v5951 = vsel %vm152, %v5749, 0.0
    %5952 = vadd.xlane.f32.xlu0 %v5951
    %v5953 = vpop.xlane.xlu0 %5952
    %v5954 = vsel %vm152, %v5750, 0.0
    %5955 = vadd.xlane.f32.xlu0 %v5954
    %v5956 = vpop.xlane.xlu0 %5955
    %v5957 = vsel %vm152, %v5751, 0.0
    %5958 = vadd.xlane.f32.xlu0 %v5957
    %v5959 = vpop.xlane.xlu0 %5958
    %v5960 = vsel %vm152, %v5752, 0.0
    %5961 = vadd.xlane.f32.xlu0 %v5960
    %v5962 = vpop.xlane.xlu0 %5961
    %v5963 = vsel %vm152, %v5753, 0.0
    %5964 = vadd.xlane.f32.xlu0 %v5963
    %v5965 = vpop.xlane.xlu0 %5964
    %v5966 = vsel %vm152, %v5754, 0.0
    %5967 = vadd.xlane.f32.xlu0 %v5966
    %v5968 = vpop.xlane.xlu0 %5967
    %v5969 = vsel %vm152, %v5755, 0.0
    %5970 = vadd.xlane.f32.xlu0 %v5969
    %v5971 = vpop.xlane.xlu0 %5970
    %v5972 = vsel %vm152, %v5756, 0.0
    %5973 = vadd.xlane.f32.xlu0 %v5972
    %v5974 = vpop.xlane.xlu0 %5973
    %v5975 = vsel %vm152, %v5757, 0.0
    %5976 = vadd.xlane.f32.xlu0 %v5975
    %v5977 = vpop.xlane.xlu0 %5976
    %v5978 = vsel %vm152, %v5758, 0.0
    %5979 = vadd.xlane.f32.xlu0 %v5978
    %v5980 = vpop.xlane.xlu0 %5979
    %v5981 = vsel %vm152, %v5759, 0.0
    %5982 = vadd.xlane.f32.xlu0 %v5981
    %v5983 = vpop.xlane.xlu0 %5982
    %v5984 = vsel %vm152, %v5760, 0.0
    %5985 = vadd.xlane.f32.xlu0 %v5984
    %v5986 = vpop.xlane.xlu0 %5985
    %v5987 = vsel %vm152, %v5761, 0.0
    %5988 = vadd.xlane.f32.xlu0 %v5987
    %v5989 = vpop.xlane.xlu0 %5988
    %v5990 = vsel %vm152, %v5762, 0.0
    %5991 = vadd.xlane.f32.xlu0 %v5990
    %v5992 = vpop.xlane.xlu0 %5991
    %v5993 = vsel %vm152, %v5763, 0.0
    %5994 = vadd.xlane.f32.xlu0 %v5993
    %v5995 = vpop.xlane.xlu0 %5994
    %v5996 = vsel %vm152, %v5764, 0.0
    %5997 = vadd.xlane.f32.xlu0 %v5996
    %v5998 = vpop.xlane.xlu0 %5997
    %v5999 = vsel %vm152, %v5765, 0.0
    %6000 = vadd.xlane.f32.xlu0 %v5999
    %v6001 = vpop.xlane.xlu0 %6000
    %v6002 = vsel %vm152, %v5766, 0.0
    %6003 = vadd.xlane.f32.xlu0 %v6002
    %v6004 = vpop.xlane.xlu0 %6003
    %v6005 = vsel %vm152, %v5767, 0.0
    %6006 = vadd.xlane.f32.xlu0 %v6005
    %v6007 = vpop.xlane.xlu0 %6006
    %v6008 = vsel %vm152, %v5768, 0.0
    %6009 = vadd.xlane.f32.xlu0 %v6008
    %v6010 = vpop.xlane.xlu0 %6009
    %v6011 = vsel %vm152, %v5769, 0.0
    %6012 = vadd.xlane.f32.xlu0 %v6011
    %v6013 = vpop.xlane.xlu0 %6012
    %v6014 = vsel %vm152, %v5770, 0.0
    %6015 = vadd.xlane.f32.xlu0 %v6014
    %v6016 = vpop.xlane.xlu0 %6015
    %v6017 = vsel %vm152, %v5771, 0.0
    %6018 = vadd.xlane.f32.xlu0 %v6017
    %v6019 = vpop.xlane.xlu0 %6018
    %v6020 = vsel %vm152, %v5772, 0.0
    %6021 = vadd.xlane.f32.xlu0 %v6020
    %v6022 = vpop.xlane.xlu0 %6021
    %v6023 = vsel %vm152, %v5773, 0.0
    %6024 = vadd.xlane.f32.xlu0 %v6023
    %v6025 = vpop.xlane.xlu0 %6024
    %v6026 = vsel %vm152, %v5774, 0.0
    %6027 = vadd.xlane.f32.xlu0 %v6026
    %v6028 = vpop.xlane.xlu0 %6027
    %v6029 = vsel %vm152, %v5775, 0.0
    %6030 = vadd.xlane.f32.xlu0 %v6029
    %v6031 = vpop.xlane.xlu0 %6030
    %v6032 = vsel %vm152, %v5776, 0.0
    %6033 = vadd.xlane.f32.xlu0 %v6032
    %v6034 = vpop.xlane.xlu0 %6033
    %v6035 = vsel %vm152, %v5777, 0.0
    %6036 = vadd.xlane.f32.xlu0 %v6035
    %v6037 = vpop.xlane.xlu0 %6036
    %v6038 = vsel %vm152, %v5778, 0.0
    %6039 = vadd.xlane.f32.xlu0 %v6038
    %v6040 = vpop.xlane.xlu0 %6039
    %v6041 = vsel %vm152, %v5779, 0.0
    %6042 = vadd.xlane.f32.xlu0 %v6041
    %v6043 = vpop.xlane.xlu0 %6042
    %v6044 = vsel %vm152, %v5780, 0.0
    %6045 = vadd.xlane.f32.xlu0 %v6044
    %v6046 = vpop.xlane.xlu0 %6045
    %v6047 = vsel %vm152, %v5781, 0.0
    %6048 = vadd.xlane.f32.xlu0 %v6047
    %v6049 = vpop.xlane.xlu0 %6048
    %v6050 = vsel %vm152, %v5782, 0.0
    %6051 = vadd.xlane.f32.xlu0 %v6050
    %v6052 = vpop.xlane.xlu0 %6051
    %v6053 = vsel %vm152, %v5783, 0.0
    %6054 = vadd.xlane.f32.xlu0 %v6053
    %v6055 = vpop.xlane.xlu0 %6054
    %v6056 = vsel %vm152, %v5784, 0.0
    %6057 = vadd.xlane.f32.xlu0 %v6056
    %v6058 = vpop.xlane.xlu0 %6057
    %v6059 = vsel %vm152, %v5785, 0.0
    %6060 = vadd.xlane.f32.xlu0 %v6059
    %v6061 = vpop.xlane.xlu0 %6060
    %v6062 = vsel %vm152, %v5786, 0.0
    %6063 = vadd.xlane.f32.xlu0 %v6062
    %v6064 = vpop.xlane.xlu0 %6063
    %v6065 = vsel %vm152, %v5787, 0.0
    %6066 = vadd.xlane.f32.xlu0 %v6065
    %v6067 = vpop.xlane.xlu0 %6066
    %v6068 = vsel %vm152, %v5788, 0.0
    %6069 = vadd.xlane.f32.xlu0 %v6068
    %v6070 = vpop.xlane.xlu0 %6069
    %v6071 = vsel %vm152, %v5789, 0.0
    %6072 = vadd.xlane.f32.xlu0 %v6071
    %v6073 = vpop.xlane.xlu0 %6072
    %v6074 = vsel %vm152, %v5790, 0.0
    %6075 = vadd.xlane.f32.xlu0 %v6074
    %v6076 = vpop.xlane.xlu0 %6075
    %v6077 = vsel %vm152, %v5791, 0.0
    %6078 = vadd.xlane.f32.xlu0 %v6077
    %v6079 = vpop.xlane.xlu0 %6078
    %v6080 = vsel %vm152, %v5792, 0.0
    %6081 = vadd.xlane.f32.xlu0 %v6080
    %v6082 = vpop.xlane.xlu0 %6081
    %v6083 = vsel %vm152, %v5793, 0.0
    %6084 = vadd.xlane.f32.xlu0 %v6083
    %v6085 = vpop.xlane.xlu0 %6084
    %v6086 = vsel %vm152, %v5794, 0.0
    %6087 = vadd.xlane.f32.xlu0 %v6086
    %v6088 = vpop.xlane.xlu0 %6087
    %v6089 = vsel %vm152, %v5795, 0.0
    %6090 = vadd.xlane.f32.xlu0 %v6089
    %v6091 = vpop.xlane.xlu0 %6090
    %v6092 = vsel %vm152, %v5796, 0.0
    %6093 = vadd.xlane.f32.xlu0 %v6092
    %v6094 = vpop.xlane.xlu0 %6093
    %v6095 = vsel %vm152, %v5797, 0.0
    %6096 = vadd.xlane.f32.xlu0 %v6095
    %v6097 = vpop.xlane.xlu0 %6096
    %v6098 = vsel %vm152, %v5798, 0.0
    %6099 = vadd.xlane.f32.xlu0 %v6098
    %v6100 = vpop.xlane.xlu0 %6099
    %v6101 = vsel %vm152, %v5799, 0.0
    %6102 = vadd.xlane.f32.xlu0 %v6101
    %v6103 = vpop.xlane.xlu0 %6102
    %v6104 = vsel %vm152, %v5800, 0.0
    %6105 = vadd.xlane.f32.xlu0 %v6104
    %v6106 = vpop.xlane.xlu0 %6105
    %v6107 = vsel %vm152, %v5801, 0.0
    %6108 = vadd.xlane.f32.xlu0 %v6107
    %v6109 = vpop.xlane.xlu0 %6108
    %v6110 = vsel %vm152, %v5802, 0.0
    %6111 = vadd.xlane.f32.xlu0 %v6110
    %v6112 = vpop.xlane.xlu0 %6111
    %v6113 = vsel %vm152, %v5803, 0.0
    %6114 = vadd.xlane.f32.xlu0 %v6113
    %v6115 = vpop.xlane.xlu0 %6114
    %v6116 = vsel %vm152, %v5804, 0.0
    %6117 = vadd.xlane.f32.xlu0 %v6116
    %v6118 = vpop.xlane.xlu0 %6117
    %v6119 = vsel %vm152, %v5805, 0.0
    %6120 = vadd.xlane.f32.xlu0 %v6119
    %v6121 = vpop.xlane.xlu0 %6120
    %v6122 = vsel %vm152, %v5806, 0.0
    %6123 = vadd.xlane.f32.xlu0 %v6122
    %v6124 = vpop.xlane.xlu0 %6123
    %v6125 = vsel %vm152, %v5807, 0.0
    %6126 = vadd.xlane.f32.xlu0 %v6125
    %v6127 = vpop.xlane.xlu0 %6126
    %v6128 = vsel %vm152, %v5808, 0.0
    %6129 = vadd.xlane.f32.xlu0 %v6128
    %v6130 = vpop.xlane.xlu0 %6129
    %v6131 = vsel %vm152, %v5809, 0.0
    %6132 = vadd.xlane.f32.xlu0 %v6131
    %v6133 = vpop.xlane.xlu0 %6132
    %v6134 = vsel %vm152, %v5810, 0.0
    %6135 = vadd.xlane.f32.xlu0 %v6134
    %v6136 = vpop.xlane.xlu0 %6135
    %v6137 = vsel %vm152, %v5811, 0.0
    %6138 = vadd.xlane.f32.xlu0 %v6137
    %v6139 = vpop.xlane.xlu0 %6138
    %v6140 = vsel %vm152, %v5812, 0.0
    %6141 = vadd.xlane.f32.xlu0 %v6140
    %v6142 = vpop.xlane.xlu0 %6141
    %v6143 = vsel %vm152, %v5813, 0.0
    %6144 = vadd.xlane.f32.xlu0 %v6143
    %v6145 = vpop.xlane.xlu0 %6144
    %v6146 = vsel %vm152, %v5814, 0.0
    %6147 = vadd.xlane.f32.xlu0 %v6146
    %v6148 = vpop.xlane.xlu0 %6147
    %v6149 = vsel %vm152, %v5815, 0.0
    %6150 = vadd.xlane.f32.xlu0 %v6149
    %v6151 = vpop.xlane.xlu0 %6150
    %v6152 = vsel %vm152, %v5816, 0.0
    %6153 = vadd.xlane.f32.xlu0 %v6152
    %v6154 = vpop.xlane.xlu0 %6153
    %v6155 = vsel %vm152, %v5817, 0.0
    %6156 = vadd.xlane.f32.xlu0 %v6155
    %v6157 = vpop.xlane.xlu0 %6156
    %v6158 = vsel %vm152, %v5818, 0.0
    %6159 = vadd.xlane.f32.xlu0 %v6158
    %v6160 = vpop.xlane.xlu0 %6159
    %v6161 = vsel %vm152, %v5819, 0.0
    %6162 = vadd.xlane.f32.xlu0 %v6161
    %v6163 = vpop.xlane.xlu0 %6162
    %v6164 = vsel %vm152, %v5820, 0.0
    %6165 = vadd.xlane.f32.xlu0 %v6164
    %v6166 = vpop.xlane.xlu0 %6165
    %v6167 = vsel %vm152, %v5821, 0.0
    %6168 = vadd.xlane.f32.xlu0 %v6167
    %v6169 = vpop.xlane.xlu0 %6168
    %v6170 = vsel %vm152, %v5822, 0.0
    %6171 = vadd.xlane.f32.xlu0 %v6170
    %v6172 = vpop.xlane.xlu0 %6171
    %v6173 = vsel %vm152, %v5823, 0.0
    %6174 = vadd.xlane.f32.xlu0 %v6173
    %v6175 = vpop.xlane.xlu0 %6174
    %v6176 = vsel %vm152, %v5824, 0.0
    %6177 = vadd.xlane.f32.xlu0 %v6176
    %v6178 = vpop.xlane.xlu0 %6177
    %v6179 = vsel %vm152, %v5825, 0.0
    %6180 = vadd.xlane.f32.xlu0 %v6179
    %v6181 = vpop.xlane.xlu0 %6180
    %v6182 = vsel %vm152, %v5826, 0.0
    %6183 = vadd.xlane.f32.xlu0 %v6182
    %v6184 = vpop.xlane.xlu0 %6183
    %v6185 = vsel %vm152, %v5827, 0.0
    %6186 = vadd.xlane.f32.xlu0 %v6185
    %v6187 = vpop.xlane.xlu0 %6186
    %v6188 = vsel %vm152, %v5828, 0.0
    %6189 = vadd.xlane.f32.xlu0 %v6188
    %v6190 = vpop.xlane.xlu0 %6189
    %v6191 = vsel %vm152, %v5829, 0.0
    %6192 = vadd.xlane.f32.xlu0 %v6191
    %v6193 = vpop.xlane.xlu0 %6192
    %v6194 = vsel %vm152, %v5830, 0.0
    %6195 = vadd.xlane.f32.xlu0 %v6194
    %v6196 = vpop.xlane.xlu0 %6195
    %v6197 = vsel %vm152, %v5831, 0.0
    %6198 = vadd.xlane.f32.xlu0 %v6197
    %v6199 = vpop.xlane.xlu0 %6198
    %v6200 = vsel %vm152, %v5832, 0.0
    %6201 = vadd.xlane.f32.xlu0 %v6200
    %v6202 = vpop.xlane.xlu0 %6201
    %v6203 = vsel %vm152, %v5833, 0.0
    %6204 = vadd.xlane.f32.xlu0 %v6203
    %v6205 = vpop.xlane.xlu0 %6204
    %v6206 = vsel %vm152, %v5834, 0.0
    %6207 = vadd.xlane.f32.xlu0 %v6206
    %v6208 = vpop.xlane.xlu0 %6207
    %v6209 = vsel %vm152, %v5835, 0.0
    %6210 = vadd.xlane.f32.xlu0 %v6209
    %v6211 = vpop.xlane.xlu0 %6210
    %v6212 = vsel %vm152, %v5836, 0.0
    %6213 = vadd.xlane.f32.xlu0 %v6212
    %v6214 = vpop.xlane.xlu0 %6213
    %v6215 = vsel %vm152, %v5837, 0.0
    %6216 = vadd.xlane.f32.xlu0 %v6215
    %v6217 = vpop.xlane.xlu0 %6216
    %v6218 = vsel %vm152, %v5838, 0.0
    %6219 = vadd.xlane.f32.xlu0 %v6218
    %v6220 = vpop.xlane.xlu0 %6219
    %v6221 = vsel %vm152, %v5839, 0.0
    %6222 = vadd.xlane.f32.xlu0 %v6221
    %v6223 = vpop.xlane.xlu0 %6222
    %v6224 = vadd.f32 %v1505, %v5842
    %v6225 = vadd.f32 %v1507, %v5845
    %v6226 = vadd.f32 %v1509, %v5848
    %v6227 = vadd.f32 %v1511, %v5851
    %v6228 = vadd.f32 %v1513, %v5854
    %v6229 = vadd.f32 %v1515, %v5857
    %v6230 = vadd.f32 %v1517, %v5860
    %v6231 = vadd.f32 %v1519, %v5863
    %v6232 = vadd.f32 %v1521, %v5866
    %v6233 = vadd.f32 %v1523, %v5869
    %v6234 = vadd.f32 %v1525, %v5872
    %v6235 = vadd.f32 %v1527, %v5875
    %v6236 = vadd.f32 %v1529, %v5878
    %v6237 = vadd.f32 %v1531, %v5881
    %v6238 = vadd.f32 %v1533, %v5884
    %v6239 = vadd.f32 %v1535, %v5887
    %v6240 = vadd.f32 %v1537, %v5890
    %v6241 = vadd.f32 %v1539, %v5893
    %v6242 = vadd.f32 %v1541, %v5896
    %v6243 = vadd.f32 %v1543, %v5899
    %v6244 = vadd.f32 %v1545, %v5902
    %v6245 = vadd.f32 %v1547, %v5905
    %v6246 = vadd.f32 %v1549, %v5908
    %v6247 = vadd.f32 %v1551, %v5911
    %v6248 = vadd.f32 %v1553, %v5914
    %v6249 = vadd.f32 %v1555, %v5917
    %v6250 = vadd.f32 %v1557, %v5920
    %v6251 = vadd.f32 %v1559, %v5923
    %v6252 = vadd.f32 %v1561, %v5926
    %v6253 = vadd.f32 %v1563, %v5929
    %v6254 = vadd.f32 %v1565, %v5932
    %v6255 = vadd.f32 %v1567, %v5935
    %v6256 = vadd.f32 %v1569, %v5938
    %v6257 = vadd.f32 %v1571, %v5941
    %v6258 = vadd.f32 %v1573, %v5944
    %v6259 = vadd.f32 %v1575, %v5947
    %v6260 = vadd.f32 %v1577, %v5950
    %v6261 = vadd.f32 %v1579, %v5953
    %v6262 = vadd.f32 %v1581, %v5956
    %v6263 = vadd.f32 %v1583, %v5959
    %v6264 = vadd.f32 %v1585, %v5962
    %v6265 = vadd.f32 %v1587, %v5965
    %v6266 = vadd.f32 %v1589, %v5968
    %v6267 = vadd.f32 %v1591, %v5971
    %v6268 = vadd.f32 %v1593, %v5974
    %v6269 = vadd.f32 %v1595, %v5977
    %v6270 = vadd.f32 %v1597, %v5980
    %v6271 = vadd.f32 %v1599, %v5983
    %v6272 = vadd.f32 %v1601, %v5986
    %v6273 = vadd.f32 %v1603, %v5989
    %v6274 = vadd.f32 %v1605, %v5992
    %v6275 = vadd.f32 %v1607, %v5995
    %v6276 = vadd.f32 %v1609, %v5998
    %v6277 = vadd.f32 %v1611, %v6001
    %v6278 = vadd.f32 %v1613, %v6004
    %v6279 = vadd.f32 %v1615, %v6007
    %v6280 = vadd.f32 %v1617, %v6010
    %v6281 = vadd.f32 %v1619, %v6013
    %v6282 = vadd.f32 %v1621, %v6016
    %v6283 = vadd.f32 %v1623, %v6019
    %v6284 = vadd.f32 %v1625, %v6022
    %v6285 = vadd.f32 %v1627, %v6025
    %v6286 = vadd.f32 %v1629, %v6028
    %v6287 = vadd.f32 %v1631, %v6031
    %v6288 = vadd.f32 %v1633, %v6034
    %v6289 = vadd.f32 %v1635, %v6037
    %v6290 = vadd.f32 %v1637, %v6040
    %v6291 = vadd.f32 %v1639, %v6043
    %v6292 = vadd.f32 %v1641, %v6046
    %v6293 = vadd.f32 %v1643, %v6049
    %v6294 = vadd.f32 %v1645, %v6052
    %v6295 = vadd.f32 %v1647, %v6055
    %v6296 = vadd.f32 %v1649, %v6058
    %v6297 = vadd.f32 %v1651, %v6061
    %v6298 = vadd.f32 %v1653, %v6064
    %v6299 = vadd.f32 %v1655, %v6067
    %v6300 = vadd.f32 %v1657, %v6070
    %v6301 = vadd.f32 %v1659, %v6073
    %v6302 = vadd.f32 %v1661, %v6076
    %v6303 = vadd.f32 %v1663, %v6079
    %v6304 = vadd.f32 %v1665, %v6082
    %v6305 = vadd.f32 %v1667, %v6085
    %v6306 = vadd.f32 %v1669, %v6088
    %v6307 = vadd.f32 %v1671, %v6091
    %v6308 = vadd.f32 %v1673, %v6094
    %v6309 = vadd.f32 %v1675, %v6097
    %v6310 = vadd.f32 %v1677, %v6100
    %v6311 = vadd.f32 %v1679, %v6103
    %v6312 = vadd.f32 %v1681, %v6106
    %v6313 = vadd.f32 %v1683, %v6109
    %v6314 = vadd.f32 %v1685, %v6112
    %v6315 = vadd.f32 %v1687, %v6115
    %v6316 = vadd.f32 %v1689, %v6118
    %v6317 = vadd.f32 %v1691, %v6121
    %v6318 = vadd.f32 %v1693, %v6124
    %v6319 = vadd.f32 %v1695, %v6127
    %v6320 = vadd.f32 %v1697, %v6130
    %v6321 = vadd.f32 %v1699, %v6133
    %v6322 = vadd.f32 %v1701, %v6136
    %v6323 = vadd.f32 %v1703, %v6139
    %v6324 = vadd.f32 %v1705, %v6142
    %v6325 = vadd.f32 %v1707, %v6145
    %v6326 = vadd.f32 %v1709, %v6148
    %v6327 = vadd.f32 %v1711, %v6151
    %v6328 = vadd.f32 %v1713, %v6154
    %v6329 = vadd.f32 %v1715, %v6157
    %v6330 = vadd.f32 %v1717, %v6160
    %v6331 = vadd.f32 %v1719, %v6163
    %v6332 = vadd.f32 %v1721, %v6166
    %v6333 = vadd.f32 %v1723, %v6169
    %v6334 = vadd.f32 %v1725, %v6172
    %v6335 = vadd.f32 %v1727, %v6175
    %v6336 = vadd.f32 %v1729, %v6178
    %v6337 = vadd.f32 %v1731, %v6181
    %v6338 = vadd.f32 %v1733, %v6184
    %v6339 = vadd.f32 %v1735, %v6187
    %v6340 = vadd.f32 %v1737, %v6190
    %v6341 = vadd.f32 %v1739, %v6193
    %v6342 = vadd.f32 %v1741, %v6196
    %v6343 = vadd.f32 %v1743, %v6199
    %v6344 = vadd.f32 %v1745, %v6202
    %v6345 = vadd.f32 %v1747, %v6205
    %v6346 = vadd.f32 %v1749, %v6208
    %v6347 = vadd.f32 %v1751, %v6211
    %v6348 = vadd.f32 %v1753, %v6214
    %v6349 = vadd.f32 %v1755, %v6217
    %v6350 = vadd.f32 %v1757, %v6220
    %v6351 = vadd.f32 %v1759, %v6223
    %s6352 = smul.u32 0, 1024
    %v6353 = vlaneseq
    %v6354 = vshrl.u32 %v6353, 7
    %v6355 = vadd.s32 %v6354, 8
    %v6356 = vadd.s32 %v6354, 16
    %v6357 = vadd.s32 %v6354, 24
    %v6358 = vadd.s32 %v6354, 32
    %v6359 = vadd.s32 %v6354, 40
    %v6360 = vadd.s32 %v6354, 48
    %v6361 = vadd.s32 %v6354, 56
    %v6362 = vadd.s32 %v6354, 64
    %v6363 = vadd.s32 %v6354, 72
    %v6364 = vadd.s32 %v6354, 80
    %v6365 = vadd.s32 %v6354, 88
    %v6366 = vadd.s32 %v6354, 96
    %v6367 = vadd.s32 %v6354, 104
    %v6368 = vadd.s32 %v6354, 112
    %v6369 = vadd.s32 %v6354, 120
    %v6370 = vadd.s32 %v6354, 128
    %v6371 = vadd.s32 %v6354, 136
    %v6372 = vadd.s32 %v6354, 144
    %v6373 = vadd.s32 %v6354, 152
    %v6374 = vadd.s32 %v6354, 160
    %v6375 = vadd.s32 %v6354, 168
    %v6376 = vadd.s32 %v6354, 176
    %v6377 = vadd.s32 %v6354, 184
    %v6378 = vadd.s32 %v6354, 192
    %v6379 = vadd.s32 %v6354, 200
    %v6380 = vadd.s32 %v6354, 208
    %v6381 = vadd.s32 %v6354, 216
    %v6382 = vadd.s32 %v6354, 224
    %v6383 = vadd.s32 %v6354, 232
    %v6384 = vadd.s32 %v6354, 240
    %v6385 = vadd.s32 %v6354, 248
    %v6386 = vadd.s32 %v6354, 256
    %v6387 = vadd.s32 %v6354, 264
    %v6388 = vadd.s32 %v6354, 272
    %v6389 = vadd.s32 %v6354, 280
    %v6390 = vadd.s32 %v6354, 288
    %v6391 = vadd.s32 %v6354, 296
    %v6392 = vadd.s32 %v6354, 304
    %v6393 = vadd.s32 %v6354, 312
    %v6394 = vadd.s32 %v6354, 320
    %v6395 = vadd.s32 %v6354, 328
    %v6396 = vadd.s32 %v6354, 336
    %v6397 = vadd.s32 %v6354, 344
    %v6398 = vadd.s32 %v6354, 352
    %v6399 = vadd.s32 %v6354, 360
    %v6400 = vadd.s32 %v6354, 368
    %v6401 = vadd.s32 %v6354, 376
    %v6402 = vadd.s32 %v6354, 384
    %v6403 = vadd.s32 %v6354, 392
    %v6404 = vadd.s32 %v6354, 400
    %v6405 = vadd.s32 %v6354, 408
    %v6406 = vadd.s32 %v6354, 416
    %v6407 = vadd.s32 %v6354, 424
    %v6408 = vadd.s32 %v6354, 432
    %v6409 = vadd.s32 %v6354, 440
    %v6410 = vadd.s32 %v6354, 448
    %v6411 = vadd.s32 %v6354, 456
    %v6412 = vadd.s32 %v6354, 464
    %v6413 = vadd.s32 %v6354, 472
    %v6414 = vadd.s32 %v6354, 480
    %v6415 = vadd.s32 %v6354, 488
    %v6416 = vadd.s32 %v6354, 496
    %v6417 = vadd.s32 %v6354, 504
    %v6418 = vadd.s32 %v6354, 512
    %v6419 = vadd.s32 %v6354, 520
    %v6420 = vadd.s32 %v6354, 528
    %v6421 = vadd.s32 %v6354, 536
    %v6422 = vadd.s32 %v6354, 544
    %v6423 = vadd.s32 %v6354, 552
    %v6424 = vadd.s32 %v6354, 560
    %v6425 = vadd.s32 %v6354, 568
    %v6426 = vadd.s32 %v6354, 576
    %v6427 = vadd.s32 %v6354, 584
    %v6428 = vadd.s32 %v6354, 592
    %v6429 = vadd.s32 %v6354, 600
    %v6430 = vadd.s32 %v6354, 608
    %v6431 = vadd.s32 %v6354, 616
    %v6432 = vadd.s32 %v6354, 624
    %v6433 = vadd.s32 %v6354, 632
    %v6434 = vadd.s32 %v6354, 640
    %v6435 = vadd.s32 %v6354, 648
    %v6436 = vadd.s32 %v6354, 656
    %v6437 = vadd.s32 %v6354, 664
    %v6438 = vadd.s32 %v6354, 672
    %v6439 = vadd.s32 %v6354, 680
    %v6440 = vadd.s32 %v6354, 688
    %v6441 = vadd.s32 %v6354, 696
    %v6442 = vadd.s32 %v6354, 704
    %v6443 = vadd.s32 %v6354, 712
    %v6444 = vadd.s32 %v6354, 720
    %v6445 = vadd.s32 %v6354, 728
    %v6446 = vadd.s32 %v6354, 736
    %v6447 = vadd.s32 %v6354, 744
    %v6448 = vadd.s32 %v6354, 752
    %v6449 = vadd.s32 %v6354, 760
    %v6450 = vadd.s32 %v6354, 768
    %v6451 = vadd.s32 %v6354, 776
    %v6452 = vadd.s32 %v6354, 784
    %v6453 = vadd.s32 %v6354, 792
    %v6454 = vadd.s32 %v6354, 800
    %v6455 = vadd.s32 %v6354, 808
    %v6456 = vadd.s32 %v6354, 816
    %v6457 = vadd.s32 %v6354, 824
    %v6458 = vadd.s32 %v6354, 832
    %v6459 = vadd.s32 %v6354, 840
    %v6460 = vadd.s32 %v6354, 848
    %v6461 = vadd.s32 %v6354, 856
    %v6462 = vadd.s32 %v6354, 864
    %v6463 = vadd.s32 %v6354, 872
    %v6464 = vadd.s32 %v6354, 880
    %v6465 = vadd.s32 %v6354, 888
    %v6466 = vadd.s32 %v6354, 896
    %v6467 = vadd.s32 %v6354, 904
    %v6468 = vadd.s32 %v6354, 912
    %v6469 = vadd.s32 %v6354, 920
    %v6470 = vadd.s32 %v6354, 928
    %v6471 = vadd.s32 %v6354, 936
    %v6472 = vadd.s32 %v6354, 944
    %v6473 = vadd.s32 %v6354, 952
    %v6474 = vadd.s32 %v6354, 960
    %v6475 = vadd.s32 %v6354, 968
    %v6476 = vadd.s32 %v6354, 976
    %v6477 = vadd.s32 %v6354, 984
    %v6478 = vadd.s32 %v6354, 992
    %v6479 = vadd.s32 %v6354, 1000
    %v6480 = vadd.s32 %v6354, 1008
    %v6481 = vadd.s32 %v6354, 1016
    %v6482 = vstv %s6352
    %v6483 = vadd.s32 %v6482, %v6354
    %v6484 = vadd.s32 %v6482, %v6355
    %v6485 = vadd.s32 %v6482, %v6356
    %v6486 = vadd.s32 %v6482, %v6357
    %v6487 = vadd.s32 %v6482, %v6358
    %v6488 = vadd.s32 %v6482, %v6359
    %v6489 = vadd.s32 %v6482, %v6360
    %v6490 = vadd.s32 %v6482, %v6361
    %v6491 = vadd.s32 %v6482, %v6362
    %v6492 = vadd.s32 %v6482, %v6363
    %v6493 = vadd.s32 %v6482, %v6364
    %v6494 = vadd.s32 %v6482, %v6365
    %v6495 = vadd.s32 %v6482, %v6366
    %v6496 = vadd.s32 %v6482, %v6367
    %v6497 = vadd.s32 %v6482, %v6368
    %v6498 = vadd.s32 %v6482, %v6369
    %v6499 = vadd.s32 %v6482, %v6370
    %v6500 = vadd.s32 %v6482, %v6371
    %v6501 = vadd.s32 %v6482, %v6372
    %v6502 = vadd.s32 %v6482, %v6373
    %v6503 = vadd.s32 %v6482, %v6374
    %v6504 = vadd.s32 %v6482, %v6375
    %v6505 = vadd.s32 %v6482, %v6376
    %v6506 = vadd.s32 %v6482, %v6377
    %v6507 = vadd.s32 %v6482, %v6378
    %v6508 = vadd.s32 %v6482, %v6379
    %v6509 = vadd.s32 %v6482, %v6380
    %v6510 = vadd.s32 %v6482, %v6381
    %v6511 = vadd.s32 %v6482, %v6382
    %v6512 = vadd.s32 %v6482, %v6383
    %v6513 = vadd.s32 %v6482, %v6384
    %v6514 = vadd.s32 %v6482, %v6385
    %v6515 = vadd.s32 %v6482, %v6386
    %v6516 = vadd.s32 %v6482, %v6387
    %v6517 = vadd.s32 %v6482, %v6388
    %v6518 = vadd.s32 %v6482, %v6389
    %v6519 = vadd.s32 %v6482, %v6390
    %v6520 = vadd.s32 %v6482, %v6391
    %v6521 = vadd.s32 %v6482, %v6392
    %v6522 = vadd.s32 %v6482, %v6393
    %v6523 = vadd.s32 %v6482, %v6394
    %v6524 = vadd.s32 %v6482, %v6395
    %v6525 = vadd.s32 %v6482, %v6396
    %v6526 = vadd.s32 %v6482, %v6397
    %v6527 = vadd.s32 %v6482, %v6398
    %v6528 = vadd.s32 %v6482, %v6399
    %v6529 = vadd.s32 %v6482, %v6400
    %v6530 = vadd.s32 %v6482, %v6401
    %v6531 = vadd.s32 %v6482, %v6402
    %v6532 = vadd.s32 %v6482, %v6403
    %v6533 = vadd.s32 %v6482, %v6404
    %v6534 = vadd.s32 %v6482, %v6405
    %v6535 = vadd.s32 %v6482, %v6406
    %v6536 = vadd.s32 %v6482, %v6407
    %v6537 = vadd.s32 %v6482, %v6408
    %v6538 = vadd.s32 %v6482, %v6409
    %v6539 = vadd.s32 %v6482, %v6410
    %v6540 = vadd.s32 %v6482, %v6411
    %v6541 = vadd.s32 %v6482, %v6412
    %v6542 = vadd.s32 %v6482, %v6413
    %v6543 = vadd.s32 %v6482, %v6414
    %v6544 = vadd.s32 %v6482, %v6415
    %v6545 = vadd.s32 %v6482, %v6416
    %v6546 = vadd.s32 %v6482, %v6417
    %v6547 = vadd.s32 %v6482, %v6418
    %v6548 = vadd.s32 %v6482, %v6419
    %v6549 = vadd.s32 %v6482, %v6420
    %v6550 = vadd.s32 %v6482, %v6421
    %v6551 = vadd.s32 %v6482, %v6422
    %v6552 = vadd.s32 %v6482, %v6423
    %v6553 = vadd.s32 %v6482, %v6424
    %v6554 = vadd.s32 %v6482, %v6425
    %v6555 = vadd.s32 %v6482, %v6426
    %v6556 = vadd.s32 %v6482, %v6427
    %v6557 = vadd.s32 %v6482, %v6428
    %v6558 = vadd.s32 %v6482, %v6429
    %v6559 = vadd.s32 %v6482, %v6430
    %v6560 = vadd.s32 %v6482, %v6431
    %v6561 = vadd.s32 %v6482, %v6432
    %v6562 = vadd.s32 %v6482, %v6433
    %v6563 = vadd.s32 %v6482, %v6434
    %v6564 = vadd.s32 %v6482, %v6435
    %v6565 = vadd.s32 %v6482, %v6436
    %v6566 = vadd.s32 %v6482, %v6437
    %v6567 = vadd.s32 %v6482, %v6438
    %v6568 = vadd.s32 %v6482, %v6439
    %v6569 = vadd.s32 %v6482, %v6440
    %v6570 = vadd.s32 %v6482, %v6441
    %v6571 = vadd.s32 %v6482, %v6442
    %v6572 = vadd.s32 %v6482, %v6443
    %v6573 = vadd.s32 %v6482, %v6444
    %v6574 = vadd.s32 %v6482, %v6445
    %v6575 = vadd.s32 %v6482, %v6446
    %v6576 = vadd.s32 %v6482, %v6447
    %v6577 = vadd.s32 %v6482, %v6448
    %v6578 = vadd.s32 %v6482, %v6449
    %v6579 = vadd.s32 %v6482, %v6450
    %v6580 = vadd.s32 %v6482, %v6451
    %v6581 = vadd.s32 %v6482, %v6452
    %v6582 = vadd.s32 %v6482, %v6453
    %v6583 = vadd.s32 %v6482, %v6454
    %v6584 = vadd.s32 %v6482, %v6455
    %v6585 = vadd.s32 %v6482, %v6456
    %v6586 = vadd.s32 %v6482, %v6457
    %v6587 = vadd.s32 %v6482, %v6458
    %v6588 = vadd.s32 %v6482, %v6459
    %v6589 = vadd.s32 %v6482, %v6460
    %v6590 = vadd.s32 %v6482, %v6461
    %v6591 = vadd.s32 %v6482, %v6462
    %v6592 = vadd.s32 %v6482, %v6463
    %v6593 = vadd.s32 %v6482, %v6464
    %v6594 = vadd.s32 %v6482, %v6465
    %v6595 = vadd.s32 %v6482, %v6466
    %v6596 = vadd.s32 %v6482, %v6467
    %v6597 = vadd.s32 %v6482, %v6468
    %v6598 = vadd.s32 %v6482, %v6469
    %v6599 = vadd.s32 %v6482, %v6470
    %v6600 = vadd.s32 %v6482, %v6471
    %v6601 = vadd.s32 %v6482, %v6472
    %v6602 = vadd.s32 %v6482, %v6473
    %v6603 = vadd.s32 %v6482, %v6474
    %v6604 = vadd.s32 %v6482, %v6475
    %v6605 = vadd.s32 %v6482, %v6476
    %v6606 = vadd.s32 %v6482, %v6477
    %v6607 = vadd.s32 %v6482, %v6478
    %v6608 = vadd.s32 %v6482, %v6479
    %v6609 = vadd.s32 %v6482, %v6480
    %v6610 = vadd.s32 %v6482, %v6481
    %vm6611 = vcmp.lt.s32.totalorder %v6483, 16
    %vm6612 = vcmp.lt.s32.totalorder %v6484, 16
    %vm6613 = vcmp.lt.s32.totalorder %v6485, 16
    %vm6614 = vcmp.lt.s32.totalorder %v6486, 16
    %vm6615 = vcmp.lt.s32.totalorder %v6487, 16
    %vm6616 = vcmp.lt.s32.totalorder %v6488, 16
    %vm6617 = vcmp.lt.s32.totalorder %v6489, 16
    %vm6618 = vcmp.lt.s32.totalorder %v6490, 16
    %vm6619 = vcmp.lt.s32.totalorder %v6491, 16
    %vm6620 = vcmp.lt.s32.totalorder %v6492, 16
    %vm6621 = vcmp.lt.s32.totalorder %v6493, 16
    %vm6622 = vcmp.lt.s32.totalorder %v6494, 16
    %vm6623 = vcmp.lt.s32.totalorder %v6495, 16
    %vm6624 = vcmp.lt.s32.totalorder %v6496, 16
    %vm6625 = vcmp.lt.s32.totalorder %v6497, 16
    %vm6626 = vcmp.lt.s32.totalorder %v6498, 16
    %vm6627 = vcmp.lt.s32.totalorder %v6499, 16
    %vm6628 = vcmp.lt.s32.totalorder %v6500, 16
    %vm6629 = vcmp.lt.s32.totalorder %v6501, 16
    %vm6630 = vcmp.lt.s32.totalorder %v6502, 16
    %vm6631 = vcmp.lt.s32.totalorder %v6503, 16
    %vm6632 = vcmp.lt.s32.totalorder %v6504, 16
    %vm6633 = vcmp.lt.s32.totalorder %v6505, 16
    %vm6634 = vcmp.lt.s32.totalorder %v6506, 16
    %vm6635 = vcmp.lt.s32.totalorder %v6507, 16
    %vm6636 = vcmp.lt.s32.totalorder %v6508, 16
    %vm6637 = vcmp.lt.s32.totalorder %v6509, 16
    %vm6638 = vcmp.lt.s32.totalorder %v6510, 16
    %vm6639 = vcmp.lt.s32.totalorder %v6511, 16
    %vm6640 = vcmp.lt.s32.totalorder %v6512, 16
    %vm6641 = vcmp.lt.s32.totalorder %v6513, 16
    %vm6642 = vcmp.lt.s32.totalorder %v6514, 16
    %vm6643 = vcmp.lt.s32.totalorder %v6515, 16
    %vm6644 = vcmp.lt.s32.totalorder %v6516, 16
    %vm6645 = vcmp.lt.s32.totalorder %v6517, 16
    %vm6646 = vcmp.lt.s32.totalorder %v6518, 16
    %vm6647 = vcmp.lt.s32.totalorder %v6519, 16
    %vm6648 = vcmp.lt.s32.totalorder %v6520, 16
    %vm6649 = vcmp.lt.s32.totalorder %v6521, 16
    %vm6650 = vcmp.lt.s32.totalorder %v6522, 16
    %vm6651 = vcmp.lt.s32.totalorder %v6523, 16
    %vm6652 = vcmp.lt.s32.totalorder %v6524, 16
    %vm6653 = vcmp.lt.s32.totalorder %v6525, 16
    %vm6654 = vcmp.lt.s32.totalorder %v6526, 16
    %vm6655 = vcmp.lt.s32.totalorder %v6527, 16
    %vm6656 = vcmp.lt.s32.totalorder %v6528, 16
    %vm6657 = vcmp.lt.s32.totalorder %v6529, 16
    %vm6658 = vcmp.lt.s32.totalorder %v6530, 16
    %vm6659 = vcmp.lt.s32.totalorder %v6531, 16
    %vm6660 = vcmp.lt.s32.totalorder %v6532, 16
    %vm6661 = vcmp.lt.s32.totalorder %v6533, 16
    %vm6662 = vcmp.lt.s32.totalorder %v6534, 16
    %vm6663 = vcmp.lt.s32.totalorder %v6535, 16
    %vm6664 = vcmp.lt.s32.totalorder %v6536, 16
    %vm6665 = vcmp.lt.s32.totalorder %v6537, 16
    %vm6666 = vcmp.lt.s32.totalorder %v6538, 16
    %vm6667 = vcmp.lt.s32.totalorder %v6539, 16
    %vm6668 = vcmp.lt.s32.totalorder %v6540, 16
    %vm6669 = vcmp.lt.s32.totalorder %v6541, 16
    %vm6670 = vcmp.lt.s32.totalorder %v6542, 16
    %vm6671 = vcmp.lt.s32.totalorder %v6543, 16
    %vm6672 = vcmp.lt.s32.totalorder %v6544, 16
    %vm6673 = vcmp.lt.s32.totalorder %v6545, 16
    %vm6674 = vcmp.lt.s32.totalorder %v6546, 16
    %vm6675 = vcmp.lt.s32.totalorder %v6547, 16
    %vm6676 = vcmp.lt.s32.totalorder %v6548, 16
    %vm6677 = vcmp.lt.s32.totalorder %v6549, 16
    %vm6678 = vcmp.lt.s32.totalorder %v6550, 16
    %vm6679 = vcmp.lt.s32.totalorder %v6551, 16
    %vm6680 = vcmp.lt.s32.totalorder %v6552, 16
    %vm6681 = vcmp.lt.s32.totalorder %v6553, 16
    %vm6682 = vcmp.lt.s32.totalorder %v6554, 16
    %vm6683 = vcmp.lt.s32.totalorder %v6555, 16
    %vm6684 = vcmp.lt.s32.totalorder %v6556, 16
    %vm6685 = vcmp.lt.s32.totalorder %v6557, 16
    %vm6686 = vcmp.lt.s32.totalorder %v6558, 16
    %vm6687 = vcmp.lt.s32.totalorder %v6559, 16
    %vm6688 = vcmp.lt.s32.totalorder %v6560, 16
    %vm6689 = vcmp.lt.s32.totalorder %v6561, 16
    %vm6690 = vcmp.lt.s32.totalorder %v6562, 16
    %vm6691 = vcmp.lt.s32.totalorder %v6563, 16
    %vm6692 = vcmp.lt.s32.totalorder %v6564, 16
    %vm6693 = vcmp.lt.s32.totalorder %v6565, 16
    %vm6694 = vcmp.lt.s32.totalorder %v6566, 16
    %vm6695 = vcmp.lt.s32.totalorder %v6567, 16
    %vm6696 = vcmp.lt.s32.totalorder %v6568, 16
    %vm6697 = vcmp.lt.s32.totalorder %v6569, 16
    %vm6698 = vcmp.lt.s32.totalorder %v6570, 16
    %vm6699 = vcmp.lt.s32.totalorder %v6571, 16
    %vm6700 = vcmp.lt.s32.totalorder %v6572, 16
    %vm6701 = vcmp.lt.s32.totalorder %v6573, 16
    %vm6702 = vcmp.lt.s32.totalorder %v6574, 16
    %vm6703 = vcmp.lt.s32.totalorder %v6575, 16
    %vm6704 = vcmp.lt.s32.totalorder %v6576, 16
    %vm6705 = vcmp.lt.s32.totalorder %v6577, 16
    %vm6706 = vcmp.lt.s32.totalorder %v6578, 16
    %vm6707 = vcmp.lt.s32.totalorder %v6579, 16
    %vm6708 = vcmp.lt.s32.totalorder %v6580, 16
    %vm6709 = vcmp.lt.s32.totalorder %v6581, 16
    %vm6710 = vcmp.lt.s32.totalorder %v6582, 16
    %vm6711 = vcmp.lt.s32.totalorder %v6583, 16
    %vm6712 = vcmp.lt.s32.totalorder %v6584, 16
    %vm6713 = vcmp.lt.s32.totalorder %v6585, 16
    %vm6714 = vcmp.lt.s32.totalorder %v6586, 16
    %vm6715 = vcmp.lt.s32.totalorder %v6587, 16
    %vm6716 = vcmp.lt.s32.totalorder %v6588, 16
    %vm6717 = vcmp.lt.s32.totalorder %v6589, 16
    %vm6718 = vcmp.lt.s32.totalorder %v6590, 16
    %vm6719 = vcmp.lt.s32.totalorder %v6591, 16
    %vm6720 = vcmp.lt.s32.totalorder %v6592, 16
    %vm6721 = vcmp.lt.s32.totalorder %v6593, 16
    %vm6722 = vcmp.lt.s32.totalorder %v6594, 16
    %vm6723 = vcmp.lt.s32.totalorder %v6595, 16
    %vm6724 = vcmp.lt.s32.totalorder %v6596, 16
    %vm6725 = vcmp.lt.s32.totalorder %v6597, 16
    %vm6726 = vcmp.lt.s32.totalorder %v6598, 16
    %vm6727 = vcmp.lt.s32.totalorder %v6599, 16
    %vm6728 = vcmp.lt.s32.totalorder %v6600, 16
    %vm6729 = vcmp.lt.s32.totalorder %v6601, 16
    %vm6730 = vcmp.lt.s32.totalorder %v6602, 16
    %vm6731 = vcmp.lt.s32.totalorder %v6603, 16
    %vm6732 = vcmp.lt.s32.totalorder %v6604, 16
    %vm6733 = vcmp.lt.s32.totalorder %v6605, 16
    %vm6734 = vcmp.lt.s32.totalorder %v6606, 16
    %vm6735 = vcmp.lt.s32.totalorder %v6607, 16
    %vm6736 = vcmp.lt.s32.totalorder %v6608, 16
    %vm6737 = vcmp.lt.s32.totalorder %v6609, 16
    %vm6738 = vcmp.lt.s32.totalorder %v6610, 16
    %v6739 = vsel %vm6611, %v6224, 0.0
    %v6740 = vsel %vm6612, %v6225, 0.0
    %v6741 = vsel %vm6613, %v6226, 0.0
    %v6742 = vsel %vm6614, %v6227, 0.0
    %v6743 = vsel %vm6615, %v6228, 0.0
    %v6744 = vsel %vm6616, %v6229, 0.0
    %v6745 = vsel %vm6617, %v6230, 0.0
    %v6746 = vsel %vm6618, %v6231, 0.0
    %v6747 = vsel %vm6619, %v6232, 0.0
    %v6748 = vsel %vm6620, %v6233, 0.0
    %v6749 = vsel %vm6621, %v6234, 0.0
    %v6750 = vsel %vm6622, %v6235, 0.0
    %v6751 = vsel %vm6623, %v6236, 0.0
    %v6752 = vsel %vm6624, %v6237, 0.0
    %v6753 = vsel %vm6625, %v6238, 0.0
    %v6754 = vsel %vm6626, %v6239, 0.0
    %v6755 = vsel %vm6627, %v6240, 0.0
    %v6756 = vsel %vm6628, %v6241, 0.0
    %v6757 = vsel %vm6629, %v6242, 0.0
    %v6758 = vsel %vm6630, %v6243, 0.0
    %v6759 = vsel %vm6631, %v6244, 0.0
    %v6760 = vsel %vm6632, %v6245, 0.0
    %v6761 = vsel %vm6633, %v6246, 0.0
    %v6762 = vsel %vm6634, %v6247, 0.0
    %v6763 = vsel %vm6635, %v6248, 0.0
    %v6764 = vsel %vm6636, %v6249, 0.0
    %v6765 = vsel %vm6637, %v6250, 0.0
    %v6766 = vsel %vm6638, %v6251, 0.0
    %v6767 = vsel %vm6639, %v6252, 0.0
    %v6768 = vsel %vm6640, %v6253, 0.0
    %v6769 = vsel %vm6641, %v6254, 0.0
    %v6770 = vsel %vm6642, %v6255, 0.0
    %v6771 = vsel %vm6643, %v6256, 0.0
    %v6772 = vsel %vm6644, %v6257, 0.0
    %v6773 = vsel %vm6645, %v6258, 0.0
    %v6774 = vsel %vm6646, %v6259, 0.0
    %v6775 = vsel %vm6647, %v6260, 0.0
    %v6776 = vsel %vm6648, %v6261, 0.0
    %v6777 = vsel %vm6649, %v6262, 0.0
    %v6778 = vsel %vm6650, %v6263, 0.0
    %v6779 = vsel %vm6651, %v6264, 0.0
    %v6780 = vsel %vm6652, %v6265, 0.0
    %v6781 = vsel %vm6653, %v6266, 0.0
    %v6782 = vsel %vm6654, %v6267, 0.0
    %v6783 = vsel %vm6655, %v6268, 0.0
    %v6784 = vsel %vm6656, %v6269, 0.0
    %v6785 = vsel %vm6657, %v6270, 0.0
    %v6786 = vsel %vm6658, %v6271, 0.0
    %v6787 = vsel %vm6659, %v6272, 0.0
    %v6788 = vsel %vm6660, %v6273, 0.0
    %v6789 = vsel %vm6661, %v6274, 0.0
    %v6790 = vsel %vm6662, %v6275, 0.0
    %v6791 = vsel %vm6663, %v6276, 0.0
    %v6792 = vsel %vm6664, %v6277, 0.0
    %v6793 = vsel %vm6665, %v6278, 0.0
    %v6794 = vsel %vm6666, %v6279, 0.0
    %v6795 = vsel %vm6667, %v6280, 0.0
    %v6796 = vsel %vm6668, %v6281, 0.0
    %v6797 = vsel %vm6669, %v6282, 0.0
    %v6798 = vsel %vm6670, %v6283, 0.0
    %v6799 = vsel %vm6671, %v6284, 0.0
    %v6800 = vsel %vm6672, %v6285, 0.0
    %v6801 = vsel %vm6673, %v6286, 0.0
    %v6802 = vsel %vm6674, %v6287, 0.0
    %v6803 = vsel %vm6675, %v6288, 0.0
    %v6804 = vsel %vm6676, %v6289, 0.0
    %v6805 = vsel %vm6677, %v6290, 0.0
    %v6806 = vsel %vm6678, %v6291, 0.0
    %v6807 = vsel %vm6679, %v6292, 0.0
    %v6808 = vsel %vm6680, %v6293, 0.0
    %v6809 = vsel %vm6681, %v6294, 0.0
    %v6810 = vsel %vm6682, %v6295, 0.0
    %v6811 = vsel %vm6683, %v6296, 0.0
    %v6812 = vsel %vm6684, %v6297, 0.0
    %v6813 = vsel %vm6685, %v6298, 0.0
    %v6814 = vsel %vm6686, %v6299, 0.0
    %v6815 = vsel %vm6687, %v6300, 0.0
    %v6816 = vsel %vm6688, %v6301, 0.0
    %v6817 = vsel %vm6689, %v6302, 0.0
    %v6818 = vsel %vm6690, %v6303, 0.0
    %v6819 = vsel %vm6691, %v6304, 0.0
    %v6820 = vsel %vm6692, %v6305, 0.0
    %v6821 = vsel %vm6693, %v6306, 0.0
    %v6822 = vsel %vm6694, %v6307, 0.0
    %v6823 = vsel %vm6695, %v6308, 0.0
    %v6824 = vsel %vm6696, %v6309, 0.0
    %v6825 = vsel %vm6697, %v6310, 0.0
    %v6826 = vsel %vm6698, %v6311, 0.0
    %v6827 = vsel %vm6699, %v6312, 0.0
    %v6828 = vsel %vm6700, %v6313, 0.0
    %v6829 = vsel %vm6701, %v6314, 0.0
    %v6830 = vsel %vm6702, %v6315, 0.0
    %v6831 = vsel %vm6703, %v6316, 0.0
    %v6832 = vsel %vm6704, %v6317, 0.0
    %v6833 = vsel %vm6705, %v6318, 0.0
    %v6834 = vsel %vm6706, %v6319, 0.0
    %v6835 = vsel %vm6707, %v6320, 0.0
    %v6836 = vsel %vm6708, %v6321, 0.0
    %v6837 = vsel %vm6709, %v6322, 0.0
    %v6838 = vsel %vm6710, %v6323, 0.0
    %v6839 = vsel %vm6711, %v6324, 0.0
    %v6840 = vsel %vm6712, %v6325, 0.0
    %v6841 = vsel %vm6713, %v6326, 0.0
    %v6842 = vsel %vm6714, %v6327, 0.0
    %v6843 = vsel %vm6715, %v6328, 0.0
    %v6844 = vsel %vm6716, %v6329, 0.0
    %v6845 = vsel %vm6717, %v6330, 0.0
    %v6846 = vsel %vm6718, %v6331, 0.0
    %v6847 = vsel %vm6719, %v6332, 0.0
    %v6848 = vsel %vm6720, %v6333, 0.0
    %v6849 = vsel %vm6721, %v6334, 0.0
    %v6850 = vsel %vm6722, %v6335, 0.0
    %v6851 = vsel %vm6723, %v6336, 0.0
    %v6852 = vsel %vm6724, %v6337, 0.0
    %v6853 = vsel %vm6725, %v6338, 0.0
    %v6854 = vsel %vm6726, %v6339, 0.0
    %v6855 = vsel %vm6727, %v6340, 0.0
    %v6856 = vsel %vm6728, %v6341, 0.0
    %v6857 = vsel %vm6729, %v6342, 0.0
    %v6858 = vsel %vm6730, %v6343, 0.0
    %v6859 = vsel %vm6731, %v6344, 0.0
    %v6860 = vsel %vm6732, %v6345, 0.0
    %v6861 = vsel %vm6733, %v6346, 0.0
    %v6862 = vsel %vm6734, %v6347, 0.0
    %v6863 = vsel %vm6735, %v6348, 0.0
    %v6864 = vsel %vm6736, %v6349, 0.0
    %v6865 = vsel %vm6737, %v6350, 0.0
    %v6866 = vsel %vm6738, %v6351, 0.0
    %vm6867 = vcmask 7168
    %v6868 = vsel %vm6867, %v6739, 0.0
    %v6869 = vsel %vm6867, %v6740, 0.0
    %v6870 = vadd.f32 %v6868, %v6869
    %v6871 = vsel %vm6867, %v6741, 0.0
    %v6872 = vadd.f32 %v6870, %v6871
    %v6873 = vsel %vm6867, %v6742, 0.0
    %v6874 = vadd.f32 %v6872, %v6873
    %v6875 = vsel %vm6867, %v6743, 0.0
    %v6876 = vadd.f32 %v6874, %v6875
    %v6877 = vsel %vm6867, %v6744, 0.0
    %v6878 = vadd.f32 %v6876, %v6877
    %v6879 = vsel %vm6867, %v6745, 0.0
    %v6880 = vadd.f32 %v6878, %v6879
    %v6881 = vsel %vm6867, %v6746, 0.0
    %v6882 = vadd.f32 %v6880, %v6881
    %v6883 = vsel %vm6867, %v6747, 0.0
    %v6884 = vadd.f32 %v6882, %v6883
    %v6885 = vsel %vm6867, %v6748, 0.0
    %v6886 = vadd.f32 %v6884, %v6885
    %v6887 = vsel %vm6867, %v6749, 0.0
    %v6888 = vadd.f32 %v6886, %v6887
    %v6889 = vsel %vm6867, %v6750, 0.0
    %v6890 = vadd.f32 %v6888, %v6889
    %v6891 = vsel %vm6867, %v6751, 0.0
    %v6892 = vadd.f32 %v6890, %v6891
    %v6893 = vsel %vm6867, %v6752, 0.0
    %v6894 = vadd.f32 %v6892, %v6893
    %v6895 = vsel %vm6867, %v6753, 0.0
    %v6896 = vadd.f32 %v6894, %v6895
    %v6897 = vsel %vm6867, %v6754, 0.0
    %v6898 = vadd.f32 %v6896, %v6897
    %v6899 = vsel %vm6867, %v6755, 0.0
    %v6900 = vadd.f32 %v6898, %v6899
    %v6901 = vsel %vm6867, %v6756, 0.0
    %v6902 = vadd.f32 %v6900, %v6901
    %v6903 = vsel %vm6867, %v6757, 0.0
    %v6904 = vadd.f32 %v6902, %v6903
    %v6905 = vsel %vm6867, %v6758, 0.0
    %v6906 = vadd.f32 %v6904, %v6905
    %v6907 = vsel %vm6867, %v6759, 0.0
    %v6908 = vadd.f32 %v6906, %v6907
    %v6909 = vsel %vm6867, %v6760, 0.0
    %v6910 = vadd.f32 %v6908, %v6909
    %v6911 = vsel %vm6867, %v6761, 0.0
    %v6912 = vadd.f32 %v6910, %v6911
    %v6913 = vsel %vm6867, %v6762, 0.0
    %v6914 = vadd.f32 %v6912, %v6913
    %v6915 = vsel %vm6867, %v6763, 0.0
    %v6916 = vadd.f32 %v6914, %v6915
    %v6917 = vsel %vm6867, %v6764, 0.0
    %v6918 = vadd.f32 %v6916, %v6917
    %v6919 = vsel %vm6867, %v6765, 0.0
    %v6920 = vadd.f32 %v6918, %v6919
    %v6921 = vsel %vm6867, %v6766, 0.0
    %v6922 = vadd.f32 %v6920, %v6921
    %v6923 = vsel %vm6867, %v6767, 0.0
    %v6924 = vadd.f32 %v6922, %v6923
    %v6925 = vsel %vm6867, %v6768, 0.0
    %v6926 = vadd.f32 %v6924, %v6925
    %v6927 = vsel %vm6867, %v6769, 0.0
    %v6928 = vadd.f32 %v6926, %v6927
    %v6929 = vsel %vm6867, %v6770, 0.0
    %v6930 = vadd.f32 %v6928, %v6929
    %v6931 = vsel %vm6867, %v6771, 0.0
    %v6932 = vadd.f32 %v6930, %v6931
    %v6933 = vsel %vm6867, %v6772, 0.0
    %v6934 = vadd.f32 %v6932, %v6933
    %v6935 = vsel %vm6867, %v6773, 0.0
    %v6936 = vadd.f32 %v6934, %v6935
    %v6937 = vsel %vm6867, %v6774, 0.0
    %v6938 = vadd.f32 %v6936, %v6937
    %v6939 = vsel %vm6867, %v6775, 0.0
    %v6940 = vadd.f32 %v6938, %v6939
    %v6941 = vsel %vm6867, %v6776, 0.0
    %v6942 = vadd.f32 %v6940, %v6941
    %v6943 = vsel %vm6867, %v6777, 0.0
    %v6944 = vadd.f32 %v6942, %v6943
    %v6945 = vsel %vm6867, %v6778, 0.0
    %v6946 = vadd.f32 %v6944, %v6945
    %v6947 = vsel %vm6867, %v6779, 0.0
    %v6948 = vadd.f32 %v6946, %v6947
    %v6949 = vsel %vm6867, %v6780, 0.0
    %v6950 = vadd.f32 %v6948, %v6949
    %v6951 = vsel %vm6867, %v6781, 0.0
    %v6952 = vadd.f32 %v6950, %v6951
    %v6953 = vsel %vm6867, %v6782, 0.0
    %v6954 = vadd.f32 %v6952, %v6953
    %v6955 = vsel %vm6867, %v6783, 0.0
    %v6956 = vadd.f32 %v6954, %v6955
    %v6957 = vsel %vm6867, %v6784, 0.0
    %v6958 = vadd.f32 %v6956, %v6957
    %v6959 = vsel %vm6867, %v6785, 0.0
    %v6960 = vadd.f32 %v6958, %v6959
    %v6961 = vsel %vm6867, %v6786, 0.0
    %v6962 = vadd.f32 %v6960, %v6961
    %v6963 = vsel %vm6867, %v6787, 0.0
    %v6964 = vadd.f32 %v6962, %v6963
    %v6965 = vsel %vm6867, %v6788, 0.0
    %v6966 = vadd.f32 %v6964, %v6965
    %v6967 = vsel %vm6867, %v6789, 0.0
    %v6968 = vadd.f32 %v6966, %v6967
    %v6969 = vsel %vm6867, %v6790, 0.0
    %v6970 = vadd.f32 %v6968, %v6969
    %v6971 = vsel %vm6867, %v6791, 0.0
    %v6972 = vadd.f32 %v6970, %v6971
    %v6973 = vsel %vm6867, %v6792, 0.0
    %v6974 = vadd.f32 %v6972, %v6973
    %v6975 = vsel %vm6867, %v6793, 0.0
    %v6976 = vadd.f32 %v6974, %v6975
    %v6977 = vsel %vm6867, %v6794, 0.0
    %v6978 = vadd.f32 %v6976, %v6977
    %v6979 = vsel %vm6867, %v6795, 0.0
    %v6980 = vadd.f32 %v6978, %v6979
    %v6981 = vsel %vm6867, %v6796, 0.0
    %v6982 = vadd.f32 %v6980, %v6981
    %v6983 = vsel %vm6867, %v6797, 0.0
    %v6984 = vadd.f32 %v6982, %v6983
    %v6985 = vsel %vm6867, %v6798, 0.0
    %v6986 = vadd.f32 %v6984, %v6985
    %v6987 = vsel %vm6867, %v6799, 0.0
    %v6988 = vadd.f32 %v6986, %v6987
    %v6989 = vsel %vm6867, %v6800, 0.0
    %v6990 = vadd.f32 %v6988, %v6989
    %v6991 = vsel %vm6867, %v6801, 0.0
    %v6992 = vadd.f32 %v6990, %v6991
    %v6993 = vsel %vm6867, %v6802, 0.0
    %v6994 = vadd.f32 %v6992, %v6993
    %v6995 = vsel %vm6867, %v6803, 0.0
    %v6996 = vadd.f32 %v6994, %v6995
    %v6997 = vsel %vm6867, %v6804, 0.0
    %v6998 = vadd.f32 %v6996, %v6997
    %v6999 = vsel %vm6867, %v6805, 0.0
    %v7000 = vadd.f32 %v6998, %v6999
    %v7001 = vsel %vm6867, %v6806, 0.0
    %v7002 = vadd.f32 %v7000, %v7001
    %v7003 = vsel %vm6867, %v6807, 0.0
    %v7004 = vadd.f32 %v7002, %v7003
    %v7005 = vsel %vm6867, %v6808, 0.0
    %v7006 = vadd.f32 %v7004, %v7005
    %v7007 = vsel %vm6867, %v6809, 0.0
    %v7008 = vadd.f32 %v7006, %v7007
    %v7009 = vsel %vm6867, %v6810, 0.0
    %v7010 = vadd.f32 %v7008, %v7009
    %v7011 = vsel %vm6867, %v6811, 0.0
    %v7012 = vadd.f32 %v7010, %v7011
    %v7013 = vsel %vm6867, %v6812, 0.0
    %v7014 = vadd.f32 %v7012, %v7013
    %v7015 = vsel %vm6867, %v6813, 0.0
    %v7016 = vadd.f32 %v7014, %v7015
    %v7017 = vsel %vm6867, %v6814, 0.0
    %v7018 = vadd.f32 %v7016, %v7017
    %v7019 = vsel %vm6867, %v6815, 0.0
    %v7020 = vadd.f32 %v7018, %v7019
    %v7021 = vsel %vm6867, %v6816, 0.0
    %v7022 = vadd.f32 %v7020, %v7021
    %v7023 = vsel %vm6867, %v6817, 0.0
    %v7024 = vadd.f32 %v7022, %v7023
    %v7025 = vsel %vm6867, %v6818, 0.0
    %v7026 = vadd.f32 %v7024, %v7025
    %v7027 = vsel %vm6867, %v6819, 0.0
    %v7028 = vadd.f32 %v7026, %v7027
    %v7029 = vsel %vm6867, %v6820, 0.0
    %v7030 = vadd.f32 %v7028, %v7029
    %v7031 = vsel %vm6867, %v6821, 0.0
    %v7032 = vadd.f32 %v7030, %v7031
    %v7033 = vsel %vm6867, %v6822, 0.0
    %v7034 = vadd.f32 %v7032, %v7033
    %v7035 = vsel %vm6867, %v6823, 0.0
    %v7036 = vadd.f32 %v7034, %v7035
    %v7037 = vsel %vm6867, %v6824, 0.0
    %v7038 = vadd.f32 %v7036, %v7037
    %v7039 = vsel %vm6867, %v6825, 0.0
    %v7040 = vadd.f32 %v7038, %v7039
    %v7041 = vsel %vm6867, %v6826, 0.0
    %v7042 = vadd.f32 %v7040, %v7041
    %v7043 = vsel %vm6867, %v6827, 0.0
    %v7044 = vadd.f32 %v7042, %v7043
    %v7045 = vsel %vm6867, %v6828, 0.0
    %v7046 = vadd.f32 %v7044, %v7045
    %v7047 = vsel %vm6867, %v6829, 0.0
    %v7048 = vadd.f32 %v7046, %v7047
    %v7049 = vsel %vm6867, %v6830, 0.0
    %v7050 = vadd.f32 %v7048, %v7049
    %v7051 = vsel %vm6867, %v6831, 0.0
    %v7052 = vadd.f32 %v7050, %v7051
    %v7053 = vsel %vm6867, %v6832, 0.0
    %v7054 = vadd.f32 %v7052, %v7053
    %v7055 = vsel %vm6867, %v6833, 0.0
    %v7056 = vadd.f32 %v7054, %v7055
    %v7057 = vsel %vm6867, %v6834, 0.0
    %v7058 = vadd.f32 %v7056, %v7057
    %v7059 = vsel %vm6867, %v6835, 0.0
    %v7060 = vadd.f32 %v7058, %v7059
    %v7061 = vsel %vm6867, %v6836, 0.0
    %v7062 = vadd.f32 %v7060, %v7061
    %v7063 = vsel %vm6867, %v6837, 0.0
    %v7064 = vadd.f32 %v7062, %v7063
    %v7065 = vsel %vm6867, %v6838, 0.0
    %v7066 = vadd.f32 %v7064, %v7065
    %v7067 = vsel %vm6867, %v6839, 0.0
    %v7068 = vadd.f32 %v7066, %v7067
    %v7069 = vsel %vm6867, %v6840, 0.0
    %v7070 = vadd.f32 %v7068, %v7069
    %v7071 = vsel %vm6867, %v6841, 0.0
    %v7072 = vadd.f32 %v7070, %v7071
    %v7073 = vsel %vm6867, %v6842, 0.0
    %v7074 = vadd.f32 %v7072, %v7073
    %v7075 = vsel %vm6867, %v6843, 0.0
    %v7076 = vadd.f32 %v7074, %v7075
    %v7077 = vsel %vm6867, %v6844, 0.0
    %v7078 = vadd.f32 %v7076, %v7077
    %v7079 = vsel %vm6867, %v6845, 0.0
    %v7080 = vadd.f32 %v7078, %v7079
    %v7081 = vsel %vm6867, %v6846, 0.0
    %v7082 = vadd.f32 %v7080, %v7081
    %v7083 = vsel %vm6867, %v6847, 0.0
    %v7084 = vadd.f32 %v7082, %v7083
    %v7085 = vsel %vm6867, %v6848, 0.0
    %v7086 = vadd.f32 %v7084, %v7085
    %v7087 = vsel %vm6867, %v6849, 0.0
    %v7088 = vadd.f32 %v7086, %v7087
    %v7089 = vsel %vm6867, %v6850, 0.0
    %v7090 = vadd.f32 %v7088, %v7089
    %v7091 = vsel %vm6867, %v6851, 0.0
    %v7092 = vadd.f32 %v7090, %v7091
    %v7093 = vsel %vm6867, %v6852, 0.0
    %v7094 = vadd.f32 %v7092, %v7093
    %v7095 = vsel %vm6867, %v6853, 0.0
    %v7096 = vadd.f32 %v7094, %v7095
    %v7097 = vsel %vm6867, %v6854, 0.0
    %v7098 = vadd.f32 %v7096, %v7097
    %v7099 = vsel %vm6867, %v6855, 0.0
    %v7100 = vadd.f32 %v7098, %v7099
    %v7101 = vsel %vm6867, %v6856, 0.0
    %v7102 = vadd.f32 %v7100, %v7101
    %v7103 = vsel %vm6867, %v6857, 0.0
    %v7104 = vadd.f32 %v7102, %v7103
    %v7105 = vsel %vm6867, %v6858, 0.0
    %v7106 = vadd.f32 %v7104, %v7105
    %v7107 = vsel %vm6867, %v6859, 0.0
    %v7108 = vadd.f32 %v7106, %v7107
    %v7109 = vsel %vm6867, %v6860, 0.0
    %v7110 = vadd.f32 %v7108, %v7109
    %v7111 = vsel %vm6867, %v6861, 0.0
    %v7112 = vadd.f32 %v7110, %v7111
    %v7113 = vsel %vm6867, %v6862, 0.0
    %v7114 = vadd.f32 %v7112, %v7113
    %v7115 = vsel %vm6867, %v6863, 0.0
    %v7116 = vadd.f32 %v7114, %v7115
    %v7117 = vsel %vm6867, %v6864, 0.0
    %v7118 = vadd.f32 %v7116, %v7117
    %v7119 = vsel %vm6867, %v6865, 0.0
    %v7120 = vadd.f32 %v7118, %v7119
    %v7121 = vsel %vm6867, %v6866, 0.0
    %v7122 = vadd.f32 %v7120, %v7121
    %7123 = vadd.xlane.f32.xlu0 %v7122
    %v7124 = vpop.xlane.xlu0 %7123
    %v7125 = vrot.slane %v7124, 4
    %v7126 = vadd.f32 %v7124, %v7125
    %v7127 = vrot.slane %v7126, 2
    %v7128 = vadd.f32 %v7126, %v7127
    %v7129 = vrot.slane %v7128, 1
    %v7130 = vadd.f32 %v7128, %v7129
    %s7131 = vtos %v7130
    %s7132 = scalar_lea.smem [#allocation5], 0
    %7133 = sst [smem:[%s7132]] %s7131
    // Predicated region
    $region14: #{tpu_custom_call.1} parent=1 // pred_check
      _
    $region15: #{tpu_custom_call.1} parent=1 // pred_check_branch
      %7135 = sbr.rel (0) target = $region17
    $region16: #{tpu_custom_call.1} parent=1 // pred_region
      _
    $region17: #{tpu_custom_call.1} parent=1 // pred_fallthru
      _
    // Predicated region
    $region18: #{tpu_custom_call.1} parent=1 // pred_check
      _
    $region19: #{tpu_custom_call.1} parent=1 // pred_check_branch
      %7137 = sbr.rel (0) target = $region21
    $region20: #{tpu_custom_call.1} parent=1 // pred_region
      %s7139 = ssub.s32 128, 128
      %7140 = vsyncadd [#allocation3], %s7139
      %s7142 = sshll.u32 [#allocation2], 4
      %s7143 = int_to_ptr.vmem [resolvable:$true] %s7142
      %7145 = dma.vmem_to_hbm [thread:$0]  %s7143, 128, %s4, [#allocation3]
    $region21: #{tpu_custom_call.1} parent=1 // pred_fallthru
      _
    // Predicated region
    $region22: #{tpu_custom_call.1} parent=1 // pred_check
      _
    $region23: #{tpu_custom_call.1} parent=1 // pred_check_branch
      %7147 = sbr.rel (0) target = $region25
    $region24: #{tpu_custom_call.1} parent=1 // pred_region
      %s7149 = ssub.s32 16, 16
      %7150 = vsyncadd [#allocation4], %s7149
      %7153 = dma.smem_to_hbm [#allocation5], 16, %s5, [#allocation4]
    $region25: #{tpu_custom_call.1} parent=1 // pred_fallthru
      _
    // Predicated region
    $region26: #{tpu_custom_call.1} parent=1 // pred_check
      _
    $region27: #{tpu_custom_call.1} parent=1 // pred_check_branch
      %7155 = sbr.rel (0) target = $region29
    $region28: #{tpu_custom_call.1} parent=1 // pred_region
      _
    $region29: #{tpu_custom_call.1} parent=1 // pred_fallthru
      _
    // Predicated region
    $region30: #{tpu_custom_call.1} parent=1 // pred_check
      _
    $region31: #{tpu_custom_call.1} parent=1 // pred_check_branch
      %7157 = sbr.rel (0) target = $region33
    $region32: #{tpu_custom_call.1} parent=1 // pred_region
      %7158 = dma.done [#allocation3], 128
    $region33: #{tpu_custom_call.1} parent=1 // pred_fallthru
      _
    // Predicated region
    $region34: #{tpu_custom_call.1} parent=1 // pred_check
      _
    $region35: #{tpu_custom_call.1} parent=1 // pred_check_branch
      %7160 = sbr.rel (0) target = $region37
    $region36: #{tpu_custom_call.1} parent=1 // pred_region
      %7161 = dma.done [#allocation4], 16
    $region37: #{tpu_custom_call.1} parent=1 // pred_fallthru
      _
    %7162 = sfence
    %7163 = vsyncpa [#allocation3], 1
    %7164 = vsyncpa [#allocation4], 1

</llo_original>
